<compile_context>
chip_gen: v5e
topology: v5e:2x2
jax: 0.10.0
libtpu: 0.0.40
codegen_flags: <defaults>
</compile_context>

<pallas_src>
import functools

import jax
import jax.numpy as jnp
from jax.experimental import pallas as pl
from jax.experimental.pallas import tpu as pltpu


# ---------------------------------------------------------------------------
# Fused Pallas kernel: whole forward pass for one image per grid step.
# ---------------------------------------------------------------------------
def _buildnet_fused_kernel(
    x_ref,      # (1, H, W, FC)       f32  (input channels zero-padded to FC)
    ws_ref,     # (9*FC, FC)          bf16 stem conv, taps folded into K
    bs_ref,     # (1, FC)             f32
    we_ref,     # (NB, 9*FC, FC)      bf16 encoder blocks
    be_ref,     # (NB, FC)            f32
    wd_ref,     # (9*FC, FC)          bf16 stride-2 down conv
    bd_ref,     # (1, FC)             f32
    wm_ref,     # (NB, 9*FC, FC)      bf16 half-res blocks
    bm_ref,     # (NB, FC)            f32
    wu_ref,     # (9*FC, FC)          bf16 up conv (after nearest 2x)
    bu_ref,     # (1, FC)             f32
    wh_ref,     # (NCLASS, FC)        bf16 1x1 head, pre-transposed
    bh_ref,     # (NCLASS, 1)         f32
    o_ref,      # (1, NCLASS, H*W)    f32  lane-dense, parity-blocked slab
    pad_ref,    # VMEM (H+2,  W+2,  FC) f32 full-res halo'd activation scratch
    pad2_ref,   # VMEM (H/2+2,W/2+2,FC) f32 half-res halo'd activation scratch
    *, nblock, softmax,
):
    f32, bf16 = jnp.float32, jnp.bfloat16
    _, H, W, FC = x_ref.shape
    H2, W2 = H // 2, W // 2

    # Zero the halo scratches ONCE per grid step (cheap); the border rings are
    # never written afterwards and every layer fully rewrites the interior.
    pad_ref[...] = jnp.zeros(pad_ref.shape, f32)
    pad2_ref[...] = jnp.zeros(pad2_ref.shape, f32)

    def matmul_bias_relu(col, w, b):
        # One MXU matmul per conv layer: K = 9*FC, f32 accumulation.
        y = jnp.dot(col, w, preferred_element_type=f32)
        return jnp.maximum(y + b, 0.0)

    def im2col(ref, hh, ww):
        # (hh*ww, 9*FC) bf16 slab from 9 shifted contiguous slices.
        pieces = [
            ref[di:di + hh, dj:dj + ww, :].reshape(hh * ww, FC).astype(bf16)
            for di in range(3) for dj in range(3)
        ]
        return jnp.concatenate(pieces, axis=-1)

    def conv_full(w, b):
        """3x3 stride-1 'same' conv on the full-res scratch; writes interior."""
        y = matmul_bias_relu(im2col(pad_ref, H, W), w, b)
        pad_ref[1:H + 1, 1:W + 1, :] = y.reshape(H, W, FC)

    def conv_half(w, b):
        """3x3 stride-1 'same' conv on the half-res scratch; writes interior."""
        y = matmul_bias_relu(im2col(pad2_ref, H2, W2), w, b)
        pad2_ref[1:H2 + 1, 1:W2 + 1, :] = y.reshape(H2, W2, FC)

    def conv_down(w, b):
        """3x3 stride-2 conv fused with the ::2 subsample: im2col rows are
        emitted only for even output positions (M = H/2*W/2)."""
        pieces = []
        for di in range(3):
            for dj in range(3):
                # columns dj, dj+2, ... : sublane-strided ref read
                t = pad_ref[di:di + H, pl.ds(dj, W2, 2), :]     # (H, W2, FC)
                # rows di, di+2, ... : free leading-dim regroup + index
                t = t.reshape(H2, 2, W2, FC)[:, 0]              # (H2, W2, FC)
                pieces.append(t.reshape(H2 * W2, FC).astype(bf16))
        y = matmul_bias_relu(jnp.concatenate(pieces, axis=-1), w, b)
        pad2_ref[1:H2 + 1, 1:W2 + 1, :] = y.reshape(H2, W2, FC)

    # ---- forward pass ------------------------------------------------------
    pad_ref[1:H + 1, 1:W + 1, :] = x_ref[0]                 # load image
    conv_full(ws_ref[...], bs_ref[0])                       # stem
    for k in range(nblock):                                 # encoder blocks
        # TODO(synk): switch to lax.fori_loop for large nblock (vreg liveness)
        conv_full(we_ref[k], be_ref[k])
    conv_down(wd_ref[...], bd_ref[0])                       # stride-2 down
    for k in range(nblock):                                 # half-res blocks
        conv_half(wm_ref[k], bm_ref[k])

    # Fused nearest-2x upsample + 3x3 conv + 1x1 head, computed per output
    # parity class directly from the half-res scratch (no upsampled map).
    # pad2 index needed by tap d for output parity p is  base + off[p][d].
    off = ((0, 1, 1), (1, 1, 2))
    wu = wu_ref[...]
    wh = wh_ref[...]
    ys = []
    for pr in range(2):
        for pc in range(2):
            pieces = [
                pad2_ref[off[pr][di]:off[pr][di] + H2,
                         off[pc][dj]:off[pc][dj] + W2, :]
                .reshape(H2 * W2, FC).astype(bf16)
                for di in range(3) for dj in range(3)
            ]
            a_up = matmul_bias_relu(jnp.concatenate(pieces, axis=-1),
                                    wu, bu_ref[0])           # (H2*W2, FC)
            # 1x1 head, channel-major (classes x pixels) so the final slab is
            # lane-dense.
            ys.append(jax.lax.dot_general(
                wh, a_up.astype(bf16),
                dimension_numbers=(((1,), (1,)), ((), ())),
                preferred_element_type=f32))                  # (NCLASS, H2*W2)

    y = jnp.concatenate(ys, axis=-1) + bh_ref[...]            # (NCLASS, H*W)
    if softmax:                                               # over classes
        m = jnp.max(y, axis=0, keepdims=True)
        e = jnp.exp(y - m)
        y = e / jnp.sum(e, axis=0, keepdims=True)             # exact: sums==1
    o_ref[0] = y.astype(o_ref.dtype)


# ---------------------------------------------------------------------------
# Parameter helpers (host-side layout plumbing)
# ---------------------------------------------------------------------------
def _conv_init(key, kh, kw, cin, cout):
    kw_, _ = jax.random.split(key)
    fan_in = kh * kw * cin
    wgt = jax.random.normal(kw_, (kh, kw, cin, cout), jnp.float32) * jnp.sqrt(
        2.0 / fan_in)
    b = jnp.zeros((cout,), jnp.float32)
    return wgt, b


def _pack3x3(wgt):
    """(3, 3, Cin, Cout) -> (9*Cin, Cout): taps folded into the K dimension,
    matching the im2col piece order (di, dj) outer / channel inner."""
    kh, kw, cin, cout = wgt.shape
    return wgt.reshape(kh * kw * cin, cout)


# ---------------------------------------------------------------------------
# BuildNet (Seg16-style backbone + HeadCNN), single fused kernel per batch.
# ---------------------------------------------------------------------------
class BuildNetPallas:
    def __init__(self, backbone, nclass, img_c, img_hw, fc, type_block,
                 nblock, downsample_mode='conv', upsample_mode='conv',
                 softmax=False, key=None):
        del backbone, img_hw, type_block, downsample_mode, upsample_mode
        assert nblock >= 1 and img_c <= fc
        if key is None:
            key = jax.random.PRNGKey(0)
        keys = jax.random.split(key, 4 + 2 * nblock)
        k_iter = iter(keys)

        self.nclass, self.img_c, self.fc = nclass, img_c, fc
        self.nblock, self.softmax = nblock, softmax

        # raw f32 parameters (also used by the pure-JAX reference)
        self.w_stem, self.b_stem = _conv_init(next(k_iter), 3, 3, img_c, fc)
        self.enc = [_conv_init(next(k_iter), 3, 3, fc, fc)
                    for _ in range(nblock)]
        self.w_down, self.b_down = _conv_init(next(k_iter), 3, 3, fc, fc)
        self.mid = [_conv_init(next(k_iter), 3, 3, fc, fc)
                    for _ in range(nblock)]
        self.w_up, self.b_up = _conv_init(next(k_iter), 3, 3, fc, fc)
        wh, bh = _conv_init(next(k_iter), 1, 1, fc, nclass)
        self.w_head, self.b_head = wh.reshape(fc, nclass), bh

    def __call__(self, x_nchw):
        n, c, h, w = x_nchw.shape
        fc, nclass, nblock = self.fc, self.nclass, self.nblock
        assert c == self.img_c and h % 2 == 0 and w % 2 == 0
        h2, w2 = h // 2, w // 2
        bf16 = jnp.bfloat16

        # Layout glue: NCHW -> NHWC; zero-pad input channels to FC so every
        # conv contracts a full FC-wide block.
        x = jnp.transpose(x_nchw, (0, 2, 3, 1))
        if c < fc:
            x = jnp.pad(x, ((0, 0), (0, 0), (0, 0), (0, fc - c)))

        # Pack weights: taps folded into K, bf16 for the MXU.
        w_stem_p = jnp.pad(self.w_stem,
                           ((0, 0), (0, 0), (0, fc - c), (0, 0)))
        ws = _pack3x3(w_stem_p).astype(bf16)
        we = jnp.stack([_pack3x3(wi) for wi, _ in self.enc]).astype(bf16)
        be = jnp.stack([bi for _, bi in self.enc])
        wd = _pack3x3(self.w_down).astype(bf16)
        wm = jnp.stack([_pack3x3(wi) for wi, _ in self.mid]).astype(bf16)
        bm = jnp.stack([bi for _, bi in self.mid])
        wu = _pack3x3(self.w_up).astype(bf16)
        wht = self.w_head.T.astype(bf16)                      # (nclass, fc)
        bh = self.b_head.reshape(nclass, 1)

        kernel = functools.partial(_buildnet_fused_kernel,
                                   nblock=nblock, softmax=self.softmax)
        c2 = lambda i: (0, 0)
        c3 = lambda i: (0, 0, 0)

        y = pl.pallas_call(
            kernel,
            out_shape=jax.ShapeDtypeStruct((n, nclass, h * w), jnp.float32),
            grid_spec=pltpu.PrefetchScalarGridSpec(
                num_scalar_prefetch=0,
                grid=(n,),
                in_specs=[
                    pl.BlockSpec((1, h, w, fc), lambda i: (i, 0, 0, 0)),
                    pl.BlockSpec((9 * fc, fc), c2),
                    pl.BlockSpec((1, fc), c2),
                    pl.BlockSpec((nblock, 9 * fc, fc), c3),
                    pl.BlockSpec((nblock, fc), c2),
                    pl.BlockSpec((9 * fc, fc), c2),
                    pl.BlockSpec((1, fc), c2),
                    pl.BlockSpec((nblock, 9 * fc, fc), c3),
                    pl.BlockSpec((nblock, fc), c2),
                    pl.BlockSpec((9 * fc, fc), c2),
                    pl.BlockSpec((1, fc), c2),
                    pl.BlockSpec((nclass, fc), c2),
                    pl.BlockSpec((nclass, 1), c2),
                ],
                out_specs=pl.BlockSpec((1, nclass, h * w),
                                       lambda i: (i, 0, 0)),
                scratch_shapes=[
                    pltpu.VMEM((h + 2, w + 2, fc), jnp.float32),
                    pltpu.VMEM((h2 + 2, w2 + 2, fc), jnp.float32),
                ],
            ),
            compiler_params=pltpu.CompilerParams(
                dimension_semantics=("parallel",)),
        )(x, ws, self.b_stem.reshape(1, fc), we, be,
          wd, self.b_down.reshape(1, fc), wm, bm,
          wu, self.b_up.reshape(1, fc), wht, bh)

        # De-interleave the parity-blocked output:
        # lane index = ((pr*2 + pc)*H2 + p)*W2 + q  ->  spatial (2p+pr, 2q+pc)
        y = y.reshape(n, nclass, 2, 2, h2, w2)
        y = jnp.transpose(y, (0, 1, 4, 2, 5, 3))
        return y.reshape(n, nclass, h, w)


# ---------------------------------------------------------------------------
# Pure-JAX/XLA reference with the same bf16-operand / f32-accumulate numerics.
# ---------------------------------------------------------------------------
def _reference_forward(x_nchw, net):
    bf16, f32 = jnp.bfloat16, jnp.float32

    def conv(a, wgt, b, stride=1):
        out = jax.lax.conv_general_dilated(
            a.astype(bf16), wgt.astype(bf16),
            window_strides=(stride, stride), padding=((1, 1), (1, 1)),
            dimension_numbers=("NHWC", "HWIO", "NHWC"),
            preferred_element_type=f32)
        return jnp.maximum(out + b, 0.0)

    a = jnp.transpose(x_nchw, (0, 2, 3, 1))                   # (N, H, W, C)
    a = conv(a, net.w_stem, net.b_stem)
    for wi, bi in net.enc:
        a = conv(a, wi, bi)
    a = conv(a, net.w_down, net.b_down, stride=2)
    for wi, bi in net.mid:
        a = conv(a, wi, bi)
    a = jnp.repeat(jnp.repeat(a, 2, axis=1), 2, axis=2)       # nearest 2x
    a = conv(a, net.w_up, net.b_up)
    nb, hh, ww, _ = a.shape
    y = jnp.dot(a.reshape(nb, hh * ww, net.fc).astype(bf16),
                net.w_head.astype(bf16),
                preferred_element_type=f32) + net.b_head
    if net.softmax:
        y = jax.nn.softmax(y, axis=-1)
    return jnp.transpose(y.reshape(nb, hh, ww, -1), (0, 3, 1, 2))


# ---------------------------------------------------------------------------
if __name__ == "__main__":
    key = jax.random.PRNGKey(0)
    k_x, k_p = jax.random.split(key)

    N, C, H, W = 2, 4, 16, 16
    NCLASS, FC, NBLOCK = 4, 32, 2

    x = jax.random.normal(k_x, (N, C, H, W), dtype=jnp.float32)

    net = BuildNetPallas('Seg16', nclass=NCLASS, img_c=C, img_hw=H, fc=FC,
                         type_block='basic', nblock=NBLOCK,
                         downsample_mode='conv', upsample_mode='conv',
                         softmax=True, key=k_p)

    y = jax.block_until_ready(jax.jit(net.__call__)(x))

    assert y.shape == (N, NCLASS, H, W), y.shape
    assert bool(jnp.all(jnp.isfinite(y)))
    # exact-divide softmax: per-pixel class probabilities sum to 1
    assert bool(jnp.allclose(jnp.sum(y, axis=1), 1.0, atol=1e-3))

    # validate against a pure-JAX reference using the same bf16/f32 math
    y_ref = jax.block_until_ready(_reference_forward(x, net))
    max_abs = float(jnp.max(jnp.abs(y - y_ref)))
    assert max_abs < 5e-2, max_abs

    print("KERNEL_OK")
</pallas_src>

<mosaic_0001>
module attributes {stable_mosaic.version = 11 : i64} {
  func.func @_buildnet_fused_kernel(%arg0: i32, %arg1: memref<1x16x16x32xf32, #tpu.memory_space<vmem>>, %arg2: memref<288x32xbf16, #tpu.memory_space<vmem>>, %arg3: memref<1x32xf32, #tpu.memory_space<vmem>>, %arg4: memref<2x288x32xbf16, #tpu.memory_space<vmem>>, %arg5: memref<2x32xf32, #tpu.memory_space<vmem>>, %arg6: memref<288x32xbf16, #tpu.memory_space<vmem>>, %arg7: memref<1x32xf32, #tpu.memory_space<vmem>>, %arg8: memref<2x288x32xbf16, #tpu.memory_space<vmem>>, %arg9: memref<2x32xf32, #tpu.memory_space<vmem>>, %arg10: memref<288x32xbf16, #tpu.memory_space<vmem>>, %arg11: memref<1x32xf32, #tpu.memory_space<vmem>>, %arg12: memref<4x32xbf16, #tpu.memory_space<vmem>>, %arg13: memref<4x1xf32, #tpu.memory_space<vmem>>, %arg14: memref<1x4x256xf32, #tpu.memory_space<vmem>>, %arg15: memref<18x18x32xf32, #tpu.memory_space<vmem>>, %arg16: memref<10x10x32xf32, #tpu.memory_space<vmem>>) attributes {dimension_semantics = [#tpu.dimension_semantics<parallel>], iteration_bounds = array<i64: 2>, scalar_prefetch = 0 : i64, scratch_operands = 2 : i64, tpu.core_type = #tpu.core_type<tc>, window_params = [{transform_indices = @transform_0, window_bounds = array<i64: 1, 16, 16, 32>}, {pipeline_mode = #tpu.pipeline_mode<synchronous>, transform_indices = @transform_1, window_bounds = array<i64: 288, 32>}, {pipeline_mode = #tpu.pipeline_mode<synchronous>, transform_indices = @transform_2, window_bounds = array<i64: 1, 32>}, {pipeline_mode = #tpu.pipeline_mode<synchronous>, transform_indices = @transform_3, window_bounds = array<i64: 2, 288, 32>}, {pipeline_mode = #tpu.pipeline_mode<synchronous>, transform_indices = @transform_4, window_bounds = array<i64: 2, 32>}, {pipeline_mode = #tpu.pipeline_mode<synchronous>, transform_indices = @transform_5, window_bounds = array<i64: 288, 32>}, {pipeline_mode = #tpu.pipeline_mode<synchronous>, transform_indices = @transform_6, window_bounds = array<i64: 1, 32>}, {pipeline_mode = #tpu.pipeline_mode<synchronous>, transform_indices = @transform_7, window_bounds = array<i64: 2, 288, 32>}, {pipeline_mode = #tpu.pipeline_mode<synchronous>, transform_indices = @transform_8, window_bounds = array<i64: 2, 32>}, {pipeline_mode = #tpu.pipeline_mode<synchronous>, transform_indices = @transform_9, window_bounds = array<i64: 288, 32>}, {pipeline_mode = #tpu.pipeline_mode<synchronous>, transform_indices = @transform_10, window_bounds = array<i64: 1, 32>}, {pipeline_mode = #tpu.pipeline_mode<synchronous>, transform_indices = @transform_11, window_bounds = array<i64: 4, 32>}, {pipeline_mode = #tpu.pipeline_mode<synchronous>, transform_indices = @transform_12, window_bounds = array<i64: 4, 1>}, {transform_indices = @transform_13, window_bounds = array<i64: 1, 4, 256>}]} {
    %cst = arith.constant 0.000000e+00 : f32
    %0 = vector.broadcast %cst : f32 to vector<18x18x32xf32>
    %c0 = arith.constant 0 : index
    %c0_0 = arith.constant 0 : index
    %c0_1 = arith.constant 0 : index
    %1 = vector.load %arg15[%c0, %c0_0, %c0_1] : memref<18x18x32xf32, #tpu.memory_space<vmem>>, vector<18x18x32xf32>
    tpu.vector_store %arg15[%c0, %c0_0, %c0_1], %0 {strides = array<i32>} : memref<18x18x32xf32, #tpu.memory_space<vmem>>, vector<18x18x32xf32>,
    %cst_2 = arith.constant 0.000000e+00 : f32
    %2 = vector.broadcast %cst_2 : f32 to vector<10x10x32xf32>
    %c0_3 = arith.constant 0 : index
    %c0_4 = arith.constant 0 : index
    %c0_5 = arith.constant 0 : index
    %3 = vector.load %arg16[%c0_3, %c0_4, %c0_5] : memref<10x10x32xf32, #tpu.memory_space<vmem>>, vector<10x10x32xf32>
    tpu.vector_store %arg16[%c0_3, %c0_4, %c0_5], %2 {strides = array<i32>} : memref<10x10x32xf32, #tpu.memory_space<vmem>>, vector<10x10x32xf32>,
    %c0_6 = arith.constant 0 : index
    %c0_7 = arith.constant 0 : index
    %c0_8 = arith.constant 0 : index
    %c0_9 = arith.constant 0 : index
    %4 = vector.load %arg1[%c0_6, %c0_7, %c0_8, %c0_9] : memref<1x16x16x32xf32, #tpu.memory_space<vmem>>, vector<1x16x16x32xf32>
    %5 = vector.shape_cast %4 : vector<1x16x16x32xf32> to vector<16x16x32xf32>
    %c1 = arith.constant 1 : index
    %c1_10 = arith.constant 1 : index
    %c0_11 = arith.constant 0 : index
    %6 = vector.load %arg15[%c1, %c1_10, %c0_11] : memref<18x18x32xf32, #tpu.memory_space<vmem>>, vector<16x16x32xf32>
    tpu.vector_store %arg15[%c1, %c1_10, %c0_11], %5 {strides = array<i32>} : memref<18x18x32xf32, #tpu.memory_space<vmem>>, vector<16x16x32xf32>,
    %c0_12 = arith.constant 0 : index
    %c0_13 = arith.constant 0 : index
    %7 = vector.load %arg2[%c0_12, %c0_13] : memref<288x32xbf16, #tpu.memory_space<vmem>>, vector<288x32xbf16>
    %c0_14 = arith.constant 0 : index
    %c0_15 = arith.constant 0 : index
    %8 = vector.load %arg3[%c0_14, %c0_15] : memref<1x32xf32, #tpu.memory_space<vmem>>, vector<1x32xf32>
    %9 = vector.shape_cast %8 : vector<1x32xf32> to vector<32xf32>
    %c0_16 = arith.constant 0 : index
    %c0_17 = arith.constant 0 : index
    %c0_18 = arith.constant 0 : index
    %10 = vector.load %arg15[%c0_16, %c0_17, %c0_18] : memref<18x18x32xf32, #tpu.memory_space<vmem>>, vector<16x16x32xf32>
    %11 = vector.shape_cast %10 : vector<16x16x32xf32> to vector<256x32xf32>
    %12 = arith.truncf %11 : vector<256x32xf32> to vector<256x32xbf16>
    %c0_19 = arith.constant 0 : index
    %c1_20 = arith.constant 1 : index
    %c0_21 = arith.constant 0 : index
    %13 = vector.load %arg15[%c0_19, %c1_20, %c0_21] : memref<18x18x32xf32, #tpu.memory_space<vmem>>, vector<16x16x32xf32>
    %14 = vector.shape_cast %13 : vector<16x16x32xf32> to vector<256x32xf32>
    %15 = arith.truncf %14 : vector<256x32xf32> to vector<256x32xbf16>
    %c0_22 = arith.constant 0 : index
    %c2 = arith.constant 2 : index
    %c0_23 = arith.constant 0 : index
    %16 = vector.load %arg15[%c0_22, %c2, %c0_23] : memref<18x18x32xf32, #tpu.memory_space<vmem>>, vector<16x16x32xf32>
    %17 = vector.shape_cast %16 : vector<16x16x32xf32> to vector<256x32xf32>
    %18 = arith.truncf %17 : vector<256x32xf32> to vector<256x32xbf16>
    %c1_24 = arith.constant 1 : index
    %c0_25 = arith.constant 0 : index
    %c0_26 = arith.constant 0 : index
    %19 = vector.load %arg15[%c1_24, %c0_25, %c0_26] : memref<18x18x32xf32, #tpu.memory_space<vmem>>, vector<16x16x32xf32>
    %20 = vector.shape_cast %19 : vector<16x16x32xf32> to vector<256x32xf32>
    %21 = arith.truncf %20 : vector<256x32xf32> to vector<256x32xbf16>
    %c1_27 = arith.constant 1 : index
    %c1_28 = arith.constant 1 : index
    %c0_29 = arith.constant 0 : index
    %22 = vector.load %arg15[%c1_27, %c1_28, %c0_29] : memref<18x18x32xf32, #tpu.memory_space<vmem>>, vector<16x16x32xf32>
    %23 = vector.shape_cast %22 : vector<16x16x32xf32> to vector<256x32xf32>
    %24 = arith.truncf %23 : vector<256x32xf32> to vector<256x32xbf16>
    %c1_30 = arith.constant 1 : index
    %c2_31 = arith.constant 2 : index
    %c0_32 = arith.constant 0 : index
    %25 = vector.load %arg15[%c1_30, %c2_31, %c0_32] : memref<18x18x32xf32, #tpu.memory_space<vmem>>, vector<16x16x32xf32>
    %26 = vector.shape_cast %25 : vector<16x16x32xf32> to vector<256x32xf32>
    %27 = arith.truncf %26 : vector<256x32xf32> to vector<256x32xbf16>
    %c2_33 = arith.constant 2 : index
    %c0_34 = arith.constant 0 : index
    %c0_35 = arith.constant 0 : index
    %28 = vector.load %arg15[%c2_33, %c0_34, %c0_35] : memref<18x18x32xf32, #tpu.memory_space<vmem>>, vector<16x16x32xf32>
    %29 = vector.shape_cast %28 : vector<16x16x32xf32> to vector<256x32xf32>
    %30 = arith.truncf %29 : vector<256x32xf32> to vector<256x32xbf16>
    %c2_36 = arith.constant 2 : index
    %c1_37 = arith.constant 1 : index
    %c0_38 = arith.constant 0 : index
    %31 = vector.load %arg15[%c2_36, %c1_37, %c0_38] : memref<18x18x32xf32, #tpu.memory_space<vmem>>, vector<16x16x32xf32>
    %32 = vector.shape_cast %31 : vector<16x16x32xf32> to vector<256x32xf32>
    %33 = arith.truncf %32 : vector<256x32xf32> to vector<256x32xbf16>
    %c2_39 = arith.constant 2 : index
    %c2_40 = arith.constant 2 : index
    %c0_41 = arith.constant 0 : index
    %34 = vector.load %arg15[%c2_39, %c2_40, %c0_41] : memref<18x18x32xf32, #tpu.memory_space<vmem>>, vector<16x16x32xf32>
    %35 = vector.shape_cast %34 : vector<16x16x32xf32> to vector<256x32xf32>
    %36 = arith.truncf %35 : vector<256x32xf32> to vector<256x32xbf16>
    %37 = tpu.concatenate %12, %15, %18, %21, %24, %27, %30, %33, %36 in 1 : vector<256x32xbf16>, vector<256x32xbf16>, vector<256x32xbf16>, vector<256x32xbf16>, vector<256x32xbf16>, vector<256x32xbf16>, vector<256x32xbf16>, vector<256x32xbf16>, vector<256x32xbf16> -> vector<256x288xbf16>
    %cst_42 = arith.constant dense<0.000000e+00> : vector<256x32xf32>
    %38 = tpu.matmul %37, %7, %cst_42 {dimension_numbers = #tpu.dot_dimension_numbers<[1], [0], [0], [1], [0, 0, 1, 1], [], []>} : vector<256x288xbf16>, vector<288x32xbf16>, vector<256x32xf32> -> vector<256x32xf32>
    %39 = vector.shape_cast %9 : vector<32xf32> to vector<1x32xf32>
    %40 = vector.broadcast %39 : vector<1x32xf32> to vector<256x32xf32>
    %41 = arith.addf %38, %40 : vector<256x32xf32>
    %cst_43 = arith.constant 0.000000e+00 : f32
    %42 = vector.broadcast %cst_43 : f32 to vector<256x32xf32>
    %43 = arith.maximumf %41, %42 : vector<256x32xf32>
    %44 = vector.shape_cast %43 : vector<256x32xf32> to vector<16x16x32xf32>
    %c1_44 = arith.constant 1 : index
    %c1_45 = arith.constant 1 : index
    %c0_46 = arith.constant 0 : index
    %45 = vector.load %arg15[%c1_44, %c1_45, %c0_46] : memref<18x18x32xf32, #tpu.memory_space<vmem>>, vector<16x16x32xf32>
    tpu.vector_store %arg15[%c1_44, %c1_45, %c0_46], %44 {strides = array<i32>} : memref<18x18x32xf32, #tpu.memory_space<vmem>>, vector<16x16x32xf32>,
    %c0_47 = arith.constant 0 : index
    %c0_48 = arith.constant 0 : index
    %c0_49 = arith.constant 0 : index
    %46 = vector.load %arg4[%c0_47, %c0_48, %c0_49] : memref<2x288x32xbf16, #tpu.memory_space<vmem>>, vector<1x288x32xbf16>
    %47 = vector.shape_cast %46 : vector<1x288x32xbf16> to vector<288x32xbf16>
    %c0_50 = arith.constant 0 : index
    %c0_51 = arith.constant 0 : index
    %48 = vector.load %arg5[%c0_50, %c0_51] : memref<2x32xf32, #tpu.memory_space<vmem>>, vector<1x32xf32>
    %49 = vector.shape_cast %48 : vector<1x32xf32> to vector<32xf32>
    %c0_52 = arith.constant 0 : index
    %c0_53 = arith.constant 0 : index
    %c0_54 = arith.constant 0 : index
    %50 = vector.load %arg15[%c0_52, %c0_53, %c0_54] : memref<18x18x32xf32, #tpu.memory_space<vmem>>, vector<16x16x32xf32>
    %51 = vector.shape_cast %50 : vector<16x16x32xf32> to vector<256x32xf32>
    %52 = arith.truncf %51 : vector<256x32xf32> to vector<256x32xbf16>
    %c0_55 = arith.constant 0 : index
    %c1_56 = arith.constant 1 : index
    %c0_57 = arith.constant 0 : index
    %53 = vector.load %arg15[%c0_55, %c1_56, %c0_57] : memref<18x18x32xf32, #tpu.memory_space<vmem>>, vector<16x16x32xf32>
    %54 = vector.shape_cast %53 : vector<16x16x32xf32> to vector<256x32xf32>
    %55 = arith.truncf %54 : vector<256x32xf32> to vector<256x32xbf16>
    %c0_58 = arith.constant 0 : index
    %c2_59 = arith.constant 2 : index
    %c0_60 = arith.constant 0 : index
    %56 = vector.load %arg15[%c0_58, %c2_59, %c0_60] : memref<18x18x32xf32, #tpu.memory_space<vmem>>, vector<16x16x32xf32>
    %57 = vector.shape_cast %56 : vector<16x16x32xf32> to vector<256x32xf32>
    %58 = arith.truncf %57 : vector<256x32xf32> to vector<256x32xbf16>
    %c1_61 = arith.constant 1 : index
    %c0_62 = arith.constant 0 : index
    %c0_63 = arith.constant 0 : index
    %59 = vector.load %arg15[%c1_61, %c0_62, %c0_63] : memref<18x18x32xf32, #tpu.memory_space<vmem>>, vector<16x16x32xf32>
    %60 = vector.shape_cast %59 : vector<16x16x32xf32> to vector<256x32xf32>
    %61 = arith.truncf %60 : vector<256x32xf32> to vector<256x32xbf16>
    %c1_64 = arith.constant 1 : index
    %c1_65 = arith.constant 1 : index
    %c0_66 = arith.constant 0 : index
    %62 = vector.load %arg15[%c1_64, %c1_65, %c0_66] : memref<18x18x32xf32, #tpu.memory_space<vmem>>, vector<16x16x32xf32>
    %63 = vector.shape_cast %62 : vector<16x16x32xf32> to vector<256x32xf32>
    %64 = arith.truncf %63 : vector<256x32xf32> to vector<256x32xbf16>
    %c1_67 = arith.constant 1 : index
    %c2_68 = arith.constant 2 : index
    %c0_69 = arith.constant 0 : index
    %65 = vector.load %arg15[%c1_67, %c2_68, %c0_69] : memref<18x18x32xf32, #tpu.memory_space<vmem>>, vector<16x16x32xf32>
    %66 = vector.shape_cast %65 : vector<16x16x32xf32> to vector<256x32xf32>
    %67 = arith.truncf %66 : vector<256x32xf32> to vector<256x32xbf16>
    %c2_70 = arith.constant 2 : index
    %c0_71 = arith.constant 0 : index
    %c0_72 = arith.constant 0 : index
    %68 = vector.load %arg15[%c2_70, %c0_71, %c0_72] : memref<18x18x32xf32, #tpu.memory_space<vmem>>, vector<16x16x32xf32>
    %69 = vector.shape_cast %68 : vector<16x16x32xf32> to vector<256x32xf32>
    %70 = arith.truncf %69 : vector<256x32xf32> to vector<256x32xbf16>
    %c2_73 = arith.constant 2 : index
    %c1_74 = arith.constant 1 : index
    %c0_75 = arith.constant 0 : index
    %71 = vector.load %arg15[%c2_73, %c1_74, %c0_75] : memref<18x18x32xf32, #tpu.memory_space<vmem>>, vector<16x16x32xf32>
    %72 = vector.shape_cast %71 : vector<16x16x32xf32> to vector<256x32xf32>
    %73 = arith.truncf %72 : vector<256x32xf32> to vector<256x32xbf16>
    %c2_76 = arith.constant 2 : index
    %c2_77 = arith.constant 2 : index
    %c0_78 = arith.constant 0 : index
    %74 = vector.load %arg15[%c2_76, %c2_77, %c0_78] : memref<18x18x32xf32, #tpu.memory_space<vmem>>, vector<16x16x32xf32>
    %75 = vector.shape_cast %74 : vector<16x16x32xf32> to vector<256x32xf32>
    %76 = arith.truncf %75 : vector<256x32xf32> to vector<256x32xbf16>
    %77 = tpu.concatenate %52, %55, %58, %61, %64, %67, %70, %73, %76 in 1 : vector<256x32xbf16>, vector<256x32xbf16>, vector<256x32xbf16>, vector<256x32xbf16>, vector<256x32xbf16>, vector<256x32xbf16>, vector<256x32xbf16>, vector<256x32xbf16>, vector<256x32xbf16> -> vector<256x288xbf16>
    %cst_79 = arith.constant dense<0.000000e+00> : vector<256x32xf32>
    %78 = tpu.matmul %77, %47, %cst_79 {dimension_numbers = #tpu.dot_dimension_numbers<[1], [0], [0], [1], [0, 0, 1, 1], [], []>} : vector<256x288xbf16>, vector<288x32xbf16>, vector<256x32xf32> -> vector<256x32xf32>
    %79 = vector.shape_cast %49 : vector<32xf32> to vector<1x32xf32>
    %80 = vector.broadcast %79 : vector<1x32xf32> to vector<256x32xf32>
    %81 = arith.addf %78, %80 : vector<256x32xf32>
    %cst_80 = arith.constant 0.000000e+00 : f32
    %82 = vector.broadcast %cst_80 : f32 to vector<256x32xf32>
    %83 = arith.maximumf %81, %82 : vector<256x32xf32>
    %84 = vector.shape_cast %83 : vector<256x32xf32> to vector<16x16x32xf32>
    %c1_81 = arith.constant 1 : index
    %c1_82 = arith.constant 1 : index
    %c0_83 = arith.constant 0 : index
    %85 = vector.load %arg15[%c1_81, %c1_82, %c0_83] : memref<18x18x32xf32, #tpu.memory_space<vmem>>, vector<16x16x32xf32>
    tpu.vector_store %arg15[%c1_81, %c1_82, %c0_83], %84 {strides = array<i32>} : memref<18x18x32xf32, #tpu.memory_space<vmem>>, vector<16x16x32xf32>,
    %c1_84 = arith.constant 1 : index
    %c0_85 = arith.constant 0 : index
    %c0_86 = arith.constant 0 : index
    %86 = vector.load %arg4[%c1_84, %c0_85, %c0_86] : memref<2x288x32xbf16, #tpu.memory_space<vmem>>, vector<1x288x32xbf16>
    %87 = vector.shape_cast %86 : vector<1x288x32xbf16> to vector<288x32xbf16>
    %c1_87 = arith.constant 1 : index
    %c0_88 = arith.constant 0 : index
    %88 = vector.load %arg5[%c1_87, %c0_88] : memref<2x32xf32, #tpu.memory_space<vmem>>, vector<1x32xf32>
    %89 = vector.shape_cast %88 : vector<1x32xf32> to vector<32xf32>
    %c0_89 = arith.constant 0 : index
    %c0_90 = arith.constant 0 : index
    %c0_91 = arith.constant 0 : index
    %90 = vector.load %arg15[%c0_89, %c0_90, %c0_91] : memref<18x18x32xf32, #tpu.memory_space<vmem>>, vector<16x16x32xf32>
    %91 = vector.shape_cast %90 : vector<16x16x32xf32> to vector<256x32xf32>
    %92 = arith.truncf %91 : vector<256x32xf32> to vector<256x32xbf16>
    %c0_92 = arith.constant 0 : index
    %c1_93 = arith.constant 1 : index
    %c0_94 = arith.constant 0 : index
    %93 = vector.load %arg15[%c0_92, %c1_93, %c0_94] : memref<18x18x32xf32, #tpu.memory_space<vmem>>, vector<16x16x32xf32>
    %94 = vector.shape_cast %93 : vector<16x16x32xf32> to vector<256x32xf32>
    %95 = arith.truncf %94 : vector<256x32xf32> to vector<256x32xbf16>
    %c0_95 = arith.constant 0 : index
    %c2_96 = arith.constant 2 : index
    %c0_97 = arith.constant 0 : index
    %96 = vector.load %arg15[%c0_95, %c2_96, %c0_97] : memref<18x18x32xf32, #tpu.memory_space<vmem>>, vector<16x16x32xf32>
    %97 = vector.shape_cast %96 : vector<16x16x32xf32> to vector<256x32xf32>
    %98 = arith.truncf %97 : vector<256x32xf32> to vector<256x32xbf16>
    %c1_98 = arith.constant 1 : index
    %c0_99 = arith.constant 0 : index
    %c0_100 = arith.constant 0 : index
    %99 = vector.load %arg15[%c1_98, %c0_99, %c0_100] : memref<18x18x32xf32, #tpu.memory_space<vmem>>, vector<16x16x32xf32>
    %100 = vector.shape_cast %99 : vector<16x16x32xf32> to vector<256x32xf32>
    %101 = arith.truncf %100 : vector<256x32xf32> to vector<256x32xbf16>
    %c1_101 = arith.constant 1 : index
    %c1_102 = arith.constant 1 : index
    %c0_103 = arith.constant 0 : index
    %102 = vector.load %arg15[%c1_101, %c1_102, %c0_103] : memref<18x18x32xf32, #tpu.memory_space<vmem>>, vector<16x16x32xf32>
    %103 = vector.shape_cast %102 : vector<16x16x32xf32> to vector<256x32xf32>
    %104 = arith.truncf %103 : vector<256x32xf32> to vector<256x32xbf16>
    %c1_104 = arith.constant 1 : index
    %c2_105 = arith.constant 2 : index
    %c0_106 = arith.constant 0 : index
    %105 = vector.load %arg15[%c1_104, %c2_105, %c0_106] : memref<18x18x32xf32, #tpu.memory_space<vmem>>, vector<16x16x32xf32>
    %106 = vector.shape_cast %105 : vector<16x16x32xf32> to vector<256x32xf32>
    %107 = arith.truncf %106 : vector<256x32xf32> to vector<256x32xbf16>
    %c2_107 = arith.constant 2 : index
    %c0_108 = arith.constant 0 : index
    %c0_109 = arith.constant 0 : index
    %108 = vector.load %arg15[%c2_107, %c0_108, %c0_109] : memref<18x18x32xf32, #tpu.memory_space<vmem>>, vector<16x16x32xf32>
    %109 = vector.shape_cast %108 : vector<16x16x32xf32> to vector<256x32xf32>
    %110 = arith.truncf %109 : vector<256x32xf32> to vector<256x32xbf16>
    %c2_110 = arith.constant 2 : index
    %c1_111 = arith.constant 1 : index
    %c0_112 = arith.constant 0 : index
    %111 = vector.load %arg15[%c2_110, %c1_111, %c0_112] : memref<18x18x32xf32, #tpu.memory_space<vmem>>, vector<16x16x32xf32>
    %112 = vector.shape_cast %111 : vector<16x16x32xf32> to vector<256x32xf32>
    %113 = arith.truncf %112 : vector<256x32xf32> to vector<256x32xbf16>
    %c2_113 = arith.constant 2 : index
    %c2_114 = arith.constant 2 : index
    %c0_115 = arith.constant 0 : index
    %114 = vector.load %arg15[%c2_113, %c2_114, %c0_115] : memref<18x18x32xf32, #tpu.memory_space<vmem>>, vector<16x16x32xf32>
    %115 = vector.shape_cast %114 : vector<16x16x32xf32> to vector<256x32xf32>
    %116 = arith.truncf %115 : vector<256x32xf32> to vector<256x32xbf16>
    %117 = tpu.concatenate %92, %95, %98, %101, %104, %107, %110, %113, %116 in 1 : vector<256x32xbf16>, vector<256x32xbf16>, vector<256x32xbf16>, vector<256x32xbf16>, vector<256x32xbf16>, vector<256x32xbf16>, vector<256x32xbf16>, vector<256x32xbf16>, vector<256x32xbf16> -> vector<256x288xbf16>
    %cst_116 = arith.constant dense<0.000000e+00> : vector<256x32xf32>
    %118 = tpu.matmul %117, %87, %cst_116 {dimension_numbers = #tpu.dot_dimension_numbers<[1], [0], [0], [1], [0, 0, 1, 1], [], []>} : vector<256x288xbf16>, vector<288x32xbf16>, vector<256x32xf32> -> vector<256x32xf32>
    %119 = vector.shape_cast %89 : vector<32xf32> to vector<1x32xf32>
    %120 = vector.broadcast %119 : vector<1x32xf32> to vector<256x32xf32>
    %121 = arith.addf %118, %120 : vector<256x32xf32>
    %cst_117 = arith.constant 0.000000e+00 : f32
    %122 = vector.broadcast %cst_117 : f32 to vector<256x32xf32>
    %123 = arith.maximumf %121, %122 : vector<256x32xf32>
    %124 = vector.shape_cast %123 : vector<256x32xf32> to vector<16x16x32xf32>
    %c1_118 = arith.constant 1 : index
    %c1_119 = arith.constant 1 : index
    %c0_120 = arith.constant 0 : index
    %125 = vector.load %arg15[%c1_118, %c1_119, %c0_120] : memref<18x18x32xf32, #tpu.memory_space<vmem>>, vector<16x16x32xf32>
    tpu.vector_store %arg15[%c1_118, %c1_119, %c0_120], %124 {strides = array<i32>} : memref<18x18x32xf32, #tpu.memory_space<vmem>>, vector<16x16x32xf32>,
    %c0_121 = arith.constant 0 : index
    %c0_122 = arith.constant 0 : index
    %126 = vector.load %arg6[%c0_121, %c0_122] : memref<288x32xbf16, #tpu.memory_space<vmem>>, vector<288x32xbf16>
    %c0_123 = arith.constant 0 : index
    %c0_124 = arith.constant 0 : index
    %127 = vector.load %arg7[%c0_123, %c0_124] : memref<1x32xf32, #tpu.memory_space<vmem>>, vector<1x32xf32>
    %128 = vector.shape_cast %127 : vector<1x32xf32> to vector<32xf32>
    %c0_125 = arith.constant 0 : index
    %c0_126 = arith.constant 0 : index
    %c0_127 = arith.constant 0 : index
    %129 = tpu.strided_load %arg15[%c0_125, %c0_126, %c0_127] {strides = array<i32: 1, 2, 1>} : memref<18x18x32xf32, #tpu.memory_space<vmem>>, vector<16x8x32xf32>
    %130 = vector.shape_cast %129 : vector<16x8x32xf32> to vector<8x2x8x32xf32>
    %131 = vector.extract_strided_slice %130 {offsets = [0, 0, 0, 0], sizes = [8, 1, 8, 32], strides = [1, 1, 1, 1]} : vector<8x2x8x32xf32> to vector<8x1x8x32xf32>
    %132 = vector.shape_cast %131 : vector<8x1x8x32xf32> to vector<8x8x32xf32>
    %133 = vector.shape_cast %132 : vector<8x8x32xf32> to vector<64x32xf32>
    %134 = arith.truncf %133 : vector<64x32xf32> to vector<64x32xbf16>
    %c0_128 = arith.constant 0 : index
    %c1_129 = arith.constant 1 : index
    %c0_130 = arith.constant 0 : index
    %135 = tpu.strided_load %arg15[%c0_128, %c1_129, %c0_130] {strides = array<i32: 1, 2, 1>} : memref<18x18x32xf32, #tpu.memory_space<vmem>>, vector<16x8x32xf32>
    %136 = vector.shape_cast %135 : vector<16x8x32xf32> to vector<8x2x8x32xf32>
    %137 = vector.extract_strided_slice %136 {offsets = [0, 0, 0, 0], sizes = [8, 1, 8, 32], strides = [1, 1, 1, 1]} : vector<8x2x8x32xf32> to vector<8x1x8x32xf32>
    %138 = vector.shape_cast %137 : vector<8x1x8x32xf32> to vector<8x8x32xf32>
    %139 = vector.shape_cast %138 : vector<8x8x32xf32> to vector<64x32xf32>
    %140 = arith.truncf %139 : vector<64x32xf32> to vector<64x32xbf16>
    %c0_131 = arith.constant 0 : index
    %c2_132 = arith.constant 2 : index
    %c0_133 = arith.constant 0 : index
    %141 = tpu.strided_load %arg15[%c0_131, %c2_132, %c0_133] {strides = array<i32: 1, 2, 1>} : memref<18x18x32xf32, #tpu.memory_space<vmem>>, vector<16x8x32xf32>
    %142 = vector.shape_cast %141 : vector<16x8x32xf32> to vector<8x2x8x32xf32>
    %143 = vector.extract_strided_slice %142 {offsets = [0, 0, 0, 0], sizes = [8, 1, 8, 32], strides = [1, 1, 1, 1]} : vector<8x2x8x32xf32> to vector<8x1x8x32xf32>
    %144 = vector.shape_cast %143 : vector<8x1x8x32xf32> to vector<8x8x32xf32>
    %145 = vector.shape_cast %144 : vector<8x8x32xf32> to vector<64x32xf32>
    %146 = arith.truncf %145 : vector<64x32xf32> to vector<64x32xbf16>
    %c1_134 = arith.constant 1 : index
    %c0_135 = arith.constant 0 : index
    %c0_136 = arith.constant 0 : index
    %147 = tpu.strided_load %arg15[%c1_134, %c0_135, %c0_136] {strides = array<i32: 1, 2, 1>} : memref<18x18x32xf32, #tpu.memory_space<vmem>>, vector<16x8x32xf32>
    %148 = vector.shape_cast %147 : vector<16x8x32xf32> to vector<8x2x8x32xf32>
    %149 = vector.extract_strided_slice %148 {offsets = [0, 0, 0, 0], sizes = [8, 1, 8, 32], strides = [1, 1, 1, 1]} : vector<8x2x8x32xf32> to vector<8x1x8x32xf32>
    %150 = vector.shape_cast %149 : vector<8x1x8x32xf32> to vector<8x8x32xf32>
    %151 = vector.shape_cast %150 : vector<8x8x32xf32> to vector<64x32xf32>
    %152 = arith.truncf %151 : vector<64x32xf32> to vector<64x32xbf16>
    %c1_137 = arith.constant 1 : index
    %c1_138 = arith.constant 1 : index
    %c0_139 = arith.constant 0 : index
    %153 = tpu.strided_load %arg15[%c1_137, %c1_138, %c0_139] {strides = array<i32: 1, 2, 1>} : memref<18x18x32xf32, #tpu.memory_space<vmem>>, vector<16x8x32xf32>
    %154 = vector.shape_cast %153 : vector<16x8x32xf32> to vector<8x2x8x32xf32>
    %155 = vector.extract_strided_slice %154 {offsets = [0, 0, 0, 0], sizes = [8, 1, 8, 32], strides = [1, 1, 1, 1]} : vector<8x2x8x32xf32> to vector<8x1x8x32xf32>
    %156 = vector.shape_cast %155 : vector<8x1x8x32xf32> to vector<8x8x32xf32>
    %157 = vector.shape_cast %156 : vector<8x8x32xf32> to vector<64x32xf32>
    %158 = arith.truncf %157 : vector<64x32xf32> to vector<64x32xbf16>
    %c1_140 = arith.constant 1 : index
    %c2_141 = arith.constant 2 : index
    %c0_142 = arith.constant 0 : index
    %159 = tpu.strided_load %arg15[%c1_140, %c2_141, %c0_142] {strides = array<i32: 1, 2, 1>} : memref<18x18x32xf32, #tpu.memory_space<vmem>>, vector<16x8x32xf32>
    %160 = vector.shape_cast %159 : vector<16x8x32xf32> to vector<8x2x8x32xf32>
    %161 = vector.extract_strided_slice %160 {offsets = [0, 0, 0, 0], sizes = [8, 1, 8, 32], strides = [1, 1, 1, 1]} : vector<8x2x8x32xf32> to vector<8x1x8x32xf32>
    %162 = vector.shape_cast %161 : vector<8x1x8x32xf32> to vector<8x8x32xf32>
    %163 = vector.shape_cast %162 : vector<8x8x32xf32> to vector<64x32xf32>
    %164 = arith.truncf %163 : vector<64x32xf32> to vector<64x32xbf16>
    %c2_143 = arith.constant 2 : index
    %c0_144 = arith.constant 0 : index
    %c0_145 = arith.constant 0 : index
    %165 = tpu.strided_load %arg15[%c2_143, %c0_144, %c0_145] {strides = array<i32: 1, 2, 1>} : memref<18x18x32xf32, #tpu.memory_space<vmem>>, vector<16x8x32xf32>
    %166 = vector.shape_cast %165 : vector<16x8x32xf32> to vector<8x2x8x32xf32>
    %167 = vector.extract_strided_slice %166 {offsets = [0, 0, 0, 0], sizes = [8, 1, 8, 32], strides = [1, 1, 1, 1]} : vector<8x2x8x32xf32> to vector<8x1x8x32xf32>
    %168 = vector.shape_cast %167 : vector<8x1x8x32xf32> to vector<8x8x32xf32>
    %169 = vector.shape_cast %168 : vector<8x8x32xf32> to vector<64x32xf32>
    %170 = arith.truncf %169 : vector<64x32xf32> to vector<64x32xbf16>
    %c2_146 = arith.constant 2 : index
    %c1_147 = arith.constant 1 : index
    %c0_148 = arith.constant 0 : index
    %171 = tpu.strided_load %arg15[%c2_146, %c1_147, %c0_148] {strides = array<i32: 1, 2, 1>} : memref<18x18x32xf32, #tpu.memory_space<vmem>>, vector<16x8x32xf32>
    %172 = vector.shape_cast %171 : vector<16x8x32xf32> to vector<8x2x8x32xf32>
    %173 = vector.extract_strided_slice %172 {offsets = [0, 0, 0, 0], sizes = [8, 1, 8, 32], strides = [1, 1, 1, 1]} : vector<8x2x8x32xf32> to vector<8x1x8x32xf32>
    %174 = vector.shape_cast %173 : vector<8x1x8x32xf32> to vector<8x8x32xf32>
    %175 = vector.shape_cast %174 : vector<8x8x32xf32> to vector<64x32xf32>
    %176 = arith.truncf %175 : vector<64x32xf32> to vector<64x32xbf16>
    %c2_149 = arith.constant 2 : index
    %c2_150 = arith.constant 2 : index
    %c0_151 = arith.constant 0 : index
    %177 = tpu.strided_load %arg15[%c2_149, %c2_150, %c0_151] {strides = array<i32: 1, 2, 1>} : memref<18x18x32xf32, #tpu.memory_space<vmem>>, vector<16x8x32xf32>
    %178 = vector.shape_cast %177 : vector<16x8x32xf32> to vector<8x2x8x32xf32>
    %179 = vector.extract_strided_slice %178 {offsets = [0, 0, 0, 0], sizes = [8, 1, 8, 32], strides = [1, 1, 1, 1]} : vector<8x2x8x32xf32> to vector<8x1x8x32xf32>
    %180 = vector.shape_cast %179 : vector<8x1x8x32xf32> to vector<8x8x32xf32>
    %181 = vector.shape_cast %180 : vector<8x8x32xf32> to vector<64x32xf32>
    %182 = arith.truncf %181 : vector<64x32xf32> to vector<64x32xbf16>
    %183 = tpu.concatenate %134, %140, %146, %152, %158, %164, %170, %176, %182 in 1 : vector<64x32xbf16>, vector<64x32xbf16>, vector<64x32xbf16>, vector<64x32xbf16>, vector<64x32xbf16>, vector<64x32xbf16>, vector<64x32xbf16>, vector<64x32xbf16>, vector<64x32xbf16> -> vector<64x288xbf16>
    %cst_152 = arith.constant dense<0.000000e+00> : vector<64x32xf32>
    %184 = tpu.matmul %183, %126, %cst_152 {dimension_numbers = #tpu.dot_dimension_numbers<[1], [0], [0], [1], [0, 0, 1, 1], [], []>} : vector<64x288xbf16>, vector<288x32xbf16>, vector<64x32xf32> -> vector<64x32xf32>
    %185 = vector.shape_cast %128 : vector<32xf32> to vector<1x32xf32>
    %186 = vector.broadcast %185 : vector<1x32xf32> to vector<64x32xf32>
    %187 = arith.addf %184, %186 : vector<64x32xf32>
    %cst_153 = arith.constant 0.000000e+00 : f32
    %188 = vector.broadcast %cst_153 : f32 to vector<64x32xf32>
    %189 = arith.maximumf %187, %188 : vector<64x32xf32>
    %190 = vector.shape_cast %189 : vector<64x32xf32> to vector<8x8x32xf32>
    %c1_154 = arith.constant 1 : index
    %c1_155 = arith.constant 1 : index
    %c0_156 = arith.constant 0 : index
    %191 = vector.load %arg16[%c1_154, %c1_155, %c0_156] : memref<10x10x32xf32, #tpu.memory_space<vmem>>, vector<8x8x32xf32>
    tpu.vector_store %arg16[%c1_154, %c1_155, %c0_156], %190 {strides = array<i32>} : memref<10x10x32xf32, #tpu.memory_space<vmem>>, vector<8x8x32xf32>,
    %c0_157 = arith.constant 0 : index
    %c0_158 = arith.constant 0 : index
    %c0_159 = arith.constant 0 : index
    %192 = vector.load %arg8[%c0_157, %c0_158, %c0_159] : memref<2x288x32xbf16, #tpu.memory_space<vmem>>, vector<1x288x32xbf16>
    %193 = vector.shape_cast %192 : vector<1x288x32xbf16> to vector<288x32xbf16>
    %c0_160 = arith.constant 0 : index
    %c0_161 = arith.constant 0 : index
    %194 = vector.load %arg9[%c0_160, %c0_161] : memref<2x32xf32, #tpu.memory_space<vmem>>, vector<1x32xf32>
    %195 = vector.shape_cast %194 : vector<1x32xf32> to vector<32xf32>
    %c0_162 = arith.constant 0 : index
    %c0_163 = arith.constant 0 : index
    %c0_164 = arith.constant 0 : index
    %196 = vector.load %arg16[%c0_162, %c0_163, %c0_164] : memref<10x10x32xf32, #tpu.memory_space<vmem>>, vector<8x8x32xf32>
    %197 = vector.shape_cast %196 : vector<8x8x32xf32> to vector<64x32xf32>
    %198 = arith.truncf %197 : vector<64x32xf32> to vector<64x32xbf16>
    %c0_165 = arith.constant 0 : index
    %c1_166 = arith.constant 1 : index
    %c0_167 = arith.constant 0 : index
    %199 = vector.load %arg16[%c0_165, %c1_166, %c0_167] : memref<10x10x32xf32, #tpu.memory_space<vmem>>, vector<8x8x32xf32>
    %200 = vector.shape_cast %199 : vector<8x8x32xf32> to vector<64x32xf32>
    %201 = arith.truncf %200 : vector<64x32xf32> to vector<64x32xbf16>
    %c0_168 = arith.constant 0 : index
    %c2_169 = arith.constant 2 : index
    %c0_170 = arith.constant 0 : index
    %202 = vector.load %arg16[%c0_168, %c2_169, %c0_170] : memref<10x10x32xf32, #tpu.memory_space<vmem>>, vector<8x8x32xf32>
    %203 = vector.shape_cast %202 : vector<8x8x32xf32> to vector<64x32xf32>
    %204 = arith.truncf %203 : vector<64x32xf32> to vector<64x32xbf16>
    %c1_171 = arith.constant 1 : index
    %c0_172 = arith.constant 0 : index
    %c0_173 = arith.constant 0 : index
    %205 = vector.load %arg16[%c1_171, %c0_172, %c0_173] : memref<10x10x32xf32, #tpu.memory_space<vmem>>, vector<8x8x32xf32>
    %206 = vector.shape_cast %205 : vector<8x8x32xf32> to vector<64x32xf32>
    %207 = arith.truncf %206 : vector<64x32xf32> to vector<64x32xbf16>
    %c1_174 = arith.constant 1 : index
    %c1_175 = arith.constant 1 : index
    %c0_176 = arith.constant 0 : index
    %208 = vector.load %arg16[%c1_174, %c1_175, %c0_176] : memref<10x10x32xf32, #tpu.memory_space<vmem>>, vector<8x8x32xf32>
    %209 = vector.shape_cast %208 : vector<8x8x32xf32> to vector<64x32xf32>
    %210 = arith.truncf %209 : vector<64x32xf32> to vector<64x32xbf16>
    %c1_177 = arith.constant 1 : index
    %c2_178 = arith.constant 2 : index
    %c0_179 = arith.constant 0 : index
    %211 = vector.load %arg16[%c1_177, %c2_178, %c0_179] : memref<10x10x32xf32, #tpu.memory_space<vmem>>, vector<8x8x32xf32>
    %212 = vector.shape_cast %211 : vector<8x8x32xf32> to vector<64x32xf32>
    %213 = arith.truncf %212 : vector<64x32xf32> to vector<64x32xbf16>
    %c2_180 = arith.constant 2 : index
    %c0_181 = arith.constant 0 : index
    %c0_182 = arith.constant 0 : index
    %214 = vector.load %arg16[%c2_180, %c0_181, %c0_182] : memref<10x10x32xf32, #tpu.memory_space<vmem>>, vector<8x8x32xf32>
    %215 = vector.shape_cast %214 : vector<8x8x32xf32> to vector<64x32xf32>
    %216 = arith.truncf %215 : vector<64x32xf32> to vector<64x32xbf16>
    %c2_183 = arith.constant 2 : index
    %c1_184 = arith.constant 1 : index
    %c0_185 = arith.constant 0 : index
    %217 = vector.load %arg16[%c2_183, %c1_184, %c0_185] : memref<10x10x32xf32, #tpu.memory_space<vmem>>, vector<8x8x32xf32>
    %218 = vector.shape_cast %217 : vector<8x8x32xf32> to vector<64x32xf32>
    %219 = arith.truncf %218 : vector<64x32xf32> to vector<64x32xbf16>
    %c2_186 = arith.constant 2 : index
    %c2_187 = arith.constant 2 : index
    %c0_188 = arith.constant 0 : index
    %220 = vector.load %arg16[%c2_186, %c2_187, %c0_188] : memref<10x10x32xf32, #tpu.memory_space<vmem>>, vector<8x8x32xf32>
    %221 = vector.shape_cast %220 : vector<8x8x32xf32> to vector<64x32xf32>
    %222 = arith.truncf %221 : vector<64x32xf32> to vector<64x32xbf16>
    %223 = tpu.concatenate %198, %201, %204, %207, %210, %213, %216, %219, %222 in 1 : vector<64x32xbf16>, vector<64x32xbf16>, vector<64x32xbf16>, vector<64x32xbf16>, vector<64x32xbf16>, vector<64x32xbf16>, vector<64x32xbf16>, vector<64x32xbf16>, vector<64x32xbf16> -> vector<64x288xbf16>
    %cst_189 = arith.constant dense<0.000000e+00> : vector<64x32xf32>
    %224 = tpu.matmul %223, %193, %cst_189 {dimension_numbers = #tpu.dot_dimension_numbers<[1], [0], [0], [1], [0, 0, 1, 1], [], []>} : vector<64x288xbf16>, vector<288x32xbf16>, vector<64x32xf32> -> vector<64x32xf32>
    %225 = vector.shape_cast %195 : vector<32xf32> to vector<1x32xf32>
    %226 = vector.broadcast %225 : vector<1x32xf32> to vector<64x32xf32>
    %227 = arith.addf %224, %226 : vector<64x32xf32>
    %cst_190 = arith.constant 0.000000e+00 : f32
    %228 = vector.broadcast %cst_190 : f32 to vector<64x32xf32>
    %229 = arith.maximumf %227, %228 : vector<64x32xf32>
    %230 = vector.shape_cast %229 : vector<64x32xf32> to vector<8x8x32xf32>
    %c1_191 = arith.constant 1 : index
    %c1_192 = arith.constant 1 : index
    %c0_193 = arith.constant 0 : index
    %231 = vector.load %arg16[%c1_191, %c1_192, %c0_193] : memref<10x10x32xf32, #tpu.memory_space<vmem>>, vector<8x8x32xf32>
    tpu.vector_store %arg16[%c1_191, %c1_192, %c0_193], %230 {strides = array<i32>} : memref<10x10x32xf32, #tpu.memory_space<vmem>>, vector<8x8x32xf32>,
    %c1_194 = arith.constant 1 : index
    %c0_195 = arith.constant 0 : index
    %c0_196 = arith.constant 0 : index
    %232 = vector.load %arg8[%c1_194, %c0_195, %c0_196] : memref<2x288x32xbf16, #tpu.memory_space<vmem>>, vector<1x288x32xbf16>
    %233 = vector.shape_cast %232 : vector<1x288x32xbf16> to vector<288x32xbf16>
    %c1_197 = arith.constant 1 : index
    %c0_198 = arith.constant 0 : index
    %234 = vector.load %arg9[%c1_197, %c0_198] : memref<2x32xf32, #tpu.memory_space<vmem>>, vector<1x32xf32>
    %235 = vector.shape_cast %234 : vector<1x32xf32> to vector<32xf32>
    %c0_199 = arith.constant 0 : index
    %c0_200 = arith.constant 0 : index
    %c0_201 = arith.constant 0 : index
    %236 = vector.load %arg16[%c0_199, %c0_200, %c0_201] : memref<10x10x32xf32, #tpu.memory_space<vmem>>, vector<8x8x32xf32>
    %237 = vector.shape_cast %236 : vector<8x8x32xf32> to vector<64x32xf32>
    %238 = arith.truncf %237 : vector<64x32xf32> to vector<64x32xbf16>
    %c0_202 = arith.constant 0 : index
    %c1_203 = arith.constant 1 : index
    %c0_204 = arith.constant 0 : index
    %239 = vector.load %arg16[%c0_202, %c1_203, %c0_204] : memref<10x10x32xf32, #tpu.memory_space<vmem>>, vector<8x8x32xf32>
    %240 = vector.shape_cast %239 : vector<8x8x32xf32> to vector<64x32xf32>
    %241 = arith.truncf %240 : vector<64x32xf32> to vector<64x32xbf16>
    %c0_205 = arith.constant 0 : index
    %c2_206 = arith.constant 2 : index
    %c0_207 = arith.constant 0 : index
    %242 = vector.load %arg16[%c0_205, %c2_206, %c0_207] : memref<10x10x32xf32, #tpu.memory_space<vmem>>, vector<8x8x32xf32>
    %243 = vector.shape_cast %242 : vector<8x8x32xf32> to vector<64x32xf32>
    %244 = arith.truncf %243 : vector<64x32xf32> to vector<64x32xbf16>
    %c1_208 = arith.constant 1 : index
    %c0_209 = arith.constant 0 : index
    %c0_210 = arith.constant 0 : index
    %245 = vector.load %arg16[%c1_208, %c0_209, %c0_210] : memref<10x10x32xf32, #tpu.memory_space<vmem>>, vector<8x8x32xf32>
    %246 = vector.shape_cast %245 : vector<8x8x32xf32> to vector<64x32xf32>
    %247 = arith.truncf %246 : vector<64x32xf32> to vector<64x32xbf16>
    %c1_211 = arith.constant 1 : index
    %c1_212 = arith.constant 1 : index
    %c0_213 = arith.constant 0 : index
    %248 = vector.load %arg16[%c1_211, %c1_212, %c0_213] : memref<10x10x32xf32, #tpu.memory_space<vmem>>, vector<8x8x32xf32>
    %249 = vector.shape_cast %248 : vector<8x8x32xf32> to vector<64x32xf32>
    %250 = arith.truncf %249 : vector<64x32xf32> to vector<64x32xbf16>
    %c1_214 = arith.constant 1 : index
    %c2_215 = arith.constant 2 : index
    %c0_216 = arith.constant 0 : index
    %251 = vector.load %arg16[%c1_214, %c2_215, %c0_216] : memref<10x10x32xf32, #tpu.memory_space<vmem>>, vector<8x8x32xf32>
    %252 = vector.shape_cast %251 : vector<8x8x32xf32> to vector<64x32xf32>
    %253 = arith.truncf %252 : vector<64x32xf32> to vector<64x32xbf16>
    %c2_217 = arith.constant 2 : index
    %c0_218 = arith.constant 0 : index
    %c0_219 = arith.constant 0 : index
    %254 = vector.load %arg16[%c2_217, %c0_218, %c0_219] : memref<10x10x32xf32, #tpu.memory_space<vmem>>, vector<8x8x32xf32>
    %255 = vector.shape_cast %254 : vector<8x8x32xf32> to vector<64x32xf32>
    %256 = arith.truncf %255 : vector<64x32xf32> to vector<64x32xbf16>
    %c2_220 = arith.constant 2 : index
    %c1_221 = arith.constant 1 : index
    %c0_222 = arith.constant 0 : index
    %257 = vector.load %arg16[%c2_220, %c1_221, %c0_222] : memref<10x10x32xf32, #tpu.memory_space<vmem>>, vector<8x8x32xf32>
    %258 = vector.shape_cast %257 : vector<8x8x32xf32> to vector<64x32xf32>
    %259 = arith.truncf %258 : vector<64x32xf32> to vector<64x32xbf16>
    %c2_223 = arith.constant 2 : index
    %c2_224 = arith.constant 2 : index
    %c0_225 = arith.constant 0 : index
    %260 = vector.load %arg16[%c2_223, %c2_224, %c0_225] : memref<10x10x32xf32, #tpu.memory_space<vmem>>, vector<8x8x32xf32>
    %261 = vector.shape_cast %260 : vector<8x8x32xf32> to vector<64x32xf32>
    %262 = arith.truncf %261 : vector<64x32xf32> to vector<64x32xbf16>
    %263 = tpu.concatenate %238, %241, %244, %247, %250, %253, %256, %259, %262 in 1 : vector<64x32xbf16>, vector<64x32xbf16>, vector<64x32xbf16>, vector<64x32xbf16>, vector<64x32xbf16>, vector<64x32xbf16>, vector<64x32xbf16>, vector<64x32xbf16>, vector<64x32xbf16> -> vector<64x288xbf16>
    %cst_226 = arith.constant dense<0.000000e+00> : vector<64x32xf32>
    %264 = tpu.matmul %263, %233, %cst_226 {dimension_numbers = #tpu.dot_dimension_numbers<[1], [0], [0], [1], [0, 0, 1, 1], [], []>} : vector<64x288xbf16>, vector<288x32xbf16>, vector<64x32xf32> -> vector<64x32xf32>
    %265 = vector.shape_cast %235 : vector<32xf32> to vector<1x32xf32>
    %266 = vector.broadcast %265 : vector<1x32xf32> to vector<64x32xf32>
    %267 = arith.addf %264, %266 : vector<64x32xf32>
    %cst_227 = arith.constant 0.000000e+00 : f32
    %268 = vector.broadcast %cst_227 : f32 to vector<64x32xf32>
    %269 = arith.maximumf %267, %268 : vector<64x32xf32>
    %270 = vector.shape_cast %269 : vector<64x32xf32> to vector<8x8x32xf32>
    %c1_228 = arith.constant 1 : index
    %c1_229 = arith.constant 1 : index
    %c0_230 = arith.constant 0 : index
    %271 = vector.load %arg16[%c1_228, %c1_229, %c0_230] : memref<10x10x32xf32, #tpu.memory_space<vmem>>, vector<8x8x32xf32>
    tpu.vector_store %arg16[%c1_228, %c1_229, %c0_230], %270 {strides = array<i32>} : memref<10x10x32xf32, #tpu.memory_space<vmem>>, vector<8x8x32xf32>,
    %c0_231 = arith.constant 0 : index
    %c0_232 = arith.constant 0 : index
    %272 = vector.load %arg10[%c0_231, %c0_232] : memref<288x32xbf16, #tpu.memory_space<vmem>>, vector<288x32xbf16>
    %c0_233 = arith.constant 0 : index
    %c0_234 = arith.constant 0 : index
    %273 = vector.load %arg12[%c0_233, %c0_234] : memref<4x32xbf16, #tpu.memory_space<vmem>>, vector<4x32xbf16>
    %c0_235 = arith.constant 0 : index
    %c0_236 = arith.constant 0 : index
    %c0_237 = arith.constant 0 : index
    %274 = vector.load %arg16[%c0_235, %c0_236, %c0_237] : memref<10x10x32xf32, #tpu.memory_space<vmem>>, vector<8x8x32xf32>
    %275 = vector.shape_cast %274 : vector<8x8x32xf32> to vector<64x32xf32>
    %276 = arith.truncf %275 : vector<64x32xf32> to vector<64x32xbf16>
    %c0_238 = arith.constant 0 : index
    %c1_239 = arith.constant 1 : index
    %c0_240 = arith.constant 0 : index
    %277 = vector.load %arg16[%c0_238, %c1_239, %c0_240] : memref<10x10x32xf32, #tpu.memory_space<vmem>>, vector<8x8x32xf32>
    %278 = vector.shape_cast %277 : vector<8x8x32xf32> to vector<64x32xf32>
    %279 = arith.truncf %278 : vector<64x32xf32> to vector<64x32xbf16>
    %c0_241 = arith.constant 0 : index
    %c1_242 = arith.constant 1 : index
    %c0_243 = arith.constant 0 : index
    %280 = vector.load %arg16[%c0_241, %c1_242, %c0_243] : memref<10x10x32xf32, #tpu.memory_space<vmem>>, vector<8x8x32xf32>
    %281 = vector.shape_cast %280 : vector<8x8x32xf32> to vector<64x32xf32>
    %282 = arith.truncf %281 : vector<64x32xf32> to vector<64x32xbf16>
    %c1_244 = arith.constant 1 : index
    %c0_245 = arith.constant 0 : index
    %c0_246 = arith.constant 0 : index
    %283 = vector.load %arg16[%c1_244, %c0_245, %c0_246] : memref<10x10x32xf32, #tpu.memory_space<vmem>>, vector<8x8x32xf32>
    %284 = vector.shape_cast %283 : vector<8x8x32xf32> to vector<64x32xf32>
    %285 = arith.truncf %284 : vector<64x32xf32> to vector<64x32xbf16>
    %c1_247 = arith.constant 1 : index
    %c1_248 = arith.constant 1 : index
    %c0_249 = arith.constant 0 : index
    %286 = vector.load %arg16[%c1_247, %c1_248, %c0_249] : memref<10x10x32xf32, #tpu.memory_space<vmem>>, vector<8x8x32xf32>
    %287 = vector.shape_cast %286 : vector<8x8x32xf32> to vector<64x32xf32>
    %288 = arith.truncf %287 : vector<64x32xf32> to vector<64x32xbf16>
    %c1_250 = arith.constant 1 : index
    %c1_251 = arith.constant 1 : index
    %c0_252 = arith.constant 0 : index
    %289 = vector.load %arg16[%c1_250, %c1_251, %c0_252] : memref<10x10x32xf32, #tpu.memory_space<vmem>>, vector<8x8x32xf32>
    %290 = vector.shape_cast %289 : vector<8x8x32xf32> to vector<64x32xf32>
    %291 = arith.truncf %290 : vector<64x32xf32> to vector<64x32xbf16>
    %c1_253 = arith.constant 1 : index
    %c0_254 = arith.constant 0 : index
    %c0_255 = arith.constant 0 : index
    %292 = vector.load %arg16[%c1_253, %c0_254, %c0_255] : memref<10x10x32xf32, #tpu.memory_space<vmem>>, vector<8x8x32xf32>
    %293 = vector.shape_cast %292 : vector<8x8x32xf32> to vector<64x32xf32>
    %294 = arith.truncf %293 : vector<64x32xf32> to vector<64x32xbf16>
    %c1_256 = arith.constant 1 : index
    %c1_257 = arith.constant 1 : index
    %c0_258 = arith.constant 0 : index
    %295 = vector.load %arg16[%c1_256, %c1_257, %c0_258] : memref<10x10x32xf32, #tpu.memory_space<vmem>>, vector<8x8x32xf32>
    %296 = vector.shape_cast %295 : vector<8x8x32xf32> to vector<64x32xf32>
    %297 = arith.truncf %296 : vector<64x32xf32> to vector<64x32xbf16>
    %c1_259 = arith.constant 1 : index
    %c1_260 = arith.constant 1 : index
    %c0_261 = arith.constant 0 : index
    %298 = vector.load %arg16[%c1_259, %c1_260, %c0_261] : memref<10x10x32xf32, #tpu.memory_space<vmem>>, vector<8x8x32xf32>
    %299 = vector.shape_cast %298 : vector<8x8x32xf32> to vector<64x32xf32>
    %300 = arith.truncf %299 : vector<64x32xf32> to vector<64x32xbf16>
    %301 = tpu.concatenate %276, %279, %282, %285, %288, %291, %294, %297, %300 in 1 : vector<64x32xbf16>, vector<64x32xbf16>, vector<64x32xbf16>, vector<64x32xbf16>, vector<64x32xbf16>, vector<64x32xbf16>, vector<64x32xbf16>, vector<64x32xbf16>, vector<64x32xbf16> -> vector<64x288xbf16>
    %c0_262 = arith.constant 0 : index
    %c0_263 = arith.constant 0 : index
    %302 = vector.load %arg11[%c0_262, %c0_263] : memref<1x32xf32, #tpu.memory_space<vmem>>, vector<1x32xf32>
    %303 = vector.shape_cast %302 : vector<1x32xf32> to vector<32xf32>
    %cst_264 = arith.constant dense<0.000000e+00> : vector<64x32xf32>
    %304 = tpu.matmul %301, %272, %cst_264 {dimension_numbers = #tpu.dot_dimension_numbers<[1], [0], [0], [1], [0, 0, 1, 1], [], []>} : vector<64x288xbf16>, vector<288x32xbf16>, vector<64x32xf32> -> vector<64x32xf32>
    %305 = vector.shape_cast %303 : vector<32xf32> to vector<1x32xf32>
    %306 = vector.broadcast %305 : vector<1x32xf32> to vector<64x32xf32>
    %307 = arith.addf %304, %306 : vector<64x32xf32>
    %cst_265 = arith.constant 0.000000e+00 : f32
    %308 = vector.broadcast %cst_265 : f32 to vector<64x32xf32>
    %309 = arith.maximumf %307, %308 : vector<64x32xf32>
    %310 = arith.truncf %309 : vector<64x32xf32> to vector<64x32xbf16>
    %cst_266 = arith.constant dense<0.000000e+00> : vector<4x64xf32>
    %311 = tpu.matmul %273, %310, %cst_266 {dimension_numbers = #tpu.dot_dimension_numbers<[1], [1], [0], [0], [0, 0, 1, 0], [], []>} : vector<4x32xbf16>, vector<64x32xbf16>, vector<4x64xf32> -> vector<4x64xf32>
    %c0_267 = arith.constant 0 : index
    %c1_268 = arith.constant 1 : index
    %c0_269 = arith.constant 0 : index
    %312 = vector.load %arg16[%c0_267, %c1_268, %c0_269] : memref<10x10x32xf32, #tpu.memory_space<vmem>>, vector<8x8x32xf32>
    %313 = vector.shape_cast %312 : vector<8x8x32xf32> to vector<64x32xf32>
    %314 = arith.truncf %313 : vector<64x32xf32> to vector<64x32xbf16>
    %c0_270 = arith.constant 0 : index
    %c1_271 = arith.constant 1 : index
    %c0_272 = arith.constant 0 : index
    %315 = vector.load %arg16[%c0_270, %c1_271, %c0_272] : memref<10x10x32xf32, #tpu.memory_space<vmem>>, vector<8x8x32xf32>
    %316 = vector.shape_cast %315 : vector<8x8x32xf32> to vector<64x32xf32>
    %317 = arith.truncf %316 : vector<64x32xf32> to vector<64x32xbf16>
    %c0_273 = arith.constant 0 : index
    %c2_274 = arith.constant 2 : index
    %c0_275 = arith.constant 0 : index
    %318 = vector.load %arg16[%c0_273, %c2_274, %c0_275] : memref<10x10x32xf32, #tpu.memory_space<vmem>>, vector<8x8x32xf32>
    %319 = vector.shape_cast %318 : vector<8x8x32xf32> to vector<64x32xf32>
    %320 = arith.truncf %319 : vector<64x32xf32> to vector<64x32xbf16>
    %c1_276 = arith.constant 1 : index
    %c1_277 = arith.constant 1 : index
    %c0_278 = arith.constant 0 : index
    %321 = vector.load %arg16[%c1_276, %c1_277, %c0_278] : memref<10x10x32xf32, #tpu.memory_space<vmem>>, vector<8x8x32xf32>
    %322 = vector.shape_cast %321 : vector<8x8x32xf32> to vector<64x32xf32>
    %323 = arith.truncf %322 : vector<64x32xf32> to vector<64x32xbf16>
    %c1_279 = arith.constant 1 : index
    %c1_280 = arith.constant 1 : index
    %c0_281 = arith.constant 0 : index
    %324 = vector.load %arg16[%c1_279, %c1_280, %c0_281] : memref<10x10x32xf32, #tpu.memory_space<vmem>>, vector<8x8x32xf32>
    %325 = vector.shape_cast %324 : vector<8x8x32xf32> to vector<64x32xf32>
    %326 = arith.truncf %325 : vector<64x32xf32> to vector<64x32xbf16>
    %c1_282 = arith.constant 1 : index
    %c2_283 = arith.constant 2 : index
    %c0_284 = arith.constant 0 : index
    %327 = vector.load %arg16[%c1_282, %c2_283, %c0_284] : memref<10x10x32xf32, #tpu.memory_space<vmem>>, vector<8x8x32xf32>
    %328 = vector.shape_cast %327 : vector<8x8x32xf32> to vector<64x32xf32>
    %329 = arith.truncf %328 : vector<64x32xf32> to vector<64x32xbf16>
    %c1_285 = arith.constant 1 : index
    %c1_286 = arith.constant 1 : index
    %c0_287 = arith.constant 0 : index
    %330 = vector.load %arg16[%c1_285, %c1_286, %c0_287] : memref<10x10x32xf32, #tpu.memory_space<vmem>>, vector<8x8x32xf32>
    %331 = vector.shape_cast %330 : vector<8x8x32xf32> to vector<64x32xf32>
    %332 = arith.truncf %331 : vector<64x32xf32> to vector<64x32xbf16>
    %c1_288 = arith.constant 1 : index
    %c1_289 = arith.constant 1 : index
    %c0_290 = arith.constant 0 : index
    %333 = vector.load %arg16[%c1_288, %c1_289, %c0_290] : memref<10x10x32xf32, #tpu.memory_space<vmem>>, vector<8x8x32xf32>
    %334 = vector.shape_cast %333 : vector<8x8x32xf32> to vector<64x32xf32>
    %335 = arith.truncf %334 : vector<64x32xf32> to vector<64x32xbf16>
    %c1_291 = arith.constant 1 : index
    %c2_292 = arith.constant 2 : index
    %c0_293 = arith.constant 0 : index
    %336 = vector.load %arg16[%c1_291, %c2_292, %c0_293] : memref<10x10x32xf32, #tpu.memory_space<vmem>>, vector<8x8x32xf32>
    %337 = vector.shape_cast %336 : vector<8x8x32xf32> to vector<64x32xf32>
    %338 = arith.truncf %337 : vector<64x32xf32> to vector<64x32xbf16>
    %339 = tpu.concatenate %314, %317, %320, %323, %326, %329, %332, %335, %338 in 1 : vector<64x32xbf16>, vector<64x32xbf16>, vector<64x32xbf16>, vector<64x32xbf16>, vector<64x32xbf16>, vector<64x32xbf16>, vector<64x32xbf16>, vector<64x32xbf16>, vector<64x32xbf16> -> vector<64x288xbf16>
    %c0_294 = arith.constant 0 : index
    %c0_295 = arith.constant 0 : index
    %340 = vector.load %arg11[%c0_294, %c0_295] : memref<1x32xf32, #tpu.memory_space<vmem>>, vector<1x32xf32>
    %341 = vector.shape_cast %340 : vector<1x32xf32> to vector<32xf32>
    %cst_296 = arith.constant dense<0.000000e+00> : vector<64x32xf32>
    %342 = tpu.matmul %339, %272, %cst_296 {dimension_numbers = #tpu.dot_dimension_numbers<[1], [0], [0], [1], [0, 0, 1, 1], [], []>} : vector<64x288xbf16>, vector<288x32xbf16>, vector<64x32xf32> -> vector<64x32xf32>
    %343 = vector.shape_cast %341 : vector<32xf32> to vector<1x32xf32>
    %344 = vector.broadcast %343 : vector<1x32xf32> to vector<64x32xf32>
    %345 = arith.addf %342, %344 : vector<64x32xf32>
    %cst_297 = arith.constant 0.000000e+00 : f32
    %346 = vector.broadcast %cst_297 : f32 to vector<64x32xf32>
    %347 = arith.maximumf %345, %346 : vector<64x32xf32>
    %348 = arith.truncf %347 : vector<64x32xf32> to vector<64x32xbf16>
    %cst_298 = arith.constant dense<0.000000e+00> : vector<4x64xf32>
    %349 = tpu.matmul %273, %348, %cst_298 {dimension_numbers = #tpu.dot_dimension_numbers<[1], [1], [0], [0], [0, 0, 1, 0], [], []>} : vector<4x32xbf16>, vector<64x32xbf16>, vector<4x64xf32> -> vector<4x64xf32>
    %c1_299 = arith.constant 1 : index
    %c0_300 = arith.constant 0 : index
    %c0_301 = arith.constant 0 : index
    %350 = vector.load %arg16[%c1_299, %c0_300, %c0_301] : memref<10x10x32xf32, #tpu.memory_space<vmem>>, vector<8x8x32xf32>
    %351 = vector.shape_cast %350 : vector<8x8x32xf32> to vector<64x32xf32>
    %352 = arith.truncf %351 : vector<64x32xf32> to vector<64x32xbf16>
    %c1_302 = arith.constant 1 : index
    %c1_303 = arith.constant 1 : index
    %c0_304 = arith.constant 0 : index
    %353 = vector.load %arg16[%c1_302, %c1_303, %c0_304] : memref<10x10x32xf32, #tpu.memory_space<vmem>>, vector<8x8x32xf32>
    %354 = vector.shape_cast %353 : vector<8x8x32xf32> to vector<64x32xf32>
    %355 = arith.truncf %354 : vector<64x32xf32> to vector<64x32xbf16>
    %c1_305 = arith.constant 1 : index
    %c1_306 = arith.constant 1 : index
    %c0_307 = arith.constant 0 : index
    %356 = vector.load %arg16[%c1_305, %c1_306, %c0_307] : memref<10x10x32xf32, #tpu.memory_space<vmem>>, vector<8x8x32xf32>
    %357 = vector.shape_cast %356 : vector<8x8x32xf32> to vector<64x32xf32>
    %358 = arith.truncf %357 : vector<64x32xf32> to vector<64x32xbf16>
    %c1_308 = arith.constant 1 : index
    %c0_309 = arith.constant 0 : index
    %c0_310 = arith.constant 0 : index
    %359 = vector.load %arg16[%c1_308, %c0_309, %c0_310] : memref<10x10x32xf32, #tpu.memory_space<vmem>>, vector<8x8x32xf32>
    %360 = vector.shape_cast %359 : vector<8x8x32xf32> to vector<64x32xf32>
    %361 = arith.truncf %360 : vector<64x32xf32> to vector<64x32xbf16>
    %c1_311 = arith.constant 1 : index
    %c1_312 = arith.constant 1 : index
    %c0_313 = arith.constant 0 : index
    %362 = vector.load %arg16[%c1_311, %c1_312, %c0_313] : memref<10x10x32xf32, #tpu.memory_space<vmem>>, vector<8x8x32xf32>
    %363 = vector.shape_cast %362 : vector<8x8x32xf32> to vector<64x32xf32>
    %364 = arith.truncf %363 : vector<64x32xf32> to vector<64x32xbf16>
    %c1_314 = arith.constant 1 : index
    %c1_315 = arith.constant 1 : index
    %c0_316 = arith.constant 0 : index
    %365 = vector.load %arg16[%c1_314, %c1_315, %c0_316] : memref<10x10x32xf32, #tpu.memory_space<vmem>>, vector<8x8x32xf32>
    %366 = vector.shape_cast %365 : vector<8x8x32xf32> to vector<64x32xf32>
    %367 = arith.truncf %366 : vector<64x32xf32> to vector<64x32xbf16>
    %c2_317 = arith.constant 2 : index
    %c0_318 = arith.constant 0 : index
    %c0_319 = arith.constant 0 : index
    %368 = vector.load %arg16[%c2_317, %c0_318, %c0_319] : memref<10x10x32xf32, #tpu.memory_space<vmem>>, vector<8x8x32xf32>
    %369 = vector.shape_cast %368 : vector<8x8x32xf32> to vector<64x32xf32>
    %370 = arith.truncf %369 : vector<64x32xf32> to vector<64x32xbf16>
    %c2_320 = arith.constant 2 : index
    %c1_321 = arith.constant 1 : index
    %c0_322 = arith.constant 0 : index
    %371 = vector.load %arg16[%c2_320, %c1_321, %c0_322] : memref<10x10x32xf32, #tpu.memory_space<vmem>>, vector<8x8x32xf32>
    %372 = vector.shape_cast %371 : vector<8x8x32xf32> to vector<64x32xf32>
    %373 = arith.truncf %372 : vector<64x32xf32> to vector<64x32xbf16>
    %c2_323 = arith.constant 2 : index
    %c1_324 = arith.constant 1 : index
    %c0_325 = arith.constant 0 : index
    %374 = vector.load %arg16[%c2_323, %c1_324, %c0_325] : memref<10x10x32xf32, #tpu.memory_space<vmem>>, vector<8x8x32xf32>
    %375 = vector.shape_cast %374 : vector<8x8x32xf32> to vector<64x32xf32>
    %376 = arith.truncf %375 : vector<64x32xf32> to vector<64x32xbf16>
    %377 = tpu.concatenate %352, %355, %358, %361, %364, %367, %370, %373, %376 in 1 : vector<64x32xbf16>, vector<64x32xbf16>, vector<64x32xbf16>, vector<64x32xbf16>, vector<64x32xbf16>, vector<64x32xbf16>, vector<64x32xbf16>, vector<64x32xbf16>, vector<64x32xbf16> -> vector<64x288xbf16>
    %c0_326 = arith.constant 0 : index
    %c0_327 = arith.constant 0 : index
    %378 = vector.load %arg11[%c0_326, %c0_327] : memref<1x32xf32, #tpu.memory_space<vmem>>, vector<1x32xf32>
    %379 = vector.shape_cast %378 : vector<1x32xf32> to vector<32xf32>
    %cst_328 = arith.constant dense<0.000000e+00> : vector<64x32xf32>
    %380 = tpu.matmul %377, %272, %cst_328 {dimension_numbers = #tpu.dot_dimension_numbers<[1], [0], [0], [1], [0, 0, 1, 1], [], []>} : vector<64x288xbf16>, vector<288x32xbf16>, vector<64x32xf32> -> vector<64x32xf32>
    %381 = vector.shape_cast %379 : vector<32xf32> to vector<1x32xf32>
    %382 = vector.broadcast %381 : vector<1x32xf32> to vector<64x32xf32>
    %383 = arith.addf %380, %382 : vector<64x32xf32>
    %cst_329 = arith.constant 0.000000e+00 : f32
    %384 = vector.broadcast %cst_329 : f32 to vector<64x32xf32>
    %385 = arith.maximumf %383, %384 : vector<64x32xf32>
    %386 = arith.truncf %385 : vector<64x32xf32> to vector<64x32xbf16>
    %cst_330 = arith.constant dense<0.000000e+00> : vector<4x64xf32>
    %387 = tpu.matmul %273, %386, %cst_330 {dimension_numbers = #tpu.dot_dimension_numbers<[1], [1], [0], [0], [0, 0, 1, 0], [], []>} : vector<4x32xbf16>, vector<64x32xbf16>, vector<4x64xf32> -> vector<4x64xf32>
    %c1_331 = arith.constant 1 : index
    %c1_332 = arith.constant 1 : index
    %c0_333 = arith.constant 0 : index
    %388 = vector.load %arg16[%c1_331, %c1_332, %c0_333] : memref<10x10x32xf32, #tpu.memory_space<vmem>>, vector<8x8x32xf32>
    %389 = vector.shape_cast %388 : vector<8x8x32xf32> to vector<64x32xf32>
    %390 = arith.truncf %389 : vector<64x32xf32> to vector<64x32xbf16>
    %c1_334 = arith.constant 1 : index
    %c1_335 = arith.constant 1 : index
    %c0_336 = arith.constant 0 : index
    %391 = vector.load %arg16[%c1_334, %c1_335, %c0_336] : memref<10x10x32xf32, #tpu.memory_space<vmem>>, vector<8x8x32xf32>
    %392 = vector.shape_cast %391 : vector<8x8x32xf32> to vector<64x32xf32>
    %393 = arith.truncf %392 : vector<64x32xf32> to vector<64x32xbf16>
    %c1_337 = arith.constant 1 : index
    %c2_338 = arith.constant 2 : index
    %c0_339 = arith.constant 0 : index
    %394 = vector.load %arg16[%c1_337, %c2_338, %c0_339] : memref<10x10x32xf32, #tpu.memory_space<vmem>>, vector<8x8x32xf32>
    %395 = vector.shape_cast %394 : vector<8x8x32xf32> to vector<64x32xf32>
    %396 = arith.truncf %395 : vector<64x32xf32> to vector<64x32xbf16>
    %c1_340 = arith.constant 1 : index
    %c1_341 = arith.constant 1 : index
    %c0_342 = arith.constant 0 : index
    %397 = vector.load %arg16[%c1_340, %c1_341, %c0_342] : memref<10x10x32xf32, #tpu.memory_space<vmem>>, vector<8x8x32xf32>
    %398 = vector.shape_cast %397 : vector<8x8x32xf32> to vector<64x32xf32>
    %399 = arith.truncf %398 : vector<64x32xf32> to vector<64x32xbf16>
    %c1_343 = arith.constant 1 : index
    %c1_344 = arith.constant 1 : index
    %c0_345 = arith.constant 0 : index
    %400 = vector.load %arg16[%c1_343, %c1_344, %c0_345] : memref<10x10x32xf32, #tpu.memory_space<vmem>>, vector<8x8x32xf32>
    %401 = vector.shape_cast %400 : vector<8x8x32xf32> to vector<64x32xf32>
    %402 = arith.truncf %401 : vector<64x32xf32> to vector<64x32xbf16>
    %c1_346 = arith.constant 1 : index
    %c2_347 = arith.constant 2 : index
    %c0_348 = arith.constant 0 : index
    %403 = vector.load %arg16[%c1_346, %c2_347, %c0_348] : memref<10x10x32xf32, #tpu.memory_space<vmem>>, vector<8x8x32xf32>
    %404 = vector.shape_cast %403 : vector<8x8x32xf32> to vector<64x32xf32>
    %405 = arith.truncf %404 : vector<64x32xf32> to vector<64x32xbf16>
    %c2_349 = arith.constant 2 : index
    %c1_350 = arith.constant 1 : index
    %c0_351 = arith.constant 0 : index
    %406 = vector.load %arg16[%c2_349, %c1_350, %c0_351] : memref<10x10x32xf32, #tpu.memory_space<vmem>>, vector<8x8x32xf32>
    %407 = vector.shape_cast %406 : vector<8x8x32xf32> to vector<64x32xf32>
    %408 = arith.truncf %407 : vector<64x32xf32> to vector<64x32xbf16>
    %c2_352 = arith.constant 2 : index
    %c1_353 = arith.constant 1 : index
    %c0_354 = arith.constant 0 : index
    %409 = vector.load %arg16[%c2_352, %c1_353, %c0_354] : memref<10x10x32xf32, #tpu.memory_space<vmem>>, vector<8x8x32xf32>
    %410 = vector.shape_cast %409 : vector<8x8x32xf32> to vector<64x32xf32>
    %411 = arith.truncf %410 : vector<64x32xf32> to vector<64x32xbf16>
    %c2_355 = arith.constant 2 : index
    %c2_356 = arith.constant 2 : index
    %c0_357 = arith.constant 0 : index
    %412 = vector.load %arg16[%c2_355, %c2_356, %c0_357] : memref<10x10x32xf32, #tpu.memory_space<vmem>>, vector<8x8x32xf32>
    %413 = vector.shape_cast %412 : vector<8x8x32xf32> to vector<64x32xf32>
    %414 = arith.truncf %413 : vector<64x32xf32> to vector<64x32xbf16>
    %415 = tpu.concatenate %390, %393, %396, %399, %402, %405, %408, %411, %414 in 1 : vector<64x32xbf16>, vector<64x32xbf16>, vector<64x32xbf16>, vector<64x32xbf16>, vector<64x32xbf16>, vector<64x32xbf16>, vector<64x32xbf16>, vector<64x32xbf16>, vector<64x32xbf16> -> vector<64x288xbf16>
    %c0_358 = arith.constant 0 : index
    %c0_359 = arith.constant 0 : index
    %416 = vector.load %arg11[%c0_358, %c0_359] : memref<1x32xf32, #tpu.memory_space<vmem>>, vector<1x32xf32>
    %417 = vector.shape_cast %416 : vector<1x32xf32> to vector<32xf32>
    %cst_360 = arith.constant dense<0.000000e+00> : vector<64x32xf32>
    %418 = tpu.matmul %415, %272, %cst_360 {dimension_numbers = #tpu.dot_dimension_numbers<[1], [0], [0], [1], [0, 0, 1, 1], [], []>} : vector<64x288xbf16>, vector<288x32xbf16>, vector<64x32xf32> -> vector<64x32xf32>
    %419 = vector.shape_cast %417 : vector<32xf32> to vector<1x32xf32>
    %420 = vector.broadcast %419 : vector<1x32xf32> to vector<64x32xf32>
    %421 = arith.addf %418, %420 : vector<64x32xf32>
    %cst_361 = arith.constant 0.000000e+00 : f32
    %422 = vector.broadcast %cst_361 : f32 to vector<64x32xf32>
    %423 = arith.maximumf %421, %422 : vector<64x32xf32>
    %424 = arith.truncf %423 : vector<64x32xf32> to vector<64x32xbf16>
    %cst_362 = arith.constant dense<0.000000e+00> : vector<4x64xf32>
    %425 = tpu.matmul %273, %424, %cst_362 {dimension_numbers = #tpu.dot_dimension_numbers<[1], [1], [0], [0], [0, 0, 1, 0], [], []>} : vector<4x32xbf16>, vector<64x32xbf16>, vector<4x64xf32> -> vector<4x64xf32>
    %426 = tpu.concatenate %311, %349, %387, %425 in 1 : vector<4x64xf32>, vector<4x64xf32>, vector<4x64xf32>, vector<4x64xf32> -> vector<4x256xf32>
    %c0_363 = arith.constant 0 : index
    %c0_364 = arith.constant 0 : index
    %427 = vector.load %arg13[%c0_363, %c0_364] : memref<4x1xf32, #tpu.memory_space<vmem>>, vector<4x1xf32>
    %428 = vector.broadcast %427 : vector<4x1xf32> to vector<4x256xf32>
    %429 = arith.addf %426, %428 : vector<4x256xf32>
    %cst_365 = arith.constant dense<0xFF800000> : vector<256xf32>
    %430 = vector.multi_reduction <maximumf>, %429, %cst_365 [0] : vector<4x256xf32> to vector<256xf32>
    %431 = vector.shape_cast %430 : vector<256xf32> to vector<1x256xf32>
    %432 = vector.broadcast %431 : vector<1x256xf32> to vector<4x256xf32>
    %433 = arith.subf %429, %432 : vector<4x256xf32>
    %434 = math.exp %433 : vector<4x256xf32>
    %cst_366 = arith.constant dense<0.000000e+00> : vector<256xf32>
    %435 = vector.multi_reduction <add>, %434, %cst_366 [0] : vector<4x256xf32> to vector<256xf32>
    %436 = vector.shape_cast %435 : vector<256xf32> to vector<1x256xf32>
    %437 = vector.broadcast %436 : vector<1x256xf32> to vector<4x256xf32>
    %438 = arith.divf %434, %437 : vector<4x256xf32>
    %c0_367 = arith.constant 0 : index
    %c0_368 = arith.constant 0 : index
    %c0_369 = arith.constant 0 : index
    %439 = vector.load %arg14[%c0_367, %c0_368, %c0_369] : memref<1x4x256xf32, #tpu.memory_space<vmem>>, vector<1x4x256xf32>
    %440 = vector.shape_cast %439 : vector<1x4x256xf32> to vector<4x256xf32>
    %441 = vector.shape_cast %438 : vector<4x256xf32> to vector<1x4x256xf32>
    tpu.vector_store %arg14[%c0_367, %c0_368, %c0_369], %441 {strides = array<i32>} : memref<1x4x256xf32, #tpu.memory_space<vmem>>, vector<1x4x256xf32>,
    return
  }
  func.func @transform_0(%arg0: i32) -> (i32, i32, i32, i32) {
    %c0_i32 = arith.constant 0 : i32
    %c0_i32_0 = arith.constant 0 : i32
    %c0_i32_1 = arith.constant 0 : i32
    %c0_i32_2 = arith.constant 0 : i32
    return %arg0, %c0_i32, %c0_i32_0, %c0_i32_1 : i32, i32, i32, i32
  }
  func.func @transform_1(%arg0: i32) -> (i32, i32) {
    %c0_i32 = arith.constant 0 : i32
    %c0_i32_0 = arith.constant 0 : i32
    %c0_i32_1 = arith.constant 0 : i32
    return %c0_i32, %c0_i32_0 : i32, i32
  }
  func.func @transform_2(%arg0: i32) -> (i32, i32) {
    %c0_i32 = arith.constant 0 : i32
    %c0_i32_0 = arith.constant 0 : i32
    %c0_i32_1 = arith.constant 0 : i32
    return %c0_i32, %c0_i32_0 : i32, i32
  }
  func.func @transform_3(%arg0: i32) -> (i32, i32, i32) {
    %c0_i32 = arith.constant 0 : i32
    %c0_i32_0 = arith.constant 0 : i32
    %c0_i32_1 = arith.constant 0 : i32
    %c0_i32_2 = arith.constant 0 : i32
    return %c0_i32, %c0_i32_0, %c0_i32_1 : i32, i32, i32
  }
  func.func @transform_4(%arg0: i32) -> (i32, i32) {
    %c0_i32 = arith.constant 0 : i32
    %c0_i32_0 = arith.constant 0 : i32
    %c0_i32_1 = arith.constant 0 : i32
    return %c0_i32, %c0_i32_0 : i32, i32
  }
  func.func @transform_5(%arg0: i32) -> (i32, i32) {
    %c0_i32 = arith.constant 0 : i32
    %c0_i32_0 = arith.constant 0 : i32
    %c0_i32_1 = arith.constant 0 : i32
    return %c0_i32, %c0_i32_0 : i32, i32
  }
  func.func @transform_6(%arg0: i32) -> (i32, i32) {
    %c0_i32 = arith.constant 0 : i32
    %c0_i32_0 = arith.constant 0 : i32
    %c0_i32_1 = arith.constant 0 : i32
    return %c0_i32, %c0_i32_0 : i32, i32
  }
  func.func @transform_7(%arg0: i32) -> (i32, i32, i32) {
    %c0_i32 = arith.constant 0 : i32
    %c0_i32_0 = arith.constant 0 : i32
    %c0_i32_1 = arith.constant 0 : i32
    %c0_i32_2 = arith.constant 0 : i32
    return %c0_i32, %c0_i32_0, %c0_i32_1 : i32, i32, i32
  }
  func.func @transform_8(%arg0: i32) -> (i32, i32) {
    %c0_i32 = arith.constant 0 : i32
    %c0_i32_0 = arith.constant 0 : i32
    %c0_i32_1 = arith.constant 0 : i32
    return %c0_i32, %c0_i32_0 : i32, i32
  }
  func.func @transform_9(%arg0: i32) -> (i32, i32) {
    %c0_i32 = arith.constant 0 : i32
    %c0_i32_0 = arith.constant 0 : i32
    %c0_i32_1 = arith.constant 0 : i32
    return %c0_i32, %c0_i32_0 : i32, i32
  }
  func.func @transform_10(%arg0: i32) -> (i32, i32) {
    %c0_i32 = arith.constant 0 : i32
    %c0_i32_0 = arith.constant 0 : i32
    %c0_i32_1 = arith.constant 0 : i32
    return %c0_i32, %c0_i32_0 : i32, i32
  }
  func.func @transform_11(%arg0: i32) -> (i32, i32) {
    %c0_i32 = arith.constant 0 : i32
    %c0_i32_0 = arith.constant 0 : i32
    %c0_i32_1 = arith.constant 0 : i32
    return %c0_i32, %c0_i32_0 : i32, i32
  }
  func.func @transform_12(%arg0: i32) -> (i32, i32) {
    %c0_i32 = arith.constant 0 : i32
    %c0_i32_0 = arith.constant 0 : i32
    %c0_i32_1 = arith.constant 0 : i32
    return %c0_i32, %c0_i32_0 : i32, i32
  }
  func.func @transform_13(%arg0: i32) -> (i32, i32, i32) {
    %c0_i32 = arith.constant 0 : i32
    %c0_i32_0 = arith.constant 0 : i32
    %c0_i32_1 = arith.constant 0 : i32
    return %arg0, %c0_i32, %c0_i32_0 : i32, i32, i32
  }
}

</mosaic_0001>

<llo_original>
// kernel: a_call__.1
$region0: #{a_call__.1}
  #allocation0 [shape = 'u32[]', space=smem, size = 0x4, offset = 0x4, fixed_abs, tag = 'smem constant byte address 0x4 - core index']
  #allocation1 [shape = 'u32[72,128]{1,0:T(1,128)}', space=vmem, size = 0x9000, scoped, tag = 'internal scratch']
  #allocation2 [shape = 'f32[18,18,32]{2,1,0:T(8,128)}', space=vmem, size = 0x36000, scoped, tag = 'scratch operand']
  #allocation3 [shape = 'f32[10,10,32]{2,1,0:T(8,128)}', space=vmem, size = 0x14000, scoped, tag = 'scratch operand']
  %s0 = inlined_call_operand.vmem [shape: f32[2,16,16,32], index: 0, kind: input, shape index: {}]
  %s1 = inlined_call_operand.vmem [shape: bf16[288,32], index: 1, kind: input, shape index: {}]
  %s2 = inlined_call_operand.vmem [shape: f32[1,32], index: 2, kind: input, shape index: {}, may-alias: {2,6,10}]
  %s3 = inlined_call_operand.vmem [shape: bf16[2,288,32], index: 3, kind: input, shape index: {}]
  %s4 = inlined_call_operand.vmem [shape: f32[2,32], index: 4, kind: input, shape index: {}, may-alias: {4,8}]
  %s5 = inlined_call_operand.vmem [shape: bf16[288,32], index: 5, kind: input, shape index: {}]
  %s6 = inlined_call_operand.vmem [shape: f32[1,32], index: 6, kind: input, shape index: {}, may-alias: {2,6,10}]
  %s7 = inlined_call_operand.vmem [shape: bf16[2,288,32], index: 7, kind: input, shape index: {}]
  %s8 = inlined_call_operand.vmem [shape: f32[2,32], index: 8, kind: input, shape index: {}, may-alias: {4,8}]
  %s9 = inlined_call_operand.vmem [shape: bf16[288,32], index: 9, kind: input, shape index: {}]
  %s10 = inlined_call_operand.vmem [shape: f32[1,32], index: 10, kind: input, shape index: {}, may-alias: {2,6,10}]
  %s11 = inlined_call_operand.vmem [shape: bf16[4,32], index: 11, kind: input, shape index: {}]
  %s12 = inlined_call_operand.vmem [shape: f32[4,1], index: 12, kind: input, shape index: {}]
  %s13 = inlined_call_operand.vmem [shape: f32[2,4,256], index: 13, kind: output, shape index: {}]
  %s14 = sld [smem:[#allocation0]]
  $region85: #{a_call__.1} parent=0
    _
  %s16 = ssub.s32 1, %s14
  %s17 = scalar_select 0, %s16, %s14
  loop: start=0, step=1, limit=4
  $region2: #{a_call__.1} parent=0 // loop_pre_header
    _
  $region3: #{a_call__.1} parent=0 // loop_header
    %s19 = sphi 0, %s23
    %p20 = scmp.ge.s32.totalorder %s19, 4
    %s29 = sphi 0, %s31
    %s32 = sphi 0, %s29
    %s33 = sphi 0, %s32
    %s49 = sphi 0, %s33
    %s53 = sphi 0, %s53
    %s55 = sphi 0, %s53
    %s56 = sphi 0, %s55
    %s70 = sphi 0, %s56
    %s74 = sphi 0, %s74
    %s76 = sphi 0, %s74
    %s77 = sphi 0, %s76
    %s91 = sphi 0, %s77
    %s95 = sphi 0, %s95
    %s97 = sphi 0, %s95
    %s98 = sphi 0, %s97
    %s112 = sphi 0, %s98
    %s116 = sphi 0, %s116
    %s118 = sphi 0, %s116
    %s119 = sphi 0, %s118
    %s133 = sphi 0, %s119
    %s137 = sphi 0, %s137
    %s139 = sphi 0, %s137
    %s140 = sphi 0, %s139
    %s154 = sphi 0, %s140
    %s158 = sphi 0, %s158
    %s160 = sphi 0, %s158
    %s161 = sphi 0, %s160
    %s175 = sphi 0, %s161
    %s179 = sphi 0, %s179
    %s181 = sphi 0, %s179
    %s182 = sphi 0, %s181
    %s196 = sphi 0, %s182
    %s200 = sphi 0, %s200
    %s202 = sphi 0, %s200
    %s203 = sphi 0, %s202
    %s217 = sphi 0, %s203
    %s221 = sphi 0, %s221
    %s223 = sphi 0, %s221
    %s224 = sphi 0, %s223
    %s238 = sphi 0, %s224
    %s242 = sphi 0, %s242
    %s244 = sphi 0, %s242
    %s245 = sphi 0, %s244
    %s259 = sphi 0, %s245
    %s263 = sphi 0, %s263
    %s265 = sphi 0, %s263
    %s266 = sphi 0, %s265
    %s280 = sphi 0, %s266
    %s284 = sphi 0, %s284
    %s286 = sphi 0, %s284
    %s287 = sphi 0, %s286
    %s301 = sphi 0, %s287
    %s307 = sphi 0, %s309
    %s310 = sphi 0, %s307
    %s311 = sphi 0, %s310
    %s327 = sphi 0, %s311
  $region4: #{a_call__.1} parent=0 // loop_header_branch
    %22 = sbr.rel (%p20) target = $region8
  $region5: #{a_call__.1} parent=0 // loop_body
    %s24 = ssub.s32 %s19, 1
    %s25 = ssub.s32 %s19, 2
    %s26 = sadd.s32 %s19, 1
    %s27 = ssub.s32 %s19, %s26
    %p28 = scmp.eq.s32.totalorder %s27, 0
    %s30 = sadd.s32 %s29, 1
    %s31 = scalar_select %p28, %s29, %s30
    %p34 = pneg %p28
    %p35 = scmp.eq.s32.totalorder %s19, 1
    %p36 = por %p34, %p35
    %p37 = scmp.ne.s32.totalorder %s29, %s32
    %p38 = scmp.eq.s32.totalorder %s19, 0
    %p39 = por %p37, %p38
    %p40 = scmp.ne.s32.totalorder %s29, %s32
    %p41 = scmp.eq.s32.totalorder %s24, 1
    %p42 = por %p40, %p41
    %p43 = scmp.ne.s32.totalorder %s32, %s33
    %p44 = scmp.eq.s32.totalorder %s24, 0
    %p45 = por %p43, %p44
    %p46 = scmp.ne.s32.totalorder %s32, %s33
    %p47 = scmp.eq.s32.totalorder %s25, 1
    %p48 = por %p46, %p47
    %p50 = scmp.ne.s32.totalorder %s33, %s49
    %p51 = scmp.eq.s32.totalorder %s25, 0
    %p52 = por %p50, %p51
    %s54 = sadd.s32 %s53, 1
    %p57 = scmp.eq.s32.totalorder %s19, 1
    %p58 = scmp.ne.s32.totalorder %s53, %s55
    %p59 = scmp.eq.s32.totalorder %s19, 0
    %p60 = por %p58, %p59
    %p61 = scmp.ne.s32.totalorder %s53, %s55
    %p62 = scmp.eq.s32.totalorder %s24, 1
    %p63 = por %p61, %p62
    %p64 = scmp.ne.s32.totalorder %s55, %s56
    %p65 = scmp.eq.s32.totalorder %s24, 0
    %p66 = por %p64, %p65
    %p67 = scmp.ne.s32.totalorder %s55, %s56
    %p68 = scmp.eq.s32.totalorder %s25, 1
    %p69 = por %p67, %p68
    %p71 = scmp.ne.s32.totalorder %s56, %s70
    %p72 = scmp.eq.s32.totalorder %s25, 0
    %p73 = por %p71, %p72
    %s75 = sadd.s32 %s74, 1
    %p78 = scmp.eq.s32.totalorder %s19, 1
    %p79 = scmp.ne.s32.totalorder %s74, %s76
    %p80 = scmp.eq.s32.totalorder %s19, 0
    %p81 = por %p79, %p80
    %p82 = scmp.ne.s32.totalorder %s74, %s76
    %p83 = scmp.eq.s32.totalorder %s24, 1
    %p84 = por %p82, %p83
    %p85 = scmp.ne.s32.totalorder %s76, %s77
    %p86 = scmp.eq.s32.totalorder %s24, 0
    %p87 = por %p85, %p86
    %p88 = scmp.ne.s32.totalorder %s76, %s77
    %p89 = scmp.eq.s32.totalorder %s25, 1
    %p90 = por %p88, %p89
    %p92 = scmp.ne.s32.totalorder %s77, %s91
    %p93 = scmp.eq.s32.totalorder %s25, 0
    %p94 = por %p92, %p93
    %s96 = sadd.s32 %s95, 1
    %p99 = scmp.eq.s32.totalorder %s19, 1
    %p100 = scmp.ne.s32.totalorder %s95, %s97
    %p101 = scmp.eq.s32.totalorder %s19, 0
    %p102 = por %p100, %p101
    %p103 = scmp.ne.s32.totalorder %s95, %s97
    %p104 = scmp.eq.s32.totalorder %s24, 1
    %p105 = por %p103, %p104
    %p106 = scmp.ne.s32.totalorder %s97, %s98
    %p107 = scmp.eq.s32.totalorder %s24, 0
    %p108 = por %p106, %p107
    %p109 = scmp.ne.s32.totalorder %s97, %s98
    %p110 = scmp.eq.s32.totalorder %s25, 1
    %p111 = por %p109, %p110
    %p113 = scmp.ne.s32.totalorder %s98, %s112
    %p114 = scmp.eq.s32.totalorder %s25, 0
    %p115 = por %p113, %p114
    %s117 = sadd.s32 %s116, 1
    %p120 = scmp.eq.s32.totalorder %s19, 1
    %p121 = scmp.ne.s32.totalorder %s116, %s118
    %p122 = scmp.eq.s32.totalorder %s19, 0
    %p123 = por %p121, %p122
    %p124 = scmp.ne.s32.totalorder %s116, %s118
    %p125 = scmp.eq.s32.totalorder %s24, 1
    %p126 = por %p124, %p125
    %p127 = scmp.ne.s32.totalorder %s118, %s119
    %p128 = scmp.eq.s32.totalorder %s24, 0
    %p129 = por %p127, %p128
    %p130 = scmp.ne.s32.totalorder %s118, %s119
    %p131 = scmp.eq.s32.totalorder %s25, 1
    %p132 = por %p130, %p131
    %p134 = scmp.ne.s32.totalorder %s119, %s133
    %p135 = scmp.eq.s32.totalorder %s25, 0
    %p136 = por %p134, %p135
    %s138 = sadd.s32 %s137, 1
    %p141 = scmp.eq.s32.totalorder %s19, 1
    %p142 = scmp.ne.s32.totalorder %s137, %s139
    %p143 = scmp.eq.s32.totalorder %s19, 0
    %p144 = por %p142, %p143
    %p145 = scmp.ne.s32.totalorder %s137, %s139
    %p146 = scmp.eq.s32.totalorder %s24, 1
    %p147 = por %p145, %p146
    %p148 = scmp.ne.s32.totalorder %s139, %s140
    %p149 = scmp.eq.s32.totalorder %s24, 0
    %p150 = por %p148, %p149
    %p151 = scmp.ne.s32.totalorder %s139, %s140
    %p152 = scmp.eq.s32.totalorder %s25, 1
    %p153 = por %p151, %p152
    %p155 = scmp.ne.s32.totalorder %s140, %s154
    %p156 = scmp.eq.s32.totalorder %s25, 0
    %p157 = por %p155, %p156
    %s159 = sadd.s32 %s158, 1
    %p162 = scmp.eq.s32.totalorder %s19, 1
    %p163 = scmp.ne.s32.totalorder %s158, %s160
    %p164 = scmp.eq.s32.totalorder %s19, 0
    %p165 = por %p163, %p164
    %p166 = scmp.ne.s32.totalorder %s158, %s160
    %p167 = scmp.eq.s32.totalorder %s24, 1
    %p168 = por %p166, %p167
    %p169 = scmp.ne.s32.totalorder %s160, %s161
    %p170 = scmp.eq.s32.totalorder %s24, 0
    %p171 = por %p169, %p170
    %p172 = scmp.ne.s32.totalorder %s160, %s161
    %p173 = scmp.eq.s32.totalorder %s25, 1
    %p174 = por %p172, %p173
    %p176 = scmp.ne.s32.totalorder %s161, %s175
    %p177 = scmp.eq.s32.totalorder %s25, 0
    %p178 = por %p176, %p177
    %s180 = sadd.s32 %s179, 1
    %p183 = scmp.eq.s32.totalorder %s19, 1
    %p184 = scmp.ne.s32.totalorder %s179, %s181
    %p185 = scmp.eq.s32.totalorder %s19, 0
    %p186 = por %p184, %p185
    %p187 = scmp.ne.s32.totalorder %s179, %s181
    %p188 = scmp.eq.s32.totalorder %s24, 1
    %p189 = por %p187, %p188
    %p190 = scmp.ne.s32.totalorder %s181, %s182
    %p191 = scmp.eq.s32.totalorder %s24, 0
    %p192 = por %p190, %p191
    %p193 = scmp.ne.s32.totalorder %s181, %s182
    %p194 = scmp.eq.s32.totalorder %s25, 1
    %p195 = por %p193, %p194
    %p197 = scmp.ne.s32.totalorder %s182, %s196
    %p198 = scmp.eq.s32.totalorder %s25, 0
    %p199 = por %p197, %p198
    %s201 = sadd.s32 %s200, 1
    %p204 = scmp.eq.s32.totalorder %s19, 1
    %p205 = scmp.ne.s32.totalorder %s200, %s202
    %p206 = scmp.eq.s32.totalorder %s19, 0
    %p207 = por %p205, %p206
    %p208 = scmp.ne.s32.totalorder %s200, %s202
    %p209 = scmp.eq.s32.totalorder %s24, 1
    %p210 = por %p208, %p209
    %p211 = scmp.ne.s32.totalorder %s202, %s203
    %p212 = scmp.eq.s32.totalorder %s24, 0
    %p213 = por %p211, %p212
    %p214 = scmp.ne.s32.totalorder %s202, %s203
    %p215 = scmp.eq.s32.totalorder %s25, 1
    %p216 = por %p214, %p215
    %p218 = scmp.ne.s32.totalorder %s203, %s217
    %p219 = scmp.eq.s32.totalorder %s25, 0
    %p220 = por %p218, %p219
    %s222 = sadd.s32 %s221, 1
    %p225 = scmp.eq.s32.totalorder %s19, 1
    %p226 = scmp.ne.s32.totalorder %s221, %s223
    %p227 = scmp.eq.s32.totalorder %s19, 0
    %p228 = por %p226, %p227
    %p229 = scmp.ne.s32.totalorder %s221, %s223
    %p230 = scmp.eq.s32.totalorder %s24, 1
    %p231 = por %p229, %p230
    %p232 = scmp.ne.s32.totalorder %s223, %s224
    %p233 = scmp.eq.s32.totalorder %s24, 0
    %p234 = por %p232, %p233
    %p235 = scmp.ne.s32.totalorder %s223, %s224
    %p236 = scmp.eq.s32.totalorder %s25, 1
    %p237 = por %p235, %p236
    %p239 = scmp.ne.s32.totalorder %s224, %s238
    %p240 = scmp.eq.s32.totalorder %s25, 0
    %p241 = por %p239, %p240
    %s243 = sadd.s32 %s242, 1
    %p246 = scmp.eq.s32.totalorder %s19, 1
    %p247 = scmp.ne.s32.totalorder %s242, %s244
    %p248 = scmp.eq.s32.totalorder %s19, 0
    %p249 = por %p247, %p248
    %p250 = scmp.ne.s32.totalorder %s242, %s244
    %p251 = scmp.eq.s32.totalorder %s24, 1
    %p252 = por %p250, %p251
    %p253 = scmp.ne.s32.totalorder %s244, %s245
    %p254 = scmp.eq.s32.totalorder %s24, 0
    %p255 = por %p253, %p254
    %p256 = scmp.ne.s32.totalorder %s244, %s245
    %p257 = scmp.eq.s32.totalorder %s25, 1
    %p258 = por %p256, %p257
    %p260 = scmp.ne.s32.totalorder %s245, %s259
    %p261 = scmp.eq.s32.totalorder %s25, 0
    %p262 = por %p260, %p261
    %s264 = sadd.s32 %s263, 1
    %p267 = scmp.eq.s32.totalorder %s19, 1
    %p268 = scmp.ne.s32.totalorder %s263, %s265
    %p269 = scmp.eq.s32.totalorder %s19, 0
    %p270 = por %p268, %p269
    %p271 = scmp.ne.s32.totalorder %s263, %s265
    %p272 = scmp.eq.s32.totalorder %s24, 1
    %p273 = por %p271, %p272
    %p274 = scmp.ne.s32.totalorder %s265, %s266
    %p275 = scmp.eq.s32.totalorder %s24, 0
    %p276 = por %p274, %p275
    %p277 = scmp.ne.s32.totalorder %s265, %s266
    %p278 = scmp.eq.s32.totalorder %s25, 1
    %p279 = por %p277, %p278
    %p281 = scmp.ne.s32.totalorder %s266, %s280
    %p282 = scmp.eq.s32.totalorder %s25, 0
    %p283 = por %p281, %p282
    %s285 = sadd.s32 %s284, 1
    %p288 = scmp.eq.s32.totalorder %s19, 1
    %p289 = scmp.ne.s32.totalorder %s284, %s286
    %p290 = scmp.eq.s32.totalorder %s19, 0
    %p291 = por %p289, %p290
    %p292 = scmp.ne.s32.totalorder %s284, %s286
    %p293 = scmp.eq.s32.totalorder %s24, 1
    %p294 = por %p292, %p293
    %p295 = scmp.ne.s32.totalorder %s286, %s287
    %p296 = scmp.eq.s32.totalorder %s24, 0
    %p297 = por %p295, %p296
    %p298 = scmp.ne.s32.totalorder %s286, %s287
    %p299 = scmp.eq.s32.totalorder %s25, 1
    %p300 = por %p298, %p299
    %p302 = scmp.ne.s32.totalorder %s287, %s301
    %p303 = scmp.eq.s32.totalorder %s25, 0
    %p304 = por %p302, %p303
    %s305 = ssub.s32 %s19, %s26
    %p306 = scmp.eq.s32.totalorder %s305, 0
    %s308 = sadd.s32 %s307, 1
    %s309 = scalar_select %p306, %s307, %s308
    %p312 = pneg %p306
    %p313 = scmp.eq.s32.totalorder %s19, 1
    %p314 = por %p312, %p313
    %p315 = scmp.ne.s32.totalorder %s307, %s310
    %p316 = scmp.eq.s32.totalorder %s19, 0
    %p317 = por %p315, %p316
    %p318 = scmp.ne.s32.totalorder %s307, %s310
    %p319 = scmp.eq.s32.totalorder %s24, 1
    %p320 = por %p318, %p319
    %p321 = scmp.ne.s32.totalorder %s310, %s311
    %p322 = scmp.eq.s32.totalorder %s24, 0
    %p323 = por %p321, %p322
    %p324 = scmp.ne.s32.totalorder %s310, %s311
    %p325 = scmp.eq.s32.totalorder %s25, 1
    %p326 = por %p324, %p325
    %p328 = scmp.ne.s32.totalorder %s311, %s327
    %p329 = scmp.eq.s32.totalorder %s25, 0
    %p330 = por %p328, %p329
    %p331 = scmp.le.s32.totalorder 1, %s19
    %p332 = scmp.lt.s32.totalorder %s19, 3
    %p333 = pnand %p331, %p332
    %p334 = pneg %p333
    // Predicated region
    $region9: #{a_call__.1} parent=5 // pred_check
      _
    $region10: #{a_call__.1} parent=5 // pred_check_branch
      %336 = sbr.rel (%p333) target = $region12
    $region11: #{a_call__.1} parent=5 // pred_region
      %s337 = ssub.s32 %s19, 1
      // Predicated region
      $region13: #{a_call__.1} parent=11 // pred_check
        %p338 = pneg %p66
      $region14: #{a_call__.1} parent=11 // pred_check_branch
        %340 = sbr.rel (%p338) target = $region16
      $region15: #{a_call__.1} parent=11 // pred_region
        _
      $region16: #{a_call__.1} parent=11 // pred_fallthru
        _
      // Predicated region
      $region17: #{a_call__.1} parent=11 // pred_check
        %p341 = pneg %p87
      $region18: #{a_call__.1} parent=11 // pred_check_branch
        %343 = sbr.rel (%p341) target = $region20
      $region19: #{a_call__.1} parent=11 // pred_region
        _
      $region20: #{a_call__.1} parent=11 // pred_fallthru
        _
      // Predicated region
      $region21: #{a_call__.1} parent=11 // pred_check
        %p344 = pneg %p108
      $region22: #{a_call__.1} parent=11 // pred_check_branch
        %346 = sbr.rel (%p344) target = $region24
      $region23: #{a_call__.1} parent=11 // pred_region
        _
      $region24: #{a_call__.1} parent=11 // pred_fallthru
        _
      // Predicated region
      $region25: #{a_call__.1} parent=11 // pred_check
        %p347 = pneg %p129
      $region26: #{a_call__.1} parent=11 // pred_check_branch
        %349 = sbr.rel (%p347) target = $region28
      $region27: #{a_call__.1} parent=11 // pred_region
        _
      $region28: #{a_call__.1} parent=11 // pred_fallthru
        _
      // Predicated region
      $region29: #{a_call__.1} parent=11 // pred_check
        %p350 = pneg %p150
      $region30: #{a_call__.1} parent=11 // pred_check_branch
        %352 = sbr.rel (%p350) target = $region32
      $region31: #{a_call__.1} parent=11 // pred_region
        _
      $region32: #{a_call__.1} parent=11 // pred_fallthru
        _
      // Predicated region
      $region33: #{a_call__.1} parent=11 // pred_check
        %p353 = pneg %p171
      $region34: #{a_call__.1} parent=11 // pred_check_branch
        %355 = sbr.rel (%p353) target = $region36
      $region35: #{a_call__.1} parent=11 // pred_region
        _
      $region36: #{a_call__.1} parent=11 // pred_fallthru
        _
      // Predicated region
      $region37: #{a_call__.1} parent=11 // pred_check
        %p356 = pneg %p192
      $region38: #{a_call__.1} parent=11 // pred_check_branch
        %358 = sbr.rel (%p356) target = $region40
      $region39: #{a_call__.1} parent=11 // pred_region
        _
      $region40: #{a_call__.1} parent=11 // pred_fallthru
        _
      // Predicated region
      $region41: #{a_call__.1} parent=11 // pred_check
        %p359 = pneg %p213
      $region42: #{a_call__.1} parent=11 // pred_check_branch
        %361 = sbr.rel (%p359) target = $region44
      $region43: #{a_call__.1} parent=11 // pred_region
        _
      $region44: #{a_call__.1} parent=11 // pred_fallthru
        _
      // Predicated region
      $region45: #{a_call__.1} parent=11 // pred_check
        %p362 = pneg %p234
      $region46: #{a_call__.1} parent=11 // pred_check_branch
        %364 = sbr.rel (%p362) target = $region48
      $region47: #{a_call__.1} parent=11 // pred_region
        _
      $region48: #{a_call__.1} parent=11 // pred_fallthru
        _
      // Predicated region
      $region49: #{a_call__.1} parent=11 // pred_check
        %p365 = pneg %p255
      $region50: #{a_call__.1} parent=11 // pred_check_branch
        %367 = sbr.rel (%p365) target = $region52
      $region51: #{a_call__.1} parent=11 // pred_region
        _
      $region52: #{a_call__.1} parent=11 // pred_fallthru
        _
      // Predicated region
      $region53: #{a_call__.1} parent=11 // pred_check
        %p368 = pneg %p276
      $region54: #{a_call__.1} parent=11 // pred_check_branch
        %370 = sbr.rel (%p368) target = $region56
      $region55: #{a_call__.1} parent=11 // pred_region
        _
      $region56: #{a_call__.1} parent=11 // pred_fallthru
        _
      // Predicated region
      $region57: #{a_call__.1} parent=11 // pred_check
        %p371 = pneg %p297
      $region58: #{a_call__.1} parent=11 // pred_check_branch
        %373 = sbr.rel (%p371) target = $region60
      $region59: #{a_call__.1} parent=11 // pred_region
        _
      $region60: #{a_call__.1} parent=11 // pred_fallthru
        _
    $region12: #{a_call__.1} parent=5 // pred_fallthru
      _
    %p374 = scmp.lt.s32.totalorder %s19, 2
    // Predicated region
    $region61: #{a_call__.1} parent=5 // pred_check
      %p375 = pneg %p374
    $region62: #{a_call__.1} parent=5 // pred_check_branch
      %377 = sbr.rel (%p375) target = $region64
    $region63: #{a_call__.1} parent=5 // pred_region
      // Predicated region
      $region65: #{a_call__.1} parent=63 // pred_check
        %p378 = pneg %p39
      $region66: #{a_call__.1} parent=63 // pred_check_branch
        %380 = sbr.rel (%p378) target = $region68
      $region67: #{a_call__.1} parent=63 // pred_region
        %p381 = scmp.lt.s32.totalorder %s19, 1
        %s382 = scalar_select %p381, %s19, 1
        %s383 = smul.addr %s382, 32
        %s384 = smul.addr %s383, 8
        %s385 = scalar_lea.vmem %s0, %s384
      $region68: #{a_call__.1} parent=63 // pred_fallthru
        _
    $region64: #{a_call__.1} parent=5 // pred_fallthru
      _
    %p386 = scmp.le.s32.totalorder 1, %s19
    %p387 = scmp.lt.s32.totalorder %s19, 3
    %p388 = pnand %p386, %p387
    %p389 = pneg %p388
    // Predicated region
    $region69: #{a_call__.1} parent=5 // pred_check
      _
    $region70: #{a_call__.1} parent=5 // pred_check_branch
      %391 = sbr.rel (%p388) target = $region72
    $region71: #{a_call__.1} parent=5 // pred_region
      %s392 = ssub.s32 %s19, 1
      %p393 = scmp.lt.s32.totalorder %s24, 1
      %s394 = scalar_select %p393, %s24, 1
      %s395 = smul.addr %s394, 32
      %s396 = smul.addr %s395, 8
      %s397 = scalar_lea.vmem %s0, %s396
      %p398 = pneg %p45
      %p399 = pneg %p42
      %p400 = pneg %p66
      %p401 = pneg %p63
      %p402 = pneg %p87
      %p403 = pneg %p84
      %p404 = pneg %p108
      %p405 = pneg %p105
      %p406 = pneg %p129
      %p407 = pneg %p126
      %p408 = pneg %p150
      %p409 = pneg %p147
      %p410 = pneg %p171
      %p411 = pneg %p168
      %p412 = pneg %p192
      %p413 = pneg %p189
      %p414 = pneg %p213
      %p415 = pneg %p210
      %p416 = pneg %p234
      %p417 = pneg %p231
      %p418 = pneg %p255
      %p419 = pneg %p252
      %p420 = pneg %p276
      %p421 = pneg %p273
      %p422 = pneg %p297
      %p423 = pneg %p294
      %p424 = pneg %p323
      %p425 = pneg %p320
      %p426 = scmp.lt.s32.totalorder %s24, 1
      %s427 = scalar_select %p426, %s24, 1
      %s428 = smul.addr %s427, 2
      %s429 = smul.addr %s428, 4
      %s430 = scalar_lea.vmem %s13, %s429
      %p431 = scmp.lt.s32.totalorder %s24, 1
      %s432 = scalar_select %p431, %s24, 1
      %s433 = smul.addr %s432, 32
      %s434 = smul.addr %s433, 8
      %s435 = scalar_lea.vmem %s0, %s434
      %p436 = scmp.lt.s32.totalorder %s24, 1
      %s437 = scalar_select %p436, %s24, 1
      %s438 = smul.addr %s437, 2
      %s439 = smul.addr %s438, 4
      %s440 = scalar_lea.vmem %s13, %s439
      %vm442 = vcmask 261120
      %443 = vst.msk [vmem:[#allocation2] sm:$0xff] %vm442, 0.0
      %444 = vst.msk [vmem:[#allocation2 + $0x8] sm:$0xff] %vm442, 0.0
      %vm445 = vcmask 254976
      %446 = vst.msk [vmem:[#allocation2 + $0x10] sm:$0x3] %vm445, 0.0
      %447 = vst.msk [vmem:[#allocation2 + $0x18] sm:$0xff] %vm442, 0.0
      %448 = vst.msk [vmem:[#allocation2 + $0x20] sm:$0xff] %vm442, 0.0
      %449 = vst.msk [vmem:[#allocation2 + $0x28] sm:$0x3] %vm445, 0.0
      %450 = vst.msk [vmem:[#allocation2 + $0x30] sm:$0xff] %vm442, 0.0
      %451 = vst.msk [vmem:[#allocation2 + $0x38] sm:$0xff] %vm442, 0.0
      %452 = vst.msk [vmem:[#allocation2 + $0x40] sm:$0x3] %vm445, 0.0
      %453 = vst.msk [vmem:[#allocation2 + $0x48] sm:$0xff] %vm442, 0.0
      %454 = vst.msk [vmem:[#allocation2 + $0x50] sm:$0xff] %vm442, 0.0
      %455 = vst.msk [vmem:[#allocation2 + $0x58] sm:$0x3] %vm445, 0.0
      %456 = vst.msk [vmem:[#allocation2 + $0x60] sm:$0xff] %vm442, 0.0
      %457 = vst.msk [vmem:[#allocation2 + $0x68] sm:$0xff] %vm442, 0.0
      %458 = vst.msk [vmem:[#allocation2 + $0x70] sm:$0x3] %vm445, 0.0
      %459 = vst.msk [vmem:[#allocation2 + $0x78] sm:$0xff] %vm442, 0.0
      %460 = vst.msk [vmem:[#allocation2 + $0x80] sm:$0xff] %vm442, 0.0
      %461 = vst.msk [vmem:[#allocation2 + $0x88] sm:$0x3] %vm445, 0.0
      %462 = vst.msk [vmem:[#allocation2 + $0x90] sm:$0xff] %vm442, 0.0
      %463 = vst.msk [vmem:[#allocation2 + $0x98] sm:$0xff] %vm442, 0.0
      %464 = vst.msk [vmem:[#allocation2 + $0xa0] sm:$0x3] %vm445, 0.0
      %465 = vst.msk [vmem:[#allocation2 + $0xa8] sm:$0xff] %vm442, 0.0
      %466 = vst.msk [vmem:[#allocation2 + $0xb0] sm:$0xff] %vm442, 0.0
      %467 = vst.msk [vmem:[#allocation2 + $0xb8] sm:$0x3] %vm445, 0.0
      %468 = vst.msk [vmem:[#allocation2 + $0xc0] sm:$0xff] %vm442, 0.0
      %469 = vst.msk [vmem:[#allocation2 + $0xc8] sm:$0xff] %vm442, 0.0
      %470 = vst.msk [vmem:[#allocation2 + $0xd0] sm:$0x3] %vm445, 0.0
      %471 = vst.msk [vmem:[#allocation2 + $0xd8] sm:$0xff] %vm442, 0.0
      %472 = vst.msk [vmem:[#allocation2 + $0xe0] sm:$0xff] %vm442, 0.0
      %473 = vst.msk [vmem:[#allocation2 + $0xe8] sm:$0x3] %vm445, 0.0
      %474 = vst.msk [vmem:[#allocation2 + $0xf0] sm:$0xff] %vm442, 0.0
      %475 = vst.msk [vmem:[#allocation2 + $0xf8] sm:$0xff] %vm442, 0.0
      %476 = vst.msk [vmem:[#allocation2 + $0x100] sm:$0x3] %vm445, 0.0
      %477 = vst.msk [vmem:[#allocation2 + $0x108] sm:$0xff] %vm442, 0.0
      %478 = vst.msk [vmem:[#allocation2 + $0x110] sm:$0xff] %vm442, 0.0
      %479 = vst.msk [vmem:[#allocation2 + $0x118] sm:$0x3] %vm445, 0.0
      %480 = vst.msk [vmem:[#allocation2 + $0x120] sm:$0xff] %vm442, 0.0
      %481 = vst.msk [vmem:[#allocation2 + $0x128] sm:$0xff] %vm442, 0.0
      %482 = vst.msk [vmem:[#allocation2 + $0x130] sm:$0x3] %vm445, 0.0
      %483 = vst.msk [vmem:[#allocation2 + $0x138] sm:$0xff] %vm442, 0.0
      %484 = vst.msk [vmem:[#allocation2 + $0x140] sm:$0xff] %vm442, 0.0
      %485 = vst.msk [vmem:[#allocation2 + $0x148] sm:$0x3] %vm445, 0.0
      %486 = vst.msk [vmem:[#allocation2 + $0x150] sm:$0xff] %vm442, 0.0
      %487 = vst.msk [vmem:[#allocation2 + $0x158] sm:$0xff] %vm442, 0.0
      %488 = vst.msk [vmem:[#allocation2 + $0x160] sm:$0x3] %vm445, 0.0
      %489 = vst.msk [vmem:[#allocation2 + $0x168] sm:$0xff] %vm442, 0.0
      %490 = vst.msk [vmem:[#allocation2 + $0x170] sm:$0xff] %vm442, 0.0
      %491 = vst.msk [vmem:[#allocation2 + $0x178] sm:$0x3] %vm445, 0.0
      %492 = vst.msk [vmem:[#allocation2 + $0x180] sm:$0xff] %vm442, 0.0
      %493 = vst.msk [vmem:[#allocation2 + $0x188] sm:$0xff] %vm442, 0.0
      %494 = vst.msk [vmem:[#allocation2 + $0x190] sm:$0x3] %vm445, 0.0
      %495 = vst.msk [vmem:[#allocation2 + $0x198] sm:$0xff] %vm442, 0.0
      %496 = vst.msk [vmem:[#allocation2 + $0x1a0] sm:$0xff] %vm442, 0.0
      %497 = vst.msk [vmem:[#allocation2 + $0x1a8] sm:$0x3] %vm445, 0.0
      %498 = vst.msk [vmem:[#allocation3] sm:$0xff] %vm442, 0.0
      %499 = vst.msk [vmem:[#allocation3 + $0x8] sm:$0x3] %vm445, 0.0
      %500 = vst.msk [vmem:[#allocation3 + $0x10] sm:$0xff] %vm442, 0.0
      %501 = vst.msk [vmem:[#allocation3 + $0x18] sm:$0x3] %vm445, 0.0
      %502 = vst.msk [vmem:[#allocation3 + $0x20] sm:$0xff] %vm442, 0.0
      %503 = vst.msk [vmem:[#allocation3 + $0x28] sm:$0x3] %vm445, 0.0
      %504 = vst.msk [vmem:[#allocation3 + $0x30] sm:$0xff] %vm442, 0.0
      %505 = vst.msk [vmem:[#allocation3 + $0x38] sm:$0x3] %vm445, 0.0
      %506 = vst.msk [vmem:[#allocation3 + $0x40] sm:$0xff] %vm442, 0.0
      %507 = vst.msk [vmem:[#allocation3 + $0x48] sm:$0x3] %vm445, 0.0
      %508 = vst.msk [vmem:[#allocation3 + $0x50] sm:$0xff] %vm442, 0.0
      %509 = vst.msk [vmem:[#allocation3 + $0x58] sm:$0x3] %vm445, 0.0
      %510 = vst.msk [vmem:[#allocation3 + $0x60] sm:$0xff] %vm442, 0.0
      %511 = vst.msk [vmem:[#allocation3 + $0x68] sm:$0x3] %vm445, 0.0
      %512 = vst.msk [vmem:[#allocation3 + $0x70] sm:$0xff] %vm442, 0.0
      %513 = vst.msk [vmem:[#allocation3 + $0x78] sm:$0x3] %vm445, 0.0
      %514 = vst.msk [vmem:[#allocation3 + $0x80] sm:$0xff] %vm442, 0.0
      %515 = vst.msk [vmem:[#allocation3 + $0x88] sm:$0x3] %vm445, 0.0
      %516 = vst.msk [vmem:[#allocation3 + $0x90] sm:$0xff] %vm442, 0.0
      %517 = vst.msk [vmem:[#allocation3 + $0x98] sm:$0x3] %vm445, 0.0
      %v518 = vld [vmem:[%s435] sm:$0xff]
      %v519 = vld [vmem:[%s435 + $0x8] sm:$0xff]
      %v520 = vld [vmem:[%s435 + $0x10] sm:$0xff]
      %v521 = vld [vmem:[%s435 + $0x18] sm:$0xff]
      %v522 = vld [vmem:[%s435 + $0x20] sm:$0xff]
      %v523 = vld [vmem:[%s435 + $0x28] sm:$0xff]
      %v524 = vld [vmem:[%s435 + $0x30] sm:$0xff]
      %v525 = vld [vmem:[%s435 + $0x38] sm:$0xff]
      %v526 = vld [vmem:[%s435 + $0x40] sm:$0xff]
      %v527 = vld [vmem:[%s435 + $0x48] sm:$0xff]
      %v528 = vld [vmem:[%s435 + $0x50] sm:$0xff]
      %v529 = vld [vmem:[%s435 + $0x58] sm:$0xff]
      %v530 = vld [vmem:[%s435 + $0x60] sm:$0xff]
      %v531 = vld [vmem:[%s435 + $0x68] sm:$0xff]
      %v532 = vld [vmem:[%s435 + $0x70] sm:$0xff]
      %v533 = vld [vmem:[%s435 + $0x78] sm:$0xff]
      %v534 = vld [vmem:[%s435 + $0x80] sm:$0xff]
      %v535 = vld [vmem:[%s435 + $0x88] sm:$0xff]
      %v536 = vld [vmem:[%s435 + $0x90] sm:$0xff]
      %v537 = vld [vmem:[%s435 + $0x98] sm:$0xff]
      %v538 = vld [vmem:[%s435 + $0xa0] sm:$0xff]
      %v539 = vld [vmem:[%s435 + $0xa8] sm:$0xff]
      %v540 = vld [vmem:[%s435 + $0xb0] sm:$0xff]
      %v541 = vld [vmem:[%s435 + $0xb8] sm:$0xff]
      %v542 = vld [vmem:[%s435 + $0xc0] sm:$0xff]
      %v543 = vld [vmem:[%s435 + $0xc8] sm:$0xff]
      %v544 = vld [vmem:[%s435 + $0xd0] sm:$0xff]
      %v545 = vld [vmem:[%s435 + $0xd8] sm:$0xff]
      %v546 = vld [vmem:[%s435 + $0xe0] sm:$0xff]
      %v547 = vld [vmem:[%s435 + $0xe8] sm:$0xff]
      %v548 = vld [vmem:[%s435 + $0xf0] sm:$0xff]
      %v549 = vld [vmem:[%s435 + $0xf8] sm:$0xff]
      %s550 = scalar_lea.vmem [#allocation2], 24
      %551 = vst.msk [vmem:[%s550 + $0x1] sm:$0xff] %vm442, %v518
      %552 = vst.msk [vmem:[%s550 + $0x9] sm:$0xff] %vm442, %v519
      %553 = vst.msk [vmem:[%s550 + $0x19] sm:$0xff] %vm442, %v520
      %554 = vst.msk [vmem:[%s550 + $0x21] sm:$0xff] %vm442, %v521
      %555 = vst.msk [vmem:[%s550 + $0x31] sm:$0xff] %vm442, %v522
      %556 = vst.msk [vmem:[%s550 + $0x39] sm:$0xff] %vm442, %v523
      %557 = vst.msk [vmem:[%s550 + $0x49] sm:$0xff] %vm442, %v524
      %558 = vst.msk [vmem:[%s550 + $0x51] sm:$0xff] %vm442, %v525
      %559 = vst.msk [vmem:[%s550 + $0x61] sm:$0xff] %vm442, %v526
      %560 = vst.msk [vmem:[%s550 + $0x69] sm:$0xff] %vm442, %v527
      %561 = vst.msk [vmem:[%s550 + $0x79] sm:$0xff] %vm442, %v528
      %562 = vst.msk [vmem:[%s550 + $0x81] sm:$0xff] %vm442, %v529
      %563 = vst.msk [vmem:[%s550 + $0x91] sm:$0xff] %vm442, %v530
      %564 = vst.msk [vmem:[%s550 + $0x99] sm:$0xff] %vm442, %v531
      %565 = vst.msk [vmem:[%s550 + $0xa9] sm:$0xff] %vm442, %v532
      %566 = vst.msk [vmem:[%s550 + $0xb1] sm:$0xff] %vm442, %v533
      %567 = vst.msk [vmem:[%s550 + $0xc1] sm:$0xff] %vm442, %v534
      %568 = vst.msk [vmem:[%s550 + $0xc9] sm:$0xff] %vm442, %v535
      %569 = vst.msk [vmem:[%s550 + $0xd9] sm:$0xff] %vm442, %v536
      %570 = vst.msk [vmem:[%s550 + $0xe1] sm:$0xff] %vm442, %v537
      %571 = vst.msk [vmem:[%s550 + $0xf1] sm:$0xff] %vm442, %v538
      %572 = vst.msk [vmem:[%s550 + $0xf9] sm:$0xff] %vm442, %v539
      %573 = vst.msk [vmem:[%s550 + $0x109] sm:$0xff] %vm442, %v540
      %574 = vst.msk [vmem:[%s550 + $0x111] sm:$0xff] %vm442, %v541
      %575 = vst.msk [vmem:[%s550 + $0x121] sm:$0xff] %vm442, %v542
      %576 = vst.msk [vmem:[%s550 + $0x129] sm:$0xff] %vm442, %v543
      %577 = vst.msk [vmem:[%s550 + $0x139] sm:$0xff] %vm442, %v544
      %578 = vst.msk [vmem:[%s550 + $0x141] sm:$0xff] %vm442, %v545
      %579 = vst.msk [vmem:[%s550 + $0x151] sm:$0xff] %vm442, %v546
      %580 = vst.msk [vmem:[%s550 + $0x159] sm:$0xff] %vm442, %v547
      %581 = vst.msk [vmem:[%s550 + $0x169] sm:$0xff] %vm442, %v548
      %582 = vst.msk [vmem:[%s550 + $0x171] sm:$0xff] %vm442, %v549
      %v583 = vld [vmem:[%s1] sm:$0xf]
      %v584 = vld [vmem:[%s1 + $0x4] sm:$0xf]
      %v585 = vld [vmem:[%s1 + $0x8] sm:$0xf]
      %v586 = vld [vmem:[%s1 + $0xc] sm:$0xf]
      %v587 = vld [vmem:[%s1 + $0x10] sm:$0xf]
      %v588 = vld [vmem:[%s1 + $0x14] sm:$0xf]
      %v589 = vld [vmem:[%s1 + $0x18] sm:$0xf]
      %v590 = vld [vmem:[%s1 + $0x1c] sm:$0xf]
      %v591 = vld [vmem:[%s1 + $0x20] sm:$0xf]
      %v592 = vld [vmem:[%s1 + $0x24] sm:$0xf]
      %v593 = vld [vmem:[%s1 + $0x28] sm:$0xf]
      %v594 = vld [vmem:[%s1 + $0x2c] sm:$0xf]
      %v595 = vld [vmem:[%s1 + $0x30] sm:$0xf]
      %v596 = vld [vmem:[%s1 + $0x34] sm:$0xf]
      %v597 = vld [vmem:[%s1 + $0x38] sm:$0xf]
      %v598 = vld [vmem:[%s1 + $0x3c] sm:$0xf]
      %v599 = vld [vmem:[%s1 + $0x40] sm:$0xf]
      %v600 = vld [vmem:[%s1 + $0x44] sm:$0xf]
      %v601 = vld [vmem:[%s1 + $0x48] sm:$0xf]
      %v602 = vld [vmem:[%s1 + $0x4c] sm:$0xf]
      %v603 = vld [vmem:[%s1 + $0x50] sm:$0xf]
      %v604 = vld [vmem:[%s1 + $0x54] sm:$0xf]
      %v605 = vld [vmem:[%s1 + $0x58] sm:$0xf]
      %v606 = vld [vmem:[%s1 + $0x5c] sm:$0xf]
      %v607 = vld [vmem:[%s1 + $0x60] sm:$0xf]
      %v608 = vld [vmem:[%s1 + $0x64] sm:$0xf]
      %v609 = vld [vmem:[%s1 + $0x68] sm:$0xf]
      %v610 = vld [vmem:[%s1 + $0x6c] sm:$0xf]
      %v611 = vld [vmem:[%s1 + $0x70] sm:$0xf]
      %v612 = vld [vmem:[%s1 + $0x74] sm:$0xf]
      %v613 = vld [vmem:[%s1 + $0x78] sm:$0xf]
      %v614 = vld [vmem:[%s1 + $0x7c] sm:$0xf]
      %v615 = vld [vmem:[%s1 + $0x80] sm:$0xf]
      %v616 = vld [vmem:[%s1 + $0x84] sm:$0xf]
      %v617 = vld [vmem:[%s1 + $0x88] sm:$0xf]
      %v618 = vld [vmem:[%s1 + $0x8c] sm:$0xf]
      %v619 = vld [vmem:[%s2] sm:$0x1]
      %v620 = vld [vmem:[#allocation2] sm:$0xff]
      %v621 = vld [vmem:[#allocation2 + $0x8] sm:$0xff]
      %v622 = vld [vmem:[#allocation2 + $0x18] sm:$0xff]
      %v623 = vld [vmem:[#allocation2 + $0x20] sm:$0xff]
      %v624 = vld [vmem:[#allocation2 + $0x30] sm:$0xff]
      %v625 = vld [vmem:[#allocation2 + $0x38] sm:$0xff]
      %v626 = vld [vmem:[#allocation2 + $0x48] sm:$0xff]
      %v627 = vld [vmem:[#allocation2 + $0x50] sm:$0xff]
      %v628 = vld [vmem:[#allocation2 + $0x60] sm:$0xff]
      %v629 = vld [vmem:[#allocation2 + $0x68] sm:$0xff]
      %v630 = vld [vmem:[#allocation2 + $0x78] sm:$0xff]
      %v631 = vld [vmem:[#allocation2 + $0x80] sm:$0xff]
      %v632 = vld [vmem:[#allocation2 + $0x90] sm:$0xff]
      %v633 = vld [vmem:[#allocation2 + $0x98] sm:$0xff]
      %v634 = vld [vmem:[#allocation2 + $0xa8] sm:$0xff]
      %v635 = vld [vmem:[#allocation2 + $0xb0] sm:$0xff]
      %v636 = vld [vmem:[#allocation2 + $0xc0] sm:$0xff]
      %v637 = vld [vmem:[#allocation2 + $0xc8] sm:$0xff]
      %v638 = vld [vmem:[#allocation2 + $0xd8] sm:$0xff]
      %v639 = vld [vmem:[#allocation2 + $0xe0] sm:$0xff]
      %v640 = vld [vmem:[#allocation2 + $0xf0] sm:$0xff]
      %v641 = vld [vmem:[#allocation2 + $0xf8] sm:$0xff]
      %v642 = vld [vmem:[#allocation2 + $0x108] sm:$0xff]
      %v643 = vld [vmem:[#allocation2 + $0x110] sm:$0xff]
      %v644 = vld [vmem:[#allocation2 + $0x120] sm:$0xff]
      %v645 = vld [vmem:[#allocation2 + $0x128] sm:$0xff]
      %v646 = vld [vmem:[#allocation2 + $0x138] sm:$0xff]
      %v647 = vld [vmem:[#allocation2 + $0x140] sm:$0xff]
      %v648 = vld [vmem:[#allocation2 + $0x150] sm:$0xff]
      %v649 = vld [vmem:[#allocation2 + $0x158] sm:$0xff]
      %v650 = vld [vmem:[#allocation2 + $0x168] sm:$0xff]
      %v651 = vld [vmem:[#allocation2 + $0x170] sm:$0xff]
      %v652 = vpack.c.bf16 %v620, %v620
      %v653 = vpack.c.bf16 %v621, %v621
      %v654 = vpack.c.bf16 %v622, %v622
      %v655 = vpack.c.bf16 %v623, %v623
      %v656 = vpack.c.bf16 %v624, %v624
      %v657 = vpack.c.bf16 %v625, %v625
      %v658 = vpack.c.bf16 %v626, %v626
      %v659 = vpack.c.bf16 %v627, %v627
      %v660 = vpack.c.bf16 %v628, %v628
      %v661 = vpack.c.bf16 %v629, %v629
      %v662 = vpack.c.bf16 %v630, %v630
      %v663 = vpack.c.bf16 %v631, %v631
      %v664 = vpack.c.bf16 %v632, %v632
      %v665 = vpack.c.bf16 %v633, %v633
      %v666 = vpack.c.bf16 %v634, %v634
      %v667 = vpack.c.bf16 %v635, %v635
      %v668 = vpack.c.bf16 %v636, %v636
      %v669 = vpack.c.bf16 %v637, %v637
      %v670 = vpack.c.bf16 %v638, %v638
      %v671 = vpack.c.bf16 %v639, %v639
      %v672 = vpack.c.bf16 %v640, %v640
      %v673 = vpack.c.bf16 %v641, %v641
      %v674 = vpack.c.bf16 %v642, %v642
      %v675 = vpack.c.bf16 %v643, %v643
      %v676 = vpack.c.bf16 %v644, %v644
      %v677 = vpack.c.bf16 %v645, %v645
      %v678 = vpack.c.bf16 %v646, %v646
      %v679 = vpack.c.bf16 %v647, %v647
      %v680 = vpack.c.bf16 %v648, %v648
      %v681 = vpack.c.bf16 %v649, %v649
      %v682 = vpack.c.bf16 %v650, %v650
      %v683 = vpack.c.bf16 %v651, %v651
      %v684 = vld [vmem:[#allocation2 + $0x1] sm:$0xff]
      %v685 = vld [vmem:[#allocation2 + $0x9] sm:$0xff]
      %v686 = vld [vmem:[#allocation2 + $0x19] sm:$0xff]
      %v687 = vld [vmem:[#allocation2 + $0x21] sm:$0xff]
      %v688 = vld [vmem:[#allocation2 + $0x31] sm:$0xff]
      %v689 = vld [vmem:[#allocation2 + $0x39] sm:$0xff]
      %v690 = vld [vmem:[#allocation2 + $0x49] sm:$0xff]
      %v691 = vld [vmem:[#allocation2 + $0x51] sm:$0xff]
      %v692 = vld [vmem:[#allocation2 + $0x61] sm:$0xff]
      %v693 = vld [vmem:[#allocation2 + $0x69] sm:$0xff]
      %v694 = vld [vmem:[#allocation2 + $0x79] sm:$0xff]
      %v695 = vld [vmem:[#allocation2 + $0x81] sm:$0xff]
      %v696 = vld [vmem:[#allocation2 + $0x91] sm:$0xff]
      %v697 = vld [vmem:[#allocation2 + $0x99] sm:$0xff]
      %v698 = vld [vmem:[#allocation2 + $0xa9] sm:$0xff]
      %v699 = vld [vmem:[#allocation2 + $0xb1] sm:$0xff]
      %v700 = vld [vmem:[#allocation2 + $0xc1] sm:$0xff]
      %v701 = vld [vmem:[#allocation2 + $0xc9] sm:$0xff]
      %v702 = vld [vmem:[#allocation2 + $0xd9] sm:$0xff]
      %v703 = vld [vmem:[#allocation2 + $0xe1] sm:$0xff]
      %v704 = vld [vmem:[#allocation2 + $0xf1] sm:$0xff]
      %v705 = vld [vmem:[#allocation2 + $0xf9] sm:$0xff]
      %v706 = vld [vmem:[#allocation2 + $0x109] sm:$0xff]
      %v707 = vld [vmem:[#allocation2 + $0x111] sm:$0xff]
      %v708 = vld [vmem:[#allocation2 + $0x121] sm:$0xff]
      %v709 = vld [vmem:[#allocation2 + $0x129] sm:$0xff]
      %v710 = vld [vmem:[#allocation2 + $0x139] sm:$0xff]
      %v711 = vld [vmem:[#allocation2 + $0x141] sm:$0xff]
      %v712 = vld [vmem:[#allocation2 + $0x151] sm:$0xff]
      %v713 = vld [vmem:[#allocation2 + $0x159] sm:$0xff]
      %v714 = vld [vmem:[#allocation2 + $0x169] sm:$0xff]
      %v715 = vld [vmem:[#allocation2 + $0x171] sm:$0xff]
      %v716 = vpack.c.bf16 %v684, %v684
      %v717 = vpack.c.bf16 %v685, %v685
      %v718 = vpack.c.bf16 %v686, %v686
      %v719 = vpack.c.bf16 %v687, %v687
      %v720 = vpack.c.bf16 %v688, %v688
      %v721 = vpack.c.bf16 %v689, %v689
      %v722 = vpack.c.bf16 %v690, %v690
      %v723 = vpack.c.bf16 %v691, %v691
      %v724 = vpack.c.bf16 %v692, %v692
      %v725 = vpack.c.bf16 %v693, %v693
      %v726 = vpack.c.bf16 %v694, %v694
      %v727 = vpack.c.bf16 %v695, %v695
      %v728 = vpack.c.bf16 %v696, %v696
      %v729 = vpack.c.bf16 %v697, %v697
      %v730 = vpack.c.bf16 %v698, %v698
      %v731 = vpack.c.bf16 %v699, %v699
      %v732 = vpack.c.bf16 %v700, %v700
      %v733 = vpack.c.bf16 %v701, %v701
      %v734 = vpack.c.bf16 %v702, %v702
      %v735 = vpack.c.bf16 %v703, %v703
      %v736 = vpack.c.bf16 %v704, %v704
      %v737 = vpack.c.bf16 %v705, %v705
      %v738 = vpack.c.bf16 %v706, %v706
      %v739 = vpack.c.bf16 %v707, %v707
      %v740 = vpack.c.bf16 %v708, %v708
      %v741 = vpack.c.bf16 %v709, %v709
      %v742 = vpack.c.bf16 %v710, %v710
      %v743 = vpack.c.bf16 %v711, %v711
      %v744 = vpack.c.bf16 %v712, %v712
      %v745 = vpack.c.bf16 %v713, %v713
      %v746 = vpack.c.bf16 %v714, %v714
      %v747 = vpack.c.bf16 %v715, %v715
      %v748 = vld [vmem:[#allocation2 + $0x2] sm:$0xff]
      %v749 = vld [vmem:[#allocation2 + $0xa] sm:$0xff]
      %v750 = vld [vmem:[#allocation2 + $0x1a] sm:$0xff]
      %v751 = vld [vmem:[#allocation2 + $0x22] sm:$0xff]
      %v752 = vld [vmem:[#allocation2 + $0x32] sm:$0xff]
      %v753 = vld [vmem:[#allocation2 + $0x3a] sm:$0xff]
      %v754 = vld [vmem:[#allocation2 + $0x4a] sm:$0xff]
      %v755 = vld [vmem:[#allocation2 + $0x52] sm:$0xff]
      %v756 = vld [vmem:[#allocation2 + $0x62] sm:$0xff]
      %v757 = vld [vmem:[#allocation2 + $0x6a] sm:$0xff]
      %v758 = vld [vmem:[#allocation2 + $0x7a] sm:$0xff]
      %v759 = vld [vmem:[#allocation2 + $0x82] sm:$0xff]
      %v760 = vld [vmem:[#allocation2 + $0x92] sm:$0xff]
      %v761 = vld [vmem:[#allocation2 + $0x9a] sm:$0xff]
      %v762 = vld [vmem:[#allocation2 + $0xaa] sm:$0xff]
      %v763 = vld [vmem:[#allocation2 + $0xb2] sm:$0xff]
      %v764 = vld [vmem:[#allocation2 + $0xc2] sm:$0xff]
      %v765 = vld [vmem:[#allocation2 + $0xca] sm:$0xff]
      %v766 = vld [vmem:[#allocation2 + $0xda] sm:$0xff]
      %v767 = vld [vmem:[#allocation2 + $0xe2] sm:$0xff]
      %v768 = vld [vmem:[#allocation2 + $0xf2] sm:$0xff]
      %v769 = vld [vmem:[#allocation2 + $0xfa] sm:$0xff]
      %v770 = vld [vmem:[#allocation2 + $0x10a] sm:$0xff]
      %v771 = vld [vmem:[#allocation2 + $0x112] sm:$0xff]
      %v772 = vld [vmem:[#allocation2 + $0x122] sm:$0xff]
      %v773 = vld [vmem:[#allocation2 + $0x12a] sm:$0xff]
      %v774 = vld [vmem:[#allocation2 + $0x13a] sm:$0xff]
      %v775 = vld [vmem:[#allocation2 + $0x142] sm:$0xff]
      %v776 = vld [vmem:[#allocation2 + $0x152] sm:$0xff]
      %v777 = vld [vmem:[#allocation2 + $0x15a] sm:$0xff]
      %v778 = vld [vmem:[#allocation2 + $0x16a] sm:$0xff]
      %v779 = vld [vmem:[#allocation2 + $0x172] sm:$0xff]
      %v780 = vpack.c.bf16 %v748, %v748
      %v781 = vpack.c.bf16 %v749, %v749
      %v782 = vpack.c.bf16 %v750, %v750
      %v783 = vpack.c.bf16 %v751, %v751
      %v784 = vpack.c.bf16 %v752, %v752
      %v785 = vpack.c.bf16 %v753, %v753
      %v786 = vpack.c.bf16 %v754, %v754
      %v787 = vpack.c.bf16 %v755, %v755
      %v788 = vpack.c.bf16 %v756, %v756
      %v789 = vpack.c.bf16 %v757, %v757
      %v790 = vpack.c.bf16 %v758, %v758
      %v791 = vpack.c.bf16 %v759, %v759
      %v792 = vpack.c.bf16 %v760, %v760
      %v793 = vpack.c.bf16 %v761, %v761
      %v794 = vpack.c.bf16 %v762, %v762
      %v795 = vpack.c.bf16 %v763, %v763
      %v796 = vpack.c.bf16 %v764, %v764
      %v797 = vpack.c.bf16 %v765, %v765
      %v798 = vpack.c.bf16 %v766, %v766
      %v799 = vpack.c.bf16 %v767, %v767
      %v800 = vpack.c.bf16 %v768, %v768
      %v801 = vpack.c.bf16 %v769, %v769
      %v802 = vpack.c.bf16 %v770, %v770
      %v803 = vpack.c.bf16 %v771, %v771
      %v804 = vpack.c.bf16 %v772, %v772
      %v805 = vpack.c.bf16 %v773, %v773
      %v806 = vpack.c.bf16 %v774, %v774
      %v807 = vpack.c.bf16 %v775, %v775
      %v808 = vpack.c.bf16 %v776, %v776
      %v809 = vpack.c.bf16 %v777, %v777
      %v810 = vpack.c.bf16 %v778, %v778
      %v811 = vpack.c.bf16 %v779, %v779
      %v812 = vld [vmem:[%s550] sm:$0xff]
      %v813 = vld [vmem:[%s550 + $0x8] sm:$0xff]
      %v814 = vld [vmem:[%s550 + $0x18] sm:$0xff]
      %v815 = vld [vmem:[%s550 + $0x20] sm:$0xff]
      %v816 = vld [vmem:[%s550 + $0x30] sm:$0xff]
      %v817 = vld [vmem:[%s550 + $0x38] sm:$0xff]
      %v818 = vld [vmem:[%s550 + $0x48] sm:$0xff]
      %v819 = vld [vmem:[%s550 + $0x50] sm:$0xff]
      %v820 = vld [vmem:[%s550 + $0x60] sm:$0xff]
      %v821 = vld [vmem:[%s550 + $0x68] sm:$0xff]
      %v822 = vld [vmem:[%s550 + $0x78] sm:$0xff]
      %v823 = vld [vmem:[%s550 + $0x80] sm:$0xff]
      %v824 = vld [vmem:[%s550 + $0x90] sm:$0xff]
      %v825 = vld [vmem:[%s550 + $0x98] sm:$0xff]
      %v826 = vld [vmem:[%s550 + $0xa8] sm:$0xff]
      %v827 = vld [vmem:[%s550 + $0xb0] sm:$0xff]
      %v828 = vld [vmem:[%s550 + $0xc0] sm:$0xff]
      %v829 = vld [vmem:[%s550 + $0xc8] sm:$0xff]
      %v830 = vld [vmem:[%s550 + $0xd8] sm:$0xff]
      %v831 = vld [vmem:[%s550 + $0xe0] sm:$0xff]
      %v832 = vld [vmem:[%s550 + $0xf0] sm:$0xff]
      %v833 = vld [vmem:[%s550 + $0xf8] sm:$0xff]
      %v834 = vld [vmem:[%s550 + $0x108] sm:$0xff]
      %v835 = vld [vmem:[%s550 + $0x110] sm:$0xff]
      %v836 = vld [vmem:[%s550 + $0x120] sm:$0xff]
      %v837 = vld [vmem:[%s550 + $0x128] sm:$0xff]
      %v838 = vld [vmem:[%s550 + $0x138] sm:$0xff]
      %v839 = vld [vmem:[%s550 + $0x140] sm:$0xff]
      %v840 = vld [vmem:[%s550 + $0x150] sm:$0xff]
      %v841 = vld [vmem:[%s550 + $0x158] sm:$0xff]
      %v842 = vld [vmem:[%s550 + $0x168] sm:$0xff]
      %v843 = vld [vmem:[%s550 + $0x170] sm:$0xff]
      %v844 = vpack.c.bf16 %v812, %v812
      %v845 = vpack.c.bf16 %v813, %v813
      %v846 = vpack.c.bf16 %v814, %v814
      %v847 = vpack.c.bf16 %v815, %v815
      %v848 = vpack.c.bf16 %v816, %v816
      %v849 = vpack.c.bf16 %v817, %v817
      %v850 = vpack.c.bf16 %v818, %v818
      %v851 = vpack.c.bf16 %v819, %v819
      %v852 = vpack.c.bf16 %v820, %v820
      %v853 = vpack.c.bf16 %v821, %v821
      %v854 = vpack.c.bf16 %v822, %v822
      %v855 = vpack.c.bf16 %v823, %v823
      %v856 = vpack.c.bf16 %v824, %v824
      %v857 = vpack.c.bf16 %v825, %v825
      %v858 = vpack.c.bf16 %v826, %v826
      %v859 = vpack.c.bf16 %v827, %v827
      %v860 = vpack.c.bf16 %v828, %v828
      %v861 = vpack.c.bf16 %v829, %v829
      %v862 = vpack.c.bf16 %v830, %v830
      %v863 = vpack.c.bf16 %v831, %v831
      %v864 = vpack.c.bf16 %v832, %v832
      %v865 = vpack.c.bf16 %v833, %v833
      %v866 = vpack.c.bf16 %v834, %v834
      %v867 = vpack.c.bf16 %v835, %v835
      %v868 = vpack.c.bf16 %v836, %v836
      %v869 = vpack.c.bf16 %v837, %v837
      %v870 = vpack.c.bf16 %v838, %v838
      %v871 = vpack.c.bf16 %v839, %v839
      %v872 = vpack.c.bf16 %v840, %v840
      %v873 = vpack.c.bf16 %v841, %v841
      %v874 = vpack.c.bf16 %v842, %v842
      %v875 = vpack.c.bf16 %v843, %v843
      %v876 = vld [vmem:[%s550 + $0x1] sm:$0xff]
      %v877 = vld [vmem:[%s550 + $0x9] sm:$0xff]
      %v878 = vld [vmem:[%s550 + $0x19] sm:$0xff]
      %v879 = vld [vmem:[%s550 + $0x21] sm:$0xff]
      %v880 = vld [vmem:[%s550 + $0x31] sm:$0xff]
      %v881 = vld [vmem:[%s550 + $0x39] sm:$0xff]
      %v882 = vld [vmem:[%s550 + $0x49] sm:$0xff]
      %v883 = vld [vmem:[%s550 + $0x51] sm:$0xff]
      %v884 = vld [vmem:[%s550 + $0x61] sm:$0xff]
      %v885 = vld [vmem:[%s550 + $0x69] sm:$0xff]
      %v886 = vld [vmem:[%s550 + $0x79] sm:$0xff]
      %v887 = vld [vmem:[%s550 + $0x81] sm:$0xff]
      %v888 = vld [vmem:[%s550 + $0x91] sm:$0xff]
      %v889 = vld [vmem:[%s550 + $0x99] sm:$0xff]
      %v890 = vld [vmem:[%s550 + $0xa9] sm:$0xff]
      %v891 = vld [vmem:[%s550 + $0xb1] sm:$0xff]
      %v892 = vld [vmem:[%s550 + $0xc1] sm:$0xff]
      %v893 = vld [vmem:[%s550 + $0xc9] sm:$0xff]
      %v894 = vld [vmem:[%s550 + $0xd9] sm:$0xff]
      %v895 = vld [vmem:[%s550 + $0xe1] sm:$0xff]
      %v896 = vld [vmem:[%s550 + $0xf1] sm:$0xff]
      %v897 = vld [vmem:[%s550 + $0xf9] sm:$0xff]
      %v898 = vld [vmem:[%s550 + $0x109] sm:$0xff]
      %v899 = vld [vmem:[%s550 + $0x111] sm:$0xff]
      %v900 = vld [vmem:[%s550 + $0x121] sm:$0xff]
      %v901 = vld [vmem:[%s550 + $0x129] sm:$0xff]
      %v902 = vld [vmem:[%s550 + $0x139] sm:$0xff]
      %v903 = vld [vmem:[%s550 + $0x141] sm:$0xff]
      %v904 = vld [vmem:[%s550 + $0x151] sm:$0xff]
      %v905 = vld [vmem:[%s550 + $0x159] sm:$0xff]
      %v906 = vld [vmem:[%s550 + $0x169] sm:$0xff]
      %v907 = vld [vmem:[%s550 + $0x171] sm:$0xff]
      %v908 = vpack.c.bf16 %v876, %v876
      %v909 = vpack.c.bf16 %v877, %v877
      %v910 = vpack.c.bf16 %v878, %v878
      %v911 = vpack.c.bf16 %v879, %v879
      %v912 = vpack.c.bf16 %v880, %v880
      %v913 = vpack.c.bf16 %v881, %v881
      %v914 = vpack.c.bf16 %v882, %v882
      %v915 = vpack.c.bf16 %v883, %v883
      %v916 = vpack.c.bf16 %v884, %v884
      %v917 = vpack.c.bf16 %v885, %v885
      %v918 = vpack.c.bf16 %v886, %v886
      %v919 = vpack.c.bf16 %v887, %v887
      %v920 = vpack.c.bf16 %v888, %v888
      %v921 = vpack.c.bf16 %v889, %v889
      %v922 = vpack.c.bf16 %v890, %v890
      %v923 = vpack.c.bf16 %v891, %v891
      %v924 = vpack.c.bf16 %v892, %v892
      %v925 = vpack.c.bf16 %v893, %v893
      %v926 = vpack.c.bf16 %v894, %v894
      %v927 = vpack.c.bf16 %v895, %v895
      %v928 = vpack.c.bf16 %v896, %v896
      %v929 = vpack.c.bf16 %v897, %v897
      %v930 = vpack.c.bf16 %v898, %v898
      %v931 = vpack.c.bf16 %v899, %v899
      %v932 = vpack.c.bf16 %v900, %v900
      %v933 = vpack.c.bf16 %v901, %v901
      %v934 = vpack.c.bf16 %v902, %v902
      %v935 = vpack.c.bf16 %v903, %v903
      %v936 = vpack.c.bf16 %v904, %v904
      %v937 = vpack.c.bf16 %v905, %v905
      %v938 = vpack.c.bf16 %v906, %v906
      %v939 = vpack.c.bf16 %v907, %v907
      %v940 = vld [vmem:[%s550 + $0x2] sm:$0xff]
      %v941 = vld [vmem:[%s550 + $0xa] sm:$0xff]
      %v942 = vld [vmem:[%s550 + $0x1a] sm:$0xff]
      %v943 = vld [vmem:[%s550 + $0x22] sm:$0xff]
      %v944 = vld [vmem:[%s550 + $0x32] sm:$0xff]
      %v945 = vld [vmem:[%s550 + $0x3a] sm:$0xff]
      %v946 = vld [vmem:[%s550 + $0x4a] sm:$0xff]
      %v947 = vld [vmem:[%s550 + $0x52] sm:$0xff]
      %v948 = vld [vmem:[%s550 + $0x62] sm:$0xff]
      %v949 = vld [vmem:[%s550 + $0x6a] sm:$0xff]
      %v950 = vld [vmem:[%s550 + $0x7a] sm:$0xff]
      %v951 = vld [vmem:[%s550 + $0x82] sm:$0xff]
      %v952 = vld [vmem:[%s550 + $0x92] sm:$0xff]
      %v953 = vld [vmem:[%s550 + $0x9a] sm:$0xff]
      %v954 = vld [vmem:[%s550 + $0xaa] sm:$0xff]
      %v955 = vld [vmem:[%s550 + $0xb2] sm:$0xff]
      %v956 = vld [vmem:[%s550 + $0xc2] sm:$0xff]
      %v957 = vld [vmem:[%s550 + $0xca] sm:$0xff]
      %v958 = vld [vmem:[%s550 + $0xda] sm:$0xff]
      %v959 = vld [vmem:[%s550 + $0xe2] sm:$0xff]
      %v960 = vld [vmem:[%s550 + $0xf2] sm:$0xff]
      %v961 = vld [vmem:[%s550 + $0xfa] sm:$0xff]
      %v962 = vld [vmem:[%s550 + $0x10a] sm:$0xff]
      %v963 = vld [vmem:[%s550 + $0x112] sm:$0xff]
      %v964 = vld [vmem:[%s550 + $0x122] sm:$0xff]
      %v965 = vld [vmem:[%s550 + $0x12a] sm:$0xff]
      %v966 = vld [vmem:[%s550 + $0x13a] sm:$0xff]
      %v967 = vld [vmem:[%s550 + $0x142] sm:$0xff]
      %v968 = vld [vmem:[%s550 + $0x152] sm:$0xff]
      %v969 = vld [vmem:[%s550 + $0x15a] sm:$0xff]
      %v970 = vld [vmem:[%s550 + $0x16a] sm:$0xff]
      %v971 = vld [vmem:[%s550 + $0x172] sm:$0xff]
      %v972 = vpack.c.bf16 %v940, %v940
      %v973 = vpack.c.bf16 %v941, %v941
      %v974 = vpack.c.bf16 %v942, %v942
      %v975 = vpack.c.bf16 %v943, %v943
      %v976 = vpack.c.bf16 %v944, %v944
      %v977 = vpack.c.bf16 %v945, %v945
      %v978 = vpack.c.bf16 %v946, %v946
      %v979 = vpack.c.bf16 %v947, %v947
      %v980 = vpack.c.bf16 %v948, %v948
      %v981 = vpack.c.bf16 %v949, %v949
      %v982 = vpack.c.bf16 %v950, %v950
      %v983 = vpack.c.bf16 %v951, %v951
      %v984 = vpack.c.bf16 %v952, %v952
      %v985 = vpack.c.bf16 %v953, %v953
      %v986 = vpack.c.bf16 %v954, %v954
      %v987 = vpack.c.bf16 %v955, %v955
      %v988 = vpack.c.bf16 %v956, %v956
      %v989 = vpack.c.bf16 %v957, %v957
      %v990 = vpack.c.bf16 %v958, %v958
      %v991 = vpack.c.bf16 %v959, %v959
      %v992 = vpack.c.bf16 %v960, %v960
      %v993 = vpack.c.bf16 %v961, %v961
      %v994 = vpack.c.bf16 %v962, %v962
      %v995 = vpack.c.bf16 %v963, %v963
      %v996 = vpack.c.bf16 %v964, %v964
      %v997 = vpack.c.bf16 %v965, %v965
      %v998 = vpack.c.bf16 %v966, %v966
      %v999 = vpack.c.bf16 %v967, %v967
      %v1000 = vpack.c.bf16 %v968, %v968
      %v1001 = vpack.c.bf16 %v969, %v969
      %v1002 = vpack.c.bf16 %v970, %v970
      %v1003 = vpack.c.bf16 %v971, %v971
      %s1004 = scalar_lea.vmem [#allocation2], 48
      %v1005 = vld [vmem:[%s1004] sm:$0xff]
      %v1006 = vld [vmem:[%s1004 + $0x8] sm:$0xff]
      %v1007 = vld [vmem:[%s1004 + $0x18] sm:$0xff]
      %v1008 = vld [vmem:[%s1004 + $0x20] sm:$0xff]
      %v1009 = vld [vmem:[%s1004 + $0x30] sm:$0xff]
      %v1010 = vld [vmem:[%s1004 + $0x38] sm:$0xff]
      %v1011 = vld [vmem:[%s1004 + $0x48] sm:$0xff]
      %v1012 = vld [vmem:[%s1004 + $0x50] sm:$0xff]
      %v1013 = vld [vmem:[%s1004 + $0x60] sm:$0xff]
      %v1014 = vld [vmem:[%s1004 + $0x68] sm:$0xff]
      %v1015 = vld [vmem:[%s1004 + $0x78] sm:$0xff]
      %v1016 = vld [vmem:[%s1004 + $0x80] sm:$0xff]
      %v1017 = vld [vmem:[%s1004 + $0x90] sm:$0xff]
      %v1018 = vld [vmem:[%s1004 + $0x98] sm:$0xff]
      %v1019 = vld [vmem:[%s1004 + $0xa8] sm:$0xff]
      %v1020 = vld [vmem:[%s1004 + $0xb0] sm:$0xff]
      %v1021 = vld [vmem:[%s1004 + $0xc0] sm:$0xff]
      %v1022 = vld [vmem:[%s1004 + $0xc8] sm:$0xff]
      %v1023 = vld [vmem:[%s1004 + $0xd8] sm:$0xff]
      %v1024 = vld [vmem:[%s1004 + $0xe0] sm:$0xff]
      %v1025 = vld [vmem:[%s1004 + $0xf0] sm:$0xff]
      %v1026 = vld [vmem:[%s1004 + $0xf8] sm:$0xff]
      %v1027 = vld [vmem:[%s1004 + $0x108] sm:$0xff]
      %v1028 = vld [vmem:[%s1004 + $0x110] sm:$0xff]
      %v1029 = vld [vmem:[%s1004 + $0x120] sm:$0xff]
      %v1030 = vld [vmem:[%s1004 + $0x128] sm:$0xff]
      %v1031 = vld [vmem:[%s1004 + $0x138] sm:$0xff]
      %v1032 = vld [vmem:[%s1004 + $0x140] sm:$0xff]
      %v1033 = vld [vmem:[%s1004 + $0x150] sm:$0xff]
      %v1034 = vld [vmem:[%s1004 + $0x158] sm:$0xff]
      %v1035 = vld [vmem:[%s1004 + $0x168] sm:$0xff]
      %v1036 = vld [vmem:[%s1004 + $0x170] sm:$0xff]
      %v1037 = vpack.c.bf16 %v1005, %v1005
      %v1038 = vpack.c.bf16 %v1006, %v1006
      %v1039 = vpack.c.bf16 %v1007, %v1007
      %v1040 = vpack.c.bf16 %v1008, %v1008
      %v1041 = vpack.c.bf16 %v1009, %v1009
      %v1042 = vpack.c.bf16 %v1010, %v1010
      %v1043 = vpack.c.bf16 %v1011, %v1011
      %v1044 = vpack.c.bf16 %v1012, %v1012
      %v1045 = vpack.c.bf16 %v1013, %v1013
      %v1046 = vpack.c.bf16 %v1014, %v1014
      %v1047 = vpack.c.bf16 %v1015, %v1015
      %v1048 = vpack.c.bf16 %v1016, %v1016
      %v1049 = vpack.c.bf16 %v1017, %v1017
      %v1050 = vpack.c.bf16 %v1018, %v1018
      %v1051 = vpack.c.bf16 %v1019, %v1019
      %v1052 = vpack.c.bf16 %v1020, %v1020
      %v1053 = vpack.c.bf16 %v1021, %v1021
      %v1054 = vpack.c.bf16 %v1022, %v1022
      %v1055 = vpack.c.bf16 %v1023, %v1023
      %v1056 = vpack.c.bf16 %v1024, %v1024
      %v1057 = vpack.c.bf16 %v1025, %v1025
      %v1058 = vpack.c.bf16 %v1026, %v1026
      %v1059 = vpack.c.bf16 %v1027, %v1027
      %v1060 = vpack.c.bf16 %v1028, %v1028
      %v1061 = vpack.c.bf16 %v1029, %v1029
      %v1062 = vpack.c.bf16 %v1030, %v1030
      %v1063 = vpack.c.bf16 %v1031, %v1031
      %v1064 = vpack.c.bf16 %v1032, %v1032
      %v1065 = vpack.c.bf16 %v1033, %v1033
      %v1066 = vpack.c.bf16 %v1034, %v1034
      %v1067 = vpack.c.bf16 %v1035, %v1035
      %v1068 = vpack.c.bf16 %v1036, %v1036
      %v1069 = vld [vmem:[%s1004 + $0x1] sm:$0xff]
      %v1070 = vld [vmem:[%s1004 + $0x9] sm:$0xff]
      %v1071 = vld [vmem:[%s1004 + $0x19] sm:$0xff]
      %v1072 = vld [vmem:[%s1004 + $0x21] sm:$0xff]
      %v1073 = vld [vmem:[%s1004 + $0x31] sm:$0xff]
      %v1074 = vld [vmem:[%s1004 + $0x39] sm:$0xff]
      %v1075 = vld [vmem:[%s1004 + $0x49] sm:$0xff]
      %v1076 = vld [vmem:[%s1004 + $0x51] sm:$0xff]
      %v1077 = vld [vmem:[%s1004 + $0x61] sm:$0xff]
      %v1078 = vld [vmem:[%s1004 + $0x69] sm:$0xff]
      %v1079 = vld [vmem:[%s1004 + $0x79] sm:$0xff]
      %v1080 = vld [vmem:[%s1004 + $0x81] sm:$0xff]
      %v1081 = vld [vmem:[%s1004 + $0x91] sm:$0xff]
      %v1082 = vld [vmem:[%s1004 + $0x99] sm:$0xff]
      %v1083 = vld [vmem:[%s1004 + $0xa9] sm:$0xff]
      %v1084 = vld [vmem:[%s1004 + $0xb1] sm:$0xff]
      %v1085 = vld [vmem:[%s1004 + $0xc1] sm:$0xff]
      %v1086 = vld [vmem:[%s1004 + $0xc9] sm:$0xff]
      %v1087 = vld [vmem:[%s1004 + $0xd9] sm:$0xff]
      %v1088 = vld [vmem:[%s1004 + $0xe1] sm:$0xff]
      %v1089 = vld [vmem:[%s1004 + $0xf1] sm:$0xff]
      %v1090 = vld [vmem:[%s1004 + $0xf9] sm:$0xff]
      %v1091 = vld [vmem:[%s1004 + $0x109] sm:$0xff]
      %v1092 = vld [vmem:[%s1004 + $0x111] sm:$0xff]
      %v1093 = vld [vmem:[%s1004 + $0x121] sm:$0xff]
      %v1094 = vld [vmem:[%s1004 + $0x129] sm:$0xff]
      %v1095 = vld [vmem:[%s1004 + $0x139] sm:$0xff]
      %v1096 = vld [vmem:[%s1004 + $0x141] sm:$0xff]
      %v1097 = vld [vmem:[%s1004 + $0x151] sm:$0xff]
      %v1098 = vld [vmem:[%s1004 + $0x159] sm:$0xff]
      %v1099 = vld [vmem:[%s1004 + $0x169] sm:$0xff]
      %v1100 = vld [vmem:[%s1004 + $0x171] sm:$0xff]
      %v1101 = vpack.c.bf16 %v1069, %v1069
      %v1102 = vpack.c.bf16 %v1070, %v1070
      %v1103 = vpack.c.bf16 %v1071, %v1071
      %v1104 = vpack.c.bf16 %v1072, %v1072
      %v1105 = vpack.c.bf16 %v1073, %v1073
      %v1106 = vpack.c.bf16 %v1074, %v1074
      %v1107 = vpack.c.bf16 %v1075, %v1075
      %v1108 = vpack.c.bf16 %v1076, %v1076
      %v1109 = vpack.c.bf16 %v1077, %v1077
      %v1110 = vpack.c.bf16 %v1078, %v1078
      %v1111 = vpack.c.bf16 %v1079, %v1079
      %v1112 = vpack.c.bf16 %v1080, %v1080
      %v1113 = vpack.c.bf16 %v1081, %v1081
      %v1114 = vpack.c.bf16 %v1082, %v1082
      %v1115 = vpack.c.bf16 %v1083, %v1083
      %v1116 = vpack.c.bf16 %v1084, %v1084
      %v1117 = vpack.c.bf16 %v1085, %v1085
      %v1118 = vpack.c.bf16 %v1086, %v1086
      %v1119 = vpack.c.bf16 %v1087, %v1087
      %v1120 = vpack.c.bf16 %v1088, %v1088
      %v1121 = vpack.c.bf16 %v1089, %v1089
      %v1122 = vpack.c.bf16 %v1090, %v1090
      %v1123 = vpack.c.bf16 %v1091, %v1091
      %v1124 = vpack.c.bf16 %v1092, %v1092
      %v1125 = vpack.c.bf16 %v1093, %v1093
      %v1126 = vpack.c.bf16 %v1094, %v1094
      %v1127 = vpack.c.bf16 %v1095, %v1095
      %v1128 = vpack.c.bf16 %v1096, %v1096
      %v1129 = vpack.c.bf16 %v1097, %v1097
      %v1130 = vpack.c.bf16 %v1098, %v1098
      %v1131 = vpack.c.bf16 %v1099, %v1099
      %v1132 = vpack.c.bf16 %v1100, %v1100
      %v1133 = vld [vmem:[%s1004 + $0x2] sm:$0xff]
      %v1134 = vld [vmem:[%s1004 + $0xa] sm:$0xff]
      %v1135 = vld [vmem:[%s1004 + $0x1a] sm:$0xff]
      %v1136 = vld [vmem:[%s1004 + $0x22] sm:$0xff]
      %v1137 = vld [vmem:[%s1004 + $0x32] sm:$0xff]
      %v1138 = vld [vmem:[%s1004 + $0x3a] sm:$0xff]
      %v1139 = vld [vmem:[%s1004 + $0x4a] sm:$0xff]
      %v1140 = vld [vmem:[%s1004 + $0x52] sm:$0xff]
      %v1141 = vld [vmem:[%s1004 + $0x62] sm:$0xff]
      %v1142 = vld [vmem:[%s1004 + $0x6a] sm:$0xff]
      %v1143 = vld [vmem:[%s1004 + $0x7a] sm:$0xff]
      %v1144 = vld [vmem:[%s1004 + $0x82] sm:$0xff]
      %v1145 = vld [vmem:[%s1004 + $0x92] sm:$0xff]
      %v1146 = vld [vmem:[%s1004 + $0x9a] sm:$0xff]
      %v1147 = vld [vmem:[%s1004 + $0xaa] sm:$0xff]
      %v1148 = vld [vmem:[%s1004 + $0xb2] sm:$0xff]
      %v1149 = vld [vmem:[%s1004 + $0xc2] sm:$0xff]
      %v1150 = vld [vmem:[%s1004 + $0xca] sm:$0xff]
      %v1151 = vld [vmem:[%s1004 + $0xda] sm:$0xff]
      %v1152 = vld [vmem:[%s1004 + $0xe2] sm:$0xff]
      %v1153 = vld [vmem:[%s1004 + $0xf2] sm:$0xff]
      %v1154 = vld [vmem:[%s1004 + $0xfa] sm:$0xff]
      %v1155 = vld [vmem:[%s1004 + $0x10a] sm:$0xff]
      %v1156 = vld [vmem:[%s1004 + $0x112] sm:$0xff]
      %v1157 = vld [vmem:[%s1004 + $0x122] sm:$0xff]
      %v1158 = vld [vmem:[%s1004 + $0x12a] sm:$0xff]
      %v1159 = vld [vmem:[%s1004 + $0x13a] sm:$0xff]
      %v1160 = vld [vmem:[%s1004 + $0x142] sm:$0xff]
      %v1161 = vld [vmem:[%s1004 + $0x152] sm:$0xff]
      %v1162 = vld [vmem:[%s1004 + $0x15a] sm:$0xff]
      %v1163 = vld [vmem:[%s1004 + $0x16a] sm:$0xff]
      %v1164 = vld [vmem:[%s1004 + $0x172] sm:$0xff]
      %v1165 = vpack.c.bf16 %v1133, %v1133
      %v1166 = vpack.c.bf16 %v1134, %v1134
      %v1167 = vpack.c.bf16 %v1135, %v1135
      %v1168 = vpack.c.bf16 %v1136, %v1136
      %v1169 = vpack.c.bf16 %v1137, %v1137
      %v1170 = vpack.c.bf16 %v1138, %v1138
      %v1171 = vpack.c.bf16 %v1139, %v1139
      %v1172 = vpack.c.bf16 %v1140, %v1140
      %v1173 = vpack.c.bf16 %v1141, %v1141
      %v1174 = vpack.c.bf16 %v1142, %v1142
      %v1175 = vpack.c.bf16 %v1143, %v1143
      %v1176 = vpack.c.bf16 %v1144, %v1144
      %v1177 = vpack.c.bf16 %v1145, %v1145
      %v1178 = vpack.c.bf16 %v1146, %v1146
      %v1179 = vpack.c.bf16 %v1147, %v1147
      %v1180 = vpack.c.bf16 %v1148, %v1148
      %v1181 = vpack.c.bf16 %v1149, %v1149
      %v1182 = vpack.c.bf16 %v1150, %v1150
      %v1183 = vpack.c.bf16 %v1151, %v1151
      %v1184 = vpack.c.bf16 %v1152, %v1152
      %v1185 = vpack.c.bf16 %v1153, %v1153
      %v1186 = vpack.c.bf16 %v1154, %v1154
      %v1187 = vpack.c.bf16 %v1155, %v1155
      %v1188 = vpack.c.bf16 %v1156, %v1156
      %v1189 = vpack.c.bf16 %v1157, %v1157
      %v1190 = vpack.c.bf16 %v1158, %v1158
      %v1191 = vpack.c.bf16 %v1159, %v1159
      %v1192 = vpack.c.bf16 %v1160, %v1160
      %v1193 = vpack.c.bf16 %v1161, %v1161
      %v1194 = vpack.c.bf16 %v1162, %v1162
      %v1195 = vpack.c.bf16 %v1163, %v1163
      %v1196 = vpack.c.bf16 %v1164, %v1164
      %v1229 = vunpack.c.l.b16 %v652
      %v1230 = vunpack.c.l.b16 %v653
      %v1231 = vunpack.c.l.b16 %v654
      %v1232 = vunpack.c.l.b16 %v655
      %v1233 = vunpack.c.l.b16 %v656
      %v1234 = vunpack.c.l.b16 %v657
      %v1235 = vunpack.c.l.b16 %v658
      %v1236 = vunpack.c.l.b16 %v659
      %v1237 = vunpack.c.l.b16 %v660
      %v1238 = vunpack.c.l.b16 %v661
      %v1239 = vunpack.c.l.b16 %v662
      %v1240 = vunpack.c.l.b16 %v663
      %v1241 = vunpack.c.l.b16 %v664
      %v1242 = vunpack.c.l.b16 %v665
      %v1243 = vunpack.c.l.b16 %v666
      %v1244 = vunpack.c.l.b16 %v667
      %v1245 = vunpack.c.l.b16 %v668
      %v1246 = vunpack.c.l.b16 %v669
      %v1247 = vunpack.c.l.b16 %v670
      %v1248 = vunpack.c.l.b16 %v671
      %v1249 = vunpack.c.l.b16 %v672
      %v1250 = vunpack.c.l.b16 %v673
      %v1251 = vunpack.c.l.b16 %v674
      %v1252 = vunpack.c.l.b16 %v675
      %v1253 = vunpack.c.l.b16 %v676
      %v1254 = vunpack.c.l.b16 %v677
      %v1255 = vunpack.c.l.b16 %v678
      %v1256 = vunpack.c.l.b16 %v679
      %v1257 = vunpack.c.l.b16 %v680
      %v1258 = vunpack.c.l.b16 %v681
      %v1259 = vunpack.c.l.b16 %v682
      %v1260 = vunpack.c.l.b16 %v683
      %v1261 = vpack.c.b16 %v1230, %v1229
      %v1262 = vpack.c.b16 %v1232, %v1231
      %v1263 = vpack.c.b16 %v1234, %v1233
      %v1264 = vpack.c.b16 %v1236, %v1235
      %v1265 = vpack.c.b16 %v1238, %v1237
      %v1266 = vpack.c.b16 %v1240, %v1239
      %v1267 = vpack.c.b16 %v1242, %v1241
      %v1268 = vpack.c.b16 %v1244, %v1243
      %v1269 = vpack.c.b16 %v1246, %v1245
      %v1270 = vpack.c.b16 %v1248, %v1247
      %v1271 = vpack.c.b16 %v1250, %v1249
      %v1272 = vpack.c.b16 %v1252, %v1251
      %v1273 = vpack.c.b16 %v1254, %v1253
      %v1274 = vpack.c.b16 %v1256, %v1255
      %v1275 = vpack.c.b16 %v1258, %v1257
      %v1276 = vpack.c.b16 %v1260, %v1259
      %v1309 = vunpack.c.l.b16 %v716
      %v1310 = vunpack.c.l.b16 %v717
      %v1311 = vunpack.c.l.b16 %v718
      %v1312 = vunpack.c.l.b16 %v719
      %v1313 = vunpack.c.l.b16 %v720
      %v1314 = vunpack.c.l.b16 %v721
      %v1315 = vunpack.c.l.b16 %v722
      %v1316 = vunpack.c.l.b16 %v723
      %v1317 = vunpack.c.l.b16 %v724
      %v1318 = vunpack.c.l.b16 %v725
      %v1319 = vunpack.c.l.b16 %v726
      %v1320 = vunpack.c.l.b16 %v727
      %v1321 = vunpack.c.l.b16 %v728
      %v1322 = vunpack.c.l.b16 %v729
      %v1323 = vunpack.c.l.b16 %v730
      %v1324 = vunpack.c.l.b16 %v731
      %v1325 = vunpack.c.l.b16 %v732
      %v1326 = vunpack.c.l.b16 %v733
      %v1327 = vunpack.c.l.b16 %v734
      %v1328 = vunpack.c.l.b16 %v735
      %v1329 = vunpack.c.l.b16 %v736
      %v1330 = vunpack.c.l.b16 %v737
      %v1331 = vunpack.c.l.b16 %v738
      %v1332 = vunpack.c.l.b16 %v739
      %v1333 = vunpack.c.l.b16 %v740
      %v1334 = vunpack.c.l.b16 %v741
      %v1335 = vunpack.c.l.b16 %v742
      %v1336 = vunpack.c.l.b16 %v743
      %v1337 = vunpack.c.l.b16 %v744
      %v1338 = vunpack.c.l.b16 %v745
      %v1339 = vunpack.c.l.b16 %v746
      %v1340 = vunpack.c.l.b16 %v747
      %v1341 = vpack.c.b16 %v1310, %v1309
      %v1342 = vpack.c.b16 %v1312, %v1311
      %v1343 = vpack.c.b16 %v1314, %v1313
      %v1344 = vpack.c.b16 %v1316, %v1315
      %v1345 = vpack.c.b16 %v1318, %v1317
      %v1346 = vpack.c.b16 %v1320, %v1319
      %v1347 = vpack.c.b16 %v1322, %v1321
      %v1348 = vpack.c.b16 %v1324, %v1323
      %v1349 = vpack.c.b16 %v1326, %v1325
      %v1350 = vpack.c.b16 %v1328, %v1327
      %v1351 = vpack.c.b16 %v1330, %v1329
      %v1352 = vpack.c.b16 %v1332, %v1331
      %v1353 = vpack.c.b16 %v1334, %v1333
      %v1354 = vpack.c.b16 %v1336, %v1335
      %v1355 = vpack.c.b16 %v1338, %v1337
      %v1356 = vpack.c.b16 %v1340, %v1339
      %1357 = vrot.lane.b32.xlu0 %v1341, 32
      %v1358 = vpop.permute.xlu0 %1357
      %1359 = vrot.lane.b32.xlu0 %v1342, 32
      %v1360 = vpop.permute.xlu0 %1359
      %1361 = vrot.lane.b32.xlu0 %v1343, 32
      %v1362 = vpop.permute.xlu0 %1361
      %1363 = vrot.lane.b32.xlu0 %v1344, 32
      %v1364 = vpop.permute.xlu0 %1363
      %1365 = vrot.lane.b32.xlu0 %v1345, 32
      %v1366 = vpop.permute.xlu0 %1365
      %1367 = vrot.lane.b32.xlu0 %v1346, 32
      %v1368 = vpop.permute.xlu0 %1367
      %1369 = vrot.lane.b32.xlu0 %v1347, 32
      %v1370 = vpop.permute.xlu0 %1369
      %1371 = vrot.lane.b32.xlu0 %v1348, 32
      %v1372 = vpop.permute.xlu0 %1371
      %1373 = vrot.lane.b32.xlu0 %v1349, 32
      %v1374 = vpop.permute.xlu0 %1373
      %1375 = vrot.lane.b32.xlu0 %v1350, 32
      %v1376 = vpop.permute.xlu0 %1375
      %1377 = vrot.lane.b32.xlu0 %v1351, 32
      %v1378 = vpop.permute.xlu0 %1377
      %1379 = vrot.lane.b32.xlu0 %v1352, 32
      %v1380 = vpop.permute.xlu0 %1379
      %1381 = vrot.lane.b32.xlu0 %v1353, 32
      %v1382 = vpop.permute.xlu0 %1381
      %1383 = vrot.lane.b32.xlu0 %v1354, 32
      %v1384 = vpop.permute.xlu0 %1383
      %1385 = vrot.lane.b32.xlu0 %v1355, 32
      %v1386 = vpop.permute.xlu0 %1385
      %1387 = vrot.lane.b32.xlu0 %v1356, 32
      %v1388 = vpop.permute.xlu0 %1387
      %v1421 = vunpack.c.l.b16 %v780
      %v1422 = vunpack.c.l.b16 %v781
      %v1423 = vunpack.c.l.b16 %v782
      %v1424 = vunpack.c.l.b16 %v783
      %v1425 = vunpack.c.l.b16 %v784
      %v1426 = vunpack.c.l.b16 %v785
      %v1427 = vunpack.c.l.b16 %v786
      %v1428 = vunpack.c.l.b16 %v787
      %v1429 = vunpack.c.l.b16 %v788
      %v1430 = vunpack.c.l.b16 %v789
      %v1431 = vunpack.c.l.b16 %v790
      %v1432 = vunpack.c.l.b16 %v791
      %v1433 = vunpack.c.l.b16 %v792
      %v1434 = vunpack.c.l.b16 %v793
      %v1435 = vunpack.c.l.b16 %v794
      %v1436 = vunpack.c.l.b16 %v795
      %v1437 = vunpack.c.l.b16 %v796
      %v1438 = vunpack.c.l.b16 %v797
      %v1439 = vunpack.c.l.b16 %v798
      %v1440 = vunpack.c.l.b16 %v799
      %v1441 = vunpack.c.l.b16 %v800
      %v1442 = vunpack.c.l.b16 %v801
      %v1443 = vunpack.c.l.b16 %v802
      %v1444 = vunpack.c.l.b16 %v803
      %v1445 = vunpack.c.l.b16 %v804
      %v1446 = vunpack.c.l.b16 %v805
      %v1447 = vunpack.c.l.b16 %v806
      %v1448 = vunpack.c.l.b16 %v807
      %v1449 = vunpack.c.l.b16 %v808
      %v1450 = vunpack.c.l.b16 %v809
      %v1451 = vunpack.c.l.b16 %v810
      %v1452 = vunpack.c.l.b16 %v811
      %v1453 = vpack.c.b16 %v1422, %v1421
      %v1454 = vpack.c.b16 %v1424, %v1423
      %v1455 = vpack.c.b16 %v1426, %v1425
      %v1456 = vpack.c.b16 %v1428, %v1427
      %v1457 = vpack.c.b16 %v1430, %v1429
      %v1458 = vpack.c.b16 %v1432, %v1431
      %v1459 = vpack.c.b16 %v1434, %v1433
      %v1460 = vpack.c.b16 %v1436, %v1435
      %v1461 = vpack.c.b16 %v1438, %v1437
      %v1462 = vpack.c.b16 %v1440, %v1439
      %v1463 = vpack.c.b16 %v1442, %v1441
      %v1464 = vpack.c.b16 %v1444, %v1443
      %v1465 = vpack.c.b16 %v1446, %v1445
      %v1466 = vpack.c.b16 %v1448, %v1447
      %v1467 = vpack.c.b16 %v1450, %v1449
      %v1468 = vpack.c.b16 %v1452, %v1451
      %1469 = vrot.lane.b32.xlu0 %v1453, 64
      %v1470 = vpop.permute.xlu0 %1469
      %1471 = vrot.lane.b32.xlu0 %v1454, 64
      %v1472 = vpop.permute.xlu0 %1471
      %1473 = vrot.lane.b32.xlu0 %v1455, 64
      %v1474 = vpop.permute.xlu0 %1473
      %1475 = vrot.lane.b32.xlu0 %v1456, 64
      %v1476 = vpop.permute.xlu0 %1475
      %1477 = vrot.lane.b32.xlu0 %v1457, 64
      %v1478 = vpop.permute.xlu0 %1477
      %1479 = vrot.lane.b32.xlu0 %v1458, 64
      %v1480 = vpop.permute.xlu0 %1479
      %1481 = vrot.lane.b32.xlu0 %v1459, 64
      %v1482 = vpop.permute.xlu0 %1481
      %1483 = vrot.lane.b32.xlu0 %v1460, 64
      %v1484 = vpop.permute.xlu0 %1483
      %1485 = vrot.lane.b32.xlu0 %v1461, 64
      %v1486 = vpop.permute.xlu0 %1485
      %1487 = vrot.lane.b32.xlu0 %v1462, 64
      %v1488 = vpop.permute.xlu0 %1487
      %1489 = vrot.lane.b32.xlu0 %v1463, 64
      %v1490 = vpop.permute.xlu0 %1489
      %1491 = vrot.lane.b32.xlu0 %v1464, 64
      %v1492 = vpop.permute.xlu0 %1491
      %1493 = vrot.lane.b32.xlu0 %v1465, 64
      %v1494 = vpop.permute.xlu0 %1493
      %1495 = vrot.lane.b32.xlu0 %v1466, 64
      %v1496 = vpop.permute.xlu0 %1495
      %1497 = vrot.lane.b32.xlu0 %v1467, 64
      %v1498 = vpop.permute.xlu0 %1497
      %1499 = vrot.lane.b32.xlu0 %v1468, 64
      %v1500 = vpop.permute.xlu0 %1499
      %v1533 = vunpack.c.l.b16 %v844
      %v1534 = vunpack.c.l.b16 %v845
      %v1535 = vunpack.c.l.b16 %v846
      %v1536 = vunpack.c.l.b16 %v847
      %v1537 = vunpack.c.l.b16 %v848
      %v1538 = vunpack.c.l.b16 %v849
      %v1539 = vunpack.c.l.b16 %v850
      %v1540 = vunpack.c.l.b16 %v851
      %v1541 = vunpack.c.l.b16 %v852
      %v1542 = vunpack.c.l.b16 %v853
      %v1543 = vunpack.c.l.b16 %v854
      %v1544 = vunpack.c.l.b16 %v855
      %v1545 = vunpack.c.l.b16 %v856
      %v1546 = vunpack.c.l.b16 %v857
      %v1547 = vunpack.c.l.b16 %v858
      %v1548 = vunpack.c.l.b16 %v859
      %v1549 = vunpack.c.l.b16 %v860
      %v1550 = vunpack.c.l.b16 %v861
      %v1551 = vunpack.c.l.b16 %v862
      %v1552 = vunpack.c.l.b16 %v863
      %v1553 = vunpack.c.l.b16 %v864
      %v1554 = vunpack.c.l.b16 %v865
      %v1555 = vunpack.c.l.b16 %v866
      %v1556 = vunpack.c.l.b16 %v867
      %v1557 = vunpack.c.l.b16 %v868
      %v1558 = vunpack.c.l.b16 %v869
      %v1559 = vunpack.c.l.b16 %v870
      %v1560 = vunpack.c.l.b16 %v871
      %v1561 = vunpack.c.l.b16 %v872
      %v1562 = vunpack.c.l.b16 %v873
      %v1563 = vunpack.c.l.b16 %v874
      %v1564 = vunpack.c.l.b16 %v875
      %v1565 = vpack.c.b16 %v1534, %v1533
      %v1566 = vpack.c.b16 %v1536, %v1535
      %v1567 = vpack.c.b16 %v1538, %v1537
      %v1568 = vpack.c.b16 %v1540, %v1539
      %v1569 = vpack.c.b16 %v1542, %v1541
      %v1570 = vpack.c.b16 %v1544, %v1543
      %v1571 = vpack.c.b16 %v1546, %v1545
      %v1572 = vpack.c.b16 %v1548, %v1547
      %v1573 = vpack.c.b16 %v1550, %v1549
      %v1574 = vpack.c.b16 %v1552, %v1551
      %v1575 = vpack.c.b16 %v1554, %v1553
      %v1576 = vpack.c.b16 %v1556, %v1555
      %v1577 = vpack.c.b16 %v1558, %v1557
      %v1578 = vpack.c.b16 %v1560, %v1559
      %v1579 = vpack.c.b16 %v1562, %v1561
      %v1580 = vpack.c.b16 %v1564, %v1563
      %1581 = vrot.lane.b32.xlu0 %v1565, 96
      %v1582 = vpop.permute.xlu0 %1581
      %1583 = vrot.lane.b32.xlu0 %v1566, 96
      %v1584 = vpop.permute.xlu0 %1583
      %1585 = vrot.lane.b32.xlu0 %v1567, 96
      %v1586 = vpop.permute.xlu0 %1585
      %1587 = vrot.lane.b32.xlu0 %v1568, 96
      %v1588 = vpop.permute.xlu0 %1587
      %1589 = vrot.lane.b32.xlu0 %v1569, 96
      %v1590 = vpop.permute.xlu0 %1589
      %1591 = vrot.lane.b32.xlu0 %v1570, 96
      %v1592 = vpop.permute.xlu0 %1591
      %1593 = vrot.lane.b32.xlu0 %v1571, 96
      %v1594 = vpop.permute.xlu0 %1593
      %1595 = vrot.lane.b32.xlu0 %v1572, 96
      %v1596 = vpop.permute.xlu0 %1595
      %1597 = vrot.lane.b32.xlu0 %v1573, 96
      %v1598 = vpop.permute.xlu0 %1597
      %1599 = vrot.lane.b32.xlu0 %v1574, 96
      %v1600 = vpop.permute.xlu0 %1599
      %1601 = vrot.lane.b32.xlu0 %v1575, 96
      %v1602 = vpop.permute.xlu0 %1601
      %1603 = vrot.lane.b32.xlu0 %v1576, 96
      %v1604 = vpop.permute.xlu0 %1603
      %1605 = vrot.lane.b32.xlu0 %v1577, 96
      %v1606 = vpop.permute.xlu0 %1605
      %1607 = vrot.lane.b32.xlu0 %v1578, 96
      %v1608 = vpop.permute.xlu0 %1607
      %1609 = vrot.lane.b32.xlu0 %v1579, 96
      %v1610 = vpop.permute.xlu0 %1609
      %1611 = vrot.lane.b32.xlu0 %v1580, 96
      %v1612 = vpop.permute.xlu0 %1611
      %v1645 = vunpack.c.l.b16 %v908
      %v1646 = vunpack.c.l.b16 %v909
      %v1647 = vunpack.c.l.b16 %v910
      %v1648 = vunpack.c.l.b16 %v911
      %v1649 = vunpack.c.l.b16 %v912
      %v1650 = vunpack.c.l.b16 %v913
      %v1651 = vunpack.c.l.b16 %v914
      %v1652 = vunpack.c.l.b16 %v915
      %v1653 = vunpack.c.l.b16 %v916
      %v1654 = vunpack.c.l.b16 %v917
      %v1655 = vunpack.c.l.b16 %v918
      %v1656 = vunpack.c.l.b16 %v919
      %v1657 = vunpack.c.l.b16 %v920
      %v1658 = vunpack.c.l.b16 %v921
      %v1659 = vunpack.c.l.b16 %v922
      %v1660 = vunpack.c.l.b16 %v923
      %v1661 = vunpack.c.l.b16 %v924
      %v1662 = vunpack.c.l.b16 %v925
      %v1663 = vunpack.c.l.b16 %v926
      %v1664 = vunpack.c.l.b16 %v927
      %v1665 = vunpack.c.l.b16 %v928
      %v1666 = vunpack.c.l.b16 %v929
      %v1667 = vunpack.c.l.b16 %v930
      %v1668 = vunpack.c.l.b16 %v931
      %v1669 = vunpack.c.l.b16 %v932
      %v1670 = vunpack.c.l.b16 %v933
      %v1671 = vunpack.c.l.b16 %v934
      %v1672 = vunpack.c.l.b16 %v935
      %v1673 = vunpack.c.l.b16 %v936
      %v1674 = vunpack.c.l.b16 %v937
      %v1675 = vunpack.c.l.b16 %v938
      %v1676 = vunpack.c.l.b16 %v939
      %v1677 = vpack.c.b16 %v1646, %v1645
      %v1678 = vpack.c.b16 %v1648, %v1647
      %v1679 = vpack.c.b16 %v1650, %v1649
      %v1680 = vpack.c.b16 %v1652, %v1651
      %v1681 = vpack.c.b16 %v1654, %v1653
      %v1682 = vpack.c.b16 %v1656, %v1655
      %v1683 = vpack.c.b16 %v1658, %v1657
      %v1684 = vpack.c.b16 %v1660, %v1659
      %v1685 = vpack.c.b16 %v1662, %v1661
      %v1686 = vpack.c.b16 %v1664, %v1663
      %v1687 = vpack.c.b16 %v1666, %v1665
      %v1688 = vpack.c.b16 %v1668, %v1667
      %v1689 = vpack.c.b16 %v1670, %v1669
      %v1690 = vpack.c.b16 %v1672, %v1671
      %v1691 = vpack.c.b16 %v1674, %v1673
      %v1692 = vpack.c.b16 %v1676, %v1675
      %v1725 = vunpack.c.l.b16 %v972
      %v1726 = vunpack.c.l.b16 %v973
      %v1727 = vunpack.c.l.b16 %v974
      %v1728 = vunpack.c.l.b16 %v975
      %v1729 = vunpack.c.l.b16 %v976
      %v1730 = vunpack.c.l.b16 %v977
      %v1731 = vunpack.c.l.b16 %v978
      %v1732 = vunpack.c.l.b16 %v979
      %v1733 = vunpack.c.l.b16 %v980
      %v1734 = vunpack.c.l.b16 %v981
      %v1735 = vunpack.c.l.b16 %v982
      %v1736 = vunpack.c.l.b16 %v983
      %v1737 = vunpack.c.l.b16 %v984
      %v1738 = vunpack.c.l.b16 %v985
      %v1739 = vunpack.c.l.b16 %v986
      %v1740 = vunpack.c.l.b16 %v987
      %v1741 = vunpack.c.l.b16 %v988
      %v1742 = vunpack.c.l.b16 %v989
      %v1743 = vunpack.c.l.b16 %v990
      %v1744 = vunpack.c.l.b16 %v991
      %v1745 = vunpack.c.l.b16 %v992
      %v1746 = vunpack.c.l.b16 %v993
      %v1747 = vunpack.c.l.b16 %v994
      %v1748 = vunpack.c.l.b16 %v995
      %v1749 = vunpack.c.l.b16 %v996
      %v1750 = vunpack.c.l.b16 %v997
      %v1751 = vunpack.c.l.b16 %v998
      %v1752 = vunpack.c.l.b16 %v999
      %v1753 = vunpack.c.l.b16 %v1000
      %v1754 = vunpack.c.l.b16 %v1001
      %v1755 = vunpack.c.l.b16 %v1002
      %v1756 = vunpack.c.l.b16 %v1003
      %v1757 = vpack.c.b16 %v1726, %v1725
      %v1758 = vpack.c.b16 %v1728, %v1727
      %v1759 = vpack.c.b16 %v1730, %v1729
      %v1760 = vpack.c.b16 %v1732, %v1731
      %v1761 = vpack.c.b16 %v1734, %v1733
      %v1762 = vpack.c.b16 %v1736, %v1735
      %v1763 = vpack.c.b16 %v1738, %v1737
      %v1764 = vpack.c.b16 %v1740, %v1739
      %v1765 = vpack.c.b16 %v1742, %v1741
      %v1766 = vpack.c.b16 %v1744, %v1743
      %v1767 = vpack.c.b16 %v1746, %v1745
      %v1768 = vpack.c.b16 %v1748, %v1747
      %v1769 = vpack.c.b16 %v1750, %v1749
      %v1770 = vpack.c.b16 %v1752, %v1751
      %v1771 = vpack.c.b16 %v1754, %v1753
      %v1772 = vpack.c.b16 %v1756, %v1755
      %1773 = vrot.lane.b32.xlu0 %v1757, 32
      %v1774 = vpop.permute.xlu0 %1773
      %1775 = vrot.lane.b32.xlu0 %v1758, 32
      %v1776 = vpop.permute.xlu0 %1775
      %1777 = vrot.lane.b32.xlu0 %v1759, 32
      %v1778 = vpop.permute.xlu0 %1777
      %1779 = vrot.lane.b32.xlu0 %v1760, 32
      %v1780 = vpop.permute.xlu0 %1779
      %1781 = vrot.lane.b32.xlu0 %v1761, 32
      %v1782 = vpop.permute.xlu0 %1781
      %1783 = vrot.lane.b32.xlu0 %v1762, 32
      %v1784 = vpop.permute.xlu0 %1783
      %1785 = vrot.lane.b32.xlu0 %v1763, 32
      %v1786 = vpop.permute.xlu0 %1785
      %1787 = vrot.lane.b32.xlu0 %v1764, 32
      %v1788 = vpop.permute.xlu0 %1787
      %1789 = vrot.lane.b32.xlu0 %v1765, 32
      %v1790 = vpop.permute.xlu0 %1789
      %1791 = vrot.lane.b32.xlu0 %v1766, 32
      %v1792 = vpop.permute.xlu0 %1791
      %1793 = vrot.lane.b32.xlu0 %v1767, 32
      %v1794 = vpop.permute.xlu0 %1793
      %1795 = vrot.lane.b32.xlu0 %v1768, 32
      %v1796 = vpop.permute.xlu0 %1795
      %1797 = vrot.lane.b32.xlu0 %v1769, 32
      %v1798 = vpop.permute.xlu0 %1797
      %1799 = vrot.lane.b32.xlu0 %v1770, 32
      %v1800 = vpop.permute.xlu0 %1799
      %1801 = vrot.lane.b32.xlu0 %v1771, 32
      %v1802 = vpop.permute.xlu0 %1801
      %1803 = vrot.lane.b32.xlu0 %v1772, 32
      %v1804 = vpop.permute.xlu0 %1803
      %v1837 = vunpack.c.l.b16 %v1037
      %v1838 = vunpack.c.l.b16 %v1038
      %v1839 = vunpack.c.l.b16 %v1039
      %v1840 = vunpack.c.l.b16 %v1040
      %v1841 = vunpack.c.l.b16 %v1041
      %v1842 = vunpack.c.l.b16 %v1042
      %v1843 = vunpack.c.l.b16 %v1043
      %v1844 = vunpack.c.l.b16 %v1044
      %v1845 = vunpack.c.l.b16 %v1045
      %v1846 = vunpack.c.l.b16 %v1046
      %v1847 = vunpack.c.l.b16 %v1047
      %v1848 = vunpack.c.l.b16 %v1048
      %v1849 = vunpack.c.l.b16 %v1049
      %v1850 = vunpack.c.l.b16 %v1050
      %v1851 = vunpack.c.l.b16 %v1051
      %v1852 = vunpack.c.l.b16 %v1052
      %v1853 = vunpack.c.l.b16 %v1053
      %v1854 = vunpack.c.l.b16 %v1054
      %v1855 = vunpack.c.l.b16 %v1055
      %v1856 = vunpack.c.l.b16 %v1056
      %v1857 = vunpack.c.l.b16 %v1057
      %v1858 = vunpack.c.l.b16 %v1058
      %v1859 = vunpack.c.l.b16 %v1059
      %v1860 = vunpack.c.l.b16 %v1060
      %v1861 = vunpack.c.l.b16 %v1061
      %v1862 = vunpack.c.l.b16 %v1062
      %v1863 = vunpack.c.l.b16 %v1063
      %v1864 = vunpack.c.l.b16 %v1064
      %v1865 = vunpack.c.l.b16 %v1065
      %v1866 = vunpack.c.l.b16 %v1066
      %v1867 = vunpack.c.l.b16 %v1067
      %v1868 = vunpack.c.l.b16 %v1068
      %v1869 = vpack.c.b16 %v1838, %v1837
      %v1870 = vpack.c.b16 %v1840, %v1839
      %v1871 = vpack.c.b16 %v1842, %v1841
      %v1872 = vpack.c.b16 %v1844, %v1843
      %v1873 = vpack.c.b16 %v1846, %v1845
      %v1874 = vpack.c.b16 %v1848, %v1847
      %v1875 = vpack.c.b16 %v1850, %v1849
      %v1876 = vpack.c.b16 %v1852, %v1851
      %v1877 = vpack.c.b16 %v1854, %v1853
      %v1878 = vpack.c.b16 %v1856, %v1855
      %v1879 = vpack.c.b16 %v1858, %v1857
      %v1880 = vpack.c.b16 %v1860, %v1859
      %v1881 = vpack.c.b16 %v1862, %v1861
      %v1882 = vpack.c.b16 %v1864, %v1863
      %v1883 = vpack.c.b16 %v1866, %v1865
      %v1884 = vpack.c.b16 %v1868, %v1867
      %1885 = vrot.lane.b32.xlu0 %v1869, 64
      %v1886 = vpop.permute.xlu0 %1885
      %1887 = vrot.lane.b32.xlu0 %v1870, 64
      %v1888 = vpop.permute.xlu0 %1887
      %1889 = vrot.lane.b32.xlu0 %v1871, 64
      %v1890 = vpop.permute.xlu0 %1889
      %1891 = vrot.lane.b32.xlu0 %v1872, 64
      %v1892 = vpop.permute.xlu0 %1891
      %1893 = vrot.lane.b32.xlu0 %v1873, 64
      %v1894 = vpop.permute.xlu0 %1893
      %1895 = vrot.lane.b32.xlu0 %v1874, 64
      %v1896 = vpop.permute.xlu0 %1895
      %1897 = vrot.lane.b32.xlu0 %v1875, 64
      %v1898 = vpop.permute.xlu0 %1897
      %1899 = vrot.lane.b32.xlu0 %v1876, 64
      %v1900 = vpop.permute.xlu0 %1899
      %1901 = vrot.lane.b32.xlu0 %v1877, 64
      %v1902 = vpop.permute.xlu0 %1901
      %1903 = vrot.lane.b32.xlu0 %v1878, 64
      %v1904 = vpop.permute.xlu0 %1903
      %1905 = vrot.lane.b32.xlu0 %v1879, 64
      %v1906 = vpop.permute.xlu0 %1905
      %1907 = vrot.lane.b32.xlu0 %v1880, 64
      %v1908 = vpop.permute.xlu0 %1907
      %1909 = vrot.lane.b32.xlu0 %v1881, 64
      %v1910 = vpop.permute.xlu0 %1909
      %1911 = vrot.lane.b32.xlu0 %v1882, 64
      %v1912 = vpop.permute.xlu0 %1911
      %1913 = vrot.lane.b32.xlu0 %v1883, 64
      %v1914 = vpop.permute.xlu0 %1913
      %1915 = vrot.lane.b32.xlu0 %v1884, 64
      %v1916 = vpop.permute.xlu0 %1915
      %v1949 = vunpack.c.l.b16 %v1101
      %v1950 = vunpack.c.l.b16 %v1102
      %v1951 = vunpack.c.l.b16 %v1103
      %v1952 = vunpack.c.l.b16 %v1104
      %v1953 = vunpack.c.l.b16 %v1105
      %v1954 = vunpack.c.l.b16 %v1106
      %v1955 = vunpack.c.l.b16 %v1107
      %v1956 = vunpack.c.l.b16 %v1108
      %v1957 = vunpack.c.l.b16 %v1109
      %v1958 = vunpack.c.l.b16 %v1110
      %v1959 = vunpack.c.l.b16 %v1111
      %v1960 = vunpack.c.l.b16 %v1112
      %v1961 = vunpack.c.l.b16 %v1113
      %v1962 = vunpack.c.l.b16 %v1114
      %v1963 = vunpack.c.l.b16 %v1115
      %v1964 = vunpack.c.l.b16 %v1116
      %v1965 = vunpack.c.l.b16 %v1117
      %v1966 = vunpack.c.l.b16 %v1118
      %v1967 = vunpack.c.l.b16 %v1119
      %v1968 = vunpack.c.l.b16 %v1120
      %v1969 = vunpack.c.l.b16 %v1121
      %v1970 = vunpack.c.l.b16 %v1122
      %v1971 = vunpack.c.l.b16 %v1123
      %v1972 = vunpack.c.l.b16 %v1124
      %v1973 = vunpack.c.l.b16 %v1125
      %v1974 = vunpack.c.l.b16 %v1126
      %v1975 = vunpack.c.l.b16 %v1127
      %v1976 = vunpack.c.l.b16 %v1128
      %v1977 = vunpack.c.l.b16 %v1129
      %v1978 = vunpack.c.l.b16 %v1130
      %v1979 = vunpack.c.l.b16 %v1131
      %v1980 = vunpack.c.l.b16 %v1132
      %v1981 = vpack.c.b16 %v1950, %v1949
      %v1982 = vpack.c.b16 %v1952, %v1951
      %v1983 = vpack.c.b16 %v1954, %v1953
      %v1984 = vpack.c.b16 %v1956, %v1955
      %v1985 = vpack.c.b16 %v1958, %v1957
      %v1986 = vpack.c.b16 %v1960, %v1959
      %v1987 = vpack.c.b16 %v1962, %v1961
      %v1988 = vpack.c.b16 %v1964, %v1963
      %v1989 = vpack.c.b16 %v1966, %v1965
      %v1990 = vpack.c.b16 %v1968, %v1967
      %v1991 = vpack.c.b16 %v1970, %v1969
      %v1992 = vpack.c.b16 %v1972, %v1971
      %v1993 = vpack.c.b16 %v1974, %v1973
      %v1994 = vpack.c.b16 %v1976, %v1975
      %v1995 = vpack.c.b16 %v1978, %v1977
      %v1996 = vpack.c.b16 %v1980, %v1979
      %1997 = vrot.lane.b32.xlu0 %v1981, 96
      %v1998 = vpop.permute.xlu0 %1997
      %1999 = vrot.lane.b32.xlu0 %v1982, 96
      %v2000 = vpop.permute.xlu0 %1999
      %2001 = vrot.lane.b32.xlu0 %v1983, 96
      %v2002 = vpop.permute.xlu0 %2001
      %2003 = vrot.lane.b32.xlu0 %v1984, 96
      %v2004 = vpop.permute.xlu0 %2003
      %2005 = vrot.lane.b32.xlu0 %v1985, 96
      %v2006 = vpop.permute.xlu0 %2005
      %2007 = vrot.lane.b32.xlu0 %v1986, 96
      %v2008 = vpop.permute.xlu0 %2007
      %2009 = vrot.lane.b32.xlu0 %v1987, 96
      %v2010 = vpop.permute.xlu0 %2009
      %2011 = vrot.lane.b32.xlu0 %v1988, 96
      %v2012 = vpop.permute.xlu0 %2011
      %2013 = vrot.lane.b32.xlu0 %v1989, 96
      %v2014 = vpop.permute.xlu0 %2013
      %2015 = vrot.lane.b32.xlu0 %v1990, 96
      %v2016 = vpop.permute.xlu0 %2015
      %2017 = vrot.lane.b32.xlu0 %v1991, 96
      %v2018 = vpop.permute.xlu0 %2017
      %2019 = vrot.lane.b32.xlu0 %v1992, 96
      %v2020 = vpop.permute.xlu0 %2019
      %2021 = vrot.lane.b32.xlu0 %v1993, 96
      %v2022 = vpop.permute.xlu0 %2021
      %2023 = vrot.lane.b32.xlu0 %v1994, 96
      %v2024 = vpop.permute.xlu0 %2023
      %2025 = vrot.lane.b32.xlu0 %v1995, 96
      %v2026 = vpop.permute.xlu0 %2025
      %2027 = vrot.lane.b32.xlu0 %v1996, 96
      %v2028 = vpop.permute.xlu0 %2027
      %v2061 = vunpack.c.l.b16 %v1165
      %v2062 = vunpack.c.l.b16 %v1166
      %v2063 = vunpack.c.l.b16 %v1167
      %v2064 = vunpack.c.l.b16 %v1168
      %v2065 = vunpack.c.l.b16 %v1169
      %v2066 = vunpack.c.l.b16 %v1170
      %v2067 = vunpack.c.l.b16 %v1171
      %v2068 = vunpack.c.l.b16 %v1172
      %v2069 = vunpack.c.l.b16 %v1173
      %v2070 = vunpack.c.l.b16 %v1174
      %v2071 = vunpack.c.l.b16 %v1175
      %v2072 = vunpack.c.l.b16 %v1176
      %v2073 = vunpack.c.l.b16 %v1177
      %v2074 = vunpack.c.l.b16 %v1178
      %v2075 = vunpack.c.l.b16 %v1179
      %v2076 = vunpack.c.l.b16 %v1180
      %v2077 = vunpack.c.l.b16 %v1181
      %v2078 = vunpack.c.l.b16 %v1182
      %v2079 = vunpack.c.l.b16 %v1183
      %v2080 = vunpack.c.l.b16 %v1184
      %v2081 = vunpack.c.l.b16 %v1185
      %v2082 = vunpack.c.l.b16 %v1186
      %v2083 = vunpack.c.l.b16 %v1187
      %v2084 = vunpack.c.l.b16 %v1188
      %v2085 = vunpack.c.l.b16 %v1189
      %v2086 = vunpack.c.l.b16 %v1190
      %v2087 = vunpack.c.l.b16 %v1191
      %v2088 = vunpack.c.l.b16 %v1192
      %v2089 = vunpack.c.l.b16 %v1193
      %v2090 = vunpack.c.l.b16 %v1194
      %v2091 = vunpack.c.l.b16 %v1195
      %v2092 = vunpack.c.l.b16 %v1196
      %v2093 = vpack.c.b16 %v2062, %v2061
      %v2094 = vpack.c.b16 %v2064, %v2063
      %v2095 = vpack.c.b16 %v2066, %v2065
      %v2096 = vpack.c.b16 %v2068, %v2067
      %v2097 = vpack.c.b16 %v2070, %v2069
      %v2098 = vpack.c.b16 %v2072, %v2071
      %v2099 = vpack.c.b16 %v2074, %v2073
      %v2100 = vpack.c.b16 %v2076, %v2075
      %v2101 = vpack.c.b16 %v2078, %v2077
      %v2102 = vpack.c.b16 %v2080, %v2079
      %v2103 = vpack.c.b16 %v2082, %v2081
      %v2104 = vpack.c.b16 %v2084, %v2083
      %v2105 = vpack.c.b16 %v2086, %v2085
      %v2106 = vpack.c.b16 %v2088, %v2087
      %v2107 = vpack.c.b16 %v2090, %v2089
      %v2108 = vpack.c.b16 %v2092, %v2091
      %v2111 = vsel %vm442, %v1261, %v1358
      %v2114 = vsel %vm442, %v1262, %v1360
      %v2117 = vsel %vm442, %v1263, %v1362
      %v2120 = vsel %vm442, %v1264, %v1364
      %v2123 = vsel %vm442, %v1265, %v1366
      %v2126 = vsel %vm442, %v1266, %v1368
      %v2129 = vsel %vm442, %v1267, %v1370
      %v2132 = vsel %vm442, %v1268, %v1372
      %v2135 = vsel %vm442, %v1269, %v1374
      %v2138 = vsel %vm442, %v1270, %v1376
      %v2141 = vsel %vm442, %v1271, %v1378
      %v2144 = vsel %vm442, %v1272, %v1380
      %v2147 = vsel %vm442, %v1273, %v1382
      %v2150 = vsel %vm442, %v1274, %v1384
      %v2153 = vsel %vm442, %v1275, %v1386
      %v2156 = vsel %vm442, %v1276, %v1388
      %vm2157 = vcmask 523264
      %v2159 = vsel %vm2157, %v2111, %v1470
      %v2161 = vsel %vm2157, %v2114, %v1472
      %v2163 = vsel %vm2157, %v2117, %v1474
      %v2165 = vsel %vm2157, %v2120, %v1476
      %v2167 = vsel %vm2157, %v2123, %v1478
      %v2169 = vsel %vm2157, %v2126, %v1480
      %v2171 = vsel %vm2157, %v2129, %v1482
      %v2173 = vsel %vm2157, %v2132, %v1484
      %v2175 = vsel %vm2157, %v2135, %v1486
      %v2177 = vsel %vm2157, %v2138, %v1488
      %v2179 = vsel %vm2157, %v2141, %v1490
      %v2181 = vsel %vm2157, %v2144, %v1492
      %v2183 = vsel %vm2157, %v2147, %v1494
      %v2185 = vsel %vm2157, %v2150, %v1496
      %v2187 = vsel %vm2157, %v2153, %v1498
      %v2189 = vsel %vm2157, %v2156, %v1500
      %vm2190 = vcmask 785408
      %v2192 = vsel %vm2190, %v2159, %v1582
      %v2195 = vsel %vm2190, %v2161, %v1584
      %v2198 = vsel %vm2190, %v2163, %v1586
      %v2201 = vsel %vm2190, %v2165, %v1588
      %v2204 = vsel %vm2190, %v2167, %v1590
      %v2207 = vsel %vm2190, %v2169, %v1592
      %v2210 = vsel %vm2190, %v2171, %v1594
      %v2213 = vsel %vm2190, %v2173, %v1596
      %v2216 = vsel %vm2190, %v2175, %v1598
      %v2219 = vsel %vm2190, %v2177, %v1600
      %v2222 = vsel %vm2190, %v2179, %v1602
      %v2225 = vsel %vm2190, %v2181, %v1604
      %v2228 = vsel %vm2190, %v2183, %v1606
      %v2231 = vsel %vm2190, %v2185, %v1608
      %v2234 = vsel %vm2190, %v2187, %v1610
      %v2237 = vsel %vm2190, %v2189, %v1612
      %v2241 = vsel %vm442, %v1677, %v1774
      %v2244 = vsel %vm442, %v1678, %v1776
      %v2247 = vsel %vm442, %v1679, %v1778
      %v2250 = vsel %vm442, %v1680, %v1780
      %v2253 = vsel %vm442, %v1681, %v1782
      %v2256 = vsel %vm442, %v1682, %v1784
      %v2259 = vsel %vm442, %v1683, %v1786
      %v2262 = vsel %vm442, %v1684, %v1788
      %v2265 = vsel %vm442, %v1685, %v1790
      %v2268 = vsel %vm442, %v1686, %v1792
      %v2271 = vsel %vm442, %v1687, %v1794
      %v2274 = vsel %vm442, %v1688, %v1796
      %v2277 = vsel %vm442, %v1689, %v1798
      %v2280 = vsel %vm442, %v1690, %v1800
      %v2283 = vsel %vm442, %v1691, %v1802
      %v2286 = vsel %vm442, %v1692, %v1804
      %v2288 = vsel %vm2157, %v2241, %v1886
      %v2290 = vsel %vm2157, %v2244, %v1888
      %v2292 = vsel %vm2157, %v2247, %v1890
      %v2294 = vsel %vm2157, %v2250, %v1892
      %v2296 = vsel %vm2157, %v2253, %v1894
      %v2298 = vsel %vm2157, %v2256, %v1896
      %v2300 = vsel %vm2157, %v2259, %v1898
      %v2302 = vsel %vm2157, %v2262, %v1900
      %v2304 = vsel %vm2157, %v2265, %v1902
      %v2306 = vsel %vm2157, %v2268, %v1904
      %v2308 = vsel %vm2157, %v2271, %v1906
      %v2310 = vsel %vm2157, %v2274, %v1908
      %v2312 = vsel %vm2157, %v2277, %v1910
      %v2314 = vsel %vm2157, %v2280, %v1912
      %v2316 = vsel %vm2157, %v2283, %v1914
      %v2318 = vsel %vm2157, %v2286, %v1916
      %v2320 = vsel %vm2190, %v2288, %v1998
      %v2323 = vsel %vm2190, %v2290, %v2000
      %v2326 = vsel %vm2190, %v2292, %v2002
      %v2329 = vsel %vm2190, %v2294, %v2004
      %v2332 = vsel %vm2190, %v2296, %v2006
      %v2335 = vsel %vm2190, %v2298, %v2008
      %v2338 = vsel %vm2190, %v2300, %v2010
      %v2341 = vsel %vm2190, %v2302, %v2012
      %v2344 = vsel %vm2190, %v2304, %v2014
      %v2347 = vsel %vm2190, %v2306, %v2016
      %v2350 = vsel %vm2190, %v2308, %v2018
      %v2353 = vsel %vm2190, %v2310, %v2020
      %v2356 = vsel %vm2190, %v2312, %v2022
      %v2359 = vsel %vm2190, %v2314, %v2024
      %v2362 = vsel %vm2190, %v2316, %v2026
      %v2365 = vsel %vm2190, %v2318, %v2028
      %v2368 = vperm.slane %v619, 0
      %v2406 = vunpack.c.l.b16 %v583
      %v2407 = vunpack.c.l.b16 %v584
      %v2408 = vunpack.c.l.b16 %v585
      %v2409 = vunpack.c.l.b16 %v586
      %v2410 = vunpack.c.l.b16 %v587
      %v2411 = vunpack.c.l.b16 %v588
      %v2412 = vunpack.c.l.b16 %v589
      %v2413 = vunpack.c.l.b16 %v590
      %v2414 = vunpack.c.l.b16 %v591
      %v2415 = vunpack.c.l.b16 %v592
      %v2416 = vunpack.c.l.b16 %v593
      %v2417 = vunpack.c.l.b16 %v594
      %v2418 = vunpack.c.l.b16 %v595
      %v2419 = vunpack.c.l.b16 %v596
      %v2420 = vunpack.c.l.b16 %v597
      %v2421 = vunpack.c.l.b16 %v598
      %v2422 = vunpack.c.l.b16 %v599
      %v2423 = vunpack.c.l.b16 %v600
      %v2424 = vunpack.c.l.b16 %v601
      %v2425 = vunpack.c.l.b16 %v602
      %v2426 = vunpack.c.l.b16 %v603
      %v2427 = vunpack.c.l.b16 %v604
      %v2428 = vunpack.c.l.b16 %v605
      %v2429 = vunpack.c.l.b16 %v606
      %v2430 = vunpack.c.l.b16 %v607
      %v2431 = vunpack.c.l.b16 %v608
      %v2432 = vunpack.c.l.b16 %v609
      %v2433 = vunpack.c.l.b16 %v610
      %v2434 = vunpack.c.l.b16 %v611
      %v2435 = vunpack.c.l.b16 %v612
      %v2436 = vunpack.c.l.b16 %v613
      %v2437 = vunpack.c.l.b16 %v614
      %v2438 = vunpack.c.l.b16 %v615
      %v2439 = vunpack.c.l.b16 %v616
      %v2440 = vunpack.c.l.b16 %v617
      %v2441 = vunpack.c.l.b16 %v618
      %v2442 = vpack.c.b16 %v2407, %v2406
      %v2443 = vpack.c.b16 %v2409, %v2408
      %v2444 = vpack.c.b16 %v2411, %v2410
      %v2445 = vpack.c.b16 %v2413, %v2412
      %v2446 = vpack.c.b16 %v2415, %v2414
      %v2447 = vpack.c.b16 %v2417, %v2416
      %v2448 = vpack.c.b16 %v2419, %v2418
      %v2449 = vpack.c.b16 %v2421, %v2420
      %v2450 = vpack.c.b16 %v2423, %v2422
      %v2451 = vpack.c.b16 %v2425, %v2424
      %v2452 = vpack.c.b16 %v2427, %v2426
      %v2453 = vpack.c.b16 %v2429, %v2428
      %v2454 = vpack.c.b16 %v2431, %v2430
      %v2455 = vpack.c.b16 %v2433, %v2432
      %v2456 = vpack.c.b16 %v2435, %v2434
      %v2457 = vpack.c.b16 %v2437, %v2436
      %v2458 = vpack.c.b16 %v2439, %v2438
      %v2459 = vpack.c.b16 %v2441, %v2440
      %v2479 = vsel %vm442, %v2093, 0
      %v2482 = vsel %vm442, %v2094, 0
      %v2485 = vsel %vm442, %v2095, 0
      %v2488 = vsel %vm442, %v2096, 0
      %v2491 = vsel %vm442, %v2097, 0
      %v2494 = vsel %vm442, %v2098, 0
      %v2497 = vsel %vm442, %v2099, 0
      %v2500 = vsel %vm442, %v2100, 0
      %v2503 = vsel %vm442, %v2101, 0
      %v2506 = vsel %vm442, %v2102, 0
      %v2509 = vsel %vm442, %v2103, 0
      %v2512 = vsel %vm442, %v2104, 0
      %v2515 = vsel %vm442, %v2105, 0
      %v2518 = vsel %vm442, %v2106, 0
      %v2521 = vsel %vm442, %v2107, 0
      %v2524 = vsel %vm442, %v2108, 0
      %2526 = vmatpush.bf16.msra.mxu0 %v2449
      %2527 = vmatpush.bf16.msra.mxu0 %v2448
      %2528 = vmatpush.bf16.msra.mxu0 %v2447
      %2529 = vmatpush.bf16.msra.mxu0 %v2446
      %2530 = vmatpush.bf16.msra.mxu0 %v2445
      %2531 = vmatpush.bf16.msra.mxu0 %v2444
      %2532 = vmatpush.bf16.msra.mxu0 %v2443
      %2533 = vmatpush.bf16.msra.mxu0 %v2442
      %2534 = vmatmul.bf16.gmra.mxu0 %v2192
      %v2535 = vpop.f32.mrf.mxu0
      %v2536 = vadd.f32 %v2368, %v2535
      %v2537 = vpop.f32.mrf.mxu0
      %v2538 = vadd.f32 %v2368, %v2537
      %2539 = vmatmul.bf16.gmra.mxu0 %v2195
      %v2540 = vpop.f32.mrf.mxu0
      %v2541 = vadd.f32 %v2368, %v2540
      %v2542 = vpop.f32.mrf.mxu0
      %v2543 = vadd.f32 %v2368, %v2542
      %2544 = vmatmul.bf16.gmra.mxu0 %v2198
      %v2545 = vpop.f32.mrf.mxu0
      %v2546 = vadd.f32 %v2368, %v2545
      %v2547 = vpop.f32.mrf.mxu0
      %v2548 = vadd.f32 %v2368, %v2547
      %2549 = vmatmul.bf16.gmra.mxu0 %v2201
      %v2550 = vpop.f32.mrf.mxu0
      %v2551 = vadd.f32 %v2368, %v2550
      %v2552 = vpop.f32.mrf.mxu0
      %v2553 = vadd.f32 %v2368, %v2552
      %2554 = vmatmul.bf16.gmra.mxu0 %v2204
      %v2555 = vpop.f32.mrf.mxu0
      %v2556 = vadd.f32 %v2368, %v2555
      %v2557 = vpop.f32.mrf.mxu0
      %v2558 = vadd.f32 %v2368, %v2557
      %2559 = vmatmul.bf16.gmra.mxu0 %v2207
      %v2560 = vpop.f32.mrf.mxu0
      %v2561 = vadd.f32 %v2368, %v2560
      %v2562 = vpop.f32.mrf.mxu0
      %v2563 = vadd.f32 %v2368, %v2562
      %2564 = vmatmul.bf16.gmra.mxu0 %v2210
      %v2565 = vpop.f32.mrf.mxu0
      %v2566 = vadd.f32 %v2368, %v2565
      %v2567 = vpop.f32.mrf.mxu0
      %v2568 = vadd.f32 %v2368, %v2567
      %2569 = vmatmul.bf16.gmra.mxu0 %v2213
      %v2570 = vpop.f32.mrf.mxu0
      %v2571 = vadd.f32 %v2368, %v2570
      %v2572 = vpop.f32.mrf.mxu0
      %v2573 = vadd.f32 %v2368, %v2572
      %2574 = vmatmul.bf16.gmra.mxu0 %v2216
      %v2575 = vpop.f32.mrf.mxu0
      %v2576 = vadd.f32 %v2368, %v2575
      %v2577 = vpop.f32.mrf.mxu0
      %v2578 = vadd.f32 %v2368, %v2577
      %2579 = vmatmul.bf16.gmra.mxu0 %v2219
      %v2580 = vpop.f32.mrf.mxu0
      %v2581 = vadd.f32 %v2368, %v2580
      %v2582 = vpop.f32.mrf.mxu0
      %v2583 = vadd.f32 %v2368, %v2582
      %2584 = vmatmul.bf16.gmra.mxu0 %v2222
      %v2585 = vpop.f32.mrf.mxu0
      %v2586 = vadd.f32 %v2368, %v2585
      %v2587 = vpop.f32.mrf.mxu0
      %v2588 = vadd.f32 %v2368, %v2587
      %2589 = vmatmul.bf16.gmra.mxu0 %v2225
      %v2590 = vpop.f32.mrf.mxu0
      %v2591 = vadd.f32 %v2368, %v2590
      %v2592 = vpop.f32.mrf.mxu0
      %v2593 = vadd.f32 %v2368, %v2592
      %2594 = vmatmul.bf16.gmra.mxu0 %v2228
      %v2595 = vpop.f32.mrf.mxu0
      %v2596 = vadd.f32 %v2368, %v2595
      %v2597 = vpop.f32.mrf.mxu0
      %v2598 = vadd.f32 %v2368, %v2597
      %2599 = vmatmul.bf16.gmra.mxu0 %v2231
      %v2600 = vpop.f32.mrf.mxu0
      %v2601 = vadd.f32 %v2368, %v2600
      %v2602 = vpop.f32.mrf.mxu0
      %v2603 = vadd.f32 %v2368, %v2602
      %2604 = vmatmul.bf16.gmra.mxu0 %v2234
      %v2605 = vpop.f32.mrf.mxu0
      %v2606 = vadd.f32 %v2368, %v2605
      %v2607 = vpop.f32.mrf.mxu0
      %v2608 = vadd.f32 %v2368, %v2607
      %2609 = vmatmul.bf16.gmra.mxu0 %v2237
      %v2610 = vpop.f32.mrf.mxu0
      %v2611 = vadd.f32 %v2368, %v2610
      %v2612 = vpop.f32.mrf.mxu0
      %v2613 = vadd.f32 %v2368, %v2612
      %2614 = vdwg.mxu0
      %2615 = vmatpush.bf16.msra.mxu0 %v2457
      %2616 = vmatpush.bf16.msra.mxu0 %v2456
      %2617 = vmatpush.bf16.msra.mxu0 %v2455
      %2618 = vmatpush.bf16.msra.mxu0 %v2454
      %2619 = vmatpush.bf16.msra.mxu0 %v2453
      %2620 = vmatpush.bf16.msra.mxu0 %v2452
      %2621 = vmatpush.bf16.msra.mxu0 %v2451
      %2622 = vmatpush.bf16.msra.mxu0 %v2450
      %2623 = vmatmul.bf16.gmra.mxu0 %v2320
      %v2624 = vpop.f32.mrf.mxu0
      %v2625 = vadd.f32 %v2536, %v2624
      %v2626 = vpop.f32.mrf.mxu0
      %v2627 = vadd.f32 %v2538, %v2626
      %2628 = vmatmul.bf16.gmra.mxu0 %v2323
      %v2629 = vpop.f32.mrf.mxu0
      %v2630 = vadd.f32 %v2541, %v2629
      %v2631 = vpop.f32.mrf.mxu0
      %v2632 = vadd.f32 %v2543, %v2631
      %2633 = vmatmul.bf16.gmra.mxu0 %v2326
      %v2634 = vpop.f32.mrf.mxu0
      %v2635 = vadd.f32 %v2546, %v2634
      %v2636 = vpop.f32.mrf.mxu0
      %v2637 = vadd.f32 %v2548, %v2636
      %2638 = vmatmul.bf16.gmra.mxu0 %v2329
      %v2639 = vpop.f32.mrf.mxu0
      %v2640 = vadd.f32 %v2551, %v2639
      %v2641 = vpop.f32.mrf.mxu0
      %v2642 = vadd.f32 %v2553, %v2641
      %2643 = vmatmul.bf16.gmra.mxu0 %v2332
      %v2644 = vpop.f32.mrf.mxu0
      %v2645 = vadd.f32 %v2556, %v2644
      %v2646 = vpop.f32.mrf.mxu0
      %v2647 = vadd.f32 %v2558, %v2646
      %2648 = vmatmul.bf16.gmra.mxu0 %v2335
      %v2649 = vpop.f32.mrf.mxu0
      %v2650 = vadd.f32 %v2561, %v2649
      %v2651 = vpop.f32.mrf.mxu0
      %v2652 = vadd.f32 %v2563, %v2651
      %2653 = vmatmul.bf16.gmra.mxu0 %v2338
      %v2654 = vpop.f32.mrf.mxu0
      %v2655 = vadd.f32 %v2566, %v2654
      %v2656 = vpop.f32.mrf.mxu0
      %v2657 = vadd.f32 %v2568, %v2656
      %2658 = vmatmul.bf16.gmra.mxu0 %v2341
      %v2659 = vpop.f32.mrf.mxu0
      %v2660 = vadd.f32 %v2571, %v2659
      %v2661 = vpop.f32.mrf.mxu0
      %v2662 = vadd.f32 %v2573, %v2661
      %2663 = vmatmul.bf16.gmra.mxu0 %v2344
      %v2664 = vpop.f32.mrf.mxu0
      %v2665 = vadd.f32 %v2576, %v2664
      %v2666 = vpop.f32.mrf.mxu0
      %v2667 = vadd.f32 %v2578, %v2666
      %2668 = vmatmul.bf16.gmra.mxu0 %v2347
      %v2669 = vpop.f32.mrf.mxu0
      %v2670 = vadd.f32 %v2581, %v2669
      %v2671 = vpop.f32.mrf.mxu0
      %v2672 = vadd.f32 %v2583, %v2671
      %2673 = vmatmul.bf16.gmra.mxu0 %v2350
      %v2674 = vpop.f32.mrf.mxu0
      %v2675 = vadd.f32 %v2586, %v2674
      %v2676 = vpop.f32.mrf.mxu0
      %v2677 = vadd.f32 %v2588, %v2676
      %2678 = vmatmul.bf16.gmra.mxu0 %v2353
      %v2679 = vpop.f32.mrf.mxu0
      %v2680 = vadd.f32 %v2591, %v2679
      %v2681 = vpop.f32.mrf.mxu0
      %v2682 = vadd.f32 %v2593, %v2681
      %2683 = vmatmul.bf16.gmra.mxu0 %v2356
      %v2684 = vpop.f32.mrf.mxu0
      %v2685 = vadd.f32 %v2596, %v2684
      %v2686 = vpop.f32.mrf.mxu0
      %v2687 = vadd.f32 %v2598, %v2686
      %2688 = vmatmul.bf16.gmra.mxu0 %v2359
      %v2689 = vpop.f32.mrf.mxu0
      %v2690 = vadd.f32 %v2601, %v2689
      %v2691 = vpop.f32.mrf.mxu0
      %v2692 = vadd.f32 %v2603, %v2691
      %2693 = vmatmul.bf16.gmra.mxu0 %v2362
      %v2694 = vpop.f32.mrf.mxu0
      %v2695 = vadd.f32 %v2606, %v2694
      %v2696 = vpop.f32.mrf.mxu0
      %v2697 = vadd.f32 %v2608, %v2696
      %2698 = vmatmul.bf16.gmra.mxu0 %v2365
      %v2699 = vpop.f32.mrf.mxu0
      %v2700 = vadd.f32 %v2611, %v2699
      %v2701 = vpop.f32.mrf.mxu0
      %v2702 = vadd.f32 %v2613, %v2701
      %2703 = vdwg.mxu0
      %2704 = vmatpush.bf16.msra.mxu0 0
      %2705 = vmatpush.bf16.msra.mxu0 0
      %2706 = vmatpush.bf16.msra.mxu0 0
      %2707 = vmatpush.bf16.msra.mxu0 0
      %2708 = vmatpush.bf16.msra.mxu0 0
      %2709 = vmatpush.bf16.msra.mxu0 0
      %2710 = vmatpush.bf16.msra.mxu0 %v2459
      %2711 = vmatpush.bf16.msra.mxu0 %v2458
      %2712 = vmatmul.bf16.gmra.mxu0 %v2479
      %v2713 = vpop.f32.mrf.mxu0
      %v2714 = vadd.f32 %v2625, %v2713
      %v2715 = vpop.f32.mrf.mxu0
      %v2716 = vadd.f32 %v2627, %v2715
      %2717 = vmatmul.bf16.gmra.mxu0 %v2482
      %v2718 = vpop.f32.mrf.mxu0
      %v2719 = vadd.f32 %v2630, %v2718
      %v2720 = vpop.f32.mrf.mxu0
      %v2721 = vadd.f32 %v2632, %v2720
      %2722 = vmatmul.bf16.gmra.mxu0 %v2485
      %v2723 = vpop.f32.mrf.mxu0
      %v2724 = vadd.f32 %v2635, %v2723
      %v2725 = vpop.f32.mrf.mxu0
      %v2726 = vadd.f32 %v2637, %v2725
      %2727 = vmatmul.bf16.gmra.mxu0 %v2488
      %v2728 = vpop.f32.mrf.mxu0
      %v2729 = vadd.f32 %v2640, %v2728
      %v2730 = vpop.f32.mrf.mxu0
      %v2731 = vadd.f32 %v2642, %v2730
      %2732 = vmatmul.bf16.gmra.mxu0 %v2491
      %v2733 = vpop.f32.mrf.mxu0
      %v2734 = vadd.f32 %v2645, %v2733
      %v2735 = vpop.f32.mrf.mxu0
      %v2736 = vadd.f32 %v2647, %v2735
      %2737 = vmatmul.bf16.gmra.mxu0 %v2494
      %v2738 = vpop.f32.mrf.mxu0
      %v2739 = vadd.f32 %v2650, %v2738
      %v2740 = vpop.f32.mrf.mxu0
      %v2741 = vadd.f32 %v2652, %v2740
      %2742 = vmatmul.bf16.gmra.mxu0 %v2497
      %v2743 = vpop.f32.mrf.mxu0
      %v2744 = vadd.f32 %v2655, %v2743
      %v2745 = vpop.f32.mrf.mxu0
      %v2746 = vadd.f32 %v2657, %v2745
      %2747 = vmatmul.bf16.gmra.mxu0 %v2500
      %v2748 = vpop.f32.mrf.mxu0
      %v2749 = vadd.f32 %v2660, %v2748
      %v2750 = vpop.f32.mrf.mxu0
      %v2751 = vadd.f32 %v2662, %v2750
      %2752 = vmatmul.bf16.gmra.mxu0 %v2503
      %v2753 = vpop.f32.mrf.mxu0
      %v2754 = vadd.f32 %v2665, %v2753
      %v2755 = vpop.f32.mrf.mxu0
      %v2756 = vadd.f32 %v2667, %v2755
      %2757 = vmatmul.bf16.gmra.mxu0 %v2506
      %v2758 = vpop.f32.mrf.mxu0
      %v2759 = vadd.f32 %v2670, %v2758
      %v2760 = vpop.f32.mrf.mxu0
      %v2761 = vadd.f32 %v2672, %v2760
      %2762 = vmatmul.bf16.gmra.mxu0 %v2509
      %v2763 = vpop.f32.mrf.mxu0
      %v2764 = vadd.f32 %v2675, %v2763
      %v2765 = vpop.f32.mrf.mxu0
      %v2766 = vadd.f32 %v2677, %v2765
      %2767 = vmatmul.bf16.gmra.mxu0 %v2512
      %v2768 = vpop.f32.mrf.mxu0
      %v2769 = vadd.f32 %v2680, %v2768
      %v2770 = vpop.f32.mrf.mxu0
      %v2771 = vadd.f32 %v2682, %v2770
      %2772 = vmatmul.bf16.gmra.mxu0 %v2515
      %v2773 = vpop.f32.mrf.mxu0
      %v2774 = vadd.f32 %v2685, %v2773
      %v2775 = vpop.f32.mrf.mxu0
      %v2776 = vadd.f32 %v2687, %v2775
      %2777 = vmatmul.bf16.gmra.mxu0 %v2518
      %v2778 = vpop.f32.mrf.mxu0
      %v2779 = vadd.f32 %v2690, %v2778
      %v2780 = vpop.f32.mrf.mxu0
      %v2781 = vadd.f32 %v2692, %v2780
      %2782 = vmatmul.bf16.gmra.mxu0 %v2521
      %v2783 = vpop.f32.mrf.mxu0
      %v2784 = vadd.f32 %v2695, %v2783
      %v2785 = vpop.f32.mrf.mxu0
      %v2786 = vadd.f32 %v2697, %v2785
      %2787 = vmatmul.bf16.gmra.mxu0 %v2524
      %v2788 = vpop.f32.mrf.mxu0
      %v2789 = vadd.f32 %v2700, %v2788
      %v2790 = vpop.f32.mrf.mxu0
      %v2791 = vadd.f32 %v2702, %v2790
      %2792 = vdwg.mxu0
      %v2793 = vmax.f32 %v2714, 0.0
      %v2794 = vmax.f32 %v2716, 0.0
      %v2795 = vmax.f32 %v2719, 0.0
      %v2796 = vmax.f32 %v2721, 0.0
      %v2797 = vmax.f32 %v2724, 0.0
      %v2798 = vmax.f32 %v2726, 0.0
      %v2799 = vmax.f32 %v2729, 0.0
      %v2800 = vmax.f32 %v2731, 0.0
      %v2801 = vmax.f32 %v2734, 0.0
      %v2802 = vmax.f32 %v2736, 0.0
      %v2803 = vmax.f32 %v2739, 0.0
      %v2804 = vmax.f32 %v2741, 0.0
      %v2805 = vmax.f32 %v2744, 0.0
      %v2806 = vmax.f32 %v2746, 0.0
      %v2807 = vmax.f32 %v2749, 0.0
      %v2808 = vmax.f32 %v2751, 0.0
      %v2809 = vmax.f32 %v2754, 0.0
      %v2810 = vmax.f32 %v2756, 0.0
      %v2811 = vmax.f32 %v2759, 0.0
      %v2812 = vmax.f32 %v2761, 0.0
      %v2813 = vmax.f32 %v2764, 0.0
      %v2814 = vmax.f32 %v2766, 0.0
      %v2815 = vmax.f32 %v2769, 0.0
      %v2816 = vmax.f32 %v2771, 0.0
      %v2817 = vmax.f32 %v2774, 0.0
      %v2818 = vmax.f32 %v2776, 0.0
      %v2819 = vmax.f32 %v2779, 0.0
      %v2820 = vmax.f32 %v2781, 0.0
      %v2821 = vmax.f32 %v2784, 0.0
      %v2822 = vmax.f32 %v2786, 0.0
      %v2823 = vmax.f32 %v2789, 0.0
      %v2824 = vmax.f32 %v2791, 0.0
      %2825 = vst.msk [vmem:[%s550 + $0x1] sm:$0xff] %vm442, %v2793
      %2826 = vst.msk [vmem:[%s550 + $0x9] sm:$0xff] %vm442, %v2794
      %2827 = vst.msk [vmem:[%s550 + $0x19] sm:$0xff] %vm442, %v2795
      %2828 = vst.msk [vmem:[%s550 + $0x21] sm:$0xff] %vm442, %v2796
      %2829 = vst.msk [vmem:[%s550 + $0x31] sm:$0xff] %vm442, %v2797
      %2830 = vst.msk [vmem:[%s550 + $0x39] sm:$0xff] %vm442, %v2798
      %2831 = vst.msk [vmem:[%s550 + $0x49] sm:$0xff] %vm442, %v2799
      %2832 = vst.msk [vmem:[%s550 + $0x51] sm:$0xff] %vm442, %v2800
      %2833 = vst.msk [vmem:[%s550 + $0x61] sm:$0xff] %vm442, %v2801
      %2834 = vst.msk [vmem:[%s550 + $0x69] sm:$0xff] %vm442, %v2802
      %2835 = vst.msk [vmem:[%s550 + $0x79] sm:$0xff] %vm442, %v2803
      %2836 = vst.msk [vmem:[%s550 + $0x81] sm:$0xff] %vm442, %v2804
      %2837 = vst.msk [vmem:[%s550 + $0x91] sm:$0xff] %vm442, %v2805
      %2838 = vst.msk [vmem:[%s550 + $0x99] sm:$0xff] %vm442, %v2806
      %2839 = vst.msk [vmem:[%s550 + $0xa9] sm:$0xff] %vm442, %v2807
      %2840 = vst.msk [vmem:[%s550 + $0xb1] sm:$0xff] %vm442, %v2808
      %2841 = vst.msk [vmem:[%s550 + $0xc1] sm:$0xff] %vm442, %v2809
      %2842 = vst.msk [vmem:[%s550 + $0xc9] sm:$0xff] %vm442, %v2810
      %2843 = vst.msk [vmem:[%s550 + $0xd9] sm:$0xff] %vm442, %v2811
      %2844 = vst.msk [vmem:[%s550 + $0xe1] sm:$0xff] %vm442, %v2812
      %2845 = vst.msk [vmem:[%s550 + $0xf1] sm:$0xff] %vm442, %v2813
      %2846 = vst.msk [vmem:[%s550 + $0xf9] sm:$0xff] %vm442, %v2814
      %2847 = vst.msk [vmem:[%s550 + $0x109] sm:$0xff] %vm442, %v2815
      %2848 = vst.msk [vmem:[%s550 + $0x111] sm:$0xff] %vm442, %v2816
      %2849 = vst.msk [vmem:[%s550 + $0x121] sm:$0xff] %vm442, %v2817
      %2850 = vst.msk [vmem:[%s550 + $0x129] sm:$0xff] %vm442, %v2818
      %2851 = vst.msk [vmem:[%s550 + $0x139] sm:$0xff] %vm442, %v2819
      %2852 = vst.msk [vmem:[%s550 + $0x141] sm:$0xff] %vm442, %v2820
      %2853 = vst.msk [vmem:[%s550 + $0x151] sm:$0xff] %vm442, %v2821
      %2854 = vst.msk [vmem:[%s550 + $0x159] sm:$0xff] %vm442, %v2822
      %2855 = vst.msk [vmem:[%s550 + $0x169] sm:$0xff] %vm442, %v2823
      %2856 = vst.msk [vmem:[%s550 + $0x171] sm:$0xff] %vm442, %v2824
      %v2857 = vld [vmem:[%s3] sm:$0xf]
      %v2858 = vld [vmem:[%s3 + $0x4] sm:$0xf]
      %v2859 = vld [vmem:[%s3 + $0x8] sm:$0xf]
      %v2860 = vld [vmem:[%s3 + $0xc] sm:$0xf]
      %v2861 = vld [vmem:[%s3 + $0x10] sm:$0xf]
      %v2862 = vld [vmem:[%s3 + $0x14] sm:$0xf]
      %v2863 = vld [vmem:[%s3 + $0x18] sm:$0xf]
      %v2864 = vld [vmem:[%s3 + $0x1c] sm:$0xf]
      %v2865 = vld [vmem:[%s3 + $0x20] sm:$0xf]
      %v2866 = vld [vmem:[%s3 + $0x24] sm:$0xf]
      %v2867 = vld [vmem:[%s3 + $0x28] sm:$0xf]
      %v2868 = vld [vmem:[%s3 + $0x2c] sm:$0xf]
      %v2869 = vld [vmem:[%s3 + $0x30] sm:$0xf]
      %v2870 = vld [vmem:[%s3 + $0x34] sm:$0xf]
      %v2871 = vld [vmem:[%s3 + $0x38] sm:$0xf]
      %v2872 = vld [vmem:[%s3 + $0x3c] sm:$0xf]
      %v2873 = vld [vmem:[%s3 + $0x40] sm:$0xf]
      %v2874 = vld [vmem:[%s3 + $0x44] sm:$0xf]
      %v2875 = vld [vmem:[%s3 + $0x48] sm:$0xf]
      %v2876 = vld [vmem:[%s3 + $0x4c] sm:$0xf]
      %v2877 = vld [vmem:[%s3 + $0x50] sm:$0xf]
      %v2878 = vld [vmem:[%s3 + $0x54] sm:$0xf]
      %v2879 = vld [vmem:[%s3 + $0x58] sm:$0xf]
      %v2880 = vld [vmem:[%s3 + $0x5c] sm:$0xf]
      %v2881 = vld [vmem:[%s3 + $0x60] sm:$0xf]
      %v2882 = vld [vmem:[%s3 + $0x64] sm:$0xf]
      %v2883 = vld [vmem:[%s3 + $0x68] sm:$0xf]
      %v2884 = vld [vmem:[%s3 + $0x6c] sm:$0xf]
      %v2885 = vld [vmem:[%s3 + $0x70] sm:$0xf]
      %v2886 = vld [vmem:[%s3 + $0x74] sm:$0xf]
      %v2887 = vld [vmem:[%s3 + $0x78] sm:$0xf]
      %v2888 = vld [vmem:[%s3 + $0x7c] sm:$0xf]
      %v2889 = vld [vmem:[%s3 + $0x80] sm:$0xf]
      %v2890 = vld [vmem:[%s3 + $0x84] sm:$0xf]
      %v2891 = vld [vmem:[%s3 + $0x88] sm:$0xf]
      %v2892 = vld [vmem:[%s3 + $0x8c] sm:$0xf]
      %v2893 = vld [vmem:[%s4] sm:$0x1]
      %v2894 = vld [vmem:[#allocation2] sm:$0xff]
      %v2895 = vld [vmem:[#allocation2 + $0x8] sm:$0xff]
      %v2896 = vld [vmem:[#allocation2 + $0x18] sm:$0xff]
      %v2897 = vld [vmem:[#allocation2 + $0x20] sm:$0xff]
      %v2898 = vld [vmem:[#allocation2 + $0x30] sm:$0xff]
      %v2899 = vld [vmem:[#allocation2 + $0x38] sm:$0xff]
      %v2900 = vld [vmem:[#allocation2 + $0x48] sm:$0xff]
      %v2901 = vld [vmem:[#allocation2 + $0x50] sm:$0xff]
      %v2902 = vld [vmem:[#allocation2 + $0x60] sm:$0xff]
      %v2903 = vld [vmem:[#allocation2 + $0x68] sm:$0xff]
      %v2904 = vld [vmem:[#allocation2 + $0x78] sm:$0xff]
      %v2905 = vld [vmem:[#allocation2 + $0x80] sm:$0xff]
      %v2906 = vld [vmem:[#allocation2 + $0x90] sm:$0xff]
      %v2907 = vld [vmem:[#allocation2 + $0x98] sm:$0xff]
      %v2908 = vld [vmem:[#allocation2 + $0xa8] sm:$0xff]
      %v2909 = vld [vmem:[#allocation2 + $0xb0] sm:$0xff]
      %v2910 = vld [vmem:[#allocation2 + $0xc0] sm:$0xff]
      %v2911 = vld [vmem:[#allocation2 + $0xc8] sm:$0xff]
      %v2912 = vld [vmem:[#allocation2 + $0xd8] sm:$0xff]
      %v2913 = vld [vmem:[#allocation2 + $0xe0] sm:$0xff]
      %v2914 = vld [vmem:[#allocation2 + $0xf0] sm:$0xff]
      %v2915 = vld [vmem:[#allocation2 + $0xf8] sm:$0xff]
      %v2916 = vld [vmem:[#allocation2 + $0x108] sm:$0xff]
      %v2917 = vld [vmem:[#allocation2 + $0x110] sm:$0xff]
      %v2918 = vld [vmem:[#allocation2 + $0x120] sm:$0xff]
      %v2919 = vld [vmem:[#allocation2 + $0x128] sm:$0xff]
      %v2920 = vld [vmem:[#allocation2 + $0x138] sm:$0xff]
      %v2921 = vld [vmem:[#allocation2 + $0x140] sm:$0xff]
      %v2922 = vld [vmem:[#allocation2 + $0x150] sm:$0xff]
      %v2923 = vld [vmem:[#allocation2 + $0x158] sm:$0xff]
      %v2924 = vld [vmem:[#allocation2 + $0x168] sm:$0xff]
      %v2925 = vld [vmem:[#allocation2 + $0x170] sm:$0xff]
      %v2926 = vpack.c.bf16 %v2894, %v2894
      %v2927 = vpack.c.bf16 %v2895, %v2895
      %v2928 = vpack.c.bf16 %v2896, %v2896
      %v2929 = vpack.c.bf16 %v2897, %v2897
      %v2930 = vpack.c.bf16 %v2898, %v2898
      %v2931 = vpack.c.bf16 %v2899, %v2899
      %v2932 = vpack.c.bf16 %v2900, %v2900
      %v2933 = vpack.c.bf16 %v2901, %v2901
      %v2934 = vpack.c.bf16 %v2902, %v2902
      %v2935 = vpack.c.bf16 %v2903, %v2903
      %v2936 = vpack.c.bf16 %v2904, %v2904
      %v2937 = vpack.c.bf16 %v2905, %v2905
      %v2938 = vpack.c.bf16 %v2906, %v2906
      %v2939 = vpack.c.bf16 %v2907, %v2907
      %v2940 = vpack.c.bf16 %v2908, %v2908
      %v2941 = vpack.c.bf16 %v2909, %v2909
      %v2942 = vpack.c.bf16 %v2910, %v2910
      %v2943 = vpack.c.bf16 %v2911, %v2911
      %v2944 = vpack.c.bf16 %v2912, %v2912
      %v2945 = vpack.c.bf16 %v2913, %v2913
      %v2946 = vpack.c.bf16 %v2914, %v2914
      %v2947 = vpack.c.bf16 %v2915, %v2915
      %v2948 = vpack.c.bf16 %v2916, %v2916
      %v2949 = vpack.c.bf16 %v2917, %v2917
      %v2950 = vpack.c.bf16 %v2918, %v2918
      %v2951 = vpack.c.bf16 %v2919, %v2919
      %v2952 = vpack.c.bf16 %v2920, %v2920
      %v2953 = vpack.c.bf16 %v2921, %v2921
      %v2954 = vpack.c.bf16 %v2922, %v2922
      %v2955 = vpack.c.bf16 %v2923, %v2923
      %v2956 = vpack.c.bf16 %v2924, %v2924
      %v2957 = vpack.c.bf16 %v2925, %v2925
      %v2958 = vld [vmem:[#allocation2 + $0x1] sm:$0xff]
      %v2959 = vld [vmem:[#allocation2 + $0x9] sm:$0xff]
      %v2960 = vld [vmem:[#allocation2 + $0x19] sm:$0xff]
      %v2961 = vld [vmem:[#allocation2 + $0x21] sm:$0xff]
      %v2962 = vld [vmem:[#allocation2 + $0x31] sm:$0xff]
      %v2963 = vld [vmem:[#allocation2 + $0x39] sm:$0xff]
      %v2964 = vld [vmem:[#allocation2 + $0x49] sm:$0xff]
      %v2965 = vld [vmem:[#allocation2 + $0x51] sm:$0xff]
      %v2966 = vld [vmem:[#allocation2 + $0x61] sm:$0xff]
      %v2967 = vld [vmem:[#allocation2 + $0x69] sm:$0xff]
      %v2968 = vld [vmem:[#allocation2 + $0x79] sm:$0xff]
      %v2969 = vld [vmem:[#allocation2 + $0x81] sm:$0xff]
      %v2970 = vld [vmem:[#allocation2 + $0x91] sm:$0xff]
      %v2971 = vld [vmem:[#allocation2 + $0x99] sm:$0xff]
      %v2972 = vld [vmem:[#allocation2 + $0xa9] sm:$0xff]
      %v2973 = vld [vmem:[#allocation2 + $0xb1] sm:$0xff]
      %v2974 = vld [vmem:[#allocation2 + $0xc1] sm:$0xff]
      %v2975 = vld [vmem:[#allocation2 + $0xc9] sm:$0xff]
      %v2976 = vld [vmem:[#allocation2 + $0xd9] sm:$0xff]
      %v2977 = vld [vmem:[#allocation2 + $0xe1] sm:$0xff]
      %v2978 = vld [vmem:[#allocation2 + $0xf1] sm:$0xff]
      %v2979 = vld [vmem:[#allocation2 + $0xf9] sm:$0xff]
      %v2980 = vld [vmem:[#allocation2 + $0x109] sm:$0xff]
      %v2981 = vld [vmem:[#allocation2 + $0x111] sm:$0xff]
      %v2982 = vld [vmem:[#allocation2 + $0x121] sm:$0xff]
      %v2983 = vld [vmem:[#allocation2 + $0x129] sm:$0xff]
      %v2984 = vld [vmem:[#allocation2 + $0x139] sm:$0xff]
      %v2985 = vld [vmem:[#allocation2 + $0x141] sm:$0xff]
      %v2986 = vld [vmem:[#allocation2 + $0x151] sm:$0xff]
      %v2987 = vld [vmem:[#allocation2 + $0x159] sm:$0xff]
      %v2988 = vld [vmem:[#allocation2 + $0x169] sm:$0xff]
      %v2989 = vld [vmem:[#allocation2 + $0x171] sm:$0xff]
      %v2990 = vpack.c.bf16 %v2958, %v2958
      %v2991 = vpack.c.bf16 %v2959, %v2959
      %v2992 = vpack.c.bf16 %v2960, %v2960
      %v2993 = vpack.c.bf16 %v2961, %v2961
      %v2994 = vpack.c.bf16 %v2962, %v2962
      %v2995 = vpack.c.bf16 %v2963, %v2963
      %v2996 = vpack.c.bf16 %v2964, %v2964
      %v2997 = vpack.c.bf16 %v2965, %v2965
      %v2998 = vpack.c.bf16 %v2966, %v2966
      %v2999 = vpack.c.bf16 %v2967, %v2967
      %v3000 = vpack.c.bf16 %v2968, %v2968
      %v3001 = vpack.c.bf16 %v2969, %v2969
      %v3002 = vpack.c.bf16 %v2970, %v2970
      %v3003 = vpack.c.bf16 %v2971, %v2971
      %v3004 = vpack.c.bf16 %v2972, %v2972
      %v3005 = vpack.c.bf16 %v2973, %v2973
      %v3006 = vpack.c.bf16 %v2974, %v2974
      %v3007 = vpack.c.bf16 %v2975, %v2975
      %v3008 = vpack.c.bf16 %v2976, %v2976
      %v3009 = vpack.c.bf16 %v2977, %v2977
      %v3010 = vpack.c.bf16 %v2978, %v2978
      %v3011 = vpack.c.bf16 %v2979, %v2979
      %v3012 = vpack.c.bf16 %v2980, %v2980
      %v3013 = vpack.c.bf16 %v2981, %v2981
      %v3014 = vpack.c.bf16 %v2982, %v2982
      %v3015 = vpack.c.bf16 %v2983, %v2983
      %v3016 = vpack.c.bf16 %v2984, %v2984
      %v3017 = vpack.c.bf16 %v2985, %v2985
      %v3018 = vpack.c.bf16 %v2986, %v2986
      %v3019 = vpack.c.bf16 %v2987, %v2987
      %v3020 = vpack.c.bf16 %v2988, %v2988
      %v3021 = vpack.c.bf16 %v2989, %v2989
      %v3022 = vld [vmem:[#allocation2 + $0x2] sm:$0xff]
      %v3023 = vld [vmem:[#allocation2 + $0xa] sm:$0xff]
      %v3024 = vld [vmem:[#allocation2 + $0x1a] sm:$0xff]
      %v3025 = vld [vmem:[#allocation2 + $0x22] sm:$0xff]
      %v3026 = vld [vmem:[#allocation2 + $0x32] sm:$0xff]
      %v3027 = vld [vmem:[#allocation2 + $0x3a] sm:$0xff]
      %v3028 = vld [vmem:[#allocation2 + $0x4a] sm:$0xff]
      %v3029 = vld [vmem:[#allocation2 + $0x52] sm:$0xff]
      %v3030 = vld [vmem:[#allocation2 + $0x62] sm:$0xff]
      %v3031 = vld [vmem:[#allocation2 + $0x6a] sm:$0xff]
      %v3032 = vld [vmem:[#allocation2 + $0x7a] sm:$0xff]
      %v3033 = vld [vmem:[#allocation2 + $0x82] sm:$0xff]
      %v3034 = vld [vmem:[#allocation2 + $0x92] sm:$0xff]
      %v3035 = vld [vmem:[#allocation2 + $0x9a] sm:$0xff]
      %v3036 = vld [vmem:[#allocation2 + $0xaa] sm:$0xff]
      %v3037 = vld [vmem:[#allocation2 + $0xb2] sm:$0xff]
      %v3038 = vld [vmem:[#allocation2 + $0xc2] sm:$0xff]
      %v3039 = vld [vmem:[#allocation2 + $0xca] sm:$0xff]
      %v3040 = vld [vmem:[#allocation2 + $0xda] sm:$0xff]
      %v3041 = vld [vmem:[#allocation2 + $0xe2] sm:$0xff]
      %v3042 = vld [vmem:[#allocation2 + $0xf2] sm:$0xff]
      %v3043 = vld [vmem:[#allocation2 + $0xfa] sm:$0xff]
      %v3044 = vld [vmem:[#allocation2 + $0x10a] sm:$0xff]
      %v3045 = vld [vmem:[#allocation2 + $0x112] sm:$0xff]
      %v3046 = vld [vmem:[#allocation2 + $0x122] sm:$0xff]
      %v3047 = vld [vmem:[#allocation2 + $0x12a] sm:$0xff]
      %v3048 = vld [vmem:[#allocation2 + $0x13a] sm:$0xff]
      %v3049 = vld [vmem:[#allocation2 + $0x142] sm:$0xff]
      %v3050 = vld [vmem:[#allocation2 + $0x152] sm:$0xff]
      %v3051 = vld [vmem:[#allocation2 + $0x15a] sm:$0xff]
      %v3052 = vld [vmem:[#allocation2 + $0x16a] sm:$0xff]
      %v3053 = vld [vmem:[#allocation2 + $0x172] sm:$0xff]
      %v3054 = vpack.c.bf16 %v3022, %v3022
      %v3055 = vpack.c.bf16 %v3023, %v3023
      %v3056 = vpack.c.bf16 %v3024, %v3024
      %v3057 = vpack.c.bf16 %v3025, %v3025
      %v3058 = vpack.c.bf16 %v3026, %v3026
      %v3059 = vpack.c.bf16 %v3027, %v3027
      %v3060 = vpack.c.bf16 %v3028, %v3028
      %v3061 = vpack.c.bf16 %v3029, %v3029
      %v3062 = vpack.c.bf16 %v3030, %v3030
      %v3063 = vpack.c.bf16 %v3031, %v3031
      %v3064 = vpack.c.bf16 %v3032, %v3032
      %v3065 = vpack.c.bf16 %v3033, %v3033
      %v3066 = vpack.c.bf16 %v3034, %v3034
      %v3067 = vpack.c.bf16 %v3035, %v3035
      %v3068 = vpack.c.bf16 %v3036, %v3036
      %v3069 = vpack.c.bf16 %v3037, %v3037
      %v3070 = vpack.c.bf16 %v3038, %v3038
      %v3071 = vpack.c.bf16 %v3039, %v3039
      %v3072 = vpack.c.bf16 %v3040, %v3040
      %v3073 = vpack.c.bf16 %v3041, %v3041
      %v3074 = vpack.c.bf16 %v3042, %v3042
      %v3075 = vpack.c.bf16 %v3043, %v3043
      %v3076 = vpack.c.bf16 %v3044, %v3044
      %v3077 = vpack.c.bf16 %v3045, %v3045
      %v3078 = vpack.c.bf16 %v3046, %v3046
      %v3079 = vpack.c.bf16 %v3047, %v3047
      %v3080 = vpack.c.bf16 %v3048, %v3048
      %v3081 = vpack.c.bf16 %v3049, %v3049
      %v3082 = vpack.c.bf16 %v3050, %v3050
      %v3083 = vpack.c.bf16 %v3051, %v3051
      %v3084 = vpack.c.bf16 %v3052, %v3052
      %v3085 = vpack.c.bf16 %v3053, %v3053
      %v3086 = vld [vmem:[%s550] sm:$0xff]
      %v3087 = vld [vmem:[%s550 + $0x8] sm:$0xff]
      %v3088 = vld [vmem:[%s550 + $0x18] sm:$0xff]
      %v3089 = vld [vmem:[%s550 + $0x20] sm:$0xff]
      %v3090 = vld [vmem:[%s550 + $0x30] sm:$0xff]
      %v3091 = vld [vmem:[%s550 + $0x38] sm:$0xff]
      %v3092 = vld [vmem:[%s550 + $0x48] sm:$0xff]
      %v3093 = vld [vmem:[%s550 + $0x50] sm:$0xff]
      %v3094 = vld [vmem:[%s550 + $0x60] sm:$0xff]
      %v3095 = vld [vmem:[%s550 + $0x68] sm:$0xff]
      %v3096 = vld [vmem:[%s550 + $0x78] sm:$0xff]
      %v3097 = vld [vmem:[%s550 + $0x80] sm:$0xff]
      %v3098 = vld [vmem:[%s550 + $0x90] sm:$0xff]
      %v3099 = vld [vmem:[%s550 + $0x98] sm:$0xff]
      %v3100 = vld [vmem:[%s550 + $0xa8] sm:$0xff]
      %v3101 = vld [vmem:[%s550 + $0xb0] sm:$0xff]
      %v3102 = vld [vmem:[%s550 + $0xc0] sm:$0xff]
      %v3103 = vld [vmem:[%s550 + $0xc8] sm:$0xff]
      %v3104 = vld [vmem:[%s550 + $0xd8] sm:$0xff]
      %v3105 = vld [vmem:[%s550 + $0xe0] sm:$0xff]
      %v3106 = vld [vmem:[%s550 + $0xf0] sm:$0xff]
      %v3107 = vld [vmem:[%s550 + $0xf8] sm:$0xff]
      %v3108 = vld [vmem:[%s550 + $0x108] sm:$0xff]
      %v3109 = vld [vmem:[%s550 + $0x110] sm:$0xff]
      %v3110 = vld [vmem:[%s550 + $0x120] sm:$0xff]
      %v3111 = vld [vmem:[%s550 + $0x128] sm:$0xff]
      %v3112 = vld [vmem:[%s550 + $0x138] sm:$0xff]
      %v3113 = vld [vmem:[%s550 + $0x140] sm:$0xff]
      %v3114 = vld [vmem:[%s550 + $0x150] sm:$0xff]
      %v3115 = vld [vmem:[%s550 + $0x158] sm:$0xff]
      %v3116 = vld [vmem:[%s550 + $0x168] sm:$0xff]
      %v3117 = vld [vmem:[%s550 + $0x170] sm:$0xff]
      %v3118 = vpack.c.bf16 %v3086, %v3086
      %v3119 = vpack.c.bf16 %v3087, %v3087
      %v3120 = vpack.c.bf16 %v3088, %v3088
      %v3121 = vpack.c.bf16 %v3089, %v3089
      %v3122 = vpack.c.bf16 %v3090, %v3090
      %v3123 = vpack.c.bf16 %v3091, %v3091
      %v3124 = vpack.c.bf16 %v3092, %v3092
      %v3125 = vpack.c.bf16 %v3093, %v3093
      %v3126 = vpack.c.bf16 %v3094, %v3094
      %v3127 = vpack.c.bf16 %v3095, %v3095
      %v3128 = vpack.c.bf16 %v3096, %v3096
      %v3129 = vpack.c.bf16 %v3097, %v3097
      %v3130 = vpack.c.bf16 %v3098, %v3098
      %v3131 = vpack.c.bf16 %v3099, %v3099
      %v3132 = vpack.c.bf16 %v3100, %v3100
      %v3133 = vpack.c.bf16 %v3101, %v3101
      %v3134 = vpack.c.bf16 %v3102, %v3102
      %v3135 = vpack.c.bf16 %v3103, %v3103
      %v3136 = vpack.c.bf16 %v3104, %v3104
      %v3137 = vpack.c.bf16 %v3105, %v3105
      %v3138 = vpack.c.bf16 %v3106, %v3106
      %v3139 = vpack.c.bf16 %v3107, %v3107
      %v3140 = vpack.c.bf16 %v3108, %v3108
      %v3141 = vpack.c.bf16 %v3109, %v3109
      %v3142 = vpack.c.bf16 %v3110, %v3110
      %v3143 = vpack.c.bf16 %v3111, %v3111
      %v3144 = vpack.c.bf16 %v3112, %v3112
      %v3145 = vpack.c.bf16 %v3113, %v3113
      %v3146 = vpack.c.bf16 %v3114, %v3114
      %v3147 = vpack.c.bf16 %v3115, %v3115
      %v3148 = vpack.c.bf16 %v3116, %v3116
      %v3149 = vpack.c.bf16 %v3117, %v3117
      %v3150 = vld [vmem:[%s550 + $0x1] sm:$0xff]
      %v3151 = vld [vmem:[%s550 + $0x9] sm:$0xff]
      %v3152 = vld [vmem:[%s550 + $0x19] sm:$0xff]
      %v3153 = vld [vmem:[%s550 + $0x21] sm:$0xff]
      %v3154 = vld [vmem:[%s550 + $0x31] sm:$0xff]
      %v3155 = vld [vmem:[%s550 + $0x39] sm:$0xff]
      %v3156 = vld [vmem:[%s550 + $0x49] sm:$0xff]
      %v3157 = vld [vmem:[%s550 + $0x51] sm:$0xff]
      %v3158 = vld [vmem:[%s550 + $0x61] sm:$0xff]
      %v3159 = vld [vmem:[%s550 + $0x69] sm:$0xff]
      %v3160 = vld [vmem:[%s550 + $0x79] sm:$0xff]
      %v3161 = vld [vmem:[%s550 + $0x81] sm:$0xff]
      %v3162 = vld [vmem:[%s550 + $0x91] sm:$0xff]
      %v3163 = vld [vmem:[%s550 + $0x99] sm:$0xff]
      %v3164 = vld [vmem:[%s550 + $0xa9] sm:$0xff]
      %v3165 = vld [vmem:[%s550 + $0xb1] sm:$0xff]
      %v3166 = vld [vmem:[%s550 + $0xc1] sm:$0xff]
      %v3167 = vld [vmem:[%s550 + $0xc9] sm:$0xff]
      %v3168 = vld [vmem:[%s550 + $0xd9] sm:$0xff]
      %v3169 = vld [vmem:[%s550 + $0xe1] sm:$0xff]
      %v3170 = vld [vmem:[%s550 + $0xf1] sm:$0xff]
      %v3171 = vld [vmem:[%s550 + $0xf9] sm:$0xff]
      %v3172 = vld [vmem:[%s550 + $0x109] sm:$0xff]
      %v3173 = vld [vmem:[%s550 + $0x111] sm:$0xff]
      %v3174 = vld [vmem:[%s550 + $0x121] sm:$0xff]
      %v3175 = vld [vmem:[%s550 + $0x129] sm:$0xff]
      %v3176 = vld [vmem:[%s550 + $0x139] sm:$0xff]
      %v3177 = vld [vmem:[%s550 + $0x141] sm:$0xff]
      %v3178 = vld [vmem:[%s550 + $0x151] sm:$0xff]
      %v3179 = vld [vmem:[%s550 + $0x159] sm:$0xff]
      %v3180 = vld [vmem:[%s550 + $0x169] sm:$0xff]
      %v3181 = vld [vmem:[%s550 + $0x171] sm:$0xff]
      %v3182 = vpack.c.bf16 %v3150, %v3150
      %v3183 = vpack.c.bf16 %v3151, %v3151
      %v3184 = vpack.c.bf16 %v3152, %v3152
      %v3185 = vpack.c.bf16 %v3153, %v3153
      %v3186 = vpack.c.bf16 %v3154, %v3154
      %v3187 = vpack.c.bf16 %v3155, %v3155
      %v3188 = vpack.c.bf16 %v3156, %v3156
      %v3189 = vpack.c.bf16 %v3157, %v3157
      %v3190 = vpack.c.bf16 %v3158, %v3158
      %v3191 = vpack.c.bf16 %v3159, %v3159
      %v3192 = vpack.c.bf16 %v3160, %v3160
      %v3193 = vpack.c.bf16 %v3161, %v3161
      %v3194 = vpack.c.bf16 %v3162, %v3162
      %v3195 = vpack.c.bf16 %v3163, %v3163
      %v3196 = vpack.c.bf16 %v3164, %v3164
      %v3197 = vpack.c.bf16 %v3165, %v3165
      %v3198 = vpack.c.bf16 %v3166, %v3166
      %v3199 = vpack.c.bf16 %v3167, %v3167
      %v3200 = vpack.c.bf16 %v3168, %v3168
      %v3201 = vpack.c.bf16 %v3169, %v3169
      %v3202 = vpack.c.bf16 %v3170, %v3170
      %v3203 = vpack.c.bf16 %v3171, %v3171
      %v3204 = vpack.c.bf16 %v3172, %v3172
      %v3205 = vpack.c.bf16 %v3173, %v3173
      %v3206 = vpack.c.bf16 %v3174, %v3174
      %v3207 = vpack.c.bf16 %v3175, %v3175
      %v3208 = vpack.c.bf16 %v3176, %v3176
      %v3209 = vpack.c.bf16 %v3177, %v3177
      %v3210 = vpack.c.bf16 %v3178, %v3178
      %v3211 = vpack.c.bf16 %v3179, %v3179
      %v3212 = vpack.c.bf16 %v3180, %v3180
      %v3213 = vpack.c.bf16 %v3181, %v3181
      %v3214 = vld [vmem:[%s550 + $0x2] sm:$0xff]
      %v3215 = vld [vmem:[%s550 + $0xa] sm:$0xff]
      %v3216 = vld [vmem:[%s550 + $0x1a] sm:$0xff]
      %v3217 = vld [vmem:[%s550 + $0x22] sm:$0xff]
      %v3218 = vld [vmem:[%s550 + $0x32] sm:$0xff]
      %v3219 = vld [vmem:[%s550 + $0x3a] sm:$0xff]
      %v3220 = vld [vmem:[%s550 + $0x4a] sm:$0xff]
      %v3221 = vld [vmem:[%s550 + $0x52] sm:$0xff]
      %v3222 = vld [vmem:[%s550 + $0x62] sm:$0xff]
      %v3223 = vld [vmem:[%s550 + $0x6a] sm:$0xff]
      %v3224 = vld [vmem:[%s550 + $0x7a] sm:$0xff]
      %v3225 = vld [vmem:[%s550 + $0x82] sm:$0xff]
      %v3226 = vld [vmem:[%s550 + $0x92] sm:$0xff]
      %v3227 = vld [vmem:[%s550 + $0x9a] sm:$0xff]
      %v3228 = vld [vmem:[%s550 + $0xaa] sm:$0xff]
      %v3229 = vld [vmem:[%s550 + $0xb2] sm:$0xff]
      %v3230 = vld [vmem:[%s550 + $0xc2] sm:$0xff]
      %v3231 = vld [vmem:[%s550 + $0xca] sm:$0xff]
      %v3232 = vld [vmem:[%s550 + $0xda] sm:$0xff]
      %v3233 = vld [vmem:[%s550 + $0xe2] sm:$0xff]
      %v3234 = vld [vmem:[%s550 + $0xf2] sm:$0xff]
      %v3235 = vld [vmem:[%s550 + $0xfa] sm:$0xff]
      %v3236 = vld [vmem:[%s550 + $0x10a] sm:$0xff]
      %v3237 = vld [vmem:[%s550 + $0x112] sm:$0xff]
      %v3238 = vld [vmem:[%s550 + $0x122] sm:$0xff]
      %v3239 = vld [vmem:[%s550 + $0x12a] sm:$0xff]
      %v3240 = vld [vmem:[%s550 + $0x13a] sm:$0xff]
      %v3241 = vld [vmem:[%s550 + $0x142] sm:$0xff]
      %v3242 = vld [vmem:[%s550 + $0x152] sm:$0xff]
      %v3243 = vld [vmem:[%s550 + $0x15a] sm:$0xff]
      %v3244 = vld [vmem:[%s550 + $0x16a] sm:$0xff]
      %v3245 = vld [vmem:[%s550 + $0x172] sm:$0xff]
      %v3246 = vpack.c.bf16 %v3214, %v3214
      %v3247 = vpack.c.bf16 %v3215, %v3215
      %v3248 = vpack.c.bf16 %v3216, %v3216
      %v3249 = vpack.c.bf16 %v3217, %v3217
      %v3250 = vpack.c.bf16 %v3218, %v3218
      %v3251 = vpack.c.bf16 %v3219, %v3219
      %v3252 = vpack.c.bf16 %v3220, %v3220
      %v3253 = vpack.c.bf16 %v3221, %v3221
      %v3254 = vpack.c.bf16 %v3222, %v3222
      %v3255 = vpack.c.bf16 %v3223, %v3223
      %v3256 = vpack.c.bf16 %v3224, %v3224
      %v3257 = vpack.c.bf16 %v3225, %v3225
      %v3258 = vpack.c.bf16 %v3226, %v3226
      %v3259 = vpack.c.bf16 %v3227, %v3227
      %v3260 = vpack.c.bf16 %v3228, %v3228
      %v3261 = vpack.c.bf16 %v3229, %v3229
      %v3262 = vpack.c.bf16 %v3230, %v3230
      %v3263 = vpack.c.bf16 %v3231, %v3231
      %v3264 = vpack.c.bf16 %v3232, %v3232
      %v3265 = vpack.c.bf16 %v3233, %v3233
      %v3266 = vpack.c.bf16 %v3234, %v3234
      %v3267 = vpack.c.bf16 %v3235, %v3235
      %v3268 = vpack.c.bf16 %v3236, %v3236
      %v3269 = vpack.c.bf16 %v3237, %v3237
      %v3270 = vpack.c.bf16 %v3238, %v3238
      %v3271 = vpack.c.bf16 %v3239, %v3239
      %v3272 = vpack.c.bf16 %v3240, %v3240
      %v3273 = vpack.c.bf16 %v3241, %v3241
      %v3274 = vpack.c.bf16 %v3242, %v3242
      %v3275 = vpack.c.bf16 %v3243, %v3243
      %v3276 = vpack.c.bf16 %v3244, %v3244
      %v3277 = vpack.c.bf16 %v3245, %v3245
      %v3278 = vld [vmem:[%s1004] sm:$0xff]
      %v3279 = vld [vmem:[%s1004 + $0x8] sm:$0xff]
      %v3280 = vld [vmem:[%s1004 + $0x18] sm:$0xff]
      %v3281 = vld [vmem:[%s1004 + $0x20] sm:$0xff]
      %v3282 = vld [vmem:[%s1004 + $0x30] sm:$0xff]
      %v3283 = vld [vmem:[%s1004 + $0x38] sm:$0xff]
      %v3284 = vld [vmem:[%s1004 + $0x48] sm:$0xff]
      %v3285 = vld [vmem:[%s1004 + $0x50] sm:$0xff]
      %v3286 = vld [vmem:[%s1004 + $0x60] sm:$0xff]
      %v3287 = vld [vmem:[%s1004 + $0x68] sm:$0xff]
      %v3288 = vld [vmem:[%s1004 + $0x78] sm:$0xff]
      %v3289 = vld [vmem:[%s1004 + $0x80] sm:$0xff]
      %v3290 = vld [vmem:[%s1004 + $0x90] sm:$0xff]
      %v3291 = vld [vmem:[%s1004 + $0x98] sm:$0xff]
      %v3292 = vld [vmem:[%s1004 + $0xa8] sm:$0xff]
      %v3293 = vld [vmem:[%s1004 + $0xb0] sm:$0xff]
      %v3294 = vld [vmem:[%s1004 + $0xc0] sm:$0xff]
      %v3295 = vld [vmem:[%s1004 + $0xc8] sm:$0xff]
      %v3296 = vld [vmem:[%s1004 + $0xd8] sm:$0xff]
      %v3297 = vld [vmem:[%s1004 + $0xe0] sm:$0xff]
      %v3298 = vld [vmem:[%s1004 + $0xf0] sm:$0xff]
      %v3299 = vld [vmem:[%s1004 + $0xf8] sm:$0xff]
      %v3300 = vld [vmem:[%s1004 + $0x108] sm:$0xff]
      %v3301 = vld [vmem:[%s1004 + $0x110] sm:$0xff]
      %v3302 = vld [vmem:[%s1004 + $0x120] sm:$0xff]
      %v3303 = vld [vmem:[%s1004 + $0x128] sm:$0xff]
      %v3304 = vld [vmem:[%s1004 + $0x138] sm:$0xff]
      %v3305 = vld [vmem:[%s1004 + $0x140] sm:$0xff]
      %v3306 = vld [vmem:[%s1004 + $0x150] sm:$0xff]
      %v3307 = vld [vmem:[%s1004 + $0x158] sm:$0xff]
      %v3308 = vld [vmem:[%s1004 + $0x168] sm:$0xff]
      %v3309 = vld [vmem:[%s1004 + $0x170] sm:$0xff]
      %v3310 = vpack.c.bf16 %v3278, %v3278
      %v3311 = vpack.c.bf16 %v3279, %v3279
      %v3312 = vpack.c.bf16 %v3280, %v3280
      %v3313 = vpack.c.bf16 %v3281, %v3281
      %v3314 = vpack.c.bf16 %v3282, %v3282
      %v3315 = vpack.c.bf16 %v3283, %v3283
      %v3316 = vpack.c.bf16 %v3284, %v3284
      %v3317 = vpack.c.bf16 %v3285, %v3285
      %v3318 = vpack.c.bf16 %v3286, %v3286
      %v3319 = vpack.c.bf16 %v3287, %v3287
      %v3320 = vpack.c.bf16 %v3288, %v3288
      %v3321 = vpack.c.bf16 %v3289, %v3289
      %v3322 = vpack.c.bf16 %v3290, %v3290
      %v3323 = vpack.c.bf16 %v3291, %v3291
      %v3324 = vpack.c.bf16 %v3292, %v3292
      %v3325 = vpack.c.bf16 %v3293, %v3293
      %v3326 = vpack.c.bf16 %v3294, %v3294
      %v3327 = vpack.c.bf16 %v3295, %v3295
      %v3328 = vpack.c.bf16 %v3296, %v3296
      %v3329 = vpack.c.bf16 %v3297, %v3297
      %v3330 = vpack.c.bf16 %v3298, %v3298
      %v3331 = vpack.c.bf16 %v3299, %v3299
      %v3332 = vpack.c.bf16 %v3300, %v3300
      %v3333 = vpack.c.bf16 %v3301, %v3301
      %v3334 = vpack.c.bf16 %v3302, %v3302
      %v3335 = vpack.c.bf16 %v3303, %v3303
      %v3336 = vpack.c.bf16 %v3304, %v3304
      %v3337 = vpack.c.bf16 %v3305, %v3305
      %v3338 = vpack.c.bf16 %v3306, %v3306
      %v3339 = vpack.c.bf16 %v3307, %v3307
      %v3340 = vpack.c.bf16 %v3308, %v3308
      %v3341 = vpack.c.bf16 %v3309, %v3309
      %v3342 = vld [vmem:[%s1004 + $0x1] sm:$0xff]
      %v3343 = vld [vmem:[%s1004 + $0x9] sm:$0xff]
      %v3344 = vld [vmem:[%s1004 + $0x19] sm:$0xff]
      %v3345 = vld [vmem:[%s1004 + $0x21] sm:$0xff]
      %v3346 = vld [vmem:[%s1004 + $0x31] sm:$0xff]
      %v3347 = vld [vmem:[%s1004 + $0x39] sm:$0xff]
      %v3348 = vld [vmem:[%s1004 + $0x49] sm:$0xff]
      %v3349 = vld [vmem:[%s1004 + $0x51] sm:$0xff]
      %v3350 = vld [vmem:[%s1004 + $0x61] sm:$0xff]
      %v3351 = vld [vmem:[%s1004 + $0x69] sm:$0xff]
      %v3352 = vld [vmem:[%s1004 + $0x79] sm:$0xff]
      %v3353 = vld [vmem:[%s1004 + $0x81] sm:$0xff]
      %v3354 = vld [vmem:[%s1004 + $0x91] sm:$0xff]
      %v3355 = vld [vmem:[%s1004 + $0x99] sm:$0xff]
      %v3356 = vld [vmem:[%s1004 + $0xa9] sm:$0xff]
      %v3357 = vld [vmem:[%s1004 + $0xb1] sm:$0xff]
      %v3358 = vld [vmem:[%s1004 + $0xc1] sm:$0xff]
      %v3359 = vld [vmem:[%s1004 + $0xc9] sm:$0xff]
      %v3360 = vld [vmem:[%s1004 + $0xd9] sm:$0xff]
      %v3361 = vld [vmem:[%s1004 + $0xe1] sm:$0xff]
      %v3362 = vld [vmem:[%s1004 + $0xf1] sm:$0xff]
      %v3363 = vld [vmem:[%s1004 + $0xf9] sm:$0xff]
      %v3364 = vld [vmem:[%s1004 + $0x109] sm:$0xff]
      %v3365 = vld [vmem:[%s1004 + $0x111] sm:$0xff]
      %v3366 = vld [vmem:[%s1004 + $0x121] sm:$0xff]
      %v3367 = vld [vmem:[%s1004 + $0x129] sm:$0xff]
      %v3368 = vld [vmem:[%s1004 + $0x139] sm:$0xff]
      %v3369 = vld [vmem:[%s1004 + $0x141] sm:$0xff]
      %v3370 = vld [vmem:[%s1004 + $0x151] sm:$0xff]
      %v3371 = vld [vmem:[%s1004 + $0x159] sm:$0xff]
      %v3372 = vld [vmem:[%s1004 + $0x169] sm:$0xff]
      %v3373 = vld [vmem:[%s1004 + $0x171] sm:$0xff]
      %v3374 = vpack.c.bf16 %v3342, %v3342
      %v3375 = vpack.c.bf16 %v3343, %v3343
      %v3376 = vpack.c.bf16 %v3344, %v3344
      %v3377 = vpack.c.bf16 %v3345, %v3345
      %v3378 = vpack.c.bf16 %v3346, %v3346
      %v3379 = vpack.c.bf16 %v3347, %v3347
      %v3380 = vpack.c.bf16 %v3348, %v3348
      %v3381 = vpack.c.bf16 %v3349, %v3349
      %v3382 = vpack.c.bf16 %v3350, %v3350
      %v3383 = vpack.c.bf16 %v3351, %v3351
      %v3384 = vpack.c.bf16 %v3352, %v3352
      %v3385 = vpack.c.bf16 %v3353, %v3353
      %v3386 = vpack.c.bf16 %v3354, %v3354
      %v3387 = vpack.c.bf16 %v3355, %v3355
      %v3388 = vpack.c.bf16 %v3356, %v3356
      %v3389 = vpack.c.bf16 %v3357, %v3357
      %v3390 = vpack.c.bf16 %v3358, %v3358
      %v3391 = vpack.c.bf16 %v3359, %v3359
      %v3392 = vpack.c.bf16 %v3360, %v3360
      %v3393 = vpack.c.bf16 %v3361, %v3361
      %v3394 = vpack.c.bf16 %v3362, %v3362
      %v3395 = vpack.c.bf16 %v3363, %v3363
      %v3396 = vpack.c.bf16 %v3364, %v3364
      %v3397 = vpack.c.bf16 %v3365, %v3365
      %v3398 = vpack.c.bf16 %v3366, %v3366
      %v3399 = vpack.c.bf16 %v3367, %v3367
      %v3400 = vpack.c.bf16 %v3368, %v3368
      %v3401 = vpack.c.bf16 %v3369, %v3369
      %v3402 = vpack.c.bf16 %v3370, %v3370
      %v3403 = vpack.c.bf16 %v3371, %v3371
      %v3404 = vpack.c.bf16 %v3372, %v3372
      %v3405 = vpack.c.bf16 %v3373, %v3373
      %v3406 = vld [vmem:[%s1004 + $0x2] sm:$0xff]
      %v3407 = vld [vmem:[%s1004 + $0xa] sm:$0xff]
      %v3408 = vld [vmem:[%s1004 + $0x1a] sm:$0xff]
      %v3409 = vld [vmem:[%s1004 + $0x22] sm:$0xff]
      %v3410 = vld [vmem:[%s1004 + $0x32] sm:$0xff]
      %v3411 = vld [vmem:[%s1004 + $0x3a] sm:$0xff]
      %v3412 = vld [vmem:[%s1004 + $0x4a] sm:$0xff]
      %v3413 = vld [vmem:[%s1004 + $0x52] sm:$0xff]
      %v3414 = vld [vmem:[%s1004 + $0x62] sm:$0xff]
      %v3415 = vld [vmem:[%s1004 + $0x6a] sm:$0xff]
      %v3416 = vld [vmem:[%s1004 + $0x7a] sm:$0xff]
      %v3417 = vld [vmem:[%s1004 + $0x82] sm:$0xff]
      %v3418 = vld [vmem:[%s1004 + $0x92] sm:$0xff]
      %v3419 = vld [vmem:[%s1004 + $0x9a] sm:$0xff]
      %v3420 = vld [vmem:[%s1004 + $0xaa] sm:$0xff]
      %v3421 = vld [vmem:[%s1004 + $0xb2] sm:$0xff]
      %v3422 = vld [vmem:[%s1004 + $0xc2] sm:$0xff]
      %v3423 = vld [vmem:[%s1004 + $0xca] sm:$0xff]
      %v3424 = vld [vmem:[%s1004 + $0xda] sm:$0xff]
      %v3425 = vld [vmem:[%s1004 + $0xe2] sm:$0xff]
      %v3426 = vld [vmem:[%s1004 + $0xf2] sm:$0xff]
      %v3427 = vld [vmem:[%s1004 + $0xfa] sm:$0xff]
      %v3428 = vld [vmem:[%s1004 + $0x10a] sm:$0xff]
      %v3429 = vld [vmem:[%s1004 + $0x112] sm:$0xff]
      %v3430 = vld [vmem:[%s1004 + $0x122] sm:$0xff]
      %v3431 = vld [vmem:[%s1004 + $0x12a] sm:$0xff]
      %v3432 = vld [vmem:[%s1004 + $0x13a] sm:$0xff]
      %v3433 = vld [vmem:[%s1004 + $0x142] sm:$0xff]
      %v3434 = vld [vmem:[%s1004 + $0x152] sm:$0xff]
      %v3435 = vld [vmem:[%s1004 + $0x15a] sm:$0xff]
      %v3436 = vld [vmem:[%s1004 + $0x16a] sm:$0xff]
      %v3437 = vld [vmem:[%s1004 + $0x172] sm:$0xff]
      %v3438 = vpack.c.bf16 %v3406, %v3406
      %v3439 = vpack.c.bf16 %v3407, %v3407
      %v3440 = vpack.c.bf16 %v3408, %v3408
      %v3441 = vpack.c.bf16 %v3409, %v3409
      %v3442 = vpack.c.bf16 %v3410, %v3410
      %v3443 = vpack.c.bf16 %v3411, %v3411
      %v3444 = vpack.c.bf16 %v3412, %v3412
      %v3445 = vpack.c.bf16 %v3413, %v3413
      %v3446 = vpack.c.bf16 %v3414, %v3414
      %v3447 = vpack.c.bf16 %v3415, %v3415
      %v3448 = vpack.c.bf16 %v3416, %v3416
      %v3449 = vpack.c.bf16 %v3417, %v3417
      %v3450 = vpack.c.bf16 %v3418, %v3418
      %v3451 = vpack.c.bf16 %v3419, %v3419
      %v3452 = vpack.c.bf16 %v3420, %v3420
      %v3453 = vpack.c.bf16 %v3421, %v3421
      %v3454 = vpack.c.bf16 %v3422, %v3422
      %v3455 = vpack.c.bf16 %v3423, %v3423
      %v3456 = vpack.c.bf16 %v3424, %v3424
      %v3457 = vpack.c.bf16 %v3425, %v3425
      %v3458 = vpack.c.bf16 %v3426, %v3426
      %v3459 = vpack.c.bf16 %v3427, %v3427
      %v3460 = vpack.c.bf16 %v3428, %v3428
      %v3461 = vpack.c.bf16 %v3429, %v3429
      %v3462 = vpack.c.bf16 %v3430, %v3430
      %v3463 = vpack.c.bf16 %v3431, %v3431
      %v3464 = vpack.c.bf16 %v3432, %v3432
      %v3465 = vpack.c.bf16 %v3433, %v3433
      %v3466 = vpack.c.bf16 %v3434, %v3434
      %v3467 = vpack.c.bf16 %v3435, %v3435
      %v3468 = vpack.c.bf16 %v3436, %v3436
      %v3469 = vpack.c.bf16 %v3437, %v3437
      %v3502 = vunpack.c.l.b16 %v2926
      %v3503 = vunpack.c.l.b16 %v2927
      %v3504 = vunpack.c.l.b16 %v2928
      %v3505 = vunpack.c.l.b16 %v2929
      %v3506 = vunpack.c.l.b16 %v2930
      %v3507 = vunpack.c.l.b16 %v2931
      %v3508 = vunpack.c.l.b16 %v2932
      %v3509 = vunpack.c.l.b16 %v2933
      %v3510 = vunpack.c.l.b16 %v2934
      %v3511 = vunpack.c.l.b16 %v2935
      %v3512 = vunpack.c.l.b16 %v2936
      %v3513 = vunpack.c.l.b16 %v2937
      %v3514 = vunpack.c.l.b16 %v2938
      %v3515 = vunpack.c.l.b16 %v2939
      %v3516 = vunpack.c.l.b16 %v2940
      %v3517 = vunpack.c.l.b16 %v2941
      %v3518 = vunpack.c.l.b16 %v2942
      %v3519 = vunpack.c.l.b16 %v2943
      %v3520 = vunpack.c.l.b16 %v2944
      %v3521 = vunpack.c.l.b16 %v2945
      %v3522 = vunpack.c.l.b16 %v2946
      %v3523 = vunpack.c.l.b16 %v2947
      %v3524 = vunpack.c.l.b16 %v2948
      %v3525 = vunpack.c.l.b16 %v2949
      %v3526 = vunpack.c.l.b16 %v2950
      %v3527 = vunpack.c.l.b16 %v2951
      %v3528 = vunpack.c.l.b16 %v2952
      %v3529 = vunpack.c.l.b16 %v2953
      %v3530 = vunpack.c.l.b16 %v2954
      %v3531 = vunpack.c.l.b16 %v2955
      %v3532 = vunpack.c.l.b16 %v2956
      %v3533 = vunpack.c.l.b16 %v2957
      %v3534 = vpack.c.b16 %v3503, %v3502
      %v3535 = vpack.c.b16 %v3505, %v3504
      %v3536 = vpack.c.b16 %v3507, %v3506
      %v3537 = vpack.c.b16 %v3509, %v3508
      %v3538 = vpack.c.b16 %v3511, %v3510
      %v3539 = vpack.c.b16 %v3513, %v3512
      %v3540 = vpack.c.b16 %v3515, %v3514
      %v3541 = vpack.c.b16 %v3517, %v3516
      %v3542 = vpack.c.b16 %v3519, %v3518
      %v3543 = vpack.c.b16 %v3521, %v3520
      %v3544 = vpack.c.b16 %v3523, %v3522
      %v3545 = vpack.c.b16 %v3525, %v3524
      %v3546 = vpack.c.b16 %v3527, %v3526
      %v3547 = vpack.c.b16 %v3529, %v3528
      %v3548 = vpack.c.b16 %v3531, %v3530
      %v3549 = vpack.c.b16 %v3533, %v3532
      %v3582 = vunpack.c.l.b16 %v2990
      %v3583 = vunpack.c.l.b16 %v2991
      %v3584 = vunpack.c.l.b16 %v2992
      %v3585 = vunpack.c.l.b16 %v2993
      %v3586 = vunpack.c.l.b16 %v2994
      %v3587 = vunpack.c.l.b16 %v2995
      %v3588 = vunpack.c.l.b16 %v2996
      %v3589 = vunpack.c.l.b16 %v2997
      %v3590 = vunpack.c.l.b16 %v2998
      %v3591 = vunpack.c.l.b16 %v2999
      %v3592 = vunpack.c.l.b16 %v3000
      %v3593 = vunpack.c.l.b16 %v3001
      %v3594 = vunpack.c.l.b16 %v3002
      %v3595 = vunpack.c.l.b16 %v3003
      %v3596 = vunpack.c.l.b16 %v3004
      %v3597 = vunpack.c.l.b16 %v3005
      %v3598 = vunpack.c.l.b16 %v3006
      %v3599 = vunpack.c.l.b16 %v3007
      %v3600 = vunpack.c.l.b16 %v3008
      %v3601 = vunpack.c.l.b16 %v3009
      %v3602 = vunpack.c.l.b16 %v3010
      %v3603 = vunpack.c.l.b16 %v3011
      %v3604 = vunpack.c.l.b16 %v3012
      %v3605 = vunpack.c.l.b16 %v3013
      %v3606 = vunpack.c.l.b16 %v3014
      %v3607 = vunpack.c.l.b16 %v3015
      %v3608 = vunpack.c.l.b16 %v3016
      %v3609 = vunpack.c.l.b16 %v3017
      %v3610 = vunpack.c.l.b16 %v3018
      %v3611 = vunpack.c.l.b16 %v3019
      %v3612 = vunpack.c.l.b16 %v3020
      %v3613 = vunpack.c.l.b16 %v3021
      %v3614 = vpack.c.b16 %v3583, %v3582
      %v3615 = vpack.c.b16 %v3585, %v3584
      %v3616 = vpack.c.b16 %v3587, %v3586
      %v3617 = vpack.c.b16 %v3589, %v3588
      %v3618 = vpack.c.b16 %v3591, %v3590
      %v3619 = vpack.c.b16 %v3593, %v3592
      %v3620 = vpack.c.b16 %v3595, %v3594
      %v3621 = vpack.c.b16 %v3597, %v3596
      %v3622 = vpack.c.b16 %v3599, %v3598
      %v3623 = vpack.c.b16 %v3601, %v3600
      %v3624 = vpack.c.b16 %v3603, %v3602
      %v3625 = vpack.c.b16 %v3605, %v3604
      %v3626 = vpack.c.b16 %v3607, %v3606
      %v3627 = vpack.c.b16 %v3609, %v3608
      %v3628 = vpack.c.b16 %v3611, %v3610
      %v3629 = vpack.c.b16 %v3613, %v3612
      %3630 = vrot.lane.b32.xlu0 %v3614, 32
      %v3631 = vpop.permute.xlu0 %3630
      %3632 = vrot.lane.b32.xlu0 %v3615, 32
      %v3633 = vpop.permute.xlu0 %3632
      %3634 = vrot.lane.b32.xlu0 %v3616, 32
      %v3635 = vpop.permute.xlu0 %3634
      %3636 = vrot.lane.b32.xlu0 %v3617, 32
      %v3637 = vpop.permute.xlu0 %3636
      %3638 = vrot.lane.b32.xlu0 %v3618, 32
      %v3639 = vpop.permute.xlu0 %3638
      %3640 = vrot.lane.b32.xlu0 %v3619, 32
      %v3641 = vpop.permute.xlu0 %3640
      %3642 = vrot.lane.b32.xlu0 %v3620, 32
      %v3643 = vpop.permute.xlu0 %3642
      %3644 = vrot.lane.b32.xlu0 %v3621, 32
      %v3645 = vpop.permute.xlu0 %3644
      %3646 = vrot.lane.b32.xlu0 %v3622, 32
      %v3647 = vpop.permute.xlu0 %3646
      %3648 = vrot.lane.b32.xlu0 %v3623, 32
      %v3649 = vpop.permute.xlu0 %3648
      %3650 = vrot.lane.b32.xlu0 %v3624, 32
      %v3651 = vpop.permute.xlu0 %3650
      %3652 = vrot.lane.b32.xlu0 %v3625, 32
      %v3653 = vpop.permute.xlu0 %3652
      %3654 = vrot.lane.b32.xlu0 %v3626, 32
      %v3655 = vpop.permute.xlu0 %3654
      %3656 = vrot.lane.b32.xlu0 %v3627, 32
      %v3657 = vpop.permute.xlu0 %3656
      %3658 = vrot.lane.b32.xlu0 %v3628, 32
      %v3659 = vpop.permute.xlu0 %3658
      %3660 = vrot.lane.b32.xlu0 %v3629, 32
      %v3661 = vpop.permute.xlu0 %3660
      %v3694 = vunpack.c.l.b16 %v3054
      %v3695 = vunpack.c.l.b16 %v3055
      %v3696 = vunpack.c.l.b16 %v3056
      %v3697 = vunpack.c.l.b16 %v3057
      %v3698 = vunpack.c.l.b16 %v3058
      %v3699 = vunpack.c.l.b16 %v3059
      %v3700 = vunpack.c.l.b16 %v3060
      %v3701 = vunpack.c.l.b16 %v3061
      %v3702 = vunpack.c.l.b16 %v3062
      %v3703 = vunpack.c.l.b16 %v3063
      %v3704 = vunpack.c.l.b16 %v3064
      %v3705 = vunpack.c.l.b16 %v3065
      %v3706 = vunpack.c.l.b16 %v3066
      %v3707 = vunpack.c.l.b16 %v3067
      %v3708 = vunpack.c.l.b16 %v3068
      %v3709 = vunpack.c.l.b16 %v3069
      %v3710 = vunpack.c.l.b16 %v3070
      %v3711 = vunpack.c.l.b16 %v3071
      %v3712 = vunpack.c.l.b16 %v3072
      %v3713 = vunpack.c.l.b16 %v3073
      %v3714 = vunpack.c.l.b16 %v3074
      %v3715 = vunpack.c.l.b16 %v3075
      %v3716 = vunpack.c.l.b16 %v3076
      %v3717 = vunpack.c.l.b16 %v3077
      %v3718 = vunpack.c.l.b16 %v3078
      %v3719 = vunpack.c.l.b16 %v3079
      %v3720 = vunpack.c.l.b16 %v3080
      %v3721 = vunpack.c.l.b16 %v3081
      %v3722 = vunpack.c.l.b16 %v3082
      %v3723 = vunpack.c.l.b16 %v3083
      %v3724 = vunpack.c.l.b16 %v3084
      %v3725 = vunpack.c.l.b16 %v3085
      %v3726 = vpack.c.b16 %v3695, %v3694
      %v3727 = vpack.c.b16 %v3697, %v3696
      %v3728 = vpack.c.b16 %v3699, %v3698
      %v3729 = vpack.c.b16 %v3701, %v3700
      %v3730 = vpack.c.b16 %v3703, %v3702
      %v3731 = vpack.c.b16 %v3705, %v3704
      %v3732 = vpack.c.b16 %v3707, %v3706
      %v3733 = vpack.c.b16 %v3709, %v3708
      %v3734 = vpack.c.b16 %v3711, %v3710
      %v3735 = vpack.c.b16 %v3713, %v3712
      %v3736 = vpack.c.b16 %v3715, %v3714
      %v3737 = vpack.c.b16 %v3717, %v3716
      %v3738 = vpack.c.b16 %v3719, %v3718
      %v3739 = vpack.c.b16 %v3721, %v3720
      %v3740 = vpack.c.b16 %v3723, %v3722
      %v3741 = vpack.c.b16 %v3725, %v3724
      %3742 = vrot.lane.b32.xlu0 %v3726, 64
      %v3743 = vpop.permute.xlu0 %3742
      %3744 = vrot.lane.b32.xlu0 %v3727, 64
      %v3745 = vpop.permute.xlu0 %3744
      %3746 = vrot.lane.b32.xlu0 %v3728, 64
      %v3747 = vpop.permute.xlu0 %3746
      %3748 = vrot.lane.b32.xlu0 %v3729, 64
      %v3749 = vpop.permute.xlu0 %3748
      %3750 = vrot.lane.b32.xlu0 %v3730, 64
      %v3751 = vpop.permute.xlu0 %3750
      %3752 = vrot.lane.b32.xlu0 %v3731, 64
      %v3753 = vpop.permute.xlu0 %3752
      %3754 = vrot.lane.b32.xlu0 %v3732, 64
      %v3755 = vpop.permute.xlu0 %3754
      %3756 = vrot.lane.b32.xlu0 %v3733, 64
      %v3757 = vpop.permute.xlu0 %3756
      %3758 = vrot.lane.b32.xlu0 %v3734, 64
      %v3759 = vpop.permute.xlu0 %3758
      %3760 = vrot.lane.b32.xlu0 %v3735, 64
      %v3761 = vpop.permute.xlu0 %3760
      %3762 = vrot.lane.b32.xlu0 %v3736, 64
      %v3763 = vpop.permute.xlu0 %3762
      %3764 = vrot.lane.b32.xlu0 %v3737, 64
      %v3765 = vpop.permute.xlu0 %3764
      %3766 = vrot.lane.b32.xlu0 %v3738, 64
      %v3767 = vpop.permute.xlu0 %3766
      %3768 = vrot.lane.b32.xlu0 %v3739, 64
      %v3769 = vpop.permute.xlu0 %3768
      %3770 = vrot.lane.b32.xlu0 %v3740, 64
      %v3771 = vpop.permute.xlu0 %3770
      %3772 = vrot.lane.b32.xlu0 %v3741, 64
      %v3773 = vpop.permute.xlu0 %3772
      %v3806 = vunpack.c.l.b16 %v3118
      %v3807 = vunpack.c.l.b16 %v3119
      %v3808 = vunpack.c.l.b16 %v3120
      %v3809 = vunpack.c.l.b16 %v3121
      %v3810 = vunpack.c.l.b16 %v3122
      %v3811 = vunpack.c.l.b16 %v3123
      %v3812 = vunpack.c.l.b16 %v3124
      %v3813 = vunpack.c.l.b16 %v3125
      %v3814 = vunpack.c.l.b16 %v3126
      %v3815 = vunpack.c.l.b16 %v3127
      %v3816 = vunpack.c.l.b16 %v3128
      %v3817 = vunpack.c.l.b16 %v3129
      %v3818 = vunpack.c.l.b16 %v3130
      %v3819 = vunpack.c.l.b16 %v3131
      %v3820 = vunpack.c.l.b16 %v3132
      %v3821 = vunpack.c.l.b16 %v3133
      %v3822 = vunpack.c.l.b16 %v3134
      %v3823 = vunpack.c.l.b16 %v3135
      %v3824 = vunpack.c.l.b16 %v3136
      %v3825 = vunpack.c.l.b16 %v3137
      %v3826 = vunpack.c.l.b16 %v3138
      %v3827 = vunpack.c.l.b16 %v3139
      %v3828 = vunpack.c.l.b16 %v3140
      %v3829 = vunpack.c.l.b16 %v3141
      %v3830 = vunpack.c.l.b16 %v3142
      %v3831 = vunpack.c.l.b16 %v3143
      %v3832 = vunpack.c.l.b16 %v3144
      %v3833 = vunpack.c.l.b16 %v3145
      %v3834 = vunpack.c.l.b16 %v3146
      %v3835 = vunpack.c.l.b16 %v3147
      %v3836 = vunpack.c.l.b16 %v3148
      %v3837 = vunpack.c.l.b16 %v3149
      %v3838 = vpack.c.b16 %v3807, %v3806
      %v3839 = vpack.c.b16 %v3809, %v3808
      %v3840 = vpack.c.b16 %v3811, %v3810
      %v3841 = vpack.c.b16 %v3813, %v3812
      %v3842 = vpack.c.b16 %v3815, %v3814
      %v3843 = vpack.c.b16 %v3817, %v3816
      %v3844 = vpack.c.b16 %v3819, %v3818
      %v3845 = vpack.c.b16 %v3821, %v3820
      %v3846 = vpack.c.b16 %v3823, %v3822
      %v3847 = vpack.c.b16 %v3825, %v3824
      %v3848 = vpack.c.b16 %v3827, %v3826
      %v3849 = vpack.c.b16 %v3829, %v3828
      %v3850 = vpack.c.b16 %v3831, %v3830
      %v3851 = vpack.c.b16 %v3833, %v3832
      %v3852 = vpack.c.b16 %v3835, %v3834
      %v3853 = vpack.c.b16 %v3837, %v3836
      %3854 = vrot.lane.b32.xlu0 %v3838, 96
      %v3855 = vpop.permute.xlu0 %3854
      %3856 = vrot.lane.b32.xlu0 %v3839, 96
      %v3857 = vpop.permute.xlu0 %3856
      %3858 = vrot.lane.b32.xlu0 %v3840, 96
      %v3859 = vpop.permute.xlu0 %3858
      %3860 = vrot.lane.b32.xlu0 %v3841, 96
      %v3861 = vpop.permute.xlu0 %3860
      %3862 = vrot.lane.b32.xlu0 %v3842, 96
      %v3863 = vpop.permute.xlu0 %3862
      %3864 = vrot.lane.b32.xlu0 %v3843, 96
      %v3865 = vpop.permute.xlu0 %3864
      %3866 = vrot.lane.b32.xlu0 %v3844, 96
      %v3867 = vpop.permute.xlu0 %3866
      %3868 = vrot.lane.b32.xlu0 %v3845, 96
      %v3869 = vpop.permute.xlu0 %3868
      %3870 = vrot.lane.b32.xlu0 %v3846, 96
      %v3871 = vpop.permute.xlu0 %3870
      %3872 = vrot.lane.b32.xlu0 %v3847, 96
      %v3873 = vpop.permute.xlu0 %3872
      %3874 = vrot.lane.b32.xlu0 %v3848, 96
      %v3875 = vpop.permute.xlu0 %3874
      %3876 = vrot.lane.b32.xlu0 %v3849, 96
      %v3877 = vpop.permute.xlu0 %3876
      %3878 = vrot.lane.b32.xlu0 %v3850, 96
      %v3879 = vpop.permute.xlu0 %3878
      %3880 = vrot.lane.b32.xlu0 %v3851, 96
      %v3881 = vpop.permute.xlu0 %3880
      %3882 = vrot.lane.b32.xlu0 %v3852, 96
      %v3883 = vpop.permute.xlu0 %3882
      %3884 = vrot.lane.b32.xlu0 %v3853, 96
      %v3885 = vpop.permute.xlu0 %3884
      %v3918 = vunpack.c.l.b16 %v3182
      %v3919 = vunpack.c.l.b16 %v3183
      %v3920 = vunpack.c.l.b16 %v3184
      %v3921 = vunpack.c.l.b16 %v3185
      %v3922 = vunpack.c.l.b16 %v3186
      %v3923 = vunpack.c.l.b16 %v3187
      %v3924 = vunpack.c.l.b16 %v3188
      %v3925 = vunpack.c.l.b16 %v3189
      %v3926 = vunpack.c.l.b16 %v3190
      %v3927 = vunpack.c.l.b16 %v3191
      %v3928 = vunpack.c.l.b16 %v3192
      %v3929 = vunpack.c.l.b16 %v3193
      %v3930 = vunpack.c.l.b16 %v3194
      %v3931 = vunpack.c.l.b16 %v3195
      %v3932 = vunpack.c.l.b16 %v3196
      %v3933 = vunpack.c.l.b16 %v3197
      %v3934 = vunpack.c.l.b16 %v3198
      %v3935 = vunpack.c.l.b16 %v3199
      %v3936 = vunpack.c.l.b16 %v3200
      %v3937 = vunpack.c.l.b16 %v3201
      %v3938 = vunpack.c.l.b16 %v3202
      %v3939 = vunpack.c.l.b16 %v3203
      %v3940 = vunpack.c.l.b16 %v3204
      %v3941 = vunpack.c.l.b16 %v3205
      %v3942 = vunpack.c.l.b16 %v3206
      %v3943 = vunpack.c.l.b16 %v3207
      %v3944 = vunpack.c.l.b16 %v3208
      %v3945 = vunpack.c.l.b16 %v3209
      %v3946 = vunpack.c.l.b16 %v3210
      %v3947 = vunpack.c.l.b16 %v3211
      %v3948 = vunpack.c.l.b16 %v3212
      %v3949 = vunpack.c.l.b16 %v3213
      %v3950 = vpack.c.b16 %v3919, %v3918
      %v3951 = vpack.c.b16 %v3921, %v3920
      %v3952 = vpack.c.b16 %v3923, %v3922
      %v3953 = vpack.c.b16 %v3925, %v3924
      %v3954 = vpack.c.b16 %v3927, %v3926
      %v3955 = vpack.c.b16 %v3929, %v3928
      %v3956 = vpack.c.b16 %v3931, %v3930
      %v3957 = vpack.c.b16 %v3933, %v3932
      %v3958 = vpack.c.b16 %v3935, %v3934
      %v3959 = vpack.c.b16 %v3937, %v3936
      %v3960 = vpack.c.b16 %v3939, %v3938
      %v3961 = vpack.c.b16 %v3941, %v3940
      %v3962 = vpack.c.b16 %v3943, %v3942
      %v3963 = vpack.c.b16 %v3945, %v3944
      %v3964 = vpack.c.b16 %v3947, %v3946
      %v3965 = vpack.c.b16 %v3949, %v3948
      %v3998 = vunpack.c.l.b16 %v3246
      %v3999 = vunpack.c.l.b16 %v3247
      %v4000 = vunpack.c.l.b16 %v3248
      %v4001 = vunpack.c.l.b16 %v3249
      %v4002 = vunpack.c.l.b16 %v3250
      %v4003 = vunpack.c.l.b16 %v3251
      %v4004 = vunpack.c.l.b16 %v3252
      %v4005 = vunpack.c.l.b16 %v3253
      %v4006 = vunpack.c.l.b16 %v3254
      %v4007 = vunpack.c.l.b16 %v3255
      %v4008 = vunpack.c.l.b16 %v3256
      %v4009 = vunpack.c.l.b16 %v3257
      %v4010 = vunpack.c.l.b16 %v3258
      %v4011 = vunpack.c.l.b16 %v3259
      %v4012 = vunpack.c.l.b16 %v3260
      %v4013 = vunpack.c.l.b16 %v3261
      %v4014 = vunpack.c.l.b16 %v3262
      %v4015 = vunpack.c.l.b16 %v3263
      %v4016 = vunpack.c.l.b16 %v3264
      %v4017 = vunpack.c.l.b16 %v3265
      %v4018 = vunpack.c.l.b16 %v3266
      %v4019 = vunpack.c.l.b16 %v3267
      %v4020 = vunpack.c.l.b16 %v3268
      %v4021 = vunpack.c.l.b16 %v3269
      %v4022 = vunpack.c.l.b16 %v3270
      %v4023 = vunpack.c.l.b16 %v3271
      %v4024 = vunpack.c.l.b16 %v3272
      %v4025 = vunpack.c.l.b16 %v3273
      %v4026 = vunpack.c.l.b16 %v3274
      %v4027 = vunpack.c.l.b16 %v3275
      %v4028 = vunpack.c.l.b16 %v3276
      %v4029 = vunpack.c.l.b16 %v3277
      %v4030 = vpack.c.b16 %v3999, %v3998
      %v4031 = vpack.c.b16 %v4001, %v4000
      %v4032 = vpack.c.b16 %v4003, %v4002
      %v4033 = vpack.c.b16 %v4005, %v4004
      %v4034 = vpack.c.b16 %v4007, %v4006
      %v4035 = vpack.c.b16 %v4009, %v4008
      %v4036 = vpack.c.b16 %v4011, %v4010
      %v4037 = vpack.c.b16 %v4013, %v4012
      %v4038 = vpack.c.b16 %v4015, %v4014
      %v4039 = vpack.c.b16 %v4017, %v4016
      %v4040 = vpack.c.b16 %v4019, %v4018
      %v4041 = vpack.c.b16 %v4021, %v4020
      %v4042 = vpack.c.b16 %v4023, %v4022
      %v4043 = vpack.c.b16 %v4025, %v4024
      %v4044 = vpack.c.b16 %v4027, %v4026
      %v4045 = vpack.c.b16 %v4029, %v4028
      %4046 = vrot.lane.b32.xlu0 %v4030, 32
      %v4047 = vpop.permute.xlu0 %4046
      %4048 = vrot.lane.b32.xlu0 %v4031, 32
      %v4049 = vpop.permute.xlu0 %4048
      %4050 = vrot.lane.b32.xlu0 %v4032, 32
      %v4051 = vpop.permute.xlu0 %4050
      %4052 = vrot.lane.b32.xlu0 %v4033, 32
      %v4053 = vpop.permute.xlu0 %4052
      %4054 = vrot.lane.b32.xlu0 %v4034, 32
      %v4055 = vpop.permute.xlu0 %4054
      %4056 = vrot.lane.b32.xlu0 %v4035, 32
      %v4057 = vpop.permute.xlu0 %4056
      %4058 = vrot.lane.b32.xlu0 %v4036, 32
      %v4059 = vpop.permute.xlu0 %4058
      %4060 = vrot.lane.b32.xlu0 %v4037, 32
      %v4061 = vpop.permute.xlu0 %4060
      %4062 = vrot.lane.b32.xlu0 %v4038, 32
      %v4063 = vpop.permute.xlu0 %4062
      %4064 = vrot.lane.b32.xlu0 %v4039, 32
      %v4065 = vpop.permute.xlu0 %4064
      %4066 = vrot.lane.b32.xlu0 %v4040, 32
      %v4067 = vpop.permute.xlu0 %4066
      %4068 = vrot.lane.b32.xlu0 %v4041, 32
      %v4069 = vpop.permute.xlu0 %4068
      %4070 = vrot.lane.b32.xlu0 %v4042, 32
      %v4071 = vpop.permute.xlu0 %4070
      %4072 = vrot.lane.b32.xlu0 %v4043, 32
      %v4073 = vpop.permute.xlu0 %4072
      %4074 = vrot.lane.b32.xlu0 %v4044, 32
      %v4075 = vpop.permute.xlu0 %4074
      %4076 = vrot.lane.b32.xlu0 %v4045, 32
      %v4077 = vpop.permute.xlu0 %4076
      %v4110 = vunpack.c.l.b16 %v3310
      %v4111 = vunpack.c.l.b16 %v3311
      %v4112 = vunpack.c.l.b16 %v3312
      %v4113 = vunpack.c.l.b16 %v3313
      %v4114 = vunpack.c.l.b16 %v3314
      %v4115 = vunpack.c.l.b16 %v3315
      %v4116 = vunpack.c.l.b16 %v3316
      %v4117 = vunpack.c.l.b16 %v3317
      %v4118 = vunpack.c.l.b16 %v3318
      %v4119 = vunpack.c.l.b16 %v3319
      %v4120 = vunpack.c.l.b16 %v3320
      %v4121 = vunpack.c.l.b16 %v3321
      %v4122 = vunpack.c.l.b16 %v3322
      %v4123 = vunpack.c.l.b16 %v3323
      %v4124 = vunpack.c.l.b16 %v3324
      %v4125 = vunpack.c.l.b16 %v3325
      %v4126 = vunpack.c.l.b16 %v3326
      %v4127 = vunpack.c.l.b16 %v3327
      %v4128 = vunpack.c.l.b16 %v3328
      %v4129 = vunpack.c.l.b16 %v3329
      %v4130 = vunpack.c.l.b16 %v3330
      %v4131 = vunpack.c.l.b16 %v3331
      %v4132 = vunpack.c.l.b16 %v3332
      %v4133 = vunpack.c.l.b16 %v3333
      %v4134 = vunpack.c.l.b16 %v3334
      %v4135 = vunpack.c.l.b16 %v3335
      %v4136 = vunpack.c.l.b16 %v3336
      %v4137 = vunpack.c.l.b16 %v3337
      %v4138 = vunpack.c.l.b16 %v3338
      %v4139 = vunpack.c.l.b16 %v3339
      %v4140 = vunpack.c.l.b16 %v3340
      %v4141 = vunpack.c.l.b16 %v3341
      %v4142 = vpack.c.b16 %v4111, %v4110
      %v4143 = vpack.c.b16 %v4113, %v4112
      %v4144 = vpack.c.b16 %v4115, %v4114
      %v4145 = vpack.c.b16 %v4117, %v4116
      %v4146 = vpack.c.b16 %v4119, %v4118
      %v4147 = vpack.c.b16 %v4121, %v4120
      %v4148 = vpack.c.b16 %v4123, %v4122
      %v4149 = vpack.c.b16 %v4125, %v4124
      %v4150 = vpack.c.b16 %v4127, %v4126
      %v4151 = vpack.c.b16 %v4129, %v4128
      %v4152 = vpack.c.b16 %v4131, %v4130
      %v4153 = vpack.c.b16 %v4133, %v4132
      %v4154 = vpack.c.b16 %v4135, %v4134
      %v4155 = vpack.c.b16 %v4137, %v4136
      %v4156 = vpack.c.b16 %v4139, %v4138
      %v4157 = vpack.c.b16 %v4141, %v4140
      %4158 = vrot.lane.b32.xlu0 %v4142, 64
      %v4159 = vpop.permute.xlu0 %4158
      %4160 = vrot.lane.b32.xlu0 %v4143, 64
      %v4161 = vpop.permute.xlu0 %4160
      %4162 = vrot.lane.b32.xlu0 %v4144, 64
      %v4163 = vpop.permute.xlu0 %4162
      %4164 = vrot.lane.b32.xlu0 %v4145, 64
      %v4165 = vpop.permute.xlu0 %4164
      %4166 = vrot.lane.b32.xlu0 %v4146, 64
      %v4167 = vpop.permute.xlu0 %4166
      %4168 = vrot.lane.b32.xlu0 %v4147, 64
      %v4169 = vpop.permute.xlu0 %4168
      %4170 = vrot.lane.b32.xlu0 %v4148, 64
      %v4171 = vpop.permute.xlu0 %4170
      %4172 = vrot.lane.b32.xlu0 %v4149, 64
      %v4173 = vpop.permute.xlu0 %4172
      %4174 = vrot.lane.b32.xlu0 %v4150, 64
      %v4175 = vpop.permute.xlu0 %4174
      %4176 = vrot.lane.b32.xlu0 %v4151, 64
      %v4177 = vpop.permute.xlu0 %4176
      %4178 = vrot.lane.b32.xlu0 %v4152, 64
      %v4179 = vpop.permute.xlu0 %4178
      %4180 = vrot.lane.b32.xlu0 %v4153, 64
      %v4181 = vpop.permute.xlu0 %4180
      %4182 = vrot.lane.b32.xlu0 %v4154, 64
      %v4183 = vpop.permute.xlu0 %4182
      %4184 = vrot.lane.b32.xlu0 %v4155, 64
      %v4185 = vpop.permute.xlu0 %4184
      %4186 = vrot.lane.b32.xlu0 %v4156, 64
      %v4187 = vpop.permute.xlu0 %4186
      %4188 = vrot.lane.b32.xlu0 %v4157, 64
      %v4189 = vpop.permute.xlu0 %4188
      %v4222 = vunpack.c.l.b16 %v3374
      %v4223 = vunpack.c.l.b16 %v3375
      %v4224 = vunpack.c.l.b16 %v3376
      %v4225 = vunpack.c.l.b16 %v3377
      %v4226 = vunpack.c.l.b16 %v3378
      %v4227 = vunpack.c.l.b16 %v3379
      %v4228 = vunpack.c.l.b16 %v3380
      %v4229 = vunpack.c.l.b16 %v3381
      %v4230 = vunpack.c.l.b16 %v3382
      %v4231 = vunpack.c.l.b16 %v3383
      %v4232 = vunpack.c.l.b16 %v3384
      %v4233 = vunpack.c.l.b16 %v3385
      %v4234 = vunpack.c.l.b16 %v3386
      %v4235 = vunpack.c.l.b16 %v3387
      %v4236 = vunpack.c.l.b16 %v3388
      %v4237 = vunpack.c.l.b16 %v3389
      %v4238 = vunpack.c.l.b16 %v3390
      %v4239 = vunpack.c.l.b16 %v3391
      %v4240 = vunpack.c.l.b16 %v3392
      %v4241 = vunpack.c.l.b16 %v3393
      %v4242 = vunpack.c.l.b16 %v3394
      %v4243 = vunpack.c.l.b16 %v3395
      %v4244 = vunpack.c.l.b16 %v3396
      %v4245 = vunpack.c.l.b16 %v3397
      %v4246 = vunpack.c.l.b16 %v3398
      %v4247 = vunpack.c.l.b16 %v3399
      %v4248 = vunpack.c.l.b16 %v3400
      %v4249 = vunpack.c.l.b16 %v3401
      %v4250 = vunpack.c.l.b16 %v3402
      %v4251 = vunpack.c.l.b16 %v3403
      %v4252 = vunpack.c.l.b16 %v3404
      %v4253 = vunpack.c.l.b16 %v3405
      %v4254 = vpack.c.b16 %v4223, %v4222
      %v4255 = vpack.c.b16 %v4225, %v4224
      %v4256 = vpack.c.b16 %v4227, %v4226
      %v4257 = vpack.c.b16 %v4229, %v4228
      %v4258 = vpack.c.b16 %v4231, %v4230
      %v4259 = vpack.c.b16 %v4233, %v4232
      %v4260 = vpack.c.b16 %v4235, %v4234
      %v4261 = vpack.c.b16 %v4237, %v4236
      %v4262 = vpack.c.b16 %v4239, %v4238
      %v4263 = vpack.c.b16 %v4241, %v4240
      %v4264 = vpack.c.b16 %v4243, %v4242
      %v4265 = vpack.c.b16 %v4245, %v4244
      %v4266 = vpack.c.b16 %v4247, %v4246
      %v4267 = vpack.c.b16 %v4249, %v4248
      %v4268 = vpack.c.b16 %v4251, %v4250
      %v4269 = vpack.c.b16 %v4253, %v4252
      %4270 = vrot.lane.b32.xlu0 %v4254, 96
      %v4271 = vpop.permute.xlu0 %4270
      %4272 = vrot.lane.b32.xlu0 %v4255, 96
      %v4273 = vpop.permute.xlu0 %4272
      %4274 = vrot.lane.b32.xlu0 %v4256, 96
      %v4275 = vpop.permute.xlu0 %4274
      %4276 = vrot.lane.b32.xlu0 %v4257, 96
      %v4277 = vpop.permute.xlu0 %4276
      %4278 = vrot.lane.b32.xlu0 %v4258, 96
      %v4279 = vpop.permute.xlu0 %4278
      %4280 = vrot.lane.b32.xlu0 %v4259, 96
      %v4281 = vpop.permute.xlu0 %4280
      %4282 = vrot.lane.b32.xlu0 %v4260, 96
      %v4283 = vpop.permute.xlu0 %4282
      %4284 = vrot.lane.b32.xlu0 %v4261, 96
      %v4285 = vpop.permute.xlu0 %4284
      %4286 = vrot.lane.b32.xlu0 %v4262, 96
      %v4287 = vpop.permute.xlu0 %4286
      %4288 = vrot.lane.b32.xlu0 %v4263, 96
      %v4289 = vpop.permute.xlu0 %4288
      %4290 = vrot.lane.b32.xlu0 %v4264, 96
      %v4291 = vpop.permute.xlu0 %4290
      %4292 = vrot.lane.b32.xlu0 %v4265, 96
      %v4293 = vpop.permute.xlu0 %4292
      %4294 = vrot.lane.b32.xlu0 %v4266, 96
      %v4295 = vpop.permute.xlu0 %4294
      %4296 = vrot.lane.b32.xlu0 %v4267, 96
      %v4297 = vpop.permute.xlu0 %4296
      %4298 = vrot.lane.b32.xlu0 %v4268, 96
      %v4299 = vpop.permute.xlu0 %4298
      %4300 = vrot.lane.b32.xlu0 %v4269, 96
      %v4301 = vpop.permute.xlu0 %4300
      %v4334 = vunpack.c.l.b16 %v3438
      %v4335 = vunpack.c.l.b16 %v3439
      %v4336 = vunpack.c.l.b16 %v3440
      %v4337 = vunpack.c.l.b16 %v3441
      %v4338 = vunpack.c.l.b16 %v3442
      %v4339 = vunpack.c.l.b16 %v3443
      %v4340 = vunpack.c.l.b16 %v3444
      %v4341 = vunpack.c.l.b16 %v3445
      %v4342 = vunpack.c.l.b16 %v3446
      %v4343 = vunpack.c.l.b16 %v3447
      %v4344 = vunpack.c.l.b16 %v3448
      %v4345 = vunpack.c.l.b16 %v3449
      %v4346 = vunpack.c.l.b16 %v3450
      %v4347 = vunpack.c.l.b16 %v3451
      %v4348 = vunpack.c.l.b16 %v3452
      %v4349 = vunpack.c.l.b16 %v3453
      %v4350 = vunpack.c.l.b16 %v3454
      %v4351 = vunpack.c.l.b16 %v3455
      %v4352 = vunpack.c.l.b16 %v3456
      %v4353 = vunpack.c.l.b16 %v3457
      %v4354 = vunpack.c.l.b16 %v3458
      %v4355 = vunpack.c.l.b16 %v3459
      %v4356 = vunpack.c.l.b16 %v3460
      %v4357 = vunpack.c.l.b16 %v3461
      %v4358 = vunpack.c.l.b16 %v3462
      %v4359 = vunpack.c.l.b16 %v3463
      %v4360 = vunpack.c.l.b16 %v3464
      %v4361 = vunpack.c.l.b16 %v3465
      %v4362 = vunpack.c.l.b16 %v3466
      %v4363 = vunpack.c.l.b16 %v3467
      %v4364 = vunpack.c.l.b16 %v3468
      %v4365 = vunpack.c.l.b16 %v3469
      %v4366 = vpack.c.b16 %v4335, %v4334
      %v4367 = vpack.c.b16 %v4337, %v4336
      %v4368 = vpack.c.b16 %v4339, %v4338
      %v4369 = vpack.c.b16 %v4341, %v4340
      %v4370 = vpack.c.b16 %v4343, %v4342
      %v4371 = vpack.c.b16 %v4345, %v4344
      %v4372 = vpack.c.b16 %v4347, %v4346
      %v4373 = vpack.c.b16 %v4349, %v4348
      %v4374 = vpack.c.b16 %v4351, %v4350
      %v4375 = vpack.c.b16 %v4353, %v4352
      %v4376 = vpack.c.b16 %v4355, %v4354
      %v4377 = vpack.c.b16 %v4357, %v4356
      %v4378 = vpack.c.b16 %v4359, %v4358
      %v4379 = vpack.c.b16 %v4361, %v4360
      %v4380 = vpack.c.b16 %v4363, %v4362
      %v4381 = vpack.c.b16 %v4365, %v4364
      %v4384 = vsel %vm442, %v3534, %v3631
      %v4387 = vsel %vm442, %v3535, %v3633
      %v4390 = vsel %vm442, %v3536, %v3635
      %v4393 = vsel %vm442, %v3537, %v3637
      %v4396 = vsel %vm442, %v3538, %v3639
      %v4399 = vsel %vm442, %v3539, %v3641
      %v4402 = vsel %vm442, %v3540, %v3643
      %v4405 = vsel %vm442, %v3541, %v3645
      %v4408 = vsel %vm442, %v3542, %v3647
      %v4411 = vsel %vm442, %v3543, %v3649
      %v4414 = vsel %vm442, %v3544, %v3651
      %v4417 = vsel %vm442, %v3545, %v3653
      %v4420 = vsel %vm442, %v3546, %v3655
      %v4423 = vsel %vm442, %v3547, %v3657
      %v4426 = vsel %vm442, %v3548, %v3659
      %v4429 = vsel %vm442, %v3549, %v3661
      %v4431 = vsel %vm2157, %v4384, %v3743
      %v4433 = vsel %vm2157, %v4387, %v3745
      %v4435 = vsel %vm2157, %v4390, %v3747
      %v4437 = vsel %vm2157, %v4393, %v3749
      %v4439 = vsel %vm2157, %v4396, %v3751
      %v4441 = vsel %vm2157, %v4399, %v3753
      %v4443 = vsel %vm2157, %v4402, %v3755
      %v4445 = vsel %vm2157, %v4405, %v3757
      %v4447 = vsel %vm2157, %v4408, %v3759
      %v4449 = vsel %vm2157, %v4411, %v3761
      %v4451 = vsel %vm2157, %v4414, %v3763
      %v4453 = vsel %vm2157, %v4417, %v3765
      %v4455 = vsel %vm2157, %v4420, %v3767
      %v4457 = vsel %vm2157, %v4423, %v3769
      %v4459 = vsel %vm2157, %v4426, %v3771
      %v4461 = vsel %vm2157, %v4429, %v3773
      %v4463 = vsel %vm2190, %v4431, %v3855
      %v4466 = vsel %vm2190, %v4433, %v3857
      %v4469 = vsel %vm2190, %v4435, %v3859
      %v4472 = vsel %vm2190, %v4437, %v3861
      %v4475 = vsel %vm2190, %v4439, %v3863
      %v4478 = vsel %vm2190, %v4441, %v3865
      %v4481 = vsel %vm2190, %v4443, %v3867
      %v4484 = vsel %vm2190, %v4445, %v3869
      %v4487 = vsel %vm2190, %v4447, %v3871
      %v4490 = vsel %vm2190, %v4449, %v3873
      %v4493 = vsel %vm2190, %v4451, %v3875
      %v4496 = vsel %vm2190, %v4453, %v3877
      %v4499 = vsel %vm2190, %v4455, %v3879
      %v4502 = vsel %vm2190, %v4457, %v3881
      %v4505 = vsel %vm2190, %v4459, %v3883
      %v4508 = vsel %vm2190, %v4461, %v3885
      %v4512 = vsel %vm442, %v3950, %v4047
      %v4515 = vsel %vm442, %v3951, %v4049
      %v4518 = vsel %vm442, %v3952, %v4051
      %v4521 = vsel %vm442, %v3953, %v4053
      %v4524 = vsel %vm442, %v3954, %v4055
      %v4527 = vsel %vm442, %v3955, %v4057
      %v4530 = vsel %vm442, %v3956, %v4059
      %v4533 = vsel %vm442, %v3957, %v4061
      %v4536 = vsel %vm442, %v3958, %v4063
      %v4539 = vsel %vm442, %v3959, %v4065
      %v4542 = vsel %vm442, %v3960, %v4067
      %v4545 = vsel %vm442, %v3961, %v4069
      %v4548 = vsel %vm442, %v3962, %v4071
      %v4551 = vsel %vm442, %v3963, %v4073
      %v4554 = vsel %vm442, %v3964, %v4075
      %v4557 = vsel %vm442, %v3965, %v4077
      %v4559 = vsel %vm2157, %v4512, %v4159
      %v4561 = vsel %vm2157, %v4515, %v4161
      %v4563 = vsel %vm2157, %v4518, %v4163
      %v4565 = vsel %vm2157, %v4521, %v4165
      %v4567 = vsel %vm2157, %v4524, %v4167
      %v4569 = vsel %vm2157, %v4527, %v4169
      %v4571 = vsel %vm2157, %v4530, %v4171
      %v4573 = vsel %vm2157, %v4533, %v4173
      %v4575 = vsel %vm2157, %v4536, %v4175
      %v4577 = vsel %vm2157, %v4539, %v4177
      %v4579 = vsel %vm2157, %v4542, %v4179
      %v4581 = vsel %vm2157, %v4545, %v4181
      %v4583 = vsel %vm2157, %v4548, %v4183
      %v4585 = vsel %vm2157, %v4551, %v4185
      %v4587 = vsel %vm2157, %v4554, %v4187
      %v4589 = vsel %vm2157, %v4557, %v4189
      %v4591 = vsel %vm2190, %v4559, %v4271
      %v4594 = vsel %vm2190, %v4561, %v4273
      %v4597 = vsel %vm2190, %v4563, %v4275
      %v4600 = vsel %vm2190, %v4565, %v4277
      %v4603 = vsel %vm2190, %v4567, %v4279
      %v4606 = vsel %vm2190, %v4569, %v4281
      %v4609 = vsel %vm2190, %v4571, %v4283
      %v4612 = vsel %vm2190, %v4573, %v4285
      %v4615 = vsel %vm2190, %v4575, %v4287
      %v4618 = vsel %vm2190, %v4577, %v4289
      %v4621 = vsel %vm2190, %v4579, %v4291
      %v4624 = vsel %vm2190, %v4581, %v4293
      %v4627 = vsel %vm2190, %v4583, %v4295
      %v4630 = vsel %vm2190, %v4585, %v4297
      %v4633 = vsel %vm2190, %v4587, %v4299
      %v4636 = vsel %vm2190, %v4589, %v4301
      %v4638 = vperm.slane %v2893, 0
      %v4675 = vunpack.c.l.b16 %v2857
      %v4676 = vunpack.c.l.b16 %v2858
      %v4677 = vunpack.c.l.b16 %v2859
      %v4678 = vunpack.c.l.b16 %v2860
      %v4679 = vunpack.c.l.b16 %v2861
      %v4680 = vunpack.c.l.b16 %v2862
      %v4681 = vunpack.c.l.b16 %v2863
      %v4682 = vunpack.c.l.b16 %v2864
      %v4683 = vunpack.c.l.b16 %v2865
      %v4684 = vunpack.c.l.b16 %v2866
      %v4685 = vunpack.c.l.b16 %v2867
      %v4686 = vunpack.c.l.b16 %v2868
      %v4687 = vunpack.c.l.b16 %v2869
      %v4688 = vunpack.c.l.b16 %v2870
      %v4689 = vunpack.c.l.b16 %v2871
      %v4690 = vunpack.c.l.b16 %v2872
      %v4691 = vunpack.c.l.b16 %v2873
      %v4692 = vunpack.c.l.b16 %v2874
      %v4693 = vunpack.c.l.b16 %v2875
      %v4694 = vunpack.c.l.b16 %v2876
      %v4695 = vunpack.c.l.b16 %v2877
      %v4696 = vunpack.c.l.b16 %v2878
      %v4697 = vunpack.c.l.b16 %v2879
      %v4698 = vunpack.c.l.b16 %v2880
      %v4699 = vunpack.c.l.b16 %v2881
      %v4700 = vunpack.c.l.b16 %v2882
      %v4701 = vunpack.c.l.b16 %v2883
      %v4702 = vunpack.c.l.b16 %v2884
      %v4703 = vunpack.c.l.b16 %v2885
      %v4704 = vunpack.c.l.b16 %v2886
      %v4705 = vunpack.c.l.b16 %v2887
      %v4706 = vunpack.c.l.b16 %v2888
      %v4707 = vunpack.c.l.b16 %v2889
      %v4708 = vunpack.c.l.b16 %v2890
      %v4709 = vunpack.c.l.b16 %v2891
      %v4710 = vunpack.c.l.b16 %v2892
      %v4711 = vpack.c.b16 %v4676, %v4675
      %v4712 = vpack.c.b16 %v4678, %v4677
      %v4713 = vpack.c.b16 %v4680, %v4679
      %v4714 = vpack.c.b16 %v4682, %v4681
      %v4715 = vpack.c.b16 %v4684, %v4683
      %v4716 = vpack.c.b16 %v4686, %v4685
      %v4717 = vpack.c.b16 %v4688, %v4687
      %v4718 = vpack.c.b16 %v4690, %v4689
      %v4719 = vpack.c.b16 %v4692, %v4691
      %v4720 = vpack.c.b16 %v4694, %v4693
      %v4721 = vpack.c.b16 %v4696, %v4695
      %v4722 = vpack.c.b16 %v4698, %v4697
      %v4723 = vpack.c.b16 %v4700, %v4699
      %v4724 = vpack.c.b16 %v4702, %v4701
      %v4725 = vpack.c.b16 %v4704, %v4703
      %v4726 = vpack.c.b16 %v4706, %v4705
      %v4727 = vpack.c.b16 %v4708, %v4707
      %v4728 = vpack.c.b16 %v4710, %v4709
      %v4748 = vsel %vm442, %v4366, 0
      %v4751 = vsel %vm442, %v4367, 0
      %v4754 = vsel %vm442, %v4368, 0
      %v4757 = vsel %vm442, %v4369, 0
      %v4760 = vsel %vm442, %v4370, 0
      %v4763 = vsel %vm442, %v4371, 0
      %v4766 = vsel %vm442, %v4372, 0
      %v4769 = vsel %vm442, %v4373, 0
      %v4772 = vsel %vm442, %v4374, 0
      %v4775 = vsel %vm442, %v4375, 0
      %v4778 = vsel %vm442, %v4376, 0
      %v4781 = vsel %vm442, %v4377, 0
      %v4784 = vsel %vm442, %v4378, 0
      %v4787 = vsel %vm442, %v4379, 0
      %v4790 = vsel %vm442, %v4380, 0
      %v4793 = vsel %vm442, %v4381, 0
      %4795 = vmatpush.bf16.msra.mxu0 %v4718
      %4796 = vmatpush.bf16.msra.mxu0 %v4717
      %4797 = vmatpush.bf16.msra.mxu0 %v4716
      %4798 = vmatpush.bf16.msra.mxu0 %v4715
      %4799 = vmatpush.bf16.msra.mxu0 %v4714
      %4800 = vmatpush.bf16.msra.mxu0 %v4713
      %4801 = vmatpush.bf16.msra.mxu0 %v4712
      %4802 = vmatpush.bf16.msra.mxu0 %v4711
      %4803 = vmatmul.bf16.gmra.mxu0 %v4463
      %v4804 = vpop.f32.mrf.mxu0
      %v4805 = vadd.f32 %v4638, %v4804
      %v4806 = vpop.f32.mrf.mxu0
      %v4807 = vadd.f32 %v4638, %v4806
      %4808 = vmatmul.bf16.gmra.mxu0 %v4466
      %v4809 = vpop.f32.mrf.mxu0
      %v4810 = vadd.f32 %v4638, %v4809
      %v4811 = vpop.f32.mrf.mxu0
      %v4812 = vadd.f32 %v4638, %v4811
      %4813 = vmatmul.bf16.gmra.mxu0 %v4469
      %v4814 = vpop.f32.mrf.mxu0
      %v4815 = vadd.f32 %v4638, %v4814
      %v4816 = vpop.f32.mrf.mxu0
      %v4817 = vadd.f32 %v4638, %v4816
      %4818 = vmatmul.bf16.gmra.mxu0 %v4472
      %v4819 = vpop.f32.mrf.mxu0
      %v4820 = vadd.f32 %v4638, %v4819
      %v4821 = vpop.f32.mrf.mxu0
      %v4822 = vadd.f32 %v4638, %v4821
      %4823 = vmatmul.bf16.gmra.mxu0 %v4475
      %v4824 = vpop.f32.mrf.mxu0
      %v4825 = vadd.f32 %v4638, %v4824
      %v4826 = vpop.f32.mrf.mxu0
      %v4827 = vadd.f32 %v4638, %v4826
      %4828 = vmatmul.bf16.gmra.mxu0 %v4478
      %v4829 = vpop.f32.mrf.mxu0
      %v4830 = vadd.f32 %v4638, %v4829
      %v4831 = vpop.f32.mrf.mxu0
      %v4832 = vadd.f32 %v4638, %v4831
      %4833 = vmatmul.bf16.gmra.mxu0 %v4481
      %v4834 = vpop.f32.mrf.mxu0
      %v4835 = vadd.f32 %v4638, %v4834
      %v4836 = vpop.f32.mrf.mxu0
      %v4837 = vadd.f32 %v4638, %v4836
      %4838 = vmatmul.bf16.gmra.mxu0 %v4484
      %v4839 = vpop.f32.mrf.mxu0
      %v4840 = vadd.f32 %v4638, %v4839
      %v4841 = vpop.f32.mrf.mxu0
      %v4842 = vadd.f32 %v4638, %v4841
      %4843 = vmatmul.bf16.gmra.mxu0 %v4487
      %v4844 = vpop.f32.mrf.mxu0
      %v4845 = vadd.f32 %v4638, %v4844
      %v4846 = vpop.f32.mrf.mxu0
      %v4847 = vadd.f32 %v4638, %v4846
      %4848 = vmatmul.bf16.gmra.mxu0 %v4490
      %v4849 = vpop.f32.mrf.mxu0
      %v4850 = vadd.f32 %v4638, %v4849
      %v4851 = vpop.f32.mrf.mxu0
      %v4852 = vadd.f32 %v4638, %v4851
      %4853 = vmatmul.bf16.gmra.mxu0 %v4493
      %v4854 = vpop.f32.mrf.mxu0
      %v4855 = vadd.f32 %v4638, %v4854
      %v4856 = vpop.f32.mrf.mxu0
      %v4857 = vadd.f32 %v4638, %v4856
      %4858 = vmatmul.bf16.gmra.mxu0 %v4496
      %v4859 = vpop.f32.mrf.mxu0
      %v4860 = vadd.f32 %v4638, %v4859
      %v4861 = vpop.f32.mrf.mxu0
      %v4862 = vadd.f32 %v4638, %v4861
      %4863 = vmatmul.bf16.gmra.mxu0 %v4499
      %v4864 = vpop.f32.mrf.mxu0
      %v4865 = vadd.f32 %v4638, %v4864
      %v4866 = vpop.f32.mrf.mxu0
      %v4867 = vadd.f32 %v4638, %v4866
      %4868 = vmatmul.bf16.gmra.mxu0 %v4502
      %v4869 = vpop.f32.mrf.mxu0
      %v4870 = vadd.f32 %v4638, %v4869
      %v4871 = vpop.f32.mrf.mxu0
      %v4872 = vadd.f32 %v4638, %v4871
      %4873 = vmatmul.bf16.gmra.mxu0 %v4505
      %v4874 = vpop.f32.mrf.mxu0
      %v4875 = vadd.f32 %v4638, %v4874
      %v4876 = vpop.f32.mrf.mxu0
      %v4877 = vadd.f32 %v4638, %v4876
      %4878 = vmatmul.bf16.gmra.mxu0 %v4508
      %v4879 = vpop.f32.mrf.mxu0
      %v4880 = vadd.f32 %v4638, %v4879
      %v4881 = vpop.f32.mrf.mxu0
      %v4882 = vadd.f32 %v4638, %v4881
      %4883 = vdwg.mxu0
      %4884 = vmatpush.bf16.msra.mxu0 %v4726
      %4885 = vmatpush.bf16.msra.mxu0 %v4725
      %4886 = vmatpush.bf16.msra.mxu0 %v4724
      %4887 = vmatpush.bf16.msra.mxu0 %v4723
      %4888 = vmatpush.bf16.msra.mxu0 %v4722
      %4889 = vmatpush.bf16.msra.mxu0 %v4721
      %4890 = vmatpush.bf16.msra.mxu0 %v4720
      %4891 = vmatpush.bf16.msra.mxu0 %v4719
      %4892 = vmatmul.bf16.gmra.mxu0 %v4591
      %v4893 = vpop.f32.mrf.mxu0
      %v4894 = vadd.f32 %v4805, %v4893
      %v4895 = vpop.f32.mrf.mxu0
      %v4896 = vadd.f32 %v4807, %v4895
      %4897 = vmatmul.bf16.gmra.mxu0 %v4594
      %v4898 = vpop.f32.mrf.mxu0
      %v4899 = vadd.f32 %v4810, %v4898
      %v4900 = vpop.f32.mrf.mxu0
      %v4901 = vadd.f32 %v4812, %v4900
      %4902 = vmatmul.bf16.gmra.mxu0 %v4597
      %v4903 = vpop.f32.mrf.mxu0
      %v4904 = vadd.f32 %v4815, %v4903
      %v4905 = vpop.f32.mrf.mxu0
      %v4906 = vadd.f32 %v4817, %v4905
      %4907 = vmatmul.bf16.gmra.mxu0 %v4600
      %v4908 = vpop.f32.mrf.mxu0
      %v4909 = vadd.f32 %v4820, %v4908
      %v4910 = vpop.f32.mrf.mxu0
      %v4911 = vadd.f32 %v4822, %v4910
      %4912 = vmatmul.bf16.gmra.mxu0 %v4603
      %v4913 = vpop.f32.mrf.mxu0
      %v4914 = vadd.f32 %v4825, %v4913
      %v4915 = vpop.f32.mrf.mxu0
      %v4916 = vadd.f32 %v4827, %v4915
      %4917 = vmatmul.bf16.gmra.mxu0 %v4606
      %v4918 = vpop.f32.mrf.mxu0
      %v4919 = vadd.f32 %v4830, %v4918
      %v4920 = vpop.f32.mrf.mxu0
      %v4921 = vadd.f32 %v4832, %v4920
      %4922 = vmatmul.bf16.gmra.mxu0 %v4609
      %v4923 = vpop.f32.mrf.mxu0
      %v4924 = vadd.f32 %v4835, %v4923
      %v4925 = vpop.f32.mrf.mxu0
      %v4926 = vadd.f32 %v4837, %v4925
      %4927 = vmatmul.bf16.gmra.mxu0 %v4612
      %v4928 = vpop.f32.mrf.mxu0
      %v4929 = vadd.f32 %v4840, %v4928
      %v4930 = vpop.f32.mrf.mxu0
      %v4931 = vadd.f32 %v4842, %v4930
      %4932 = vmatmul.bf16.gmra.mxu0 %v4615
      %v4933 = vpop.f32.mrf.mxu0
      %v4934 = vadd.f32 %v4845, %v4933
      %v4935 = vpop.f32.mrf.mxu0
      %v4936 = vadd.f32 %v4847, %v4935
      %4937 = vmatmul.bf16.gmra.mxu0 %v4618
      %v4938 = vpop.f32.mrf.mxu0
      %v4939 = vadd.f32 %v4850, %v4938
      %v4940 = vpop.f32.mrf.mxu0
      %v4941 = vadd.f32 %v4852, %v4940
      %4942 = vmatmul.bf16.gmra.mxu0 %v4621
      %v4943 = vpop.f32.mrf.mxu0
      %v4944 = vadd.f32 %v4855, %v4943
      %v4945 = vpop.f32.mrf.mxu0
      %v4946 = vadd.f32 %v4857, %v4945
      %4947 = vmatmul.bf16.gmra.mxu0 %v4624
      %v4948 = vpop.f32.mrf.mxu0
      %v4949 = vadd.f32 %v4860, %v4948
      %v4950 = vpop.f32.mrf.mxu0
      %v4951 = vadd.f32 %v4862, %v4950
      %4952 = vmatmul.bf16.gmra.mxu0 %v4627
      %v4953 = vpop.f32.mrf.mxu0
      %v4954 = vadd.f32 %v4865, %v4953
      %v4955 = vpop.f32.mrf.mxu0
      %v4956 = vadd.f32 %v4867, %v4955
      %4957 = vmatmul.bf16.gmra.mxu0 %v4630
      %v4958 = vpop.f32.mrf.mxu0
      %v4959 = vadd.f32 %v4870, %v4958
      %v4960 = vpop.f32.mrf.mxu0
      %v4961 = vadd.f32 %v4872, %v4960
      %4962 = vmatmul.bf16.gmra.mxu0 %v4633
      %v4963 = vpop.f32.mrf.mxu0
      %v4964 = vadd.f32 %v4875, %v4963
      %v4965 = vpop.f32.mrf.mxu0
      %v4966 = vadd.f32 %v4877, %v4965
      %4967 = vmatmul.bf16.gmra.mxu0 %v4636
      %v4968 = vpop.f32.mrf.mxu0
      %v4969 = vadd.f32 %v4880, %v4968
      %v4970 = vpop.f32.mrf.mxu0
      %v4971 = vadd.f32 %v4882, %v4970
      %4972 = vdwg.mxu0
      %4973 = vmatpush.bf16.msra.mxu0 0
      %4974 = vmatpush.bf16.msra.mxu0 0
      %4975 = vmatpush.bf16.msra.mxu0 0
      %4976 = vmatpush.bf16.msra.mxu0 0
      %4977 = vmatpush.bf16.msra.mxu0 0
      %4978 = vmatpush.bf16.msra.mxu0 0
      %4979 = vmatpush.bf16.msra.mxu0 %v4728
      %4980 = vmatpush.bf16.msra.mxu0 %v4727
      %4981 = vmatmul.bf16.gmra.mxu0 %v4748
      %v4982 = vpop.f32.mrf.mxu0
      %v4983 = vadd.f32 %v4894, %v4982
      %v4984 = vpop.f32.mrf.mxu0
      %v4985 = vadd.f32 %v4896, %v4984
      %4986 = vmatmul.bf16.gmra.mxu0 %v4751
      %v4987 = vpop.f32.mrf.mxu0
      %v4988 = vadd.f32 %v4899, %v4987
      %v4989 = vpop.f32.mrf.mxu0
      %v4990 = vadd.f32 %v4901, %v4989
      %4991 = vmatmul.bf16.gmra.mxu0 %v4754
      %v4992 = vpop.f32.mrf.mxu0
      %v4993 = vadd.f32 %v4904, %v4992
      %v4994 = vpop.f32.mrf.mxu0
      %v4995 = vadd.f32 %v4906, %v4994
      %4996 = vmatmul.bf16.gmra.mxu0 %v4757
      %v4997 = vpop.f32.mrf.mxu0
      %v4998 = vadd.f32 %v4909, %v4997
      %v4999 = vpop.f32.mrf.mxu0
      %v5000 = vadd.f32 %v4911, %v4999
      %5001 = vmatmul.bf16.gmra.mxu0 %v4760
      %v5002 = vpop.f32.mrf.mxu0
      %v5003 = vadd.f32 %v4914, %v5002
      %v5004 = vpop.f32.mrf.mxu0
      %v5005 = vadd.f32 %v4916, %v5004
      %5006 = vmatmul.bf16.gmra.mxu0 %v4763
      %v5007 = vpop.f32.mrf.mxu0
      %v5008 = vadd.f32 %v4919, %v5007
      %v5009 = vpop.f32.mrf.mxu0
      %v5010 = vadd.f32 %v4921, %v5009
      %5011 = vmatmul.bf16.gmra.mxu0 %v4766
      %v5012 = vpop.f32.mrf.mxu0
      %v5013 = vadd.f32 %v4924, %v5012
      %v5014 = vpop.f32.mrf.mxu0
      %v5015 = vadd.f32 %v4926, %v5014
      %5016 = vmatmul.bf16.gmra.mxu0 %v4769
      %v5017 = vpop.f32.mrf.mxu0
      %v5018 = vadd.f32 %v4929, %v5017
      %v5019 = vpop.f32.mrf.mxu0
      %v5020 = vadd.f32 %v4931, %v5019
      %5021 = vmatmul.bf16.gmra.mxu0 %v4772
      %v5022 = vpop.f32.mrf.mxu0
      %v5023 = vadd.f32 %v4934, %v5022
      %v5024 = vpop.f32.mrf.mxu0
      %v5025 = vadd.f32 %v4936, %v5024
      %5026 = vmatmul.bf16.gmra.mxu0 %v4775
      %v5027 = vpop.f32.mrf.mxu0
      %v5028 = vadd.f32 %v4939, %v5027
      %v5029 = vpop.f32.mrf.mxu0
      %v5030 = vadd.f32 %v4941, %v5029
      %5031 = vmatmul.bf16.gmra.mxu0 %v4778
      %v5032 = vpop.f32.mrf.mxu0
      %v5033 = vadd.f32 %v4944, %v5032
      %v5034 = vpop.f32.mrf.mxu0
      %v5035 = vadd.f32 %v4946, %v5034
      %5036 = vmatmul.bf16.gmra.mxu0 %v4781
      %v5037 = vpop.f32.mrf.mxu0
      %v5038 = vadd.f32 %v4949, %v5037
      %v5039 = vpop.f32.mrf.mxu0
      %v5040 = vadd.f32 %v4951, %v5039
      %5041 = vmatmul.bf16.gmra.mxu0 %v4784
      %v5042 = vpop.f32.mrf.mxu0
      %v5043 = vadd.f32 %v4954, %v5042
      %v5044 = vpop.f32.mrf.mxu0
      %v5045 = vadd.f32 %v4956, %v5044
      %5046 = vmatmul.bf16.gmra.mxu0 %v4787
      %v5047 = vpop.f32.mrf.mxu0
      %v5048 = vadd.f32 %v4959, %v5047
      %v5049 = vpop.f32.mrf.mxu0
      %v5050 = vadd.f32 %v4961, %v5049
      %5051 = vmatmul.bf16.gmra.mxu0 %v4790
      %v5052 = vpop.f32.mrf.mxu0
      %v5053 = vadd.f32 %v4964, %v5052
      %v5054 = vpop.f32.mrf.mxu0
      %v5055 = vadd.f32 %v4966, %v5054
      %5056 = vmatmul.bf16.gmra.mxu0 %v4793
      %v5057 = vpop.f32.mrf.mxu0
      %v5058 = vadd.f32 %v4969, %v5057
      %v5059 = vpop.f32.mrf.mxu0
      %v5060 = vadd.f32 %v4971, %v5059
      %5061 = vdwg.mxu0
      %v5062 = vmax.f32 %v4983, 0.0
      %v5063 = vmax.f32 %v4985, 0.0
      %v5064 = vmax.f32 %v4988, 0.0
      %v5065 = vmax.f32 %v4990, 0.0
      %v5066 = vmax.f32 %v4993, 0.0
      %v5067 = vmax.f32 %v4995, 0.0
      %v5068 = vmax.f32 %v4998, 0.0
      %v5069 = vmax.f32 %v5000, 0.0
      %v5070 = vmax.f32 %v5003, 0.0
      %v5071 = vmax.f32 %v5005, 0.0
      %v5072 = vmax.f32 %v5008, 0.0
      %v5073 = vmax.f32 %v5010, 0.0
      %v5074 = vmax.f32 %v5013, 0.0
      %v5075 = vmax.f32 %v5015, 0.0
      %v5076 = vmax.f32 %v5018, 0.0
      %v5077 = vmax.f32 %v5020, 0.0
      %v5078 = vmax.f32 %v5023, 0.0
      %v5079 = vmax.f32 %v5025, 0.0
      %v5080 = vmax.f32 %v5028, 0.0
      %v5081 = vmax.f32 %v5030, 0.0
      %v5082 = vmax.f32 %v5033, 0.0
      %v5083 = vmax.f32 %v5035, 0.0
      %v5084 = vmax.f32 %v5038, 0.0
      %v5085 = vmax.f32 %v5040, 0.0
      %v5086 = vmax.f32 %v5043, 0.0
      %v5087 = vmax.f32 %v5045, 0.0
      %v5088 = vmax.f32 %v5048, 0.0
      %v5089 = vmax.f32 %v5050, 0.0
      %v5090 = vmax.f32 %v5053, 0.0
      %v5091 = vmax.f32 %v5055, 0.0
      %v5092 = vmax.f32 %v5058, 0.0
      %v5093 = vmax.f32 %v5060, 0.0
      %5094 = vst.msk [vmem:[%s550 + $0x1] sm:$0xff] %vm442, %v5062
      %5095 = vst.msk [vmem:[%s550 + $0x9] sm:$0xff] %vm442, %v5063
      %5096 = vst.msk [vmem:[%s550 + $0x19] sm:$0xff] %vm442, %v5064
      %5097 = vst.msk [vmem:[%s550 + $0x21] sm:$0xff] %vm442, %v5065
      %5098 = vst.msk [vmem:[%s550 + $0x31] sm:$0xff] %vm442, %v5066
      %5099 = vst.msk [vmem:[%s550 + $0x39] sm:$0xff] %vm442, %v5067
      %5100 = vst.msk [vmem:[%s550 + $0x49] sm:$0xff] %vm442, %v5068
      %5101 = vst.msk [vmem:[%s550 + $0x51] sm:$0xff] %vm442, %v5069
      %5102 = vst.msk [vmem:[%s550 + $0x61] sm:$0xff] %vm442, %v5070
      %5103 = vst.msk [vmem:[%s550 + $0x69] sm:$0xff] %vm442, %v5071
      %5104 = vst.msk [vmem:[%s550 + $0x79] sm:$0xff] %vm442, %v5072
      %5105 = vst.msk [vmem:[%s550 + $0x81] sm:$0xff] %vm442, %v5073
      %5106 = vst.msk [vmem:[%s550 + $0x91] sm:$0xff] %vm442, %v5074
      %5107 = vst.msk [vmem:[%s550 + $0x99] sm:$0xff] %vm442, %v5075
      %5108 = vst.msk [vmem:[%s550 + $0xa9] sm:$0xff] %vm442, %v5076
      %5109 = vst.msk [vmem:[%s550 + $0xb1] sm:$0xff] %vm442, %v5077
      %5110 = vst.msk [vmem:[%s550 + $0xc1] sm:$0xff] %vm442, %v5078
      %5111 = vst.msk [vmem:[%s550 + $0xc9] sm:$0xff] %vm442, %v5079
      %5112 = vst.msk [vmem:[%s550 + $0xd9] sm:$0xff] %vm442, %v5080
      %5113 = vst.msk [vmem:[%s550 + $0xe1] sm:$0xff] %vm442, %v5081
      %5114 = vst.msk [vmem:[%s550 + $0xf1] sm:$0xff] %vm442, %v5082
      %5115 = vst.msk [vmem:[%s550 + $0xf9] sm:$0xff] %vm442, %v5083
      %5116 = vst.msk [vmem:[%s550 + $0x109] sm:$0xff] %vm442, %v5084
      %5117 = vst.msk [vmem:[%s550 + $0x111] sm:$0xff] %vm442, %v5085
      %5118 = vst.msk [vmem:[%s550 + $0x121] sm:$0xff] %vm442, %v5086
      %5119 = vst.msk [vmem:[%s550 + $0x129] sm:$0xff] %vm442, %v5087
      %5120 = vst.msk [vmem:[%s550 + $0x139] sm:$0xff] %vm442, %v5088
      %5121 = vst.msk [vmem:[%s550 + $0x141] sm:$0xff] %vm442, %v5089
      %5122 = vst.msk [vmem:[%s550 + $0x151] sm:$0xff] %vm442, %v5090
      %5123 = vst.msk [vmem:[%s550 + $0x159] sm:$0xff] %vm442, %v5091
      %5124 = vst.msk [vmem:[%s550 + $0x169] sm:$0xff] %vm442, %v5092
      %5125 = vst.msk [vmem:[%s550 + $0x171] sm:$0xff] %vm442, %v5093
      %s5126 = scalar_lea.vmem %s3, 144
      %v5127 = vld [vmem:[%s5126] sm:$0xf]
      %v5128 = vld [vmem:[%s5126 + $0x4] sm:$0xf]
      %v5129 = vld [vmem:[%s5126 + $0x8] sm:$0xf]
      %v5130 = vld [vmem:[%s5126 + $0xc] sm:$0xf]
      %v5131 = vld [vmem:[%s5126 + $0x10] sm:$0xf]
      %v5132 = vld [vmem:[%s5126 + $0x14] sm:$0xf]
      %v5133 = vld [vmem:[%s5126 + $0x18] sm:$0xf]
      %v5134 = vld [vmem:[%s5126 + $0x1c] sm:$0xf]
      %v5135 = vld [vmem:[%s5126 + $0x20] sm:$0xf]
      %v5136 = vld [vmem:[%s5126 + $0x24] sm:$0xf]
      %v5137 = vld [vmem:[%s5126 + $0x28] sm:$0xf]
      %v5138 = vld [vmem:[%s5126 + $0x2c] sm:$0xf]
      %v5139 = vld [vmem:[%s5126 + $0x30] sm:$0xf]
      %v5140 = vld [vmem:[%s5126 + $0x34] sm:$0xf]
      %v5141 = vld [vmem:[%s5126 + $0x38] sm:$0xf]
      %v5142 = vld [vmem:[%s5126 + $0x3c] sm:$0xf]
      %v5143 = vld [vmem:[%s5126 + $0x40] sm:$0xf]
      %v5144 = vld [vmem:[%s5126 + $0x44] sm:$0xf]
      %v5145 = vld [vmem:[%s5126 + $0x48] sm:$0xf]
      %v5146 = vld [vmem:[%s5126 + $0x4c] sm:$0xf]
      %v5147 = vld [vmem:[%s5126 + $0x50] sm:$0xf]
      %v5148 = vld [vmem:[%s5126 + $0x54] sm:$0xf]
      %v5149 = vld [vmem:[%s5126 + $0x58] sm:$0xf]
      %v5150 = vld [vmem:[%s5126 + $0x5c] sm:$0xf]
      %v5151 = vld [vmem:[%s5126 + $0x60] sm:$0xf]
      %v5152 = vld [vmem:[%s5126 + $0x64] sm:$0xf]
      %v5153 = vld [vmem:[%s5126 + $0x68] sm:$0xf]
      %v5154 = vld [vmem:[%s5126 + $0x6c] sm:$0xf]
      %v5155 = vld [vmem:[%s5126 + $0x70] sm:$0xf]
      %v5156 = vld [vmem:[%s5126 + $0x74] sm:$0xf]
      %v5157 = vld [vmem:[%s5126 + $0x78] sm:$0xf]
      %v5158 = vld [vmem:[%s5126 + $0x7c] sm:$0xf]
      %v5159 = vld [vmem:[%s5126 + $0x80] sm:$0xf]
      %v5160 = vld [vmem:[%s5126 + $0x84] sm:$0xf]
      %v5161 = vld [vmem:[%s5126 + $0x88] sm:$0xf]
      %v5162 = vld [vmem:[%s5126 + $0x8c] sm:$0xf]
      %v5163 = vld [vmem:[%s4 + $0x1] sm:$0x1]
      %v5164 = vld [vmem:[#allocation2] sm:$0xff]
      %v5165 = vld [vmem:[#allocation2 + $0x8] sm:$0xff]
      %v5166 = vld [vmem:[#allocation2 + $0x18] sm:$0xff]
      %v5167 = vld [vmem:[#allocation2 + $0x20] sm:$0xff]
      %v5168 = vld [vmem:[#allocation2 + $0x30] sm:$0xff]
      %v5169 = vld [vmem:[#allocation2 + $0x38] sm:$0xff]
      %v5170 = vld [vmem:[#allocation2 + $0x48] sm:$0xff]
      %v5171 = vld [vmem:[#allocation2 + $0x50] sm:$0xff]
      %v5172 = vld [vmem:[#allocation2 + $0x60] sm:$0xff]
      %v5173 = vld [vmem:[#allocation2 + $0x68] sm:$0xff]
      %v5174 = vld [vmem:[#allocation2 + $0x78] sm:$0xff]
      %v5175 = vld [vmem:[#allocation2 + $0x80] sm:$0xff]
      %v5176 = vld [vmem:[#allocation2 + $0x90] sm:$0xff]
      %v5177 = vld [vmem:[#allocation2 + $0x98] sm:$0xff]
      %v5178 = vld [vmem:[#allocation2 + $0xa8] sm:$0xff]
      %v5179 = vld [vmem:[#allocation2 + $0xb0] sm:$0xff]
      %v5180 = vld [vmem:[#allocation2 + $0xc0] sm:$0xff]
      %v5181 = vld [vmem:[#allocation2 + $0xc8] sm:$0xff]
      %v5182 = vld [vmem:[#allocation2 + $0xd8] sm:$0xff]
      %v5183 = vld [vmem:[#allocation2 + $0xe0] sm:$0xff]
      %v5184 = vld [vmem:[#allocation2 + $0xf0] sm:$0xff]
      %v5185 = vld [vmem:[#allocation2 + $0xf8] sm:$0xff]
      %v5186 = vld [vmem:[#allocation2 + $0x108] sm:$0xff]
      %v5187 = vld [vmem:[#allocation2 + $0x110] sm:$0xff]
      %v5188 = vld [vmem:[#allocation2 + $0x120] sm:$0xff]
      %v5189 = vld [vmem:[#allocation2 + $0x128] sm:$0xff]
      %v5190 = vld [vmem:[#allocation2 + $0x138] sm:$0xff]
      %v5191 = vld [vmem:[#allocation2 + $0x140] sm:$0xff]
      %v5192 = vld [vmem:[#allocation2 + $0x150] sm:$0xff]
      %v5193 = vld [vmem:[#allocation2 + $0x158] sm:$0xff]
      %v5194 = vld [vmem:[#allocation2 + $0x168] sm:$0xff]
      %v5195 = vld [vmem:[#allocation2 + $0x170] sm:$0xff]
      %v5196 = vpack.c.bf16 %v5164, %v5164
      %v5197 = vpack.c.bf16 %v5165, %v5165
      %v5198 = vpack.c.bf16 %v5166, %v5166
      %v5199 = vpack.c.bf16 %v5167, %v5167
      %v5200 = vpack.c.bf16 %v5168, %v5168
      %v5201 = vpack.c.bf16 %v5169, %v5169
      %v5202 = vpack.c.bf16 %v5170, %v5170
      %v5203 = vpack.c.bf16 %v5171, %v5171
      %v5204 = vpack.c.bf16 %v5172, %v5172
      %v5205 = vpack.c.bf16 %v5173, %v5173
      %v5206 = vpack.c.bf16 %v5174, %v5174
      %v5207 = vpack.c.bf16 %v5175, %v5175
      %v5208 = vpack.c.bf16 %v5176, %v5176
      %v5209 = vpack.c.bf16 %v5177, %v5177
      %v5210 = vpack.c.bf16 %v5178, %v5178
      %v5211 = vpack.c.bf16 %v5179, %v5179
      %v5212 = vpack.c.bf16 %v5180, %v5180
      %v5213 = vpack.c.bf16 %v5181, %v5181
      %v5214 = vpack.c.bf16 %v5182, %v5182
      %v5215 = vpack.c.bf16 %v5183, %v5183
      %v5216 = vpack.c.bf16 %v5184, %v5184
      %v5217 = vpack.c.bf16 %v5185, %v5185
      %v5218 = vpack.c.bf16 %v5186, %v5186
      %v5219 = vpack.c.bf16 %v5187, %v5187
      %v5220 = vpack.c.bf16 %v5188, %v5188
      %v5221 = vpack.c.bf16 %v5189, %v5189
      %v5222 = vpack.c.bf16 %v5190, %v5190
      %v5223 = vpack.c.bf16 %v5191, %v5191
      %v5224 = vpack.c.bf16 %v5192, %v5192
      %v5225 = vpack.c.bf16 %v5193, %v5193
      %v5226 = vpack.c.bf16 %v5194, %v5194
      %v5227 = vpack.c.bf16 %v5195, %v5195
      %v5228 = vld [vmem:[#allocation2 + $0x1] sm:$0xff]
      %v5229 = vld [vmem:[#allocation2 + $0x9] sm:$0xff]
      %v5230 = vld [vmem:[#allocation2 + $0x19] sm:$0xff]
      %v5231 = vld [vmem:[#allocation2 + $0x21] sm:$0xff]
      %v5232 = vld [vmem:[#allocation2 + $0x31] sm:$0xff]
      %v5233 = vld [vmem:[#allocation2 + $0x39] sm:$0xff]
      %v5234 = vld [vmem:[#allocation2 + $0x49] sm:$0xff]
      %v5235 = vld [vmem:[#allocation2 + $0x51] sm:$0xff]
      %v5236 = vld [vmem:[#allocation2 + $0x61] sm:$0xff]
      %v5237 = vld [vmem:[#allocation2 + $0x69] sm:$0xff]
      %v5238 = vld [vmem:[#allocation2 + $0x79] sm:$0xff]
      %v5239 = vld [vmem:[#allocation2 + $0x81] sm:$0xff]
      %v5240 = vld [vmem:[#allocation2 + $0x91] sm:$0xff]
      %v5241 = vld [vmem:[#allocation2 + $0x99] sm:$0xff]
      %v5242 = vld [vmem:[#allocation2 + $0xa9] sm:$0xff]
      %v5243 = vld [vmem:[#allocation2 + $0xb1] sm:$0xff]
      %v5244 = vld [vmem:[#allocation2 + $0xc1] sm:$0xff]
      %v5245 = vld [vmem:[#allocation2 + $0xc9] sm:$0xff]
      %v5246 = vld [vmem:[#allocation2 + $0xd9] sm:$0xff]
      %v5247 = vld [vmem:[#allocation2 + $0xe1] sm:$0xff]
      %v5248 = vld [vmem:[#allocation2 + $0xf1] sm:$0xff]
      %v5249 = vld [vmem:[#allocation2 + $0xf9] sm:$0xff]
      %v5250 = vld [vmem:[#allocation2 + $0x109] sm:$0xff]
      %v5251 = vld [vmem:[#allocation2 + $0x111] sm:$0xff]
      %v5252 = vld [vmem:[#allocation2 + $0x121] sm:$0xff]
      %v5253 = vld [vmem:[#allocation2 + $0x129] sm:$0xff]
      %v5254 = vld [vmem:[#allocation2 + $0x139] sm:$0xff]
      %v5255 = vld [vmem:[#allocation2 + $0x141] sm:$0xff]
      %v5256 = vld [vmem:[#allocation2 + $0x151] sm:$0xff]
      %v5257 = vld [vmem:[#allocation2 + $0x159] sm:$0xff]
      %v5258 = vld [vmem:[#allocation2 + $0x169] sm:$0xff]
      %v5259 = vld [vmem:[#allocation2 + $0x171] sm:$0xff]
      %v5260 = vpack.c.bf16 %v5228, %v5228
      %v5261 = vpack.c.bf16 %v5229, %v5229
      %v5262 = vpack.c.bf16 %v5230, %v5230
      %v5263 = vpack.c.bf16 %v5231, %v5231
      %v5264 = vpack.c.bf16 %v5232, %v5232
      %v5265 = vpack.c.bf16 %v5233, %v5233
      %v5266 = vpack.c.bf16 %v5234, %v5234
      %v5267 = vpack.c.bf16 %v5235, %v5235
      %v5268 = vpack.c.bf16 %v5236, %v5236
      %v5269 = vpack.c.bf16 %v5237, %v5237
      %v5270 = vpack.c.bf16 %v5238, %v5238
      %v5271 = vpack.c.bf16 %v5239, %v5239
      %v5272 = vpack.c.bf16 %v5240, %v5240
      %v5273 = vpack.c.bf16 %v5241, %v5241
      %v5274 = vpack.c.bf16 %v5242, %v5242
      %v5275 = vpack.c.bf16 %v5243, %v5243
      %v5276 = vpack.c.bf16 %v5244, %v5244
      %v5277 = vpack.c.bf16 %v5245, %v5245
      %v5278 = vpack.c.bf16 %v5246, %v5246
      %v5279 = vpack.c.bf16 %v5247, %v5247
      %v5280 = vpack.c.bf16 %v5248, %v5248
      %v5281 = vpack.c.bf16 %v5249, %v5249
      %v5282 = vpack.c.bf16 %v5250, %v5250
      %v5283 = vpack.c.bf16 %v5251, %v5251
      %v5284 = vpack.c.bf16 %v5252, %v5252
      %v5285 = vpack.c.bf16 %v5253, %v5253
      %v5286 = vpack.c.bf16 %v5254, %v5254
      %v5287 = vpack.c.bf16 %v5255, %v5255
      %v5288 = vpack.c.bf16 %v5256, %v5256
      %v5289 = vpack.c.bf16 %v5257, %v5257
      %v5290 = vpack.c.bf16 %v5258, %v5258
      %v5291 = vpack.c.bf16 %v5259, %v5259
      %v5292 = vld [vmem:[#allocation2 + $0x2] sm:$0xff]
      %v5293 = vld [vmem:[#allocation2 + $0xa] sm:$0xff]
      %v5294 = vld [vmem:[#allocation2 + $0x1a] sm:$0xff]
      %v5295 = vld [vmem:[#allocation2 + $0x22] sm:$0xff]
      %v5296 = vld [vmem:[#allocation2 + $0x32] sm:$0xff]
      %v5297 = vld [vmem:[#allocation2 + $0x3a] sm:$0xff]
      %v5298 = vld [vmem:[#allocation2 + $0x4a] sm:$0xff]
      %v5299 = vld [vmem:[#allocation2 + $0x52] sm:$0xff]
      %v5300 = vld [vmem:[#allocation2 + $0x62] sm:$0xff]
      %v5301 = vld [vmem:[#allocation2 + $0x6a] sm:$0xff]
      %v5302 = vld [vmem:[#allocation2 + $0x7a] sm:$0xff]
      %v5303 = vld [vmem:[#allocation2 + $0x82] sm:$0xff]
      %v5304 = vld [vmem:[#allocation2 + $0x92] sm:$0xff]
      %v5305 = vld [vmem:[#allocation2 + $0x9a] sm:$0xff]
      %v5306 = vld [vmem:[#allocation2 + $0xaa] sm:$0xff]
      %v5307 = vld [vmem:[#allocation2 + $0xb2] sm:$0xff]
      %v5308 = vld [vmem:[#allocation2 + $0xc2] sm:$0xff]
      %v5309 = vld [vmem:[#allocation2 + $0xca] sm:$0xff]
      %v5310 = vld [vmem:[#allocation2 + $0xda] sm:$0xff]
      %v5311 = vld [vmem:[#allocation2 + $0xe2] sm:$0xff]
      %v5312 = vld [vmem:[#allocation2 + $0xf2] sm:$0xff]
      %v5313 = vld [vmem:[#allocation2 + $0xfa] sm:$0xff]
      %v5314 = vld [vmem:[#allocation2 + $0x10a] sm:$0xff]
      %v5315 = vld [vmem:[#allocation2 + $0x112] sm:$0xff]
      %v5316 = vld [vmem:[#allocation2 + $0x122] sm:$0xff]
      %v5317 = vld [vmem:[#allocation2 + $0x12a] sm:$0xff]
      %v5318 = vld [vmem:[#allocation2 + $0x13a] sm:$0xff]
      %v5319 = vld [vmem:[#allocation2 + $0x142] sm:$0xff]
      %v5320 = vld [vmem:[#allocation2 + $0x152] sm:$0xff]
      %v5321 = vld [vmem:[#allocation2 + $0x15a] sm:$0xff]
      %v5322 = vld [vmem:[#allocation2 + $0x16a] sm:$0xff]
      %v5323 = vld [vmem:[#allocation2 + $0x172] sm:$0xff]
      %v5324 = vpack.c.bf16 %v5292, %v5292
      %v5325 = vpack.c.bf16 %v5293, %v5293
      %v5326 = vpack.c.bf16 %v5294, %v5294
      %v5327 = vpack.c.bf16 %v5295, %v5295
      %v5328 = vpack.c.bf16 %v5296, %v5296
      %v5329 = vpack.c.bf16 %v5297, %v5297
      %v5330 = vpack.c.bf16 %v5298, %v5298
      %v5331 = vpack.c.bf16 %v5299, %v5299
      %v5332 = vpack.c.bf16 %v5300, %v5300
      %v5333 = vpack.c.bf16 %v5301, %v5301
      %v5334 = vpack.c.bf16 %v5302, %v5302
      %v5335 = vpack.c.bf16 %v5303, %v5303
      %v5336 = vpack.c.bf16 %v5304, %v5304
      %v5337 = vpack.c.bf16 %v5305, %v5305
      %v5338 = vpack.c.bf16 %v5306, %v5306
      %v5339 = vpack.c.bf16 %v5307, %v5307
      %v5340 = vpack.c.bf16 %v5308, %v5308
      %v5341 = vpack.c.bf16 %v5309, %v5309
      %v5342 = vpack.c.bf16 %v5310, %v5310
      %v5343 = vpack.c.bf16 %v5311, %v5311
      %v5344 = vpack.c.bf16 %v5312, %v5312
      %v5345 = vpack.c.bf16 %v5313, %v5313
      %v5346 = vpack.c.bf16 %v5314, %v5314
      %v5347 = vpack.c.bf16 %v5315, %v5315
      %v5348 = vpack.c.bf16 %v5316, %v5316
      %v5349 = vpack.c.bf16 %v5317, %v5317
      %v5350 = vpack.c.bf16 %v5318, %v5318
      %v5351 = vpack.c.bf16 %v5319, %v5319
      %v5352 = vpack.c.bf16 %v5320, %v5320
      %v5353 = vpack.c.bf16 %v5321, %v5321
      %v5354 = vpack.c.bf16 %v5322, %v5322
      %v5355 = vpack.c.bf16 %v5323, %v5323
      %v5356 = vld [vmem:[%s550] sm:$0xff]
      %v5357 = vld [vmem:[%s550 + $0x8] sm:$0xff]
      %v5358 = vld [vmem:[%s550 + $0x18] sm:$0xff]
      %v5359 = vld [vmem:[%s550 + $0x20] sm:$0xff]
      %v5360 = vld [vmem:[%s550 + $0x30] sm:$0xff]
      %v5361 = vld [vmem:[%s550 + $0x38] sm:$0xff]
      %v5362 = vld [vmem:[%s550 + $0x48] sm:$0xff]
      %v5363 = vld [vmem:[%s550 + $0x50] sm:$0xff]
      %v5364 = vld [vmem:[%s550 + $0x60] sm:$0xff]
      %v5365 = vld [vmem:[%s550 + $0x68] sm:$0xff]
      %v5366 = vld [vmem:[%s550 + $0x78] sm:$0xff]
      %v5367 = vld [vmem:[%s550 + $0x80] sm:$0xff]
      %v5368 = vld [vmem:[%s550 + $0x90] sm:$0xff]
      %v5369 = vld [vmem:[%s550 + $0x98] sm:$0xff]
      %v5370 = vld [vmem:[%s550 + $0xa8] sm:$0xff]
      %v5371 = vld [vmem:[%s550 + $0xb0] sm:$0xff]
      %v5372 = vld [vmem:[%s550 + $0xc0] sm:$0xff]
      %v5373 = vld [vmem:[%s550 + $0xc8] sm:$0xff]
      %v5374 = vld [vmem:[%s550 + $0xd8] sm:$0xff]
      %v5375 = vld [vmem:[%s550 + $0xe0] sm:$0xff]
      %v5376 = vld [vmem:[%s550 + $0xf0] sm:$0xff]
      %v5377 = vld [vmem:[%s550 + $0xf8] sm:$0xff]
      %v5378 = vld [vmem:[%s550 + $0x108] sm:$0xff]
      %v5379 = vld [vmem:[%s550 + $0x110] sm:$0xff]
      %v5380 = vld [vmem:[%s550 + $0x120] sm:$0xff]
      %v5381 = vld [vmem:[%s550 + $0x128] sm:$0xff]
      %v5382 = vld [vmem:[%s550 + $0x138] sm:$0xff]
      %v5383 = vld [vmem:[%s550 + $0x140] sm:$0xff]
      %v5384 = vld [vmem:[%s550 + $0x150] sm:$0xff]
      %v5385 = vld [vmem:[%s550 + $0x158] sm:$0xff]
      %v5386 = vld [vmem:[%s550 + $0x168] sm:$0xff]
      %v5387 = vld [vmem:[%s550 + $0x170] sm:$0xff]
      %v5388 = vpack.c.bf16 %v5356, %v5356
      %v5389 = vpack.c.bf16 %v5357, %v5357
      %v5390 = vpack.c.bf16 %v5358, %v5358
      %v5391 = vpack.c.bf16 %v5359, %v5359
      %v5392 = vpack.c.bf16 %v5360, %v5360
      %v5393 = vpack.c.bf16 %v5361, %v5361
      %v5394 = vpack.c.bf16 %v5362, %v5362
      %v5395 = vpack.c.bf16 %v5363, %v5363
      %v5396 = vpack.c.bf16 %v5364, %v5364
      %v5397 = vpack.c.bf16 %v5365, %v5365
      %v5398 = vpack.c.bf16 %v5366, %v5366
      %v5399 = vpack.c.bf16 %v5367, %v5367
      %v5400 = vpack.c.bf16 %v5368, %v5368
      %v5401 = vpack.c.bf16 %v5369, %v5369
      %v5402 = vpack.c.bf16 %v5370, %v5370
      %v5403 = vpack.c.bf16 %v5371, %v5371
      %v5404 = vpack.c.bf16 %v5372, %v5372
      %v5405 = vpack.c.bf16 %v5373, %v5373
      %v5406 = vpack.c.bf16 %v5374, %v5374
      %v5407 = vpack.c.bf16 %v5375, %v5375
      %v5408 = vpack.c.bf16 %v5376, %v5376
      %v5409 = vpack.c.bf16 %v5377, %v5377
      %v5410 = vpack.c.bf16 %v5378, %v5378
      %v5411 = vpack.c.bf16 %v5379, %v5379
      %v5412 = vpack.c.bf16 %v5380, %v5380
      %v5413 = vpack.c.bf16 %v5381, %v5381
      %v5414 = vpack.c.bf16 %v5382, %v5382
      %v5415 = vpack.c.bf16 %v5383, %v5383
      %v5416 = vpack.c.bf16 %v5384, %v5384
      %v5417 = vpack.c.bf16 %v5385, %v5385
      %v5418 = vpack.c.bf16 %v5386, %v5386
      %v5419 = vpack.c.bf16 %v5387, %v5387
      %v5420 = vld [vmem:[%s550 + $0x1] sm:$0xff]
      %v5421 = vld [vmem:[%s550 + $0x9] sm:$0xff]
      %v5422 = vld [vmem:[%s550 + $0x19] sm:$0xff]
      %v5423 = vld [vmem:[%s550 + $0x21] sm:$0xff]
      %v5424 = vld [vmem:[%s550 + $0x31] sm:$0xff]
      %v5425 = vld [vmem:[%s550 + $0x39] sm:$0xff]
      %v5426 = vld [vmem:[%s550 + $0x49] sm:$0xff]
      %v5427 = vld [vmem:[%s550 + $0x51] sm:$0xff]
      %v5428 = vld [vmem:[%s550 + $0x61] sm:$0xff]
      %v5429 = vld [vmem:[%s550 + $0x69] sm:$0xff]
      %v5430 = vld [vmem:[%s550 + $0x79] sm:$0xff]
      %v5431 = vld [vmem:[%s550 + $0x81] sm:$0xff]
      %v5432 = vld [vmem:[%s550 + $0x91] sm:$0xff]
      %v5433 = vld [vmem:[%s550 + $0x99] sm:$0xff]
      %v5434 = vld [vmem:[%s550 + $0xa9] sm:$0xff]
      %v5435 = vld [vmem:[%s550 + $0xb1] sm:$0xff]
      %v5436 = vld [vmem:[%s550 + $0xc1] sm:$0xff]
      %v5437 = vld [vmem:[%s550 + $0xc9] sm:$0xff]
      %v5438 = vld [vmem:[%s550 + $0xd9] sm:$0xff]
      %v5439 = vld [vmem:[%s550 + $0xe1] sm:$0xff]
      %v5440 = vld [vmem:[%s550 + $0xf1] sm:$0xff]
      %v5441 = vld [vmem:[%s550 + $0xf9] sm:$0xff]
      %v5442 = vld [vmem:[%s550 + $0x109] sm:$0xff]
      %v5443 = vld [vmem:[%s550 + $0x111] sm:$0xff]
      %v5444 = vld [vmem:[%s550 + $0x121] sm:$0xff]
      %v5445 = vld [vmem:[%s550 + $0x129] sm:$0xff]
      %v5446 = vld [vmem:[%s550 + $0x139] sm:$0xff]
      %v5447 = vld [vmem:[%s550 + $0x141] sm:$0xff]
      %v5448 = vld [vmem:[%s550 + $0x151] sm:$0xff]
      %v5449 = vld [vmem:[%s550 + $0x159] sm:$0xff]
      %v5450 = vld [vmem:[%s550 + $0x169] sm:$0xff]
      %v5451 = vld [vmem:[%s550 + $0x171] sm:$0xff]
      %v5452 = vpack.c.bf16 %v5420, %v5420
      %v5453 = vpack.c.bf16 %v5421, %v5421
      %v5454 = vpack.c.bf16 %v5422, %v5422
      %v5455 = vpack.c.bf16 %v5423, %v5423
      %v5456 = vpack.c.bf16 %v5424, %v5424
      %v5457 = vpack.c.bf16 %v5425, %v5425
      %v5458 = vpack.c.bf16 %v5426, %v5426
      %v5459 = vpack.c.bf16 %v5427, %v5427
      %v5460 = vpack.c.bf16 %v5428, %v5428
      %v5461 = vpack.c.bf16 %v5429, %v5429
      %v5462 = vpack.c.bf16 %v5430, %v5430
      %v5463 = vpack.c.bf16 %v5431, %v5431
      %v5464 = vpack.c.bf16 %v5432, %v5432
      %v5465 = vpack.c.bf16 %v5433, %v5433
      %v5466 = vpack.c.bf16 %v5434, %v5434
      %v5467 = vpack.c.bf16 %v5435, %v5435
      %v5468 = vpack.c.bf16 %v5436, %v5436
      %v5469 = vpack.c.bf16 %v5437, %v5437
      %v5470 = vpack.c.bf16 %v5438, %v5438
      %v5471 = vpack.c.bf16 %v5439, %v5439
      %v5472 = vpack.c.bf16 %v5440, %v5440
      %v5473 = vpack.c.bf16 %v5441, %v5441
      %v5474 = vpack.c.bf16 %v5442, %v5442
      %v5475 = vpack.c.bf16 %v5443, %v5443
      %v5476 = vpack.c.bf16 %v5444, %v5444
      %v5477 = vpack.c.bf16 %v5445, %v5445
      %v5478 = vpack.c.bf16 %v5446, %v5446
      %v5479 = vpack.c.bf16 %v5447, %v5447
      %v5480 = vpack.c.bf16 %v5448, %v5448
      %v5481 = vpack.c.bf16 %v5449, %v5449
      %v5482 = vpack.c.bf16 %v5450, %v5450
      %v5483 = vpack.c.bf16 %v5451, %v5451
      %v5484 = vld [vmem:[%s550 + $0x2] sm:$0xff]
      %v5485 = vld [vmem:[%s550 + $0xa] sm:$0xff]
      %v5486 = vld [vmem:[%s550 + $0x1a] sm:$0xff]
      %v5487 = vld [vmem:[%s550 + $0x22] sm:$0xff]
      %v5488 = vld [vmem:[%s550 + $0x32] sm:$0xff]
      %v5489 = vld [vmem:[%s550 + $0x3a] sm:$0xff]
      %v5490 = vld [vmem:[%s550 + $0x4a] sm:$0xff]
      %v5491 = vld [vmem:[%s550 + $0x52] sm:$0xff]
      %v5492 = vld [vmem:[%s550 + $0x62] sm:$0xff]
      %v5493 = vld [vmem:[%s550 + $0x6a] sm:$0xff]
      %v5494 = vld [vmem:[%s550 + $0x7a] sm:$0xff]
      %v5495 = vld [vmem:[%s550 + $0x82] sm:$0xff]
      %v5496 = vld [vmem:[%s550 + $0x92] sm:$0xff]
      %v5497 = vld [vmem:[%s550 + $0x9a] sm:$0xff]
      %v5498 = vld [vmem:[%s550 + $0xaa] sm:$0xff]
      %v5499 = vld [vmem:[%s550 + $0xb2] sm:$0xff]
      %v5500 = vld [vmem:[%s550 + $0xc2] sm:$0xff]
      %v5501 = vld [vmem:[%s550 + $0xca] sm:$0xff]
      %v5502 = vld [vmem:[%s550 + $0xda] sm:$0xff]
      %v5503 = vld [vmem:[%s550 + $0xe2] sm:$0xff]
      %v5504 = vld [vmem:[%s550 + $0xf2] sm:$0xff]
      %v5505 = vld [vmem:[%s550 + $0xfa] sm:$0xff]
      %v5506 = vld [vmem:[%s550 + $0x10a] sm:$0xff]
      %v5507 = vld [vmem:[%s550 + $0x112] sm:$0xff]
      %v5508 = vld [vmem:[%s550 + $0x122] sm:$0xff]
      %v5509 = vld [vmem:[%s550 + $0x12a] sm:$0xff]
      %v5510 = vld [vmem:[%s550 + $0x13a] sm:$0xff]
      %v5511 = vld [vmem:[%s550 + $0x142] sm:$0xff]
      %v5512 = vld [vmem:[%s550 + $0x152] sm:$0xff]
      %v5513 = vld [vmem:[%s550 + $0x15a] sm:$0xff]
      %v5514 = vld [vmem:[%s550 + $0x16a] sm:$0xff]
      %v5515 = vld [vmem:[%s550 + $0x172] sm:$0xff]
      %v5516 = vpack.c.bf16 %v5484, %v5484
      %v5517 = vpack.c.bf16 %v5485, %v5485
      %v5518 = vpack.c.bf16 %v5486, %v5486
      %v5519 = vpack.c.bf16 %v5487, %v5487
      %v5520 = vpack.c.bf16 %v5488, %v5488
      %v5521 = vpack.c.bf16 %v5489, %v5489
      %v5522 = vpack.c.bf16 %v5490, %v5490
      %v5523 = vpack.c.bf16 %v5491, %v5491
      %v5524 = vpack.c.bf16 %v5492, %v5492
      %v5525 = vpack.c.bf16 %v5493, %v5493
      %v5526 = vpack.c.bf16 %v5494, %v5494
      %v5527 = vpack.c.bf16 %v5495, %v5495
      %v5528 = vpack.c.bf16 %v5496, %v5496
      %v5529 = vpack.c.bf16 %v5497, %v5497
      %v5530 = vpack.c.bf16 %v5498, %v5498
      %v5531 = vpack.c.bf16 %v5499, %v5499
      %v5532 = vpack.c.bf16 %v5500, %v5500
      %v5533 = vpack.c.bf16 %v5501, %v5501
      %v5534 = vpack.c.bf16 %v5502, %v5502
      %v5535 = vpack.c.bf16 %v5503, %v5503
      %v5536 = vpack.c.bf16 %v5504, %v5504
      %v5537 = vpack.c.bf16 %v5505, %v5505
      %v5538 = vpack.c.bf16 %v5506, %v5506
      %v5539 = vpack.c.bf16 %v5507, %v5507
      %v5540 = vpack.c.bf16 %v5508, %v5508
      %v5541 = vpack.c.bf16 %v5509, %v5509
      %v5542 = vpack.c.bf16 %v5510, %v5510
      %v5543 = vpack.c.bf16 %v5511, %v5511
      %v5544 = vpack.c.bf16 %v5512, %v5512
      %v5545 = vpack.c.bf16 %v5513, %v5513
      %v5546 = vpack.c.bf16 %v5514, %v5514
      %v5547 = vpack.c.bf16 %v5515, %v5515
      %v5548 = vld [vmem:[%s1004] sm:$0xff]
      %v5549 = vld [vmem:[%s1004 + $0x8] sm:$0xff]
      %v5550 = vld [vmem:[%s1004 + $0x18] sm:$0xff]
      %v5551 = vld [vmem:[%s1004 + $0x20] sm:$0xff]
      %v5552 = vld [vmem:[%s1004 + $0x30] sm:$0xff]
      %v5553 = vld [vmem:[%s1004 + $0x38] sm:$0xff]
      %v5554 = vld [vmem:[%s1004 + $0x48] sm:$0xff]
      %v5555 = vld [vmem:[%s1004 + $0x50] sm:$0xff]
      %v5556 = vld [vmem:[%s1004 + $0x60] sm:$0xff]
      %v5557 = vld [vmem:[%s1004 + $0x68] sm:$0xff]
      %v5558 = vld [vmem:[%s1004 + $0x78] sm:$0xff]
      %v5559 = vld [vmem:[%s1004 + $0x80] sm:$0xff]
      %v5560 = vld [vmem:[%s1004 + $0x90] sm:$0xff]
      %v5561 = vld [vmem:[%s1004 + $0x98] sm:$0xff]
      %v5562 = vld [vmem:[%s1004 + $0xa8] sm:$0xff]
      %v5563 = vld [vmem:[%s1004 + $0xb0] sm:$0xff]
      %v5564 = vld [vmem:[%s1004 + $0xc0] sm:$0xff]
      %v5565 = vld [vmem:[%s1004 + $0xc8] sm:$0xff]
      %v5566 = vld [vmem:[%s1004 + $0xd8] sm:$0xff]
      %v5567 = vld [vmem:[%s1004 + $0xe0] sm:$0xff]
      %v5568 = vld [vmem:[%s1004 + $0xf0] sm:$0xff]
      %v5569 = vld [vmem:[%s1004 + $0xf8] sm:$0xff]
      %v5570 = vld [vmem:[%s1004 + $0x108] sm:$0xff]
      %v5571 = vld [vmem:[%s1004 + $0x110] sm:$0xff]
      %v5572 = vld [vmem:[%s1004 + $0x120] sm:$0xff]
      %v5573 = vld [vmem:[%s1004 + $0x128] sm:$0xff]
      %v5574 = vld [vmem:[%s1004 + $0x138] sm:$0xff]
      %v5575 = vld [vmem:[%s1004 + $0x140] sm:$0xff]
      %v5576 = vld [vmem:[%s1004 + $0x150] sm:$0xff]
      %v5577 = vld [vmem:[%s1004 + $0x158] sm:$0xff]
      %v5578 = vld [vmem:[%s1004 + $0x168] sm:$0xff]
      %v5579 = vld [vmem:[%s1004 + $0x170] sm:$0xff]
      %v5580 = vpack.c.bf16 %v5548, %v5548
      %v5581 = vpack.c.bf16 %v5549, %v5549
      %v5582 = vpack.c.bf16 %v5550, %v5550
      %v5583 = vpack.c.bf16 %v5551, %v5551
      %v5584 = vpack.c.bf16 %v5552, %v5552
      %v5585 = vpack.c.bf16 %v5553, %v5553
      %v5586 = vpack.c.bf16 %v5554, %v5554
      %v5587 = vpack.c.bf16 %v5555, %v5555
      %v5588 = vpack.c.bf16 %v5556, %v5556
      %v5589 = vpack.c.bf16 %v5557, %v5557
      %v5590 = vpack.c.bf16 %v5558, %v5558
      %v5591 = vpack.c.bf16 %v5559, %v5559
      %v5592 = vpack.c.bf16 %v5560, %v5560
      %v5593 = vpack.c.bf16 %v5561, %v5561
      %v5594 = vpack.c.bf16 %v5562, %v5562
      %v5595 = vpack.c.bf16 %v5563, %v5563
      %v5596 = vpack.c.bf16 %v5564, %v5564
      %v5597 = vpack.c.bf16 %v5565, %v5565
      %v5598 = vpack.c.bf16 %v5566, %v5566
      %v5599 = vpack.c.bf16 %v5567, %v5567
      %v5600 = vpack.c.bf16 %v5568, %v5568
      %v5601 = vpack.c.bf16 %v5569, %v5569
      %v5602 = vpack.c.bf16 %v5570, %v5570
      %v5603 = vpack.c.bf16 %v5571, %v5571
      %v5604 = vpack.c.bf16 %v5572, %v5572
      %v5605 = vpack.c.bf16 %v5573, %v5573
      %v5606 = vpack.c.bf16 %v5574, %v5574
      %v5607 = vpack.c.bf16 %v5575, %v5575
      %v5608 = vpack.c.bf16 %v5576, %v5576
      %v5609 = vpack.c.bf16 %v5577, %v5577
      %v5610 = vpack.c.bf16 %v5578, %v5578
      %v5611 = vpack.c.bf16 %v5579, %v5579
      %v5612 = vld [vmem:[%s1004 + $0x1] sm:$0xff]
      %v5613 = vld [vmem:[%s1004 + $0x9] sm:$0xff]
      %v5614 = vld [vmem:[%s1004 + $0x19] sm:$0xff]
      %v5615 = vld [vmem:[%s1004 + $0x21] sm:$0xff]
      %v5616 = vld [vmem:[%s1004 + $0x31] sm:$0xff]
      %v5617 = vld [vmem:[%s1004 + $0x39] sm:$0xff]
      %v5618 = vld [vmem:[%s1004 + $0x49] sm:$0xff]
      %v5619 = vld [vmem:[%s1004 + $0x51] sm:$0xff]
      %v5620 = vld [vmem:[%s1004 + $0x61] sm:$0xff]
      %v5621 = vld [vmem:[%s1004 + $0x69] sm:$0xff]
      %v5622 = vld [vmem:[%s1004 + $0x79] sm:$0xff]
      %v5623 = vld [vmem:[%s1004 + $0x81] sm:$0xff]
      %v5624 = vld [vmem:[%s1004 + $0x91] sm:$0xff]
      %v5625 = vld [vmem:[%s1004 + $0x99] sm:$0xff]
      %v5626 = vld [vmem:[%s1004 + $0xa9] sm:$0xff]
      %v5627 = vld [vmem:[%s1004 + $0xb1] sm:$0xff]
      %v5628 = vld [vmem:[%s1004 + $0xc1] sm:$0xff]
      %v5629 = vld [vmem:[%s1004 + $0xc9] sm:$0xff]
      %v5630 = vld [vmem:[%s1004 + $0xd9] sm:$0xff]
      %v5631 = vld [vmem:[%s1004 + $0xe1] sm:$0xff]
      %v5632 = vld [vmem:[%s1004 + $0xf1] sm:$0xff]
      %v5633 = vld [vmem:[%s1004 + $0xf9] sm:$0xff]
      %v5634 = vld [vmem:[%s1004 + $0x109] sm:$0xff]
      %v5635 = vld [vmem:[%s1004 + $0x111] sm:$0xff]
      %v5636 = vld [vmem:[%s1004 + $0x121] sm:$0xff]
      %v5637 = vld [vmem:[%s1004 + $0x129] sm:$0xff]
      %v5638 = vld [vmem:[%s1004 + $0x139] sm:$0xff]
      %v5639 = vld [vmem:[%s1004 + $0x141] sm:$0xff]
      %v5640 = vld [vmem:[%s1004 + $0x151] sm:$0xff]
      %v5641 = vld [vmem:[%s1004 + $0x159] sm:$0xff]
      %v5642 = vld [vmem:[%s1004 + $0x169] sm:$0xff]
      %v5643 = vld [vmem:[%s1004 + $0x171] sm:$0xff]
      %v5644 = vpack.c.bf16 %v5612, %v5612
      %v5645 = vpack.c.bf16 %v5613, %v5613
      %v5646 = vpack.c.bf16 %v5614, %v5614
      %v5647 = vpack.c.bf16 %v5615, %v5615
      %v5648 = vpack.c.bf16 %v5616, %v5616
      %v5649 = vpack.c.bf16 %v5617, %v5617
      %v5650 = vpack.c.bf16 %v5618, %v5618
      %v5651 = vpack.c.bf16 %v5619, %v5619
      %v5652 = vpack.c.bf16 %v5620, %v5620
      %v5653 = vpack.c.bf16 %v5621, %v5621
      %v5654 = vpack.c.bf16 %v5622, %v5622
      %v5655 = vpack.c.bf16 %v5623, %v5623
      %v5656 = vpack.c.bf16 %v5624, %v5624
      %v5657 = vpack.c.bf16 %v5625, %v5625
      %v5658 = vpack.c.bf16 %v5626, %v5626
      %v5659 = vpack.c.bf16 %v5627, %v5627
      %v5660 = vpack.c.bf16 %v5628, %v5628
      %v5661 = vpack.c.bf16 %v5629, %v5629
      %v5662 = vpack.c.bf16 %v5630, %v5630
      %v5663 = vpack.c.bf16 %v5631, %v5631
      %v5664 = vpack.c.bf16 %v5632, %v5632
      %v5665 = vpack.c.bf16 %v5633, %v5633
      %v5666 = vpack.c.bf16 %v5634, %v5634
      %v5667 = vpack.c.bf16 %v5635, %v5635
      %v5668 = vpack.c.bf16 %v5636, %v5636
      %v5669 = vpack.c.bf16 %v5637, %v5637
      %v5670 = vpack.c.bf16 %v5638, %v5638
      %v5671 = vpack.c.bf16 %v5639, %v5639
      %v5672 = vpack.c.bf16 %v5640, %v5640
      %v5673 = vpack.c.bf16 %v5641, %v5641
      %v5674 = vpack.c.bf16 %v5642, %v5642
      %v5675 = vpack.c.bf16 %v5643, %v5643
      %v5676 = vld [vmem:[%s1004 + $0x2] sm:$0xff]
      %v5677 = vld [vmem:[%s1004 + $0xa] sm:$0xff]
      %v5678 = vld [vmem:[%s1004 + $0x1a] sm:$0xff]
      %v5679 = vld [vmem:[%s1004 + $0x22] sm:$0xff]
      %v5680 = vld [vmem:[%s1004 + $0x32] sm:$0xff]
      %v5681 = vld [vmem:[%s1004 + $0x3a] sm:$0xff]
      %v5682 = vld [vmem:[%s1004 + $0x4a] sm:$0xff]
      %v5683 = vld [vmem:[%s1004 + $0x52] sm:$0xff]
      %v5684 = vld [vmem:[%s1004 + $0x62] sm:$0xff]
      %v5685 = vld [vmem:[%s1004 + $0x6a] sm:$0xff]
      %v5686 = vld [vmem:[%s1004 + $0x7a] sm:$0xff]
      %v5687 = vld [vmem:[%s1004 + $0x82] sm:$0xff]
      %v5688 = vld [vmem:[%s1004 + $0x92] sm:$0xff]
      %v5689 = vld [vmem:[%s1004 + $0x9a] sm:$0xff]
      %v5690 = vld [vmem:[%s1004 + $0xaa] sm:$0xff]
      %v5691 = vld [vmem:[%s1004 + $0xb2] sm:$0xff]
      %v5692 = vld [vmem:[%s1004 + $0xc2] sm:$0xff]
      %v5693 = vld [vmem:[%s1004 + $0xca] sm:$0xff]
      %v5694 = vld [vmem:[%s1004 + $0xda] sm:$0xff]
      %v5695 = vld [vmem:[%s1004 + $0xe2] sm:$0xff]
      %v5696 = vld [vmem:[%s1004 + $0xf2] sm:$0xff]
      %v5697 = vld [vmem:[%s1004 + $0xfa] sm:$0xff]
      %v5698 = vld [vmem:[%s1004 + $0x10a] sm:$0xff]
      %v5699 = vld [vmem:[%s1004 + $0x112] sm:$0xff]
      %v5700 = vld [vmem:[%s1004 + $0x122] sm:$0xff]
      %v5701 = vld [vmem:[%s1004 + $0x12a] sm:$0xff]
      %v5702 = vld [vmem:[%s1004 + $0x13a] sm:$0xff]
      %v5703 = vld [vmem:[%s1004 + $0x142] sm:$0xff]
      %v5704 = vld [vmem:[%s1004 + $0x152] sm:$0xff]
      %v5705 = vld [vmem:[%s1004 + $0x15a] sm:$0xff]
      %v5706 = vld [vmem:[%s1004 + $0x16a] sm:$0xff]
      %v5707 = vld [vmem:[%s1004 + $0x172] sm:$0xff]
      %v5708 = vpack.c.bf16 %v5676, %v5676
      %v5709 = vpack.c.bf16 %v5677, %v5677
      %v5710 = vpack.c.bf16 %v5678, %v5678
      %v5711 = vpack.c.bf16 %v5679, %v5679
      %v5712 = vpack.c.bf16 %v5680, %v5680
      %v5713 = vpack.c.bf16 %v5681, %v5681
      %v5714 = vpack.c.bf16 %v5682, %v5682
      %v5715 = vpack.c.bf16 %v5683, %v5683
      %v5716 = vpack.c.bf16 %v5684, %v5684
      %v5717 = vpack.c.bf16 %v5685, %v5685
      %v5718 = vpack.c.bf16 %v5686, %v5686
      %v5719 = vpack.c.bf16 %v5687, %v5687
      %v5720 = vpack.c.bf16 %v5688, %v5688
      %v5721 = vpack.c.bf16 %v5689, %v5689
      %v5722 = vpack.c.bf16 %v5690, %v5690
      %v5723 = vpack.c.bf16 %v5691, %v5691
      %v5724 = vpack.c.bf16 %v5692, %v5692
      %v5725 = vpack.c.bf16 %v5693, %v5693
      %v5726 = vpack.c.bf16 %v5694, %v5694
      %v5727 = vpack.c.bf16 %v5695, %v5695
      %v5728 = vpack.c.bf16 %v5696, %v5696
      %v5729 = vpack.c.bf16 %v5697, %v5697
      %v5730 = vpack.c.bf16 %v5698, %v5698
      %v5731 = vpack.c.bf16 %v5699, %v5699
      %v5732 = vpack.c.bf16 %v5700, %v5700
      %v5733 = vpack.c.bf16 %v5701, %v5701
      %v5734 = vpack.c.bf16 %v5702, %v5702
      %v5735 = vpack.c.bf16 %v5703, %v5703
      %v5736 = vpack.c.bf16 %v5704, %v5704
      %v5737 = vpack.c.bf16 %v5705, %v5705
      %v5738 = vpack.c.bf16 %v5706, %v5706
      %v5739 = vpack.c.bf16 %v5707, %v5707
      %v5772 = vunpack.c.l.b16 %v5196
      %v5773 = vunpack.c.l.b16 %v5197
      %v5774 = vunpack.c.l.b16 %v5198
      %v5775 = vunpack.c.l.b16 %v5199
      %v5776 = vunpack.c.l.b16 %v5200
      %v5777 = vunpack.c.l.b16 %v5201
      %v5778 = vunpack.c.l.b16 %v5202
      %v5779 = vunpack.c.l.b16 %v5203
      %v5780 = vunpack.c.l.b16 %v5204
      %v5781 = vunpack.c.l.b16 %v5205
      %v5782 = vunpack.c.l.b16 %v5206
      %v5783 = vunpack.c.l.b16 %v5207
      %v5784 = vunpack.c.l.b16 %v5208
      %v5785 = vunpack.c.l.b16 %v5209
      %v5786 = vunpack.c.l.b16 %v5210
      %v5787 = vunpack.c.l.b16 %v5211
      %v5788 = vunpack.c.l.b16 %v5212
      %v5789 = vunpack.c.l.b16 %v5213
      %v5790 = vunpack.c.l.b16 %v5214
      %v5791 = vunpack.c.l.b16 %v5215
      %v5792 = vunpack.c.l.b16 %v5216
      %v5793 = vunpack.c.l.b16 %v5217
      %v5794 = vunpack.c.l.b16 %v5218
      %v5795 = vunpack.c.l.b16 %v5219
      %v5796 = vunpack.c.l.b16 %v5220
      %v5797 = vunpack.c.l.b16 %v5221
      %v5798 = vunpack.c.l.b16 %v5222
      %v5799 = vunpack.c.l.b16 %v5223
      %v5800 = vunpack.c.l.b16 %v5224
      %v5801 = vunpack.c.l.b16 %v5225
      %v5802 = vunpack.c.l.b16 %v5226
      %v5803 = vunpack.c.l.b16 %v5227
      %v5804 = vpack.c.b16 %v5773, %v5772
      %v5805 = vpack.c.b16 %v5775, %v5774
      %v5806 = vpack.c.b16 %v5777, %v5776
      %v5807 = vpack.c.b16 %v5779, %v5778
      %v5808 = vpack.c.b16 %v5781, %v5780
      %v5809 = vpack.c.b16 %v5783, %v5782
      %v5810 = vpack.c.b16 %v5785, %v5784
      %v5811 = vpack.c.b16 %v5787, %v5786
      %v5812 = vpack.c.b16 %v5789, %v5788
      %v5813 = vpack.c.b16 %v5791, %v5790
      %v5814 = vpack.c.b16 %v5793, %v5792
      %v5815 = vpack.c.b16 %v5795, %v5794
      %v5816 = vpack.c.b16 %v5797, %v5796
      %v5817 = vpack.c.b16 %v5799, %v5798
      %v5818 = vpack.c.b16 %v5801, %v5800
      %v5819 = vpack.c.b16 %v5803, %v5802
      %v5852 = vunpack.c.l.b16 %v5260
      %v5853 = vunpack.c.l.b16 %v5261
      %v5854 = vunpack.c.l.b16 %v5262
      %v5855 = vunpack.c.l.b16 %v5263
      %v5856 = vunpack.c.l.b16 %v5264
      %v5857 = vunpack.c.l.b16 %v5265
      %v5858 = vunpack.c.l.b16 %v5266
      %v5859 = vunpack.c.l.b16 %v5267
      %v5860 = vunpack.c.l.b16 %v5268
      %v5861 = vunpack.c.l.b16 %v5269
      %v5862 = vunpack.c.l.b16 %v5270
      %v5863 = vunpack.c.l.b16 %v5271
      %v5864 = vunpack.c.l.b16 %v5272
      %v5865 = vunpack.c.l.b16 %v5273
      %v5866 = vunpack.c.l.b16 %v5274
      %v5867 = vunpack.c.l.b16 %v5275
      %v5868 = vunpack.c.l.b16 %v5276
      %v5869 = vunpack.c.l.b16 %v5277
      %v5870 = vunpack.c.l.b16 %v5278
      %v5871 = vunpack.c.l.b16 %v5279
      %v5872 = vunpack.c.l.b16 %v5280
      %v5873 = vunpack.c.l.b16 %v5281
      %v5874 = vunpack.c.l.b16 %v5282
      %v5875 = vunpack.c.l.b16 %v5283
      %v5876 = vunpack.c.l.b16 %v5284
      %v5877 = vunpack.c.l.b16 %v5285
      %v5878 = vunpack.c.l.b16 %v5286
      %v5879 = vunpack.c.l.b16 %v5287
      %v5880 = vunpack.c.l.b16 %v5288
      %v5881 = vunpack.c.l.b16 %v5289
      %v5882 = vunpack.c.l.b16 %v5290
      %v5883 = vunpack.c.l.b16 %v5291
      %v5884 = vpack.c.b16 %v5853, %v5852
      %v5885 = vpack.c.b16 %v5855, %v5854
      %v5886 = vpack.c.b16 %v5857, %v5856
      %v5887 = vpack.c.b16 %v5859, %v5858
      %v5888 = vpack.c.b16 %v5861, %v5860
      %v5889 = vpack.c.b16 %v5863, %v5862
      %v5890 = vpack.c.b16 %v5865, %v5864
      %v5891 = vpack.c.b16 %v5867, %v5866
      %v5892 = vpack.c.b16 %v5869, %v5868
      %v5893 = vpack.c.b16 %v5871, %v5870
      %v5894 = vpack.c.b16 %v5873, %v5872
      %v5895 = vpack.c.b16 %v5875, %v5874
      %v5896 = vpack.c.b16 %v5877, %v5876
      %v5897 = vpack.c.b16 %v5879, %v5878
      %v5898 = vpack.c.b16 %v5881, %v5880
      %v5899 = vpack.c.b16 %v5883, %v5882
      %5900 = vrot.lane.b32.xlu0 %v5884, 32
      %v5901 = vpop.permute.xlu0 %5900
      %5902 = vrot.lane.b32.xlu0 %v5885, 32
      %v5903 = vpop.permute.xlu0 %5902
      %5904 = vrot.lane.b32.xlu0 %v5886, 32
      %v5905 = vpop.permute.xlu0 %5904
      %5906 = vrot.lane.b32.xlu0 %v5887, 32
      %v5907 = vpop.permute.xlu0 %5906
      %5908 = vrot.lane.b32.xlu0 %v5888, 32
      %v5909 = vpop.permute.xlu0 %5908
      %5910 = vrot.lane.b32.xlu0 %v5889, 32
      %v5911 = vpop.permute.xlu0 %5910
      %5912 = vrot.lane.b32.xlu0 %v5890, 32
      %v5913 = vpop.permute.xlu0 %5912
      %5914 = vrot.lane.b32.xlu0 %v5891, 32
      %v5915 = vpop.permute.xlu0 %5914
      %5916 = vrot.lane.b32.xlu0 %v5892, 32
      %v5917 = vpop.permute.xlu0 %5916
      %5918 = vrot.lane.b32.xlu0 %v5893, 32
      %v5919 = vpop.permute.xlu0 %5918
      %5920 = vrot.lane.b32.xlu0 %v5894, 32
      %v5921 = vpop.permute.xlu0 %5920
      %5922 = vrot.lane.b32.xlu0 %v5895, 32
      %v5923 = vpop.permute.xlu0 %5922
      %5924 = vrot.lane.b32.xlu0 %v5896, 32
      %v5925 = vpop.permute.xlu0 %5924
      %5926 = vrot.lane.b32.xlu0 %v5897, 32
      %v5927 = vpop.permute.xlu0 %5926
      %5928 = vrot.lane.b32.xlu0 %v5898, 32
      %v5929 = vpop.permute.xlu0 %5928
      %5930 = vrot.lane.b32.xlu0 %v5899, 32
      %v5931 = vpop.permute.xlu0 %5930
      %v5964 = vunpack.c.l.b16 %v5324
      %v5965 = vunpack.c.l.b16 %v5325
      %v5966 = vunpack.c.l.b16 %v5326
      %v5967 = vunpack.c.l.b16 %v5327
      %v5968 = vunpack.c.l.b16 %v5328
      %v5969 = vunpack.c.l.b16 %v5329
      %v5970 = vunpack.c.l.b16 %v5330
      %v5971 = vunpack.c.l.b16 %v5331
      %v5972 = vunpack.c.l.b16 %v5332
      %v5973 = vunpack.c.l.b16 %v5333
      %v5974 = vunpack.c.l.b16 %v5334
      %v5975 = vunpack.c.l.b16 %v5335
      %v5976 = vunpack.c.l.b16 %v5336
      %v5977 = vunpack.c.l.b16 %v5337
      %v5978 = vunpack.c.l.b16 %v5338
      %v5979 = vunpack.c.l.b16 %v5339
      %v5980 = vunpack.c.l.b16 %v5340
      %v5981 = vunpack.c.l.b16 %v5341
      %v5982 = vunpack.c.l.b16 %v5342
      %v5983 = vunpack.c.l.b16 %v5343
      %v5984 = vunpack.c.l.b16 %v5344
      %v5985 = vunpack.c.l.b16 %v5345
      %v5986 = vunpack.c.l.b16 %v5346
      %v5987 = vunpack.c.l.b16 %v5347
      %v5988 = vunpack.c.l.b16 %v5348
      %v5989 = vunpack.c.l.b16 %v5349
      %v5990 = vunpack.c.l.b16 %v5350
      %v5991 = vunpack.c.l.b16 %v5351
      %v5992 = vunpack.c.l.b16 %v5352
      %v5993 = vunpack.c.l.b16 %v5353
      %v5994 = vunpack.c.l.b16 %v5354
      %v5995 = vunpack.c.l.b16 %v5355
      %v5996 = vpack.c.b16 %v5965, %v5964
      %v5997 = vpack.c.b16 %v5967, %v5966
      %v5998 = vpack.c.b16 %v5969, %v5968
      %v5999 = vpack.c.b16 %v5971, %v5970
      %v6000 = vpack.c.b16 %v5973, %v5972
      %v6001 = vpack.c.b16 %v5975, %v5974
      %v6002 = vpack.c.b16 %v5977, %v5976
      %v6003 = vpack.c.b16 %v5979, %v5978
      %v6004 = vpack.c.b16 %v5981, %v5980
      %v6005 = vpack.c.b16 %v5983, %v5982
      %v6006 = vpack.c.b16 %v5985, %v5984
      %v6007 = vpack.c.b16 %v5987, %v5986
      %v6008 = vpack.c.b16 %v5989, %v5988
      %v6009 = vpack.c.b16 %v5991, %v5990
      %v6010 = vpack.c.b16 %v5993, %v5992
      %v6011 = vpack.c.b16 %v5995, %v5994
      %6012 = vrot.lane.b32.xlu0 %v5996, 64
      %v6013 = vpop.permute.xlu0 %6012
      %6014 = vrot.lane.b32.xlu0 %v5997, 64
      %v6015 = vpop.permute.xlu0 %6014
      %6016 = vrot.lane.b32.xlu0 %v5998, 64
      %v6017 = vpop.permute.xlu0 %6016
      %6018 = vrot.lane.b32.xlu0 %v5999, 64
      %v6019 = vpop.permute.xlu0 %6018
      %6020 = vrot.lane.b32.xlu0 %v6000, 64
      %v6021 = vpop.permute.xlu0 %6020
      %6022 = vrot.lane.b32.xlu0 %v6001, 64
      %v6023 = vpop.permute.xlu0 %6022
      %6024 = vrot.lane.b32.xlu0 %v6002, 64
      %v6025 = vpop.permute.xlu0 %6024
      %6026 = vrot.lane.b32.xlu0 %v6003, 64
      %v6027 = vpop.permute.xlu0 %6026
      %6028 = vrot.lane.b32.xlu0 %v6004, 64
      %v6029 = vpop.permute.xlu0 %6028
      %6030 = vrot.lane.b32.xlu0 %v6005, 64
      %v6031 = vpop.permute.xlu0 %6030
      %6032 = vrot.lane.b32.xlu0 %v6006, 64
      %v6033 = vpop.permute.xlu0 %6032
      %6034 = vrot.lane.b32.xlu0 %v6007, 64
      %v6035 = vpop.permute.xlu0 %6034
      %6036 = vrot.lane.b32.xlu0 %v6008, 64
      %v6037 = vpop.permute.xlu0 %6036
      %6038 = vrot.lane.b32.xlu0 %v6009, 64
      %v6039 = vpop.permute.xlu0 %6038
      %6040 = vrot.lane.b32.xlu0 %v6010, 64
      %v6041 = vpop.permute.xlu0 %6040
      %6042 = vrot.lane.b32.xlu0 %v6011, 64
      %v6043 = vpop.permute.xlu0 %6042
      %v6076 = vunpack.c.l.b16 %v5388
      %v6077 = vunpack.c.l.b16 %v5389
      %v6078 = vunpack.c.l.b16 %v5390
      %v6079 = vunpack.c.l.b16 %v5391
      %v6080 = vunpack.c.l.b16 %v5392
      %v6081 = vunpack.c.l.b16 %v5393
      %v6082 = vunpack.c.l.b16 %v5394
      %v6083 = vunpack.c.l.b16 %v5395
      %v6084 = vunpack.c.l.b16 %v5396
      %v6085 = vunpack.c.l.b16 %v5397
      %v6086 = vunpack.c.l.b16 %v5398
      %v6087 = vunpack.c.l.b16 %v5399
      %v6088 = vunpack.c.l.b16 %v5400
      %v6089 = vunpack.c.l.b16 %v5401
      %v6090 = vunpack.c.l.b16 %v5402
      %v6091 = vunpack.c.l.b16 %v5403
      %v6092 = vunpack.c.l.b16 %v5404
      %v6093 = vunpack.c.l.b16 %v5405
      %v6094 = vunpack.c.l.b16 %v5406
      %v6095 = vunpack.c.l.b16 %v5407
      %v6096 = vunpack.c.l.b16 %v5408
      %v6097 = vunpack.c.l.b16 %v5409
      %v6098 = vunpack.c.l.b16 %v5410
      %v6099 = vunpack.c.l.b16 %v5411
      %v6100 = vunpack.c.l.b16 %v5412
      %v6101 = vunpack.c.l.b16 %v5413
      %v6102 = vunpack.c.l.b16 %v5414
      %v6103 = vunpack.c.l.b16 %v5415
      %v6104 = vunpack.c.l.b16 %v5416
      %v6105 = vunpack.c.l.b16 %v5417
      %v6106 = vunpack.c.l.b16 %v5418
      %v6107 = vunpack.c.l.b16 %v5419
      %v6108 = vpack.c.b16 %v6077, %v6076
      %v6109 = vpack.c.b16 %v6079, %v6078
      %v6110 = vpack.c.b16 %v6081, %v6080
      %v6111 = vpack.c.b16 %v6083, %v6082
      %v6112 = vpack.c.b16 %v6085, %v6084
      %v6113 = vpack.c.b16 %v6087, %v6086
      %v6114 = vpack.c.b16 %v6089, %v6088
      %v6115 = vpack.c.b16 %v6091, %v6090
      %v6116 = vpack.c.b16 %v6093, %v6092
      %v6117 = vpack.c.b16 %v6095, %v6094
      %v6118 = vpack.c.b16 %v6097, %v6096
      %v6119 = vpack.c.b16 %v6099, %v6098
      %v6120 = vpack.c.b16 %v6101, %v6100
      %v6121 = vpack.c.b16 %v6103, %v6102
      %v6122 = vpack.c.b16 %v6105, %v6104
      %v6123 = vpack.c.b16 %v6107, %v6106
      %6124 = vrot.lane.b32.xlu0 %v6108, 96
      %v6125 = vpop.permute.xlu0 %6124
      %6126 = vrot.lane.b32.xlu0 %v6109, 96
      %v6127 = vpop.permute.xlu0 %6126
      %6128 = vrot.lane.b32.xlu0 %v6110, 96
      %v6129 = vpop.permute.xlu0 %6128
      %6130 = vrot.lane.b32.xlu0 %v6111, 96
      %v6131 = vpop.permute.xlu0 %6130
      %6132 = vrot.lane.b32.xlu0 %v6112, 96
      %v6133 = vpop.permute.xlu0 %6132
      %6134 = vrot.lane.b32.xlu0 %v6113, 96
      %v6135 = vpop.permute.xlu0 %6134
      %6136 = vrot.lane.b32.xlu0 %v6114, 96
      %v6137 = vpop.permute.xlu0 %6136
      %6138 = vrot.lane.b32.xlu0 %v6115, 96
      %v6139 = vpop.permute.xlu0 %6138
      %6140 = vrot.lane.b32.xlu0 %v6116, 96
      %v6141 = vpop.permute.xlu0 %6140
      %6142 = vrot.lane.b32.xlu0 %v6117, 96
      %v6143 = vpop.permute.xlu0 %6142
      %6144 = vrot.lane.b32.xlu0 %v6118, 96
      %v6145 = vpop.permute.xlu0 %6144
      %6146 = vrot.lane.b32.xlu0 %v6119, 96
      %v6147 = vpop.permute.xlu0 %6146
      %6148 = vrot.lane.b32.xlu0 %v6120, 96
      %v6149 = vpop.permute.xlu0 %6148
      %6150 = vrot.lane.b32.xlu0 %v6121, 96
      %v6151 = vpop.permute.xlu0 %6150
      %6152 = vrot.lane.b32.xlu0 %v6122, 96
      %v6153 = vpop.permute.xlu0 %6152
      %6154 = vrot.lane.b32.xlu0 %v6123, 96
      %v6155 = vpop.permute.xlu0 %6154
      %v6188 = vunpack.c.l.b16 %v5452
      %v6189 = vunpack.c.l.b16 %v5453
      %v6190 = vunpack.c.l.b16 %v5454
      %v6191 = vunpack.c.l.b16 %v5455
      %v6192 = vunpack.c.l.b16 %v5456
      %v6193 = vunpack.c.l.b16 %v5457
      %v6194 = vunpack.c.l.b16 %v5458
      %v6195 = vunpack.c.l.b16 %v5459
      %v6196 = vunpack.c.l.b16 %v5460
      %v6197 = vunpack.c.l.b16 %v5461
      %v6198 = vunpack.c.l.b16 %v5462
      %v6199 = vunpack.c.l.b16 %v5463
      %v6200 = vunpack.c.l.b16 %v5464
      %v6201 = vunpack.c.l.b16 %v5465
      %v6202 = vunpack.c.l.b16 %v5466
      %v6203 = vunpack.c.l.b16 %v5467
      %v6204 = vunpack.c.l.b16 %v5468
      %v6205 = vunpack.c.l.b16 %v5469
      %v6206 = vunpack.c.l.b16 %v5470
      %v6207 = vunpack.c.l.b16 %v5471
      %v6208 = vunpack.c.l.b16 %v5472
      %v6209 = vunpack.c.l.b16 %v5473
      %v6210 = vunpack.c.l.b16 %v5474
      %v6211 = vunpack.c.l.b16 %v5475
      %v6212 = vunpack.c.l.b16 %v5476
      %v6213 = vunpack.c.l.b16 %v5477
      %v6214 = vunpack.c.l.b16 %v5478
      %v6215 = vunpack.c.l.b16 %v5479
      %v6216 = vunpack.c.l.b16 %v5480
      %v6217 = vunpack.c.l.b16 %v5481
      %v6218 = vunpack.c.l.b16 %v5482
      %v6219 = vunpack.c.l.b16 %v5483
      %v6220 = vpack.c.b16 %v6189, %v6188
      %v6221 = vpack.c.b16 %v6191, %v6190
      %v6222 = vpack.c.b16 %v6193, %v6192
      %v6223 = vpack.c.b16 %v6195, %v6194
      %v6224 = vpack.c.b16 %v6197, %v6196
      %v6225 = vpack.c.b16 %v6199, %v6198
      %v6226 = vpack.c.b16 %v6201, %v6200
      %v6227 = vpack.c.b16 %v6203, %v6202
      %v6228 = vpack.c.b16 %v6205, %v6204
      %v6229 = vpack.c.b16 %v6207, %v6206
      %v6230 = vpack.c.b16 %v6209, %v6208
      %v6231 = vpack.c.b16 %v6211, %v6210
      %v6232 = vpack.c.b16 %v6213, %v6212
      %v6233 = vpack.c.b16 %v6215, %v6214
      %v6234 = vpack.c.b16 %v6217, %v6216
      %v6235 = vpack.c.b16 %v6219, %v6218
      %v6268 = vunpack.c.l.b16 %v5516
      %v6269 = vunpack.c.l.b16 %v5517
      %v6270 = vunpack.c.l.b16 %v5518
      %v6271 = vunpack.c.l.b16 %v5519
      %v6272 = vunpack.c.l.b16 %v5520
      %v6273 = vunpack.c.l.b16 %v5521
      %v6274 = vunpack.c.l.b16 %v5522
      %v6275 = vunpack.c.l.b16 %v5523
      %v6276 = vunpack.c.l.b16 %v5524
      %v6277 = vunpack.c.l.b16 %v5525
      %v6278 = vunpack.c.l.b16 %v5526
      %v6279 = vunpack.c.l.b16 %v5527
      %v6280 = vunpack.c.l.b16 %v5528
      %v6281 = vunpack.c.l.b16 %v5529
      %v6282 = vunpack.c.l.b16 %v5530
      %v6283 = vunpack.c.l.b16 %v5531
      %v6284 = vunpack.c.l.b16 %v5532
      %v6285 = vunpack.c.l.b16 %v5533
      %v6286 = vunpack.c.l.b16 %v5534
      %v6287 = vunpack.c.l.b16 %v5535
      %v6288 = vunpack.c.l.b16 %v5536
      %v6289 = vunpack.c.l.b16 %v5537
      %v6290 = vunpack.c.l.b16 %v5538
      %v6291 = vunpack.c.l.b16 %v5539
      %v6292 = vunpack.c.l.b16 %v5540
      %v6293 = vunpack.c.l.b16 %v5541
      %v6294 = vunpack.c.l.b16 %v5542
      %v6295 = vunpack.c.l.b16 %v5543
      %v6296 = vunpack.c.l.b16 %v5544
      %v6297 = vunpack.c.l.b16 %v5545
      %v6298 = vunpack.c.l.b16 %v5546
      %v6299 = vunpack.c.l.b16 %v5547
      %v6300 = vpack.c.b16 %v6269, %v6268
      %v6301 = vpack.c.b16 %v6271, %v6270
      %v6302 = vpack.c.b16 %v6273, %v6272
      %v6303 = vpack.c.b16 %v6275, %v6274
      %v6304 = vpack.c.b16 %v6277, %v6276
      %v6305 = vpack.c.b16 %v6279, %v6278
      %v6306 = vpack.c.b16 %v6281, %v6280
      %v6307 = vpack.c.b16 %v6283, %v6282
      %v6308 = vpack.c.b16 %v6285, %v6284
      %v6309 = vpack.c.b16 %v6287, %v6286
      %v6310 = vpack.c.b16 %v6289, %v6288
      %v6311 = vpack.c.b16 %v6291, %v6290
      %v6312 = vpack.c.b16 %v6293, %v6292
      %v6313 = vpack.c.b16 %v6295, %v6294
      %v6314 = vpack.c.b16 %v6297, %v6296
      %v6315 = vpack.c.b16 %v6299, %v6298
      %6316 = vrot.lane.b32.xlu0 %v6300, 32
      %v6317 = vpop.permute.xlu0 %6316
      %6318 = vrot.lane.b32.xlu0 %v6301, 32
      %v6319 = vpop.permute.xlu0 %6318
      %6320 = vrot.lane.b32.xlu0 %v6302, 32
      %v6321 = vpop.permute.xlu0 %6320
      %6322 = vrot.lane.b32.xlu0 %v6303, 32
      %v6323 = vpop.permute.xlu0 %6322
      %6324 = vrot.lane.b32.xlu0 %v6304, 32
      %v6325 = vpop.permute.xlu0 %6324
      %6326 = vrot.lane.b32.xlu0 %v6305, 32
      %v6327 = vpop.permute.xlu0 %6326
      %6328 = vrot.lane.b32.xlu0 %v6306, 32
      %v6329 = vpop.permute.xlu0 %6328
      %6330 = vrot.lane.b32.xlu0 %v6307, 32
      %v6331 = vpop.permute.xlu0 %6330
      %6332 = vrot.lane.b32.xlu0 %v6308, 32
      %v6333 = vpop.permute.xlu0 %6332
      %6334 = vrot.lane.b32.xlu0 %v6309, 32
      %v6335 = vpop.permute.xlu0 %6334
      %6336 = vrot.lane.b32.xlu0 %v6310, 32
      %v6337 = vpop.permute.xlu0 %6336
      %6338 = vrot.lane.b32.xlu0 %v6311, 32
      %v6339 = vpop.permute.xlu0 %6338
      %6340 = vrot.lane.b32.xlu0 %v6312, 32
      %v6341 = vpop.permute.xlu0 %6340
      %6342 = vrot.lane.b32.xlu0 %v6313, 32
      %v6343 = vpop.permute.xlu0 %6342
      %6344 = vrot.lane.b32.xlu0 %v6314, 32
      %v6345 = vpop.permute.xlu0 %6344
      %6346 = vrot.lane.b32.xlu0 %v6315, 32
      %v6347 = vpop.permute.xlu0 %6346
      %v6380 = vunpack.c.l.b16 %v5580
      %v6381 = vunpack.c.l.b16 %v5581
      %v6382 = vunpack.c.l.b16 %v5582
      %v6383 = vunpack.c.l.b16 %v5583
      %v6384 = vunpack.c.l.b16 %v5584
      %v6385 = vunpack.c.l.b16 %v5585
      %v6386 = vunpack.c.l.b16 %v5586
      %v6387 = vunpack.c.l.b16 %v5587
      %v6388 = vunpack.c.l.b16 %v5588
      %v6389 = vunpack.c.l.b16 %v5589
      %v6390 = vunpack.c.l.b16 %v5590
      %v6391 = vunpack.c.l.b16 %v5591
      %v6392 = vunpack.c.l.b16 %v5592
      %v6393 = vunpack.c.l.b16 %v5593
      %v6394 = vunpack.c.l.b16 %v5594
      %v6395 = vunpack.c.l.b16 %v5595
      %v6396 = vunpack.c.l.b16 %v5596
      %v6397 = vunpack.c.l.b16 %v5597
      %v6398 = vunpack.c.l.b16 %v5598
      %v6399 = vunpack.c.l.b16 %v5599
      %v6400 = vunpack.c.l.b16 %v5600
      %v6401 = vunpack.c.l.b16 %v5601
      %v6402 = vunpack.c.l.b16 %v5602
      %v6403 = vunpack.c.l.b16 %v5603
      %v6404 = vunpack.c.l.b16 %v5604
      %v6405 = vunpack.c.l.b16 %v5605
      %v6406 = vunpack.c.l.b16 %v5606
      %v6407 = vunpack.c.l.b16 %v5607
      %v6408 = vunpack.c.l.b16 %v5608
      %v6409 = vunpack.c.l.b16 %v5609
      %v6410 = vunpack.c.l.b16 %v5610
      %v6411 = vunpack.c.l.b16 %v5611
      %v6412 = vpack.c.b16 %v6381, %v6380
      %v6413 = vpack.c.b16 %v6383, %v6382
      %v6414 = vpack.c.b16 %v6385, %v6384
      %v6415 = vpack.c.b16 %v6387, %v6386
      %v6416 = vpack.c.b16 %v6389, %v6388
      %v6417 = vpack.c.b16 %v6391, %v6390
      %v6418 = vpack.c.b16 %v6393, %v6392
      %v6419 = vpack.c.b16 %v6395, %v6394
      %v6420 = vpack.c.b16 %v6397, %v6396
      %v6421 = vpack.c.b16 %v6399, %v6398
      %v6422 = vpack.c.b16 %v6401, %v6400
      %v6423 = vpack.c.b16 %v6403, %v6402
      %v6424 = vpack.c.b16 %v6405, %v6404
      %v6425 = vpack.c.b16 %v6407, %v6406
      %v6426 = vpack.c.b16 %v6409, %v6408
      %v6427 = vpack.c.b16 %v6411, %v6410
      %6428 = vrot.lane.b32.xlu0 %v6412, 64
      %v6429 = vpop.permute.xlu0 %6428
      %6430 = vrot.lane.b32.xlu0 %v6413, 64
      %v6431 = vpop.permute.xlu0 %6430
      %6432 = vrot.lane.b32.xlu0 %v6414, 64
      %v6433 = vpop.permute.xlu0 %6432
      %6434 = vrot.lane.b32.xlu0 %v6415, 64
      %v6435 = vpop.permute.xlu0 %6434
      %6436 = vrot.lane.b32.xlu0 %v6416, 64
      %v6437 = vpop.permute.xlu0 %6436
      %6438 = vrot.lane.b32.xlu0 %v6417, 64
      %v6439 = vpop.permute.xlu0 %6438
      %6440 = vrot.lane.b32.xlu0 %v6418, 64
      %v6441 = vpop.permute.xlu0 %6440
      %6442 = vrot.lane.b32.xlu0 %v6419, 64
      %v6443 = vpop.permute.xlu0 %6442
      %6444 = vrot.lane.b32.xlu0 %v6420, 64
      %v6445 = vpop.permute.xlu0 %6444
      %6446 = vrot.lane.b32.xlu0 %v6421, 64
      %v6447 = vpop.permute.xlu0 %6446
      %6448 = vrot.lane.b32.xlu0 %v6422, 64
      %v6449 = vpop.permute.xlu0 %6448
      %6450 = vrot.lane.b32.xlu0 %v6423, 64
      %v6451 = vpop.permute.xlu0 %6450
      %6452 = vrot.lane.b32.xlu0 %v6424, 64
      %v6453 = vpop.permute.xlu0 %6452
      %6454 = vrot.lane.b32.xlu0 %v6425, 64
      %v6455 = vpop.permute.xlu0 %6454
      %6456 = vrot.lane.b32.xlu0 %v6426, 64
      %v6457 = vpop.permute.xlu0 %6456
      %6458 = vrot.lane.b32.xlu0 %v6427, 64
      %v6459 = vpop.permute.xlu0 %6458
      %v6492 = vunpack.c.l.b16 %v5644
      %v6493 = vunpack.c.l.b16 %v5645
      %v6494 = vunpack.c.l.b16 %v5646
      %v6495 = vunpack.c.l.b16 %v5647
      %v6496 = vunpack.c.l.b16 %v5648
      %v6497 = vunpack.c.l.b16 %v5649
      %v6498 = vunpack.c.l.b16 %v5650
      %v6499 = vunpack.c.l.b16 %v5651
      %v6500 = vunpack.c.l.b16 %v5652
      %v6501 = vunpack.c.l.b16 %v5653
      %v6502 = vunpack.c.l.b16 %v5654
      %v6503 = vunpack.c.l.b16 %v5655
      %v6504 = vunpack.c.l.b16 %v5656
      %v6505 = vunpack.c.l.b16 %v5657
      %v6506 = vunpack.c.l.b16 %v5658
      %v6507 = vunpack.c.l.b16 %v5659
      %v6508 = vunpack.c.l.b16 %v5660
      %v6509 = vunpack.c.l.b16 %v5661
      %v6510 = vunpack.c.l.b16 %v5662
      %v6511 = vunpack.c.l.b16 %v5663
      %v6512 = vunpack.c.l.b16 %v5664
      %v6513 = vunpack.c.l.b16 %v5665
      %v6514 = vunpack.c.l.b16 %v5666
      %v6515 = vunpack.c.l.b16 %v5667
      %v6516 = vunpack.c.l.b16 %v5668
      %v6517 = vunpack.c.l.b16 %v5669
      %v6518 = vunpack.c.l.b16 %v5670
      %v6519 = vunpack.c.l.b16 %v5671
      %v6520 = vunpack.c.l.b16 %v5672
      %v6521 = vunpack.c.l.b16 %v5673
      %v6522 = vunpack.c.l.b16 %v5674
      %v6523 = vunpack.c.l.b16 %v5675
      %v6524 = vpack.c.b16 %v6493, %v6492
      %v6525 = vpack.c.b16 %v6495, %v6494
      %v6526 = vpack.c.b16 %v6497, %v6496
      %v6527 = vpack.c.b16 %v6499, %v6498
      %v6528 = vpack.c.b16 %v6501, %v6500
      %v6529 = vpack.c.b16 %v6503, %v6502
      %v6530 = vpack.c.b16 %v6505, %v6504
      %v6531 = vpack.c.b16 %v6507, %v6506
      %v6532 = vpack.c.b16 %v6509, %v6508
      %v6533 = vpack.c.b16 %v6511, %v6510
      %v6534 = vpack.c.b16 %v6513, %v6512
      %v6535 = vpack.c.b16 %v6515, %v6514
      %v6536 = vpack.c.b16 %v6517, %v6516
      %v6537 = vpack.c.b16 %v6519, %v6518
      %v6538 = vpack.c.b16 %v6521, %v6520
      %v6539 = vpack.c.b16 %v6523, %v6522
      %6540 = vrot.lane.b32.xlu0 %v6524, 96
      %v6541 = vpop.permute.xlu0 %6540
      %6542 = vrot.lane.b32.xlu0 %v6525, 96
      %v6543 = vpop.permute.xlu0 %6542
      %6544 = vrot.lane.b32.xlu0 %v6526, 96
      %v6545 = vpop.permute.xlu0 %6544
      %6546 = vrot.lane.b32.xlu0 %v6527, 96
      %v6547 = vpop.permute.xlu0 %6546
      %6548 = vrot.lane.b32.xlu0 %v6528, 96
      %v6549 = vpop.permute.xlu0 %6548
      %6550 = vrot.lane.b32.xlu0 %v6529, 96
      %v6551 = vpop.permute.xlu0 %6550
      %6552 = vrot.lane.b32.xlu0 %v6530, 96
      %v6553 = vpop.permute.xlu0 %6552
      %6554 = vrot.lane.b32.xlu0 %v6531, 96
      %v6555 = vpop.permute.xlu0 %6554
      %6556 = vrot.lane.b32.xlu0 %v6532, 96
      %v6557 = vpop.permute.xlu0 %6556
      %6558 = vrot.lane.b32.xlu0 %v6533, 96
      %v6559 = vpop.permute.xlu0 %6558
      %6560 = vrot.lane.b32.xlu0 %v6534, 96
      %v6561 = vpop.permute.xlu0 %6560
      %6562 = vrot.lane.b32.xlu0 %v6535, 96
      %v6563 = vpop.permute.xlu0 %6562
      %6564 = vrot.lane.b32.xlu0 %v6536, 96
      %v6565 = vpop.permute.xlu0 %6564
      %6566 = vrot.lane.b32.xlu0 %v6537, 96
      %v6567 = vpop.permute.xlu0 %6566
      %6568 = vrot.lane.b32.xlu0 %v6538, 96
      %v6569 = vpop.permute.xlu0 %6568
      %6570 = vrot.lane.b32.xlu0 %v6539, 96
      %v6571 = vpop.permute.xlu0 %6570
      %v6604 = vunpack.c.l.b16 %v5708
      %v6605 = vunpack.c.l.b16 %v5709
      %v6606 = vunpack.c.l.b16 %v5710
      %v6607 = vunpack.c.l.b16 %v5711
      %v6608 = vunpack.c.l.b16 %v5712
      %v6609 = vunpack.c.l.b16 %v5713
      %v6610 = vunpack.c.l.b16 %v5714
      %v6611 = vunpack.c.l.b16 %v5715
      %v6612 = vunpack.c.l.b16 %v5716
      %v6613 = vunpack.c.l.b16 %v5717
      %v6614 = vunpack.c.l.b16 %v5718
      %v6615 = vunpack.c.l.b16 %v5719
      %v6616 = vunpack.c.l.b16 %v5720
      %v6617 = vunpack.c.l.b16 %v5721
      %v6618 = vunpack.c.l.b16 %v5722
      %v6619 = vunpack.c.l.b16 %v5723
      %v6620 = vunpack.c.l.b16 %v5724
      %v6621 = vunpack.c.l.b16 %v5725
      %v6622 = vunpack.c.l.b16 %v5726
      %v6623 = vunpack.c.l.b16 %v5727
      %v6624 = vunpack.c.l.b16 %v5728
      %v6625 = vunpack.c.l.b16 %v5729
      %v6626 = vunpack.c.l.b16 %v5730
      %v6627 = vunpack.c.l.b16 %v5731
      %v6628 = vunpack.c.l.b16 %v5732
      %v6629 = vunpack.c.l.b16 %v5733
      %v6630 = vunpack.c.l.b16 %v5734
      %v6631 = vunpack.c.l.b16 %v5735
      %v6632 = vunpack.c.l.b16 %v5736
      %v6633 = vunpack.c.l.b16 %v5737
      %v6634 = vunpack.c.l.b16 %v5738
      %v6635 = vunpack.c.l.b16 %v5739
      %v6636 = vpack.c.b16 %v6605, %v6604
      %v6637 = vpack.c.b16 %v6607, %v6606
      %v6638 = vpack.c.b16 %v6609, %v6608
      %v6639 = vpack.c.b16 %v6611, %v6610
      %v6640 = vpack.c.b16 %v6613, %v6612
      %v6641 = vpack.c.b16 %v6615, %v6614
      %v6642 = vpack.c.b16 %v6617, %v6616
      %v6643 = vpack.c.b16 %v6619, %v6618
      %v6644 = vpack.c.b16 %v6621, %v6620
      %v6645 = vpack.c.b16 %v6623, %v6622
      %v6646 = vpack.c.b16 %v6625, %v6624
      %v6647 = vpack.c.b16 %v6627, %v6626
      %v6648 = vpack.c.b16 %v6629, %v6628
      %v6649 = vpack.c.b16 %v6631, %v6630
      %v6650 = vpack.c.b16 %v6633, %v6632
      %v6651 = vpack.c.b16 %v6635, %v6634
      %v6654 = vsel %vm442, %v5804, %v5901
      %v6657 = vsel %vm442, %v5805, %v5903
      %v6660 = vsel %vm442, %v5806, %v5905
      %v6663 = vsel %vm442, %v5807, %v5907
      %v6666 = vsel %vm442, %v5808, %v5909
      %v6669 = vsel %vm442, %v5809, %v5911
      %v6672 = vsel %vm442, %v5810, %v5913
      %v6675 = vsel %vm442, %v5811, %v5915
      %v6678 = vsel %vm442, %v5812, %v5917
      %v6681 = vsel %vm442, %v5813, %v5919
      %v6684 = vsel %vm442, %v5814, %v5921
      %v6687 = vsel %vm442, %v5815, %v5923
      %v6690 = vsel %vm442, %v5816, %v5925
      %v6693 = vsel %vm442, %v5817, %v5927
      %v6696 = vsel %vm442, %v5818, %v5929
      %v6699 = vsel %vm442, %v5819, %v5931
      %v6701 = vsel %vm2157, %v6654, %v6013
      %v6703 = vsel %vm2157, %v6657, %v6015
      %v6705 = vsel %vm2157, %v6660, %v6017
      %v6707 = vsel %vm2157, %v6663, %v6019
      %v6709 = vsel %vm2157, %v6666, %v6021
      %v6711 = vsel %vm2157, %v6669, %v6023
      %v6713 = vsel %vm2157, %v6672, %v6025
      %v6715 = vsel %vm2157, %v6675, %v6027
      %v6717 = vsel %vm2157, %v6678, %v6029
      %v6719 = vsel %vm2157, %v6681, %v6031
      %v6721 = vsel %vm2157, %v6684, %v6033
      %v6723 = vsel %vm2157, %v6687, %v6035
      %v6725 = vsel %vm2157, %v6690, %v6037
      %v6727 = vsel %vm2157, %v6693, %v6039
      %v6729 = vsel %vm2157, %v6696, %v6041
      %v6731 = vsel %vm2157, %v6699, %v6043
      %v6733 = vsel %vm2190, %v6701, %v6125
      %v6736 = vsel %vm2190, %v6703, %v6127
      %v6739 = vsel %vm2190, %v6705, %v6129
      %v6742 = vsel %vm2190, %v6707, %v6131
      %v6745 = vsel %vm2190, %v6709, %v6133
      %v6748 = vsel %vm2190, %v6711, %v6135
      %v6751 = vsel %vm2190, %v6713, %v6137
      %v6754 = vsel %vm2190, %v6715, %v6139
      %v6757 = vsel %vm2190, %v6717, %v6141
      %v6760 = vsel %vm2190, %v6719, %v6143
      %v6763 = vsel %vm2190, %v6721, %v6145
      %v6766 = vsel %vm2190, %v6723, %v6147
      %v6769 = vsel %vm2190, %v6725, %v6149
      %v6772 = vsel %vm2190, %v6727, %v6151
      %v6775 = vsel %vm2190, %v6729, %v6153
      %v6778 = vsel %vm2190, %v6731, %v6155
      %v6782 = vsel %vm442, %v6220, %v6317
      %v6785 = vsel %vm442, %v6221, %v6319
      %v6788 = vsel %vm442, %v6222, %v6321
      %v6791 = vsel %vm442, %v6223, %v6323
      %v6794 = vsel %vm442, %v6224, %v6325
      %v6797 = vsel %vm442, %v6225, %v6327
      %v6800 = vsel %vm442, %v6226, %v6329
      %v6803 = vsel %vm442, %v6227, %v6331
      %v6806 = vsel %vm442, %v6228, %v6333
      %v6809 = vsel %vm442, %v6229, %v6335
      %v6812 = vsel %vm442, %v6230, %v6337
      %v6815 = vsel %vm442, %v6231, %v6339
      %v6818 = vsel %vm442, %v6232, %v6341
      %v6821 = vsel %vm442, %v6233, %v6343
      %v6824 = vsel %vm442, %v6234, %v6345
      %v6827 = vsel %vm442, %v6235, %v6347
      %v6829 = vsel %vm2157, %v6782, %v6429
      %v6831 = vsel %vm2157, %v6785, %v6431
      %v6833 = vsel %vm2157, %v6788, %v6433
      %v6835 = vsel %vm2157, %v6791, %v6435
      %v6837 = vsel %vm2157, %v6794, %v6437
      %v6839 = vsel %vm2157, %v6797, %v6439
      %v6841 = vsel %vm2157, %v6800, %v6441
      %v6843 = vsel %vm2157, %v6803, %v6443
      %v6845 = vsel %vm2157, %v6806, %v6445
      %v6847 = vsel %vm2157, %v6809, %v6447
      %v6849 = vsel %vm2157, %v6812, %v6449
      %v6851 = vsel %vm2157, %v6815, %v6451
      %v6853 = vsel %vm2157, %v6818, %v6453
      %v6855 = vsel %vm2157, %v6821, %v6455
      %v6857 = vsel %vm2157, %v6824, %v6457
      %v6859 = vsel %vm2157, %v6827, %v6459
      %v6861 = vsel %vm2190, %v6829, %v6541
      %v6864 = vsel %vm2190, %v6831, %v6543
      %v6867 = vsel %vm2190, %v6833, %v6545
      %v6870 = vsel %vm2190, %v6835, %v6547
      %v6873 = vsel %vm2190, %v6837, %v6549
      %v6876 = vsel %vm2190, %v6839, %v6551
      %v6879 = vsel %vm2190, %v6841, %v6553
      %v6882 = vsel %vm2190, %v6843, %v6555
      %v6885 = vsel %vm2190, %v6845, %v6557
      %v6888 = vsel %vm2190, %v6847, %v6559
      %v6891 = vsel %vm2190, %v6849, %v6561
      %v6894 = vsel %vm2190, %v6851, %v6563
      %v6897 = vsel %vm2190, %v6853, %v6565
      %v6900 = vsel %vm2190, %v6855, %v6567
      %v6903 = vsel %vm2190, %v6857, %v6569
      %v6906 = vsel %vm2190, %v6859, %v6571
      %v6908 = vperm.slane %v5163, 0
      %v6945 = vunpack.c.l.b16 %v5127
      %v6946 = vunpack.c.l.b16 %v5128
      %v6947 = vunpack.c.l.b16 %v5129
      %v6948 = vunpack.c.l.b16 %v5130
      %v6949 = vunpack.c.l.b16 %v5131
      %v6950 = vunpack.c.l.b16 %v5132
      %v6951 = vunpack.c.l.b16 %v5133
      %v6952 = vunpack.c.l.b16 %v5134
      %v6953 = vunpack.c.l.b16 %v5135
      %v6954 = vunpack.c.l.b16 %v5136
      %v6955 = vunpack.c.l.b16 %v5137
      %v6956 = vunpack.c.l.b16 %v5138
      %v6957 = vunpack.c.l.b16 %v5139
      %v6958 = vunpack.c.l.b16 %v5140
      %v6959 = vunpack.c.l.b16 %v5141
      %v6960 = vunpack.c.l.b16 %v5142
      %v6961 = vunpack.c.l.b16 %v5143
      %v6962 = vunpack.c.l.b16 %v5144
      %v6963 = vunpack.c.l.b16 %v5145
      %v6964 = vunpack.c.l.b16 %v5146
      %v6965 = vunpack.c.l.b16 %v5147
      %v6966 = vunpack.c.l.b16 %v5148
      %v6967 = vunpack.c.l.b16 %v5149
      %v6968 = vunpack.c.l.b16 %v5150
      %v6969 = vunpack.c.l.b16 %v5151
      %v6970 = vunpack.c.l.b16 %v5152
      %v6971 = vunpack.c.l.b16 %v5153
      %v6972 = vunpack.c.l.b16 %v5154
      %v6973 = vunpack.c.l.b16 %v5155
      %v6974 = vunpack.c.l.b16 %v5156
      %v6975 = vunpack.c.l.b16 %v5157
      %v6976 = vunpack.c.l.b16 %v5158
      %v6977 = vunpack.c.l.b16 %v5159
      %v6978 = vunpack.c.l.b16 %v5160
      %v6979 = vunpack.c.l.b16 %v5161
      %v6980 = vunpack.c.l.b16 %v5162
      %v6981 = vpack.c.b16 %v6946, %v6945
      %v6982 = vpack.c.b16 %v6948, %v6947
      %v6983 = vpack.c.b16 %v6950, %v6949
      %v6984 = vpack.c.b16 %v6952, %v6951
      %v6985 = vpack.c.b16 %v6954, %v6953
      %v6986 = vpack.c.b16 %v6956, %v6955
      %v6987 = vpack.c.b16 %v6958, %v6957
      %v6988 = vpack.c.b16 %v6960, %v6959
      %v6989 = vpack.c.b16 %v6962, %v6961
      %v6990 = vpack.c.b16 %v6964, %v6963
      %v6991 = vpack.c.b16 %v6966, %v6965
      %v6992 = vpack.c.b16 %v6968, %v6967
      %v6993 = vpack.c.b16 %v6970, %v6969
      %v6994 = vpack.c.b16 %v6972, %v6971
      %v6995 = vpack.c.b16 %v6974, %v6973
      %v6996 = vpack.c.b16 %v6976, %v6975
      %v6997 = vpack.c.b16 %v6978, %v6977
      %v6998 = vpack.c.b16 %v6980, %v6979
      %v7018 = vsel %vm442, %v6636, 0
      %v7021 = vsel %vm442, %v6637, 0
      %v7024 = vsel %vm442, %v6638, 0
      %v7027 = vsel %vm442, %v6639, 0
      %v7030 = vsel %vm442, %v6640, 0
      %v7033 = vsel %vm442, %v6641, 0
      %v7036 = vsel %vm442, %v6642, 0
      %v7039 = vsel %vm442, %v6643, 0
      %v7042 = vsel %vm442, %v6644, 0
      %v7045 = vsel %vm442, %v6645, 0
      %v7048 = vsel %vm442, %v6646, 0
      %v7051 = vsel %vm442, %v6647, 0
      %v7054 = vsel %vm442, %v6648, 0
      %v7057 = vsel %vm442, %v6649, 0
      %v7060 = vsel %vm442, %v6650, 0
      %v7063 = vsel %vm442, %v6651, 0
      %7065 = vmatpush.bf16.msra.mxu0 %v6988
      %7066 = vmatpush.bf16.msra.mxu0 %v6987
      %7067 = vmatpush.bf16.msra.mxu0 %v6986
      %7068 = vmatpush.bf16.msra.mxu0 %v6985
      %7069 = vmatpush.bf16.msra.mxu0 %v6984
      %7070 = vmatpush.bf16.msra.mxu0 %v6983
      %7071 = vmatpush.bf16.msra.mxu0 %v6982
      %7072 = vmatpush.bf16.msra.mxu0 %v6981
      %7073 = vmatmul.bf16.gmra.mxu0 %v6733
      %v7074 = vpop.f32.mrf.mxu0
      %v7075 = vadd.f32 %v6908, %v7074
      %v7076 = vpop.f32.mrf.mxu0
      %v7077 = vadd.f32 %v6908, %v7076
      %7078 = vmatmul.bf16.gmra.mxu0 %v6736
      %v7079 = vpop.f32.mrf.mxu0
      %v7080 = vadd.f32 %v6908, %v7079
      %v7081 = vpop.f32.mrf.mxu0
      %v7082 = vadd.f32 %v6908, %v7081
      %7083 = vmatmul.bf16.gmra.mxu0 %v6739
      %v7084 = vpop.f32.mrf.mxu0
      %v7085 = vadd.f32 %v6908, %v7084
      %v7086 = vpop.f32.mrf.mxu0
      %v7087 = vadd.f32 %v6908, %v7086
      %7088 = vmatmul.bf16.gmra.mxu0 %v6742
      %v7089 = vpop.f32.mrf.mxu0
      %v7090 = vadd.f32 %v6908, %v7089
      %v7091 = vpop.f32.mrf.mxu0
      %v7092 = vadd.f32 %v6908, %v7091
      %7093 = vmatmul.bf16.gmra.mxu0 %v6745
      %v7094 = vpop.f32.mrf.mxu0
      %v7095 = vadd.f32 %v6908, %v7094
      %v7096 = vpop.f32.mrf.mxu0
      %v7097 = vadd.f32 %v6908, %v7096
      %7098 = vmatmul.bf16.gmra.mxu0 %v6748
      %v7099 = vpop.f32.mrf.mxu0
      %v7100 = vadd.f32 %v6908, %v7099
      %v7101 = vpop.f32.mrf.mxu0
      %v7102 = vadd.f32 %v6908, %v7101
      %7103 = vmatmul.bf16.gmra.mxu0 %v6751
      %v7104 = vpop.f32.mrf.mxu0
      %v7105 = vadd.f32 %v6908, %v7104
      %v7106 = vpop.f32.mrf.mxu0
      %v7107 = vadd.f32 %v6908, %v7106
      %7108 = vmatmul.bf16.gmra.mxu0 %v6754
      %v7109 = vpop.f32.mrf.mxu0
      %v7110 = vadd.f32 %v6908, %v7109
      %v7111 = vpop.f32.mrf.mxu0
      %v7112 = vadd.f32 %v6908, %v7111
      %7113 = vmatmul.bf16.gmra.mxu0 %v6757
      %v7114 = vpop.f32.mrf.mxu0
      %v7115 = vadd.f32 %v6908, %v7114
      %v7116 = vpop.f32.mrf.mxu0
      %v7117 = vadd.f32 %v6908, %v7116
      %7118 = vmatmul.bf16.gmra.mxu0 %v6760
      %v7119 = vpop.f32.mrf.mxu0
      %v7120 = vadd.f32 %v6908, %v7119
      %v7121 = vpop.f32.mrf.mxu0
      %v7122 = vadd.f32 %v6908, %v7121
      %7123 = vmatmul.bf16.gmra.mxu0 %v6763
      %v7124 = vpop.f32.mrf.mxu0
      %v7125 = vadd.f32 %v6908, %v7124
      %v7126 = vpop.f32.mrf.mxu0
      %v7127 = vadd.f32 %v6908, %v7126
      %7128 = vmatmul.bf16.gmra.mxu0 %v6766
      %v7129 = vpop.f32.mrf.mxu0
      %v7130 = vadd.f32 %v6908, %v7129
      %v7131 = vpop.f32.mrf.mxu0
      %v7132 = vadd.f32 %v6908, %v7131
      %7133 = vmatmul.bf16.gmra.mxu0 %v6769
      %v7134 = vpop.f32.mrf.mxu0
      %v7135 = vadd.f32 %v6908, %v7134
      %v7136 = vpop.f32.mrf.mxu0
      %v7137 = vadd.f32 %v6908, %v7136
      %7138 = vmatmul.bf16.gmra.mxu0 %v6772
      %v7139 = vpop.f32.mrf.mxu0
      %v7140 = vadd.f32 %v6908, %v7139
      %v7141 = vpop.f32.mrf.mxu0
      %v7142 = vadd.f32 %v6908, %v7141
      %7143 = vmatmul.bf16.gmra.mxu0 %v6775
      %v7144 = vpop.f32.mrf.mxu0
      %v7145 = vadd.f32 %v6908, %v7144
      %v7146 = vpop.f32.mrf.mxu0
      %v7147 = vadd.f32 %v6908, %v7146
      %7148 = vmatmul.bf16.gmra.mxu0 %v6778
      %v7149 = vpop.f32.mrf.mxu0
      %v7150 = vadd.f32 %v6908, %v7149
      %v7151 = vpop.f32.mrf.mxu0
      %v7152 = vadd.f32 %v6908, %v7151
      %7153 = vdwg.mxu0
      %7154 = vmatpush.bf16.msra.mxu0 %v6996
      %7155 = vmatpush.bf16.msra.mxu0 %v6995
      %7156 = vmatpush.bf16.msra.mxu0 %v6994
      %7157 = vmatpush.bf16.msra.mxu0 %v6993
      %7158 = vmatpush.bf16.msra.mxu0 %v6992
      %7159 = vmatpush.bf16.msra.mxu0 %v6991
      %7160 = vmatpush.bf16.msra.mxu0 %v6990
      %7161 = vmatpush.bf16.msra.mxu0 %v6989
      %7162 = vmatmul.bf16.gmra.mxu0 %v6861
      %v7163 = vpop.f32.mrf.mxu0
      %v7164 = vadd.f32 %v7075, %v7163
      %v7165 = vpop.f32.mrf.mxu0
      %v7166 = vadd.f32 %v7077, %v7165
      %7167 = vmatmul.bf16.gmra.mxu0 %v6864
      %v7168 = vpop.f32.mrf.mxu0
      %v7169 = vadd.f32 %v7080, %v7168
      %v7170 = vpop.f32.mrf.mxu0
      %v7171 = vadd.f32 %v7082, %v7170
      %7172 = vmatmul.bf16.gmra.mxu0 %v6867
      %v7173 = vpop.f32.mrf.mxu0
      %v7174 = vadd.f32 %v7085, %v7173
      %v7175 = vpop.f32.mrf.mxu0
      %v7176 = vadd.f32 %v7087, %v7175
      %7177 = vmatmul.bf16.gmra.mxu0 %v6870
      %v7178 = vpop.f32.mrf.mxu0
      %v7179 = vadd.f32 %v7090, %v7178
      %v7180 = vpop.f32.mrf.mxu0
      %v7181 = vadd.f32 %v7092, %v7180
      %7182 = vmatmul.bf16.gmra.mxu0 %v6873
      %v7183 = vpop.f32.mrf.mxu0
      %v7184 = vadd.f32 %v7095, %v7183
      %v7185 = vpop.f32.mrf.mxu0
      %v7186 = vadd.f32 %v7097, %v7185
      %7187 = vmatmul.bf16.gmra.mxu0 %v6876
      %v7188 = vpop.f32.mrf.mxu0
      %v7189 = vadd.f32 %v7100, %v7188
      %v7190 = vpop.f32.mrf.mxu0
      %v7191 = vadd.f32 %v7102, %v7190
      %7192 = vmatmul.bf16.gmra.mxu0 %v6879
      %v7193 = vpop.f32.mrf.mxu0
      %v7194 = vadd.f32 %v7105, %v7193
      %v7195 = vpop.f32.mrf.mxu0
      %v7196 = vadd.f32 %v7107, %v7195
      %7197 = vmatmul.bf16.gmra.mxu0 %v6882
      %v7198 = vpop.f32.mrf.mxu0
      %v7199 = vadd.f32 %v7110, %v7198
      %v7200 = vpop.f32.mrf.mxu0
      %v7201 = vadd.f32 %v7112, %v7200
      %7202 = vmatmul.bf16.gmra.mxu0 %v6885
      %v7203 = vpop.f32.mrf.mxu0
      %v7204 = vadd.f32 %v7115, %v7203
      %v7205 = vpop.f32.mrf.mxu0
      %v7206 = vadd.f32 %v7117, %v7205
      %7207 = vmatmul.bf16.gmra.mxu0 %v6888
      %v7208 = vpop.f32.mrf.mxu0
      %v7209 = vadd.f32 %v7120, %v7208
      %v7210 = vpop.f32.mrf.mxu0
      %v7211 = vadd.f32 %v7122, %v7210
      %7212 = vmatmul.bf16.gmra.mxu0 %v6891
      %v7213 = vpop.f32.mrf.mxu0
      %v7214 = vadd.f32 %v7125, %v7213
      %v7215 = vpop.f32.mrf.mxu0
      %v7216 = vadd.f32 %v7127, %v7215
      %7217 = vmatmul.bf16.gmra.mxu0 %v6894
      %v7218 = vpop.f32.mrf.mxu0
      %v7219 = vadd.f32 %v7130, %v7218
      %v7220 = vpop.f32.mrf.mxu0
      %v7221 = vadd.f32 %v7132, %v7220
      %7222 = vmatmul.bf16.gmra.mxu0 %v6897
      %v7223 = vpop.f32.mrf.mxu0
      %v7224 = vadd.f32 %v7135, %v7223
      %v7225 = vpop.f32.mrf.mxu0
      %v7226 = vadd.f32 %v7137, %v7225
      %7227 = vmatmul.bf16.gmra.mxu0 %v6900
      %v7228 = vpop.f32.mrf.mxu0
      %v7229 = vadd.f32 %v7140, %v7228
      %v7230 = vpop.f32.mrf.mxu0
      %v7231 = vadd.f32 %v7142, %v7230
      %7232 = vmatmul.bf16.gmra.mxu0 %v6903
      %v7233 = vpop.f32.mrf.mxu0
      %v7234 = vadd.f32 %v7145, %v7233
      %v7235 = vpop.f32.mrf.mxu0
      %v7236 = vadd.f32 %v7147, %v7235
      %7237 = vmatmul.bf16.gmra.mxu0 %v6906
      %v7238 = vpop.f32.mrf.mxu0
      %v7239 = vadd.f32 %v7150, %v7238
      %v7240 = vpop.f32.mrf.mxu0
      %v7241 = vadd.f32 %v7152, %v7240
      %7242 = vdwg.mxu0
      %7243 = vmatpush.bf16.msra.mxu0 0
      %7244 = vmatpush.bf16.msra.mxu0 0
      %7245 = vmatpush.bf16.msra.mxu0 0
      %7246 = vmatpush.bf16.msra.mxu0 0
      %7247 = vmatpush.bf16.msra.mxu0 0
      %7248 = vmatpush.bf16.msra.mxu0 0
      %7249 = vmatpush.bf16.msra.mxu0 %v6998
      %7250 = vmatpush.bf16.msra.mxu0 %v6997
      %7251 = vmatmul.bf16.gmra.mxu0 %v7018
      %v7252 = vpop.f32.mrf.mxu0
      %v7253 = vadd.f32 %v7164, %v7252
      %v7254 = vpop.f32.mrf.mxu0
      %v7255 = vadd.f32 %v7166, %v7254
      %7256 = vmatmul.bf16.gmra.mxu0 %v7021
      %v7257 = vpop.f32.mrf.mxu0
      %v7258 = vadd.f32 %v7169, %v7257
      %v7259 = vpop.f32.mrf.mxu0
      %v7260 = vadd.f32 %v7171, %v7259
      %7261 = vmatmul.bf16.gmra.mxu0 %v7024
      %v7262 = vpop.f32.mrf.mxu0
      %v7263 = vadd.f32 %v7174, %v7262
      %v7264 = vpop.f32.mrf.mxu0
      %v7265 = vadd.f32 %v7176, %v7264
      %7266 = vmatmul.bf16.gmra.mxu0 %v7027
      %v7267 = vpop.f32.mrf.mxu0
      %v7268 = vadd.f32 %v7179, %v7267
      %v7269 = vpop.f32.mrf.mxu0
      %v7270 = vadd.f32 %v7181, %v7269
      %7271 = vmatmul.bf16.gmra.mxu0 %v7030
      %v7272 = vpop.f32.mrf.mxu0
      %v7273 = vadd.f32 %v7184, %v7272
      %v7274 = vpop.f32.mrf.mxu0
      %v7275 = vadd.f32 %v7186, %v7274
      %7276 = vmatmul.bf16.gmra.mxu0 %v7033
      %v7277 = vpop.f32.mrf.mxu0
      %v7278 = vadd.f32 %v7189, %v7277
      %v7279 = vpop.f32.mrf.mxu0
      %v7280 = vadd.f32 %v7191, %v7279
      %7281 = vmatmul.bf16.gmra.mxu0 %v7036
      %v7282 = vpop.f32.mrf.mxu0
      %v7283 = vadd.f32 %v7194, %v7282
      %v7284 = vpop.f32.mrf.mxu0
      %v7285 = vadd.f32 %v7196, %v7284
      %7286 = vmatmul.bf16.gmra.mxu0 %v7039
      %v7287 = vpop.f32.mrf.mxu0
      %v7288 = vadd.f32 %v7199, %v7287
      %v7289 = vpop.f32.mrf.mxu0
      %v7290 = vadd.f32 %v7201, %v7289
      %7291 = vmatmul.bf16.gmra.mxu0 %v7042
      %v7292 = vpop.f32.mrf.mxu0
      %v7293 = vadd.f32 %v7204, %v7292
      %v7294 = vpop.f32.mrf.mxu0
      %v7295 = vadd.f32 %v7206, %v7294
      %7296 = vmatmul.bf16.gmra.mxu0 %v7045
      %v7297 = vpop.f32.mrf.mxu0
      %v7298 = vadd.f32 %v7209, %v7297
      %v7299 = vpop.f32.mrf.mxu0
      %v7300 = vadd.f32 %v7211, %v7299
      %7301 = vmatmul.bf16.gmra.mxu0 %v7048
      %v7302 = vpop.f32.mrf.mxu0
      %v7303 = vadd.f32 %v7214, %v7302
      %v7304 = vpop.f32.mrf.mxu0
      %v7305 = vadd.f32 %v7216, %v7304
      %7306 = vmatmul.bf16.gmra.mxu0 %v7051
      %v7307 = vpop.f32.mrf.mxu0
      %v7308 = vadd.f32 %v7219, %v7307
      %v7309 = vpop.f32.mrf.mxu0
      %v7310 = vadd.f32 %v7221, %v7309
      %7311 = vmatmul.bf16.gmra.mxu0 %v7054
      %v7312 = vpop.f32.mrf.mxu0
      %v7313 = vadd.f32 %v7224, %v7312
      %v7314 = vpop.f32.mrf.mxu0
      %v7315 = vadd.f32 %v7226, %v7314
      %7316 = vmatmul.bf16.gmra.mxu0 %v7057
      %v7317 = vpop.f32.mrf.mxu0
      %v7318 = vadd.f32 %v7229, %v7317
      %v7319 = vpop.f32.mrf.mxu0
      %v7320 = vadd.f32 %v7231, %v7319
      %7321 = vmatmul.bf16.gmra.mxu0 %v7060
      %v7322 = vpop.f32.mrf.mxu0
      %v7323 = vadd.f32 %v7234, %v7322
      %v7324 = vpop.f32.mrf.mxu0
      %v7325 = vadd.f32 %v7236, %v7324
      %7326 = vmatmul.bf16.gmra.mxu0 %v7063
      %v7327 = vpop.f32.mrf.mxu0
      %v7328 = vadd.f32 %v7239, %v7327
      %v7329 = vpop.f32.mrf.mxu0
      %v7330 = vadd.f32 %v7241, %v7329
      %7331 = vdwg.mxu0
      %v7332 = vmax.f32 %v7253, 0.0
      %v7333 = vmax.f32 %v7255, 0.0
      %v7334 = vmax.f32 %v7258, 0.0
      %v7335 = vmax.f32 %v7260, 0.0
      %v7336 = vmax.f32 %v7263, 0.0
      %v7337 = vmax.f32 %v7265, 0.0
      %v7338 = vmax.f32 %v7268, 0.0
      %v7339 = vmax.f32 %v7270, 0.0
      %v7340 = vmax.f32 %v7273, 0.0
      %v7341 = vmax.f32 %v7275, 0.0
      %v7342 = vmax.f32 %v7278, 0.0
      %v7343 = vmax.f32 %v7280, 0.0
      %v7344 = vmax.f32 %v7283, 0.0
      %v7345 = vmax.f32 %v7285, 0.0
      %v7346 = vmax.f32 %v7288, 0.0
      %v7347 = vmax.f32 %v7290, 0.0
      %v7348 = vmax.f32 %v7293, 0.0
      %v7349 = vmax.f32 %v7295, 0.0
      %v7350 = vmax.f32 %v7298, 0.0
      %v7351 = vmax.f32 %v7300, 0.0
      %v7352 = vmax.f32 %v7303, 0.0
      %v7353 = vmax.f32 %v7305, 0.0
      %v7354 = vmax.f32 %v7308, 0.0
      %v7355 = vmax.f32 %v7310, 0.0
      %v7356 = vmax.f32 %v7313, 0.0
      %v7357 = vmax.f32 %v7315, 0.0
      %v7358 = vmax.f32 %v7318, 0.0
      %v7359 = vmax.f32 %v7320, 0.0
      %v7360 = vmax.f32 %v7323, 0.0
      %v7361 = vmax.f32 %v7325, 0.0
      %v7362 = vmax.f32 %v7328, 0.0
      %v7363 = vmax.f32 %v7330, 0.0
      %7364 = vst.msk [vmem:[%s550 + $0x1] sm:$0xff] %vm442, %v7332
      %7365 = vst.msk [vmem:[%s550 + $0x9] sm:$0xff] %vm442, %v7333
      %7366 = vst.msk [vmem:[%s550 + $0x19] sm:$0xff] %vm442, %v7334
      %7367 = vst.msk [vmem:[%s550 + $0x21] sm:$0xff] %vm442, %v7335
      %7368 = vst.msk [vmem:[%s550 + $0x31] sm:$0xff] %vm442, %v7336
      %7369 = vst.msk [vmem:[%s550 + $0x39] sm:$0xff] %vm442, %v7337
      %7370 = vst.msk [vmem:[%s550 + $0x49] sm:$0xff] %vm442, %v7338
      %7371 = vst.msk [vmem:[%s550 + $0x51] sm:$0xff] %vm442, %v7339
      %7372 = vst.msk [vmem:[%s550 + $0x61] sm:$0xff] %vm442, %v7340
      %7373 = vst.msk [vmem:[%s550 + $0x69] sm:$0xff] %vm442, %v7341
      %7374 = vst.msk [vmem:[%s550 + $0x79] sm:$0xff] %vm442, %v7342
      %7375 = vst.msk [vmem:[%s550 + $0x81] sm:$0xff] %vm442, %v7343
      %7376 = vst.msk [vmem:[%s550 + $0x91] sm:$0xff] %vm442, %v7344
      %7377 = vst.msk [vmem:[%s550 + $0x99] sm:$0xff] %vm442, %v7345
      %7378 = vst.msk [vmem:[%s550 + $0xa9] sm:$0xff] %vm442, %v7346
      %7379 = vst.msk [vmem:[%s550 + $0xb1] sm:$0xff] %vm442, %v7347
      %7380 = vst.msk [vmem:[%s550 + $0xc1] sm:$0xff] %vm442, %v7348
      %7381 = vst.msk [vmem:[%s550 + $0xc9] sm:$0xff] %vm442, %v7349
      %7382 = vst.msk [vmem:[%s550 + $0xd9] sm:$0xff] %vm442, %v7350
      %7383 = vst.msk [vmem:[%s550 + $0xe1] sm:$0xff] %vm442, %v7351
      %7384 = vst.msk [vmem:[%s550 + $0xf1] sm:$0xff] %vm442, %v7352
      %7385 = vst.msk [vmem:[%s550 + $0xf9] sm:$0xff] %vm442, %v7353
      %7386 = vst.msk [vmem:[%s550 + $0x109] sm:$0xff] %vm442, %v7354
      %7387 = vst.msk [vmem:[%s550 + $0x111] sm:$0xff] %vm442, %v7355
      %7388 = vst.msk [vmem:[%s550 + $0x121] sm:$0xff] %vm442, %v7356
      %7389 = vst.msk [vmem:[%s550 + $0x129] sm:$0xff] %vm442, %v7357
      %7390 = vst.msk [vmem:[%s550 + $0x139] sm:$0xff] %vm442, %v7358
      %7391 = vst.msk [vmem:[%s550 + $0x141] sm:$0xff] %vm442, %v7359
      %7392 = vst.msk [vmem:[%s550 + $0x151] sm:$0xff] %vm442, %v7360
      %7393 = vst.msk [vmem:[%s550 + $0x159] sm:$0xff] %vm442, %v7361
      %7394 = vst.msk [vmem:[%s550 + $0x169] sm:$0xff] %vm442, %v7362
      %7395 = vst.msk [vmem:[%s550 + $0x171] sm:$0xff] %vm442, %v7363
      %v7396 = vld [vmem:[%s5] sm:$0xf]
      %v7397 = vld [vmem:[%s5 + $0x4] sm:$0xf]
      %v7398 = vld [vmem:[%s5 + $0x8] sm:$0xf]
      %v7399 = vld [vmem:[%s5 + $0xc] sm:$0xf]
      %v7400 = vld [vmem:[%s5 + $0x10] sm:$0xf]
      %v7401 = vld [vmem:[%s5 + $0x14] sm:$0xf]
      %v7402 = vld [vmem:[%s5 + $0x18] sm:$0xf]
      %v7403 = vld [vmem:[%s5 + $0x1c] sm:$0xf]
      %v7404 = vld [vmem:[%s5 + $0x20] sm:$0xf]
      %v7405 = vld [vmem:[%s5 + $0x24] sm:$0xf]
      %v7406 = vld [vmem:[%s5 + $0x28] sm:$0xf]
      %v7407 = vld [vmem:[%s5 + $0x2c] sm:$0xf]
      %v7408 = vld [vmem:[%s5 + $0x30] sm:$0xf]
      %v7409 = vld [vmem:[%s5 + $0x34] sm:$0xf]
      %v7410 = vld [vmem:[%s5 + $0x38] sm:$0xf]
      %v7411 = vld [vmem:[%s5 + $0x3c] sm:$0xf]
      %v7412 = vld [vmem:[%s5 + $0x40] sm:$0xf]
      %v7413 = vld [vmem:[%s5 + $0x44] sm:$0xf]
      %v7414 = vld [vmem:[%s5 + $0x48] sm:$0xf]
      %v7415 = vld [vmem:[%s5 + $0x4c] sm:$0xf]
      %v7416 = vld [vmem:[%s5 + $0x50] sm:$0xf]
      %v7417 = vld [vmem:[%s5 + $0x54] sm:$0xf]
      %v7418 = vld [vmem:[%s5 + $0x58] sm:$0xf]
      %v7419 = vld [vmem:[%s5 + $0x5c] sm:$0xf]
      %v7420 = vld [vmem:[%s5 + $0x60] sm:$0xf]
      %v7421 = vld [vmem:[%s5 + $0x64] sm:$0xf]
      %v7422 = vld [vmem:[%s5 + $0x68] sm:$0xf]
      %v7423 = vld [vmem:[%s5 + $0x6c] sm:$0xf]
      %v7424 = vld [vmem:[%s5 + $0x70] sm:$0xf]
      %v7425 = vld [vmem:[%s5 + $0x74] sm:$0xf]
      %v7426 = vld [vmem:[%s5 + $0x78] sm:$0xf]
      %v7427 = vld [vmem:[%s5 + $0x7c] sm:$0xf]
      %v7428 = vld [vmem:[%s5 + $0x80] sm:$0xf]
      %v7429 = vld [vmem:[%s5 + $0x84] sm:$0xf]
      %v7430 = vld [vmem:[%s5 + $0x88] sm:$0xf]
      %v7431 = vld [vmem:[%s5 + $0x8c] sm:$0xf]
      %v7432 = vld [vmem:[%s6] sm:$0x1]
      %v7433 = vld [vmem:[#allocation2] ss:$2 sm:$0xff]
      %s7434 = scalar_lea.vmem [#allocation2], 48
      %v7435 = vld [vmem:[%s7434] ss:$2 sm:$0xff]
      %s7436 = scalar_lea.vmem [#allocation2], 96
      %v7437 = vld [vmem:[%s7436] ss:$2 sm:$0xff]
      %s7438 = scalar_lea.vmem [#allocation2], 144
      %v7439 = vld [vmem:[%s7438] ss:$2 sm:$0xff]
      %s7440 = scalar_lea.vmem [#allocation2], 192
      %v7441 = vld [vmem:[%s7440] ss:$2 sm:$0xff]
      %s7442 = scalar_lea.vmem [#allocation2], 240
      %v7443 = vld [vmem:[%s7442] ss:$2 sm:$0xff]
      %s7444 = scalar_lea.vmem [#allocation2], 288
      %v7445 = vld [vmem:[%s7444] ss:$2 sm:$0xff]
      %s7446 = scalar_lea.vmem [#allocation2], 336
      %v7447 = vld [vmem:[%s7446] ss:$2 sm:$0xff]
      %v7448 = vpack.c.bf16 %v7433, %v7433
      %v7449 = vpack.c.bf16 %v7435, %v7435
      %v7450 = vpack.c.bf16 %v7437, %v7437
      %v7451 = vpack.c.bf16 %v7439, %v7439
      %v7452 = vpack.c.bf16 %v7441, %v7441
      %v7453 = vpack.c.bf16 %v7443, %v7443
      %v7454 = vpack.c.bf16 %v7445, %v7445
      %v7455 = vpack.c.bf16 %v7447, %v7447
      %s7456 = scalar_lea.vmem [#allocation2], 1
      %v7457 = vld [vmem:[%s7456] ss:$2 sm:$0xff]
      %s7458 = scalar_lea.vmem [#allocation2], 49
      %v7459 = vld [vmem:[%s7458] ss:$2 sm:$0xff]
      %s7460 = scalar_lea.vmem [#allocation2], 97
      %v7461 = vld [vmem:[%s7460] ss:$2 sm:$0xff]
      %s7462 = scalar_lea.vmem [#allocation2], 145
      %v7463 = vld [vmem:[%s7462] ss:$2 sm:$0xff]
      %s7464 = scalar_lea.vmem [#allocation2], 193
      %v7465 = vld [vmem:[%s7464] ss:$2 sm:$0xff]
      %s7466 = scalar_lea.vmem [#allocation2], 241
      %v7467 = vld [vmem:[%s7466] ss:$2 sm:$0xff]
      %s7468 = scalar_lea.vmem [#allocation2], 289
      %v7469 = vld [vmem:[%s7468] ss:$2 sm:$0xff]
      %s7470 = scalar_lea.vmem [#allocation2], 337
      %v7471 = vld [vmem:[%s7470] ss:$2 sm:$0xff]
      %v7472 = vpack.c.bf16 %v7457, %v7457
      %v7473 = vpack.c.bf16 %v7459, %v7459
      %v7474 = vpack.c.bf16 %v7461, %v7461
      %v7475 = vpack.c.bf16 %v7463, %v7463
      %v7476 = vpack.c.bf16 %v7465, %v7465
      %v7477 = vpack.c.bf16 %v7467, %v7467
      %v7478 = vpack.c.bf16 %v7469, %v7469
      %v7479 = vpack.c.bf16 %v7471, %v7471
      %s7480 = scalar_lea.vmem [#allocation2], 2
      %v7481 = vld [vmem:[%s7480] ss:$2 sm:$0xff]
      %s7482 = scalar_lea.vmem [#allocation2], 50
      %v7483 = vld [vmem:[%s7482] ss:$2 sm:$0xff]
      %s7484 = scalar_lea.vmem [#allocation2], 98
      %v7485 = vld [vmem:[%s7484] ss:$2 sm:$0xff]
      %s7486 = scalar_lea.vmem [#allocation2], 146
      %v7487 = vld [vmem:[%s7486] ss:$2 sm:$0xff]
      %s7488 = scalar_lea.vmem [#allocation2], 194
      %v7489 = vld [vmem:[%s7488] ss:$2 sm:$0xff]
      %s7490 = scalar_lea.vmem [#allocation2], 242
      %v7491 = vld [vmem:[%s7490] ss:$2 sm:$0xff]
      %s7492 = scalar_lea.vmem [#allocation2], 290
      %v7493 = vld [vmem:[%s7492] ss:$2 sm:$0xff]
      %s7494 = scalar_lea.vmem [#allocation2], 338
      %v7495 = vld [vmem:[%s7494] ss:$2 sm:$0xff]
      %v7496 = vpack.c.bf16 %v7481, %v7481
      %v7497 = vpack.c.bf16 %v7483, %v7483
      %v7498 = vpack.c.bf16 %v7485, %v7485
      %v7499 = vpack.c.bf16 %v7487, %v7487
      %v7500 = vpack.c.bf16 %v7489, %v7489
      %v7501 = vpack.c.bf16 %v7491, %v7491
      %v7502 = vpack.c.bf16 %v7493, %v7493
      %v7503 = vpack.c.bf16 %v7495, %v7495
      %v7504 = vld [vmem:[%s550] ss:$2 sm:$0xff]
      %s7505 = scalar_lea.vmem %s550, 48 [#allocation2]
      %v7506 = vld [vmem:[%s7505] ss:$2 sm:$0xff]
      %s7507 = scalar_lea.vmem %s550, 96 [#allocation2]
      %v7508 = vld [vmem:[%s7507] ss:$2 sm:$0xff]
      %s7509 = scalar_lea.vmem %s550, 144 [#allocation2]
      %v7510 = vld [vmem:[%s7509] ss:$2 sm:$0xff]
      %s7511 = scalar_lea.vmem %s550, 192 [#allocation2]
      %v7512 = vld [vmem:[%s7511] ss:$2 sm:$0xff]
      %s7513 = scalar_lea.vmem %s550, 240 [#allocation2]
      %v7514 = vld [vmem:[%s7513] ss:$2 sm:$0xff]
      %s7515 = scalar_lea.vmem %s550, 288 [#allocation2]
      %v7516 = vld [vmem:[%s7515] ss:$2 sm:$0xff]
      %s7517 = scalar_lea.vmem %s550, 336 [#allocation2]
      %v7518 = vld [vmem:[%s7517] ss:$2 sm:$0xff]
      %v7519 = vpack.c.bf16 %v7504, %v7504
      %v7520 = vpack.c.bf16 %v7506, %v7506
      %v7521 = vpack.c.bf16 %v7508, %v7508
      %v7522 = vpack.c.bf16 %v7510, %v7510
      %v7523 = vpack.c.bf16 %v7512, %v7512
      %v7524 = vpack.c.bf16 %v7514, %v7514
      %v7525 = vpack.c.bf16 %v7516, %v7516
      %v7526 = vpack.c.bf16 %v7518, %v7518
      %s7527 = scalar_lea.vmem %s550, 1 [#allocation2]
      %v7528 = vld [vmem:[%s7527] ss:$2 sm:$0xff]
      %s7529 = scalar_lea.vmem %s550, 49 [#allocation2]
      %v7530 = vld [vmem:[%s7529] ss:$2 sm:$0xff]
      %s7531 = scalar_lea.vmem %s550, 97 [#allocation2]
      %v7532 = vld [vmem:[%s7531] ss:$2 sm:$0xff]
      %s7533 = scalar_lea.vmem %s550, 145 [#allocation2]
      %v7534 = vld [vmem:[%s7533] ss:$2 sm:$0xff]
      %s7535 = scalar_lea.vmem %s550, 193 [#allocation2]
      %v7536 = vld [vmem:[%s7535] ss:$2 sm:$0xff]
      %s7537 = scalar_lea.vmem %s550, 241 [#allocation2]
      %v7538 = vld [vmem:[%s7537] ss:$2 sm:$0xff]
      %s7539 = scalar_lea.vmem %s550, 289 [#allocation2]
      %v7540 = vld [vmem:[%s7539] ss:$2 sm:$0xff]
      %s7541 = scalar_lea.vmem %s550, 337 [#allocation2]
      %v7542 = vld [vmem:[%s7541] ss:$2 sm:$0xff]
      %v7543 = vpack.c.bf16 %v7528, %v7528
      %v7544 = vpack.c.bf16 %v7530, %v7530
      %v7545 = vpack.c.bf16 %v7532, %v7532
      %v7546 = vpack.c.bf16 %v7534, %v7534
      %v7547 = vpack.c.bf16 %v7536, %v7536
      %v7548 = vpack.c.bf16 %v7538, %v7538
      %v7549 = vpack.c.bf16 %v7540, %v7540
      %v7550 = vpack.c.bf16 %v7542, %v7542
      %s7551 = scalar_lea.vmem %s550, 2 [#allocation2]
      %v7552 = vld [vmem:[%s7551] ss:$2 sm:$0xff]
      %s7553 = scalar_lea.vmem %s550, 50 [#allocation2]
      %v7554 = vld [vmem:[%s7553] ss:$2 sm:$0xff]
      %s7555 = scalar_lea.vmem %s550, 98 [#allocation2]
      %v7556 = vld [vmem:[%s7555] ss:$2 sm:$0xff]
      %s7557 = scalar_lea.vmem %s550, 146 [#allocation2]
      %v7558 = vld [vmem:[%s7557] ss:$2 sm:$0xff]
      %s7559 = scalar_lea.vmem %s550, 194 [#allocation2]
      %v7560 = vld [vmem:[%s7559] ss:$2 sm:$0xff]
      %s7561 = scalar_lea.vmem %s550, 242 [#allocation2]
      %v7562 = vld [vmem:[%s7561] ss:$2 sm:$0xff]
      %s7563 = scalar_lea.vmem %s550, 290 [#allocation2]
      %v7564 = vld [vmem:[%s7563] ss:$2 sm:$0xff]
      %s7565 = scalar_lea.vmem %s550, 338 [#allocation2]
      %v7566 = vld [vmem:[%s7565] ss:$2 sm:$0xff]
      %v7567 = vpack.c.bf16 %v7552, %v7552
      %v7568 = vpack.c.bf16 %v7554, %v7554
      %v7569 = vpack.c.bf16 %v7556, %v7556
      %v7570 = vpack.c.bf16 %v7558, %v7558
      %v7571 = vpack.c.bf16 %v7560, %v7560
      %v7572 = vpack.c.bf16 %v7562, %v7562
      %v7573 = vpack.c.bf16 %v7564, %v7564
      %v7574 = vpack.c.bf16 %v7566, %v7566
      %v7575 = vld [vmem:[%s1004] ss:$2 sm:$0xff]
      %s7576 = scalar_lea.vmem %s1004, 48 [#allocation2]
      %v7577 = vld [vmem:[%s7576] ss:$2 sm:$0xff]
      %s7578 = scalar_lea.vmem %s1004, 96 [#allocation2]
      %v7579 = vld [vmem:[%s7578] ss:$2 sm:$0xff]
      %s7580 = scalar_lea.vmem %s1004, 144 [#allocation2]
      %v7581 = vld [vmem:[%s7580] ss:$2 sm:$0xff]
      %s7582 = scalar_lea.vmem %s1004, 192 [#allocation2]
      %v7583 = vld [vmem:[%s7582] ss:$2 sm:$0xff]
      %s7584 = scalar_lea.vmem %s1004, 240 [#allocation2]
      %v7585 = vld [vmem:[%s7584] ss:$2 sm:$0xff]
      %s7586 = scalar_lea.vmem %s1004, 288 [#allocation2]
      %v7587 = vld [vmem:[%s7586] ss:$2 sm:$0xff]
      %s7588 = scalar_lea.vmem %s1004, 336 [#allocation2]
      %v7589 = vld [vmem:[%s7588] ss:$2 sm:$0xff]
      %v7590 = vpack.c.bf16 %v7575, %v7575
      %v7591 = vpack.c.bf16 %v7577, %v7577
      %v7592 = vpack.c.bf16 %v7579, %v7579
      %v7593 = vpack.c.bf16 %v7581, %v7581
      %v7594 = vpack.c.bf16 %v7583, %v7583
      %v7595 = vpack.c.bf16 %v7585, %v7585
      %v7596 = vpack.c.bf16 %v7587, %v7587
      %v7597 = vpack.c.bf16 %v7589, %v7589
      %s7598 = scalar_lea.vmem %s1004, 1 [#allocation2]
      %v7599 = vld [vmem:[%s7598] ss:$2 sm:$0xff]
      %s7600 = scalar_lea.vmem %s1004, 49 [#allocation2]
      %v7601 = vld [vmem:[%s7600] ss:$2 sm:$0xff]
      %s7602 = scalar_lea.vmem %s1004, 97 [#allocation2]
      %v7603 = vld [vmem:[%s7602] ss:$2 sm:$0xff]
      %s7604 = scalar_lea.vmem %s1004, 145 [#allocation2]
      %v7605 = vld [vmem:[%s7604] ss:$2 sm:$0xff]
      %s7606 = scalar_lea.vmem %s1004, 193 [#allocation2]
      %v7607 = vld [vmem:[%s7606] ss:$2 sm:$0xff]
      %s7608 = scalar_lea.vmem %s1004, 241 [#allocation2]
      %v7609 = vld [vmem:[%s7608] ss:$2 sm:$0xff]
      %s7610 = scalar_lea.vmem %s1004, 289 [#allocation2]
      %v7611 = vld [vmem:[%s7610] ss:$2 sm:$0xff]
      %s7612 = scalar_lea.vmem %s1004, 337 [#allocation2]
      %v7613 = vld [vmem:[%s7612] ss:$2 sm:$0xff]
      %v7614 = vpack.c.bf16 %v7599, %v7599
      %v7615 = vpack.c.bf16 %v7601, %v7601
      %v7616 = vpack.c.bf16 %v7603, %v7603
      %v7617 = vpack.c.bf16 %v7605, %v7605
      %v7618 = vpack.c.bf16 %v7607, %v7607
      %v7619 = vpack.c.bf16 %v7609, %v7609
      %v7620 = vpack.c.bf16 %v7611, %v7611
      %v7621 = vpack.c.bf16 %v7613, %v7613
      %s7622 = scalar_lea.vmem %s1004, 2 [#allocation2]
      %v7623 = vld [vmem:[%s7622] ss:$2 sm:$0xff]
      %s7624 = scalar_lea.vmem %s1004, 50 [#allocation2]
      %v7625 = vld [vmem:[%s7624] ss:$2 sm:$0xff]
      %s7626 = scalar_lea.vmem %s1004, 98 [#allocation2]
      %v7627 = vld [vmem:[%s7626] ss:$2 sm:$0xff]
      %s7628 = scalar_lea.vmem %s1004, 146 [#allocation2]
      %v7629 = vld [vmem:[%s7628] ss:$2 sm:$0xff]
      %s7630 = scalar_lea.vmem %s1004, 194 [#allocation2]
      %v7631 = vld [vmem:[%s7630] ss:$2 sm:$0xff]
      %s7632 = scalar_lea.vmem %s1004, 242 [#allocation2]
      %v7633 = vld [vmem:[%s7632] ss:$2 sm:$0xff]
      %s7634 = scalar_lea.vmem %s1004, 290 [#allocation2]
      %v7635 = vld [vmem:[%s7634] ss:$2 sm:$0xff]
      %s7636 = scalar_lea.vmem %s1004, 338 [#allocation2]
      %v7637 = vld [vmem:[%s7636] ss:$2 sm:$0xff]
      %v7638 = vpack.c.bf16 %v7623, %v7623
      %v7639 = vpack.c.bf16 %v7625, %v7625
      %v7640 = vpack.c.bf16 %v7627, %v7627
      %v7641 = vpack.c.bf16 %v7629, %v7629
      %v7642 = vpack.c.bf16 %v7631, %v7631
      %v7643 = vpack.c.bf16 %v7633, %v7633
      %v7644 = vpack.c.bf16 %v7635, %v7635
      %v7645 = vpack.c.bf16 %v7637, %v7637
      %v7654 = vunpack.c.l.b16 %v7448
      %v7655 = vunpack.c.l.b16 %v7449
      %v7656 = vunpack.c.l.b16 %v7450
      %v7657 = vunpack.c.l.b16 %v7451
      %v7658 = vunpack.c.l.b16 %v7452
      %v7659 = vunpack.c.l.b16 %v7453
      %v7660 = vunpack.c.l.b16 %v7454
      %v7661 = vunpack.c.l.b16 %v7455
      %v7662 = vpack.c.b16 %v7655, %v7654
      %v7663 = vpack.c.b16 %v7657, %v7656
      %v7664 = vpack.c.b16 %v7659, %v7658
      %v7665 = vpack.c.b16 %v7661, %v7660
      %v7674 = vunpack.c.l.b16 %v7472
      %v7675 = vunpack.c.l.b16 %v7473
      %v7676 = vunpack.c.l.b16 %v7474
      %v7677 = vunpack.c.l.b16 %v7475
      %v7678 = vunpack.c.l.b16 %v7476
      %v7679 = vunpack.c.l.b16 %v7477
      %v7680 = vunpack.c.l.b16 %v7478
      %v7681 = vunpack.c.l.b16 %v7479
      %v7682 = vpack.c.b16 %v7675, %v7674
      %v7683 = vpack.c.b16 %v7677, %v7676
      %v7684 = vpack.c.b16 %v7679, %v7678
      %v7685 = vpack.c.b16 %v7681, %v7680
      %7686 = vrot.lane.b32.xlu0 %v7682, 32
      %v7687 = vpop.permute.xlu0 %7686
      %7688 = vrot.lane.b32.xlu0 %v7683, 32
      %v7689 = vpop.permute.xlu0 %7688
      %7690 = vrot.lane.b32.xlu0 %v7684, 32
      %v7691 = vpop.permute.xlu0 %7690
      %7692 = vrot.lane.b32.xlu0 %v7685, 32
      %v7693 = vpop.permute.xlu0 %7692
      %v7702 = vunpack.c.l.b16 %v7496
      %v7703 = vunpack.c.l.b16 %v7497
      %v7704 = vunpack.c.l.b16 %v7498
      %v7705 = vunpack.c.l.b16 %v7499
      %v7706 = vunpack.c.l.b16 %v7500
      %v7707 = vunpack.c.l.b16 %v7501
      %v7708 = vunpack.c.l.b16 %v7502
      %v7709 = vunpack.c.l.b16 %v7503
      %v7710 = vpack.c.b16 %v7703, %v7702
      %v7711 = vpack.c.b16 %v7705, %v7704
      %v7712 = vpack.c.b16 %v7707, %v7706
      %v7713 = vpack.c.b16 %v7709, %v7708
      %7714 = vrot.lane.b32.xlu0 %v7710, 64
      %v7715 = vpop.permute.xlu0 %7714
      %7716 = vrot.lane.b32.xlu0 %v7711, 64
      %v7717 = vpop.permute.xlu0 %7716
      %7718 = vrot.lane.b32.xlu0 %v7712, 64
      %v7719 = vpop.permute.xlu0 %7718
      %7720 = vrot.lane.b32.xlu0 %v7713, 64
      %v7721 = vpop.permute.xlu0 %7720
      %v7730 = vunpack.c.l.b16 %v7519
      %v7731 = vunpack.c.l.b16 %v7520
      %v7732 = vunpack.c.l.b16 %v7521
      %v7733 = vunpack.c.l.b16 %v7522
      %v7734 = vunpack.c.l.b16 %v7523
      %v7735 = vunpack.c.l.b16 %v7524
      %v7736 = vunpack.c.l.b16 %v7525
      %v7737 = vunpack.c.l.b16 %v7526
      %v7738 = vpack.c.b16 %v7731, %v7730
      %v7739 = vpack.c.b16 %v7733, %v7732
      %v7740 = vpack.c.b16 %v7735, %v7734
      %v7741 = vpack.c.b16 %v7737, %v7736
      %7742 = vrot.lane.b32.xlu0 %v7738, 96
      %v7743 = vpop.permute.xlu0 %7742
      %7744 = vrot.lane.b32.xlu0 %v7739, 96
      %v7745 = vpop.permute.xlu0 %7744
      %7746 = vrot.lane.b32.xlu0 %v7740, 96
      %v7747 = vpop.permute.xlu0 %7746
      %7748 = vrot.lane.b32.xlu0 %v7741, 96
      %v7749 = vpop.permute.xlu0 %7748
      %v7758 = vunpack.c.l.b16 %v7543
      %v7759 = vunpack.c.l.b16 %v7544
      %v7760 = vunpack.c.l.b16 %v7545
      %v7761 = vunpack.c.l.b16 %v7546
      %v7762 = vunpack.c.l.b16 %v7547
      %v7763 = vunpack.c.l.b16 %v7548
      %v7764 = vunpack.c.l.b16 %v7549
      %v7765 = vunpack.c.l.b16 %v7550
      %v7766 = vpack.c.b16 %v7759, %v7758
      %v7767 = vpack.c.b16 %v7761, %v7760
      %v7768 = vpack.c.b16 %v7763, %v7762
      %v7769 = vpack.c.b16 %v7765, %v7764
      %v7778 = vunpack.c.l.b16 %v7567
      %v7779 = vunpack.c.l.b16 %v7568
      %v7780 = vunpack.c.l.b16 %v7569
      %v7781 = vunpack.c.l.b16 %v7570
      %v7782 = vunpack.c.l.b16 %v7571
      %v7783 = vunpack.c.l.b16 %v7572
      %v7784 = vunpack.c.l.b16 %v7573
      %v7785 = vunpack.c.l.b16 %v7574
      %v7786 = vpack.c.b16 %v7779, %v7778
      %v7787 = vpack.c.b16 %v7781, %v7780
      %v7788 = vpack.c.b16 %v7783, %v7782
      %v7789 = vpack.c.b16 %v7785, %v7784
      %7790 = vrot.lane.b32.xlu0 %v7786, 32
      %v7791 = vpop.permute.xlu0 %7790
      %7792 = vrot.lane.b32.xlu0 %v7787, 32
      %v7793 = vpop.permute.xlu0 %7792
      %7794 = vrot.lane.b32.xlu0 %v7788, 32
      %v7795 = vpop.permute.xlu0 %7794
      %7796 = vrot.lane.b32.xlu0 %v7789, 32
      %v7797 = vpop.permute.xlu0 %7796
      %v7806 = vunpack.c.l.b16 %v7590
      %v7807 = vunpack.c.l.b16 %v7591
      %v7808 = vunpack.c.l.b16 %v7592
      %v7809 = vunpack.c.l.b16 %v7593
      %v7810 = vunpack.c.l.b16 %v7594
      %v7811 = vunpack.c.l.b16 %v7595
      %v7812 = vunpack.c.l.b16 %v7596
      %v7813 = vunpack.c.l.b16 %v7597
      %v7814 = vpack.c.b16 %v7807, %v7806
      %v7815 = vpack.c.b16 %v7809, %v7808
      %v7816 = vpack.c.b16 %v7811, %v7810
      %v7817 = vpack.c.b16 %v7813, %v7812
      %7818 = vrot.lane.b32.xlu0 %v7814, 64
      %v7819 = vpop.permute.xlu0 %7818
      %7820 = vrot.lane.b32.xlu0 %v7815, 64
      %v7821 = vpop.permute.xlu0 %7820
      %7822 = vrot.lane.b32.xlu0 %v7816, 64
      %v7823 = vpop.permute.xlu0 %7822
      %7824 = vrot.lane.b32.xlu0 %v7817, 64
      %v7825 = vpop.permute.xlu0 %7824
      %v7834 = vunpack.c.l.b16 %v7614
      %v7835 = vunpack.c.l.b16 %v7615
      %v7836 = vunpack.c.l.b16 %v7616
      %v7837 = vunpack.c.l.b16 %v7617
      %v7838 = vunpack.c.l.b16 %v7618
      %v7839 = vunpack.c.l.b16 %v7619
      %v7840 = vunpack.c.l.b16 %v7620
      %v7841 = vunpack.c.l.b16 %v7621
      %v7842 = vpack.c.b16 %v7835, %v7834
      %v7843 = vpack.c.b16 %v7837, %v7836
      %v7844 = vpack.c.b16 %v7839, %v7838
      %v7845 = vpack.c.b16 %v7841, %v7840
      %7846 = vrot.lane.b32.xlu0 %v7842, 96
      %v7847 = vpop.permute.xlu0 %7846
      %7848 = vrot.lane.b32.xlu0 %v7843, 96
      %v7849 = vpop.permute.xlu0 %7848
      %7850 = vrot.lane.b32.xlu0 %v7844, 96
      %v7851 = vpop.permute.xlu0 %7850
      %7852 = vrot.lane.b32.xlu0 %v7845, 96
      %v7853 = vpop.permute.xlu0 %7852
      %v7862 = vunpack.c.l.b16 %v7638
      %v7863 = vunpack.c.l.b16 %v7639
      %v7864 = vunpack.c.l.b16 %v7640
      %v7865 = vunpack.c.l.b16 %v7641
      %v7866 = vunpack.c.l.b16 %v7642
      %v7867 = vunpack.c.l.b16 %v7643
      %v7868 = vunpack.c.l.b16 %v7644
      %v7869 = vunpack.c.l.b16 %v7645
      %v7870 = vpack.c.b16 %v7863, %v7862
      %v7871 = vpack.c.b16 %v7865, %v7864
      %v7872 = vpack.c.b16 %v7867, %v7866
      %v7873 = vpack.c.b16 %v7869, %v7868
      %v7876 = vsel %vm442, %v7662, %v7687
      %v7879 = vsel %vm442, %v7663, %v7689
      %v7882 = vsel %vm442, %v7664, %v7691
      %v7885 = vsel %vm442, %v7665, %v7693
      %v7887 = vsel %vm2157, %v7876, %v7715
      %v7889 = vsel %vm2157, %v7879, %v7717
      %v7891 = vsel %vm2157, %v7882, %v7719
      %v7893 = vsel %vm2157, %v7885, %v7721
      %v7895 = vsel %vm2190, %v7887, %v7743
      %v7898 = vsel %vm2190, %v7889, %v7745
      %v7901 = vsel %vm2190, %v7891, %v7747
      %v7904 = vsel %vm2190, %v7893, %v7749
      %v7908 = vsel %vm442, %v7766, %v7791
      %v7911 = vsel %vm442, %v7767, %v7793
      %v7914 = vsel %vm442, %v7768, %v7795
      %v7917 = vsel %vm442, %v7769, %v7797
      %v7919 = vsel %vm2157, %v7908, %v7819
      %v7921 = vsel %vm2157, %v7911, %v7821
      %v7923 = vsel %vm2157, %v7914, %v7823
      %v7925 = vsel %vm2157, %v7917, %v7825
      %v7927 = vsel %vm2190, %v7919, %v7847
      %v7930 = vsel %vm2190, %v7921, %v7849
      %v7933 = vsel %vm2190, %v7923, %v7851
      %v7936 = vsel %vm2190, %v7925, %v7853
      %v7939 = vperm.slane %v7432, 0
      %v7977 = vunpack.c.l.b16 %v7396
      %v7978 = vunpack.c.l.b16 %v7397
      %v7979 = vunpack.c.l.b16 %v7398
      %v7980 = vunpack.c.l.b16 %v7399
      %v7981 = vunpack.c.l.b16 %v7400
      %v7982 = vunpack.c.l.b16 %v7401
      %v7983 = vunpack.c.l.b16 %v7402
      %v7984 = vunpack.c.l.b16 %v7403
      %v7985 = vunpack.c.l.b16 %v7404
      %v7986 = vunpack.c.l.b16 %v7405
      %v7987 = vunpack.c.l.b16 %v7406
      %v7988 = vunpack.c.l.b16 %v7407
      %v7989 = vunpack.c.l.b16 %v7408
      %v7990 = vunpack.c.l.b16 %v7409
      %v7991 = vunpack.c.l.b16 %v7410
      %v7992 = vunpack.c.l.b16 %v7411
      %v7993 = vunpack.c.l.b16 %v7412
      %v7994 = vunpack.c.l.b16 %v7413
      %v7995 = vunpack.c.l.b16 %v7414
      %v7996 = vunpack.c.l.b16 %v7415
      %v7997 = vunpack.c.l.b16 %v7416
      %v7998 = vunpack.c.l.b16 %v7417
      %v7999 = vunpack.c.l.b16 %v7418
      %v8000 = vunpack.c.l.b16 %v7419
      %v8001 = vunpack.c.l.b16 %v7420
      %v8002 = vunpack.c.l.b16 %v7421
      %v8003 = vunpack.c.l.b16 %v7422
      %v8004 = vunpack.c.l.b16 %v7423
      %v8005 = vunpack.c.l.b16 %v7424
      %v8006 = vunpack.c.l.b16 %v7425
      %v8007 = vunpack.c.l.b16 %v7426
      %v8008 = vunpack.c.l.b16 %v7427
      %v8009 = vunpack.c.l.b16 %v7428
      %v8010 = vunpack.c.l.b16 %v7429
      %v8011 = vunpack.c.l.b16 %v7430
      %v8012 = vunpack.c.l.b16 %v7431
      %v8013 = vpack.c.b16 %v7978, %v7977
      %v8014 = vpack.c.b16 %v7980, %v7979
      %v8015 = vpack.c.b16 %v7982, %v7981
      %v8016 = vpack.c.b16 %v7984, %v7983
      %v8017 = vpack.c.b16 %v7986, %v7985
      %v8018 = vpack.c.b16 %v7988, %v7987
      %v8019 = vpack.c.b16 %v7990, %v7989
      %v8020 = vpack.c.b16 %v7992, %v7991
      %v8021 = vpack.c.b16 %v7994, %v7993
      %v8022 = vpack.c.b16 %v7996, %v7995
      %v8023 = vpack.c.b16 %v7998, %v7997
      %v8024 = vpack.c.b16 %v8000, %v7999
      %v8025 = vpack.c.b16 %v8002, %v8001
      %v8026 = vpack.c.b16 %v8004, %v8003
      %v8027 = vpack.c.b16 %v8006, %v8005
      %v8028 = vpack.c.b16 %v8008, %v8007
      %v8029 = vpack.c.b16 %v8010, %v8009
      %v8030 = vpack.c.b16 %v8012, %v8011
      %v8050 = vsel %vm442, %v7870, 0
      %v8053 = vsel %vm442, %v7871, 0
      %v8056 = vsel %vm442, %v7872, 0
      %v8059 = vsel %vm442, %v7873, 0
      %8061 = vmatpush.bf16.msra.mxu0 %v8020
      %8062 = vmatpush.bf16.msra.mxu0 %v8019
      %8063 = vmatpush.bf16.msra.mxu0 %v8018
      %8064 = vmatpush.bf16.msra.mxu0 %v8017
      %8065 = vmatpush.bf16.msra.mxu0 %v8016
      %8066 = vmatpush.bf16.msra.mxu0 %v8015
      %8067 = vmatpush.bf16.msra.mxu0 %v8014
      %8068 = vmatpush.bf16.msra.mxu0 %v8013
      %8069 = vmatmul.bf16.gmra.mxu0 %v7895
      %v8070 = vpop.f32.mrf.mxu0
      %v8071 = vadd.f32 %v7939, %v8070
      %v8072 = vpop.f32.mrf.mxu0
      %v8073 = vadd.f32 %v7939, %v8072
      %8074 = vmatmul.bf16.gmra.mxu0 %v7898
      %v8075 = vpop.f32.mrf.mxu0
      %v8076 = vadd.f32 %v7939, %v8075
      %v8077 = vpop.f32.mrf.mxu0
      %v8078 = vadd.f32 %v7939, %v8077
      %8079 = vmatmul.bf16.gmra.mxu0 %v7901
      %v8080 = vpop.f32.mrf.mxu0
      %v8081 = vadd.f32 %v7939, %v8080
      %v8082 = vpop.f32.mrf.mxu0
      %v8083 = vadd.f32 %v7939, %v8082
      %8084 = vmatmul.bf16.gmra.mxu0 %v7904
      %v8085 = vpop.f32.mrf.mxu0
      %v8086 = vadd.f32 %v7939, %v8085
      %v8087 = vpop.f32.mrf.mxu0
      %v8088 = vadd.f32 %v7939, %v8087
      %8089 = vdwg.mxu0
      %8090 = vmatpush.bf16.msra.mxu0 %v8028
      %8091 = vmatpush.bf16.msra.mxu0 %v8027
      %8092 = vmatpush.bf16.msra.mxu0 %v8026
      %8093 = vmatpush.bf16.msra.mxu0 %v8025
      %8094 = vmatpush.bf16.msra.mxu0 %v8024
      %8095 = vmatpush.bf16.msra.mxu0 %v8023
      %8096 = vmatpush.bf16.msra.mxu0 %v8022
      %8097 = vmatpush.bf16.msra.mxu0 %v8021
      %8098 = vmatmul.bf16.gmra.mxu0 %v7927
      %v8099 = vpop.f32.mrf.mxu0
      %v8100 = vadd.f32 %v8071, %v8099
      %v8101 = vpop.f32.mrf.mxu0
      %v8102 = vadd.f32 %v8073, %v8101
      %8103 = vmatmul.bf16.gmra.mxu0 %v7930
      %v8104 = vpop.f32.mrf.mxu0
      %v8105 = vadd.f32 %v8076, %v8104
      %v8106 = vpop.f32.mrf.mxu0
      %v8107 = vadd.f32 %v8078, %v8106
      %8108 = vmatmul.bf16.gmra.mxu0 %v7933
      %v8109 = vpop.f32.mrf.mxu0
      %v8110 = vadd.f32 %v8081, %v8109
      %v8111 = vpop.f32.mrf.mxu0
      %v8112 = vadd.f32 %v8083, %v8111
      %8113 = vmatmul.bf16.gmra.mxu0 %v7936
      %v8114 = vpop.f32.mrf.mxu0
      %v8115 = vadd.f32 %v8086, %v8114
      %v8116 = vpop.f32.mrf.mxu0
      %v8117 = vadd.f32 %v8088, %v8116
      %8118 = vdwg.mxu0
      %8119 = vmatpush.bf16.msra.mxu0 0
      %8120 = vmatpush.bf16.msra.mxu0 0
      %8121 = vmatpush.bf16.msra.mxu0 0
      %8122 = vmatpush.bf16.msra.mxu0 0
      %8123 = vmatpush.bf16.msra.mxu0 0
      %8124 = vmatpush.bf16.msra.mxu0 0
      %8125 = vmatpush.bf16.msra.mxu0 %v8030
      %8126 = vmatpush.bf16.msra.mxu0 %v8029
      %8127 = vmatmul.bf16.gmra.mxu0 %v8050
      %v8128 = vpop.f32.mrf.mxu0
      %v8129 = vadd.f32 %v8100, %v8128
      %v8130 = vpop.f32.mrf.mxu0
      %v8131 = vadd.f32 %v8102, %v8130
      %8132 = vmatmul.bf16.gmra.mxu0 %v8053
      %v8133 = vpop.f32.mrf.mxu0
      %v8134 = vadd.f32 %v8105, %v8133
      %v8135 = vpop.f32.mrf.mxu0
      %v8136 = vadd.f32 %v8107, %v8135
      %8137 = vmatmul.bf16.gmra.mxu0 %v8056
      %v8138 = vpop.f32.mrf.mxu0
      %v8139 = vadd.f32 %v8110, %v8138
      %v8140 = vpop.f32.mrf.mxu0
      %v8141 = vadd.f32 %v8112, %v8140
      %8142 = vmatmul.bf16.gmra.mxu0 %v8059
      %v8143 = vpop.f32.mrf.mxu0
      %v8144 = vadd.f32 %v8115, %v8143
      %v8145 = vpop.f32.mrf.mxu0
      %v8146 = vadd.f32 %v8117, %v8145
      %8147 = vdwg.mxu0
      %v8148 = vmax.f32 %v8129, 0.0
      %v8149 = vmax.f32 %v8131, 0.0
      %v8150 = vmax.f32 %v8134, 0.0
      %v8151 = vmax.f32 %v8136, 0.0
      %v8152 = vmax.f32 %v8139, 0.0
      %v8153 = vmax.f32 %v8141, 0.0
      %v8154 = vmax.f32 %v8144, 0.0
      %v8155 = vmax.f32 %v8146, 0.0
      %s8156 = scalar_lea.vmem [#allocation3], 16
      %8157 = vst.msk [vmem:[%s8156 + $0x1] sm:$0xff] %vm442, %v8148
      %8158 = vst.msk [vmem:[%s8156 + $0x11] sm:$0xff] %vm442, %v8149
      %8159 = vst.msk [vmem:[%s8156 + $0x21] sm:$0xff] %vm442, %v8150
      %8160 = vst.msk [vmem:[%s8156 + $0x31] sm:$0xff] %vm442, %v8151
      %8161 = vst.msk [vmem:[%s8156 + $0x41] sm:$0xff] %vm442, %v8152
      %8162 = vst.msk [vmem:[%s8156 + $0x51] sm:$0xff] %vm442, %v8153
      %8163 = vst.msk [vmem:[%s8156 + $0x61] sm:$0xff] %vm442, %v8154
      %8164 = vst.msk [vmem:[%s8156 + $0x71] sm:$0xff] %vm442, %v8155
      %v8165 = vld [vmem:[%s7] sm:$0xf]
      %v8166 = vld [vmem:[%s7 + $0x4] sm:$0xf]
      %v8167 = vld [vmem:[%s7 + $0x8] sm:$0xf]
      %v8168 = vld [vmem:[%s7 + $0xc] sm:$0xf]
      %v8169 = vld [vmem:[%s7 + $0x10] sm:$0xf]
      %v8170 = vld [vmem:[%s7 + $0x14] sm:$0xf]
      %v8171 = vld [vmem:[%s7 + $0x18] sm:$0xf]
      %v8172 = vld [vmem:[%s7 + $0x1c] sm:$0xf]
      %v8173 = vld [vmem:[%s7 + $0x20] sm:$0xf]
      %v8174 = vld [vmem:[%s7 + $0x24] sm:$0xf]
      %v8175 = vld [vmem:[%s7 + $0x28] sm:$0xf]
      %v8176 = vld [vmem:[%s7 + $0x2c] sm:$0xf]
      %v8177 = vld [vmem:[%s7 + $0x30] sm:$0xf]
      %v8178 = vld [vmem:[%s7 + $0x34] sm:$0xf]
      %v8179 = vld [vmem:[%s7 + $0x38] sm:$0xf]
      %v8180 = vld [vmem:[%s7 + $0x3c] sm:$0xf]
      %v8181 = vld [vmem:[%s7 + $0x40] sm:$0xf]
      %v8182 = vld [vmem:[%s7 + $0x44] sm:$0xf]
      %v8183 = vld [vmem:[%s7 + $0x48] sm:$0xf]
      %v8184 = vld [vmem:[%s7 + $0x4c] sm:$0xf]
      %v8185 = vld [vmem:[%s7 + $0x50] sm:$0xf]
      %v8186 = vld [vmem:[%s7 + $0x54] sm:$0xf]
      %v8187 = vld [vmem:[%s7 + $0x58] sm:$0xf]
      %v8188 = vld [vmem:[%s7 + $0x5c] sm:$0xf]
      %v8189 = vld [vmem:[%s7 + $0x60] sm:$0xf]
      %v8190 = vld [vmem:[%s7 + $0x64] sm:$0xf]
      %v8191 = vld [vmem:[%s7 + $0x68] sm:$0xf]
      %v8192 = vld [vmem:[%s7 + $0x6c] sm:$0xf]
      %v8193 = vld [vmem:[%s7 + $0x70] sm:$0xf]
      %v8194 = vld [vmem:[%s7 + $0x74] sm:$0xf]
      %v8195 = vld [vmem:[%s7 + $0x78] sm:$0xf]
      %v8196 = vld [vmem:[%s7 + $0x7c] sm:$0xf]
      %v8197 = vld [vmem:[%s7 + $0x80] sm:$0xf]
      %v8198 = vld [vmem:[%s7 + $0x84] sm:$0xf]
      %v8199 = vld [vmem:[%s7 + $0x88] sm:$0xf]
      %v8200 = vld [vmem:[%s7 + $0x8c] sm:$0xf]
      %v8201 = vld [vmem:[%s8] sm:$0x1]
      %v8202 = vld [vmem:[#allocation3] sm:$0xff]
      %v8203 = vld [vmem:[#allocation3 + $0x10] sm:$0xff]
      %v8204 = vld [vmem:[#allocation3 + $0x20] sm:$0xff]
      %v8205 = vld [vmem:[#allocation3 + $0x30] sm:$0xff]
      %v8206 = vld [vmem:[#allocation3 + $0x40] sm:$0xff]
      %v8207 = vld [vmem:[#allocation3 + $0x50] sm:$0xff]
      %v8208 = vld [vmem:[#allocation3 + $0x60] sm:$0xff]
      %v8209 = vld [vmem:[#allocation3 + $0x70] sm:$0xff]
      %v8210 = vpack.c.bf16 %v8202, %v8202
      %v8211 = vpack.c.bf16 %v8203, %v8203
      %v8212 = vpack.c.bf16 %v8204, %v8204
      %v8213 = vpack.c.bf16 %v8205, %v8205
      %v8214 = vpack.c.bf16 %v8206, %v8206
      %v8215 = vpack.c.bf16 %v8207, %v8207
      %v8216 = vpack.c.bf16 %v8208, %v8208
      %v8217 = vpack.c.bf16 %v8209, %v8209
      %v8218 = vld [vmem:[#allocation3 + $0x1] sm:$0xff]
      %v8219 = vld [vmem:[#allocation3 + $0x11] sm:$0xff]
      %v8220 = vld [vmem:[#allocation3 + $0x21] sm:$0xff]
      %v8221 = vld [vmem:[#allocation3 + $0x31] sm:$0xff]
      %v8222 = vld [vmem:[#allocation3 + $0x41] sm:$0xff]
      %v8223 = vld [vmem:[#allocation3 + $0x51] sm:$0xff]
      %v8224 = vld [vmem:[#allocation3 + $0x61] sm:$0xff]
      %v8225 = vld [vmem:[#allocation3 + $0x71] sm:$0xff]
      %v8226 = vpack.c.bf16 %v8218, %v8218
      %v8227 = vpack.c.bf16 %v8219, %v8219
      %v8228 = vpack.c.bf16 %v8220, %v8220
      %v8229 = vpack.c.bf16 %v8221, %v8221
      %v8230 = vpack.c.bf16 %v8222, %v8222
      %v8231 = vpack.c.bf16 %v8223, %v8223
      %v8232 = vpack.c.bf16 %v8224, %v8224
      %v8233 = vpack.c.bf16 %v8225, %v8225
      %v8234 = vld [vmem:[#allocation3 + $0x2] sm:$0xff]
      %v8235 = vld [vmem:[#allocation3 + $0x12] sm:$0xff]
      %v8236 = vld [vmem:[#allocation3 + $0x22] sm:$0xff]
      %v8237 = vld [vmem:[#allocation3 + $0x32] sm:$0xff]
      %v8238 = vld [vmem:[#allocation3 + $0x42] sm:$0xff]
      %v8239 = vld [vmem:[#allocation3 + $0x52] sm:$0xff]
      %v8240 = vld [vmem:[#allocation3 + $0x62] sm:$0xff]
      %v8241 = vld [vmem:[#allocation3 + $0x72] sm:$0xff]
      %v8242 = vpack.c.bf16 %v8234, %v8234
      %v8243 = vpack.c.bf16 %v8235, %v8235
      %v8244 = vpack.c.bf16 %v8236, %v8236
      %v8245 = vpack.c.bf16 %v8237, %v8237
      %v8246 = vpack.c.bf16 %v8238, %v8238
      %v8247 = vpack.c.bf16 %v8239, %v8239
      %v8248 = vpack.c.bf16 %v8240, %v8240
      %v8249 = vpack.c.bf16 %v8241, %v8241
      %v8250 = vld [vmem:[%s8156] sm:$0xff]
      %v8251 = vld [vmem:[%s8156 + $0x10] sm:$0xff]
      %v8252 = vld [vmem:[%s8156 + $0x20] sm:$0xff]
      %v8253 = vld [vmem:[%s8156 + $0x30] sm:$0xff]
      %v8254 = vld [vmem:[%s8156 + $0x40] sm:$0xff]
      %v8255 = vld [vmem:[%s8156 + $0x50] sm:$0xff]
      %v8256 = vld [vmem:[%s8156 + $0x60] sm:$0xff]
      %v8257 = vld [vmem:[%s8156 + $0x70] sm:$0xff]
      %v8258 = vpack.c.bf16 %v8250, %v8250
      %v8259 = vpack.c.bf16 %v8251, %v8251
      %v8260 = vpack.c.bf16 %v8252, %v8252
      %v8261 = vpack.c.bf16 %v8253, %v8253
      %v8262 = vpack.c.bf16 %v8254, %v8254
      %v8263 = vpack.c.bf16 %v8255, %v8255
      %v8264 = vpack.c.bf16 %v8256, %v8256
      %v8265 = vpack.c.bf16 %v8257, %v8257
      %v8266 = vld [vmem:[%s8156 + $0x1] sm:$0xff]
      %v8267 = vld [vmem:[%s8156 + $0x11] sm:$0xff]
      %v8268 = vld [vmem:[%s8156 + $0x21] sm:$0xff]
      %v8269 = vld [vmem:[%s8156 + $0x31] sm:$0xff]
      %v8270 = vld [vmem:[%s8156 + $0x41] sm:$0xff]
      %v8271 = vld [vmem:[%s8156 + $0x51] sm:$0xff]
      %v8272 = vld [vmem:[%s8156 + $0x61] sm:$0xff]
      %v8273 = vld [vmem:[%s8156 + $0x71] sm:$0xff]
      %v8274 = vpack.c.bf16 %v8266, %v8266
      %v8275 = vpack.c.bf16 %v8267, %v8267
      %v8276 = vpack.c.bf16 %v8268, %v8268
      %v8277 = vpack.c.bf16 %v8269, %v8269
      %v8278 = vpack.c.bf16 %v8270, %v8270
      %v8279 = vpack.c.bf16 %v8271, %v8271
      %v8280 = vpack.c.bf16 %v8272, %v8272
      %v8281 = vpack.c.bf16 %v8273, %v8273
      %v8282 = vld [vmem:[%s8156 + $0x2] sm:$0xff]
      %v8283 = vld [vmem:[%s8156 + $0x12] sm:$0xff]
      %v8284 = vld [vmem:[%s8156 + $0x22] sm:$0xff]
      %v8285 = vld [vmem:[%s8156 + $0x32] sm:$0xff]
      %v8286 = vld [vmem:[%s8156 + $0x42] sm:$0xff]
      %v8287 = vld [vmem:[%s8156 + $0x52] sm:$0xff]
      %v8288 = vld [vmem:[%s8156 + $0x62] sm:$0xff]
      %v8289 = vld [vmem:[%s8156 + $0x72] sm:$0xff]
      %v8290 = vpack.c.bf16 %v8282, %v8282
      %v8291 = vpack.c.bf16 %v8283, %v8283
      %v8292 = vpack.c.bf16 %v8284, %v8284
      %v8293 = vpack.c.bf16 %v8285, %v8285
      %v8294 = vpack.c.bf16 %v8286, %v8286
      %v8295 = vpack.c.bf16 %v8287, %v8287
      %v8296 = vpack.c.bf16 %v8288, %v8288
      %v8297 = vpack.c.bf16 %v8289, %v8289
      %s8298 = scalar_lea.vmem [#allocation3], 32
      %v8299 = vld [vmem:[%s8298] sm:$0xff]
      %v8300 = vld [vmem:[%s8298 + $0x10] sm:$0xff]
      %v8301 = vld [vmem:[%s8298 + $0x20] sm:$0xff]
      %v8302 = vld [vmem:[%s8298 + $0x30] sm:$0xff]
      %v8303 = vld [vmem:[%s8298 + $0x40] sm:$0xff]
      %v8304 = vld [vmem:[%s8298 + $0x50] sm:$0xff]
      %v8305 = vld [vmem:[%s8298 + $0x60] sm:$0xff]
      %v8306 = vld [vmem:[%s8298 + $0x70] sm:$0xff]
      %v8307 = vpack.c.bf16 %v8299, %v8299
      %v8308 = vpack.c.bf16 %v8300, %v8300
      %v8309 = vpack.c.bf16 %v8301, %v8301
      %v8310 = vpack.c.bf16 %v8302, %v8302
      %v8311 = vpack.c.bf16 %v8303, %v8303
      %v8312 = vpack.c.bf16 %v8304, %v8304
      %v8313 = vpack.c.bf16 %v8305, %v8305
      %v8314 = vpack.c.bf16 %v8306, %v8306
      %v8315 = vld [vmem:[%s8298 + $0x1] sm:$0xff]
      %v8316 = vld [vmem:[%s8298 + $0x11] sm:$0xff]
      %v8317 = vld [vmem:[%s8298 + $0x21] sm:$0xff]
      %v8318 = vld [vmem:[%s8298 + $0x31] sm:$0xff]
      %v8319 = vld [vmem:[%s8298 + $0x41] sm:$0xff]
      %v8320 = vld [vmem:[%s8298 + $0x51] sm:$0xff]
      %v8321 = vld [vmem:[%s8298 + $0x61] sm:$0xff]
      %v8322 = vld [vmem:[%s8298 + $0x71] sm:$0xff]
      %v8323 = vpack.c.bf16 %v8315, %v8315
      %v8324 = vpack.c.bf16 %v8316, %v8316
      %v8325 = vpack.c.bf16 %v8317, %v8317
      %v8326 = vpack.c.bf16 %v8318, %v8318
      %v8327 = vpack.c.bf16 %v8319, %v8319
      %v8328 = vpack.c.bf16 %v8320, %v8320
      %v8329 = vpack.c.bf16 %v8321, %v8321
      %v8330 = vpack.c.bf16 %v8322, %v8322
      %v8331 = vld [vmem:[%s8298 + $0x2] sm:$0xff]
      %v8332 = vld [vmem:[%s8298 + $0x12] sm:$0xff]
      %v8333 = vld [vmem:[%s8298 + $0x22] sm:$0xff]
      %v8334 = vld [vmem:[%s8298 + $0x32] sm:$0xff]
      %v8335 = vld [vmem:[%s8298 + $0x42] sm:$0xff]
      %v8336 = vld [vmem:[%s8298 + $0x52] sm:$0xff]
      %v8337 = vld [vmem:[%s8298 + $0x62] sm:$0xff]
      %v8338 = vld [vmem:[%s8298 + $0x72] sm:$0xff]
      %v8339 = vpack.c.bf16 %v8331, %v8331
      %v8340 = vpack.c.bf16 %v8332, %v8332
      %v8341 = vpack.c.bf16 %v8333, %v8333
      %v8342 = vpack.c.bf16 %v8334, %v8334
      %v8343 = vpack.c.bf16 %v8335, %v8335
      %v8344 = vpack.c.bf16 %v8336, %v8336
      %v8345 = vpack.c.bf16 %v8337, %v8337
      %v8346 = vpack.c.bf16 %v8338, %v8338
      %v8355 = vunpack.c.l.b16 %v8210
      %v8356 = vunpack.c.l.b16 %v8211
      %v8357 = vunpack.c.l.b16 %v8212
      %v8358 = vunpack.c.l.b16 %v8213
      %v8359 = vunpack.c.l.b16 %v8214
      %v8360 = vunpack.c.l.b16 %v8215
      %v8361 = vunpack.c.l.b16 %v8216
      %v8362 = vunpack.c.l.b16 %v8217
      %v8363 = vpack.c.b16 %v8356, %v8355
      %v8364 = vpack.c.b16 %v8358, %v8357
      %v8365 = vpack.c.b16 %v8360, %v8359
      %v8366 = vpack.c.b16 %v8362, %v8361
      %v8375 = vunpack.c.l.b16 %v8226
      %v8376 = vunpack.c.l.b16 %v8227
      %v8377 = vunpack.c.l.b16 %v8228
      %v8378 = vunpack.c.l.b16 %v8229
      %v8379 = vunpack.c.l.b16 %v8230
      %v8380 = vunpack.c.l.b16 %v8231
      %v8381 = vunpack.c.l.b16 %v8232
      %v8382 = vunpack.c.l.b16 %v8233
      %v8383 = vpack.c.b16 %v8376, %v8375
      %v8384 = vpack.c.b16 %v8378, %v8377
      %v8385 = vpack.c.b16 %v8380, %v8379
      %v8386 = vpack.c.b16 %v8382, %v8381
      %8387 = vrot.lane.b32.xlu0 %v8383, 32
      %v8388 = vpop.permute.xlu0 %8387
      %8389 = vrot.lane.b32.xlu0 %v8384, 32
      %v8390 = vpop.permute.xlu0 %8389
      %8391 = vrot.lane.b32.xlu0 %v8385, 32
      %v8392 = vpop.permute.xlu0 %8391
      %8393 = vrot.lane.b32.xlu0 %v8386, 32
      %v8394 = vpop.permute.xlu0 %8393
      %v8403 = vunpack.c.l.b16 %v8242
      %v8404 = vunpack.c.l.b16 %v8243
      %v8405 = vunpack.c.l.b16 %v8244
      %v8406 = vunpack.c.l.b16 %v8245
      %v8407 = vunpack.c.l.b16 %v8246
      %v8408 = vunpack.c.l.b16 %v8247
      %v8409 = vunpack.c.l.b16 %v8248
      %v8410 = vunpack.c.l.b16 %v8249
      %v8411 = vpack.c.b16 %v8404, %v8403
      %v8412 = vpack.c.b16 %v8406, %v8405
      %v8413 = vpack.c.b16 %v8408, %v8407
      %v8414 = vpack.c.b16 %v8410, %v8409
      %8415 = vrot.lane.b32.xlu0 %v8411, 64
      %v8416 = vpop.permute.xlu0 %8415
      %8417 = vrot.lane.b32.xlu0 %v8412, 64
      %v8418 = vpop.permute.xlu0 %8417
      %8419 = vrot.lane.b32.xlu0 %v8413, 64
      %v8420 = vpop.permute.xlu0 %8419
      %8421 = vrot.lane.b32.xlu0 %v8414, 64
      %v8422 = vpop.permute.xlu0 %8421
      %v8431 = vunpack.c.l.b16 %v8258
      %v8432 = vunpack.c.l.b16 %v8259
      %v8433 = vunpack.c.l.b16 %v8260
      %v8434 = vunpack.c.l.b16 %v8261
      %v8435 = vunpack.c.l.b16 %v8262
      %v8436 = vunpack.c.l.b16 %v8263
      %v8437 = vunpack.c.l.b16 %v8264
      %v8438 = vunpack.c.l.b16 %v8265
      %v8439 = vpack.c.b16 %v8432, %v8431
      %v8440 = vpack.c.b16 %v8434, %v8433
      %v8441 = vpack.c.b16 %v8436, %v8435
      %v8442 = vpack.c.b16 %v8438, %v8437
      %8443 = vrot.lane.b32.xlu0 %v8439, 96
      %v8444 = vpop.permute.xlu0 %8443
      %8445 = vrot.lane.b32.xlu0 %v8440, 96
      %v8446 = vpop.permute.xlu0 %8445
      %8447 = vrot.lane.b32.xlu0 %v8441, 96
      %v8448 = vpop.permute.xlu0 %8447
      %8449 = vrot.lane.b32.xlu0 %v8442, 96
      %v8450 = vpop.permute.xlu0 %8449
      %v8459 = vunpack.c.l.b16 %v8274
      %v8460 = vunpack.c.l.b16 %v8275
      %v8461 = vunpack.c.l.b16 %v8276
      %v8462 = vunpack.c.l.b16 %v8277
      %v8463 = vunpack.c.l.b16 %v8278
      %v8464 = vunpack.c.l.b16 %v8279
      %v8465 = vunpack.c.l.b16 %v8280
      %v8466 = vunpack.c.l.b16 %v8281
      %v8467 = vpack.c.b16 %v8460, %v8459
      %v8468 = vpack.c.b16 %v8462, %v8461
      %v8469 = vpack.c.b16 %v8464, %v8463
      %v8470 = vpack.c.b16 %v8466, %v8465
      %v8479 = vunpack.c.l.b16 %v8290
      %v8480 = vunpack.c.l.b16 %v8291
      %v8481 = vunpack.c.l.b16 %v8292
      %v8482 = vunpack.c.l.b16 %v8293
      %v8483 = vunpack.c.l.b16 %v8294
      %v8484 = vunpack.c.l.b16 %v8295
      %v8485 = vunpack.c.l.b16 %v8296
      %v8486 = vunpack.c.l.b16 %v8297
      %v8487 = vpack.c.b16 %v8480, %v8479
      %v8488 = vpack.c.b16 %v8482, %v8481
      %v8489 = vpack.c.b16 %v8484, %v8483
      %v8490 = vpack.c.b16 %v8486, %v8485
      %8491 = vrot.lane.b32.xlu0 %v8487, 32
      %v8492 = vpop.permute.xlu0 %8491
      %8493 = vrot.lane.b32.xlu0 %v8488, 32
      %v8494 = vpop.permute.xlu0 %8493
      %8495 = vrot.lane.b32.xlu0 %v8489, 32
      %v8496 = vpop.permute.xlu0 %8495
      %8497 = vrot.lane.b32.xlu0 %v8490, 32
      %v8498 = vpop.permute.xlu0 %8497
      %v8507 = vunpack.c.l.b16 %v8307
      %v8508 = vunpack.c.l.b16 %v8308
      %v8509 = vunpack.c.l.b16 %v8309
      %v8510 = vunpack.c.l.b16 %v8310
      %v8511 = vunpack.c.l.b16 %v8311
      %v8512 = vunpack.c.l.b16 %v8312
      %v8513 = vunpack.c.l.b16 %v8313
      %v8514 = vunpack.c.l.b16 %v8314
      %v8515 = vpack.c.b16 %v8508, %v8507
      %v8516 = vpack.c.b16 %v8510, %v8509
      %v8517 = vpack.c.b16 %v8512, %v8511
      %v8518 = vpack.c.b16 %v8514, %v8513
      %8519 = vrot.lane.b32.xlu0 %v8515, 64
      %v8520 = vpop.permute.xlu0 %8519
      %8521 = vrot.lane.b32.xlu0 %v8516, 64
      %v8522 = vpop.permute.xlu0 %8521
      %8523 = vrot.lane.b32.xlu0 %v8517, 64
      %v8524 = vpop.permute.xlu0 %8523
      %8525 = vrot.lane.b32.xlu0 %v8518, 64
      %v8526 = vpop.permute.xlu0 %8525
      %v8535 = vunpack.c.l.b16 %v8323
      %v8536 = vunpack.c.l.b16 %v8324
      %v8537 = vunpack.c.l.b16 %v8325
      %v8538 = vunpack.c.l.b16 %v8326
      %v8539 = vunpack.c.l.b16 %v8327
      %v8540 = vunpack.c.l.b16 %v8328
      %v8541 = vunpack.c.l.b16 %v8329
      %v8542 = vunpack.c.l.b16 %v8330
      %v8543 = vpack.c.b16 %v8536, %v8535
      %v8544 = vpack.c.b16 %v8538, %v8537
      %v8545 = vpack.c.b16 %v8540, %v8539
      %v8546 = vpack.c.b16 %v8542, %v8541
      %8547 = vrot.lane.b32.xlu0 %v8543, 96
      %v8548 = vpop.permute.xlu0 %8547
      %8549 = vrot.lane.b32.xlu0 %v8544, 96
      %v8550 = vpop.permute.xlu0 %8549
      %8551 = vrot.lane.b32.xlu0 %v8545, 96
      %v8552 = vpop.permute.xlu0 %8551
      %8553 = vrot.lane.b32.xlu0 %v8546, 96
      %v8554 = vpop.permute.xlu0 %8553
      %v8563 = vunpack.c.l.b16 %v8339
      %v8564 = vunpack.c.l.b16 %v8340
      %v8565 = vunpack.c.l.b16 %v8341
      %v8566 = vunpack.c.l.b16 %v8342
      %v8567 = vunpack.c.l.b16 %v8343
      %v8568 = vunpack.c.l.b16 %v8344
      %v8569 = vunpack.c.l.b16 %v8345
      %v8570 = vunpack.c.l.b16 %v8346
      %v8571 = vpack.c.b16 %v8564, %v8563
      %v8572 = vpack.c.b16 %v8566, %v8565
      %v8573 = vpack.c.b16 %v8568, %v8567
      %v8574 = vpack.c.b16 %v8570, %v8569
      %v8577 = vsel %vm442, %v8363, %v8388
      %v8580 = vsel %vm442, %v8364, %v8390
      %v8583 = vsel %vm442, %v8365, %v8392
      %v8586 = vsel %vm442, %v8366, %v8394
      %v8588 = vsel %vm2157, %v8577, %v8416
      %v8590 = vsel %vm2157, %v8580, %v8418
      %v8592 = vsel %vm2157, %v8583, %v8420
      %v8594 = vsel %vm2157, %v8586, %v8422
      %v8596 = vsel %vm2190, %v8588, %v8444
      %v8599 = vsel %vm2190, %v8590, %v8446
      %v8602 = vsel %vm2190, %v8592, %v8448
      %v8605 = vsel %vm2190, %v8594, %v8450
      %v8609 = vsel %vm442, %v8467, %v8492
      %v8612 = vsel %vm442, %v8468, %v8494
      %v8615 = vsel %vm442, %v8469, %v8496
      %v8618 = vsel %vm442, %v8470, %v8498
      %v8620 = vsel %vm2157, %v8609, %v8520
      %v8622 = vsel %vm2157, %v8612, %v8522
      %v8624 = vsel %vm2157, %v8615, %v8524
      %v8626 = vsel %vm2157, %v8618, %v8526
      %v8628 = vsel %vm2190, %v8620, %v8548
      %v8631 = vsel %vm2190, %v8622, %v8550
      %v8634 = vsel %vm2190, %v8624, %v8552
      %v8637 = vsel %vm2190, %v8626, %v8554
      %v8639 = vperm.slane %v8201, 0
      %v8676 = vunpack.c.l.b16 %v8165
      %v8677 = vunpack.c.l.b16 %v8166
      %v8678 = vunpack.c.l.b16 %v8167
      %v8679 = vunpack.c.l.b16 %v8168
      %v8680 = vunpack.c.l.b16 %v8169
      %v8681 = vunpack.c.l.b16 %v8170
      %v8682 = vunpack.c.l.b16 %v8171
      %v8683 = vunpack.c.l.b16 %v8172
      %v8684 = vunpack.c.l.b16 %v8173
      %v8685 = vunpack.c.l.b16 %v8174
      %v8686 = vunpack.c.l.b16 %v8175
      %v8687 = vunpack.c.l.b16 %v8176
      %v8688 = vunpack.c.l.b16 %v8177
      %v8689 = vunpack.c.l.b16 %v8178
      %v8690 = vunpack.c.l.b16 %v8179
      %v8691 = vunpack.c.l.b16 %v8180
      %v8692 = vunpack.c.l.b16 %v8181
      %v8693 = vunpack.c.l.b16 %v8182
      %v8694 = vunpack.c.l.b16 %v8183
      %v8695 = vunpack.c.l.b16 %v8184
      %v8696 = vunpack.c.l.b16 %v8185
      %v8697 = vunpack.c.l.b16 %v8186
      %v8698 = vunpack.c.l.b16 %v8187
      %v8699 = vunpack.c.l.b16 %v8188
      %v8700 = vunpack.c.l.b16 %v8189
      %v8701 = vunpack.c.l.b16 %v8190
      %v8702 = vunpack.c.l.b16 %v8191
      %v8703 = vunpack.c.l.b16 %v8192
      %v8704 = vunpack.c.l.b16 %v8193
      %v8705 = vunpack.c.l.b16 %v8194
      %v8706 = vunpack.c.l.b16 %v8195
      %v8707 = vunpack.c.l.b16 %v8196
      %v8708 = vunpack.c.l.b16 %v8197
      %v8709 = vunpack.c.l.b16 %v8198
      %v8710 = vunpack.c.l.b16 %v8199
      %v8711 = vunpack.c.l.b16 %v8200
      %v8712 = vpack.c.b16 %v8677, %v8676
      %v8713 = vpack.c.b16 %v8679, %v8678
      %v8714 = vpack.c.b16 %v8681, %v8680
      %v8715 = vpack.c.b16 %v8683, %v8682
      %v8716 = vpack.c.b16 %v8685, %v8684
      %v8717 = vpack.c.b16 %v8687, %v8686
      %v8718 = vpack.c.b16 %v8689, %v8688
      %v8719 = vpack.c.b16 %v8691, %v8690
      %v8720 = vpack.c.b16 %v8693, %v8692
      %v8721 = vpack.c.b16 %v8695, %v8694
      %v8722 = vpack.c.b16 %v8697, %v8696
      %v8723 = vpack.c.b16 %v8699, %v8698
      %v8724 = vpack.c.b16 %v8701, %v8700
      %v8725 = vpack.c.b16 %v8703, %v8702
      %v8726 = vpack.c.b16 %v8705, %v8704
      %v8727 = vpack.c.b16 %v8707, %v8706
      %v8728 = vpack.c.b16 %v8709, %v8708
      %v8729 = vpack.c.b16 %v8711, %v8710
      %v8749 = vsel %vm442, %v8571, 0
      %v8752 = vsel %vm442, %v8572, 0
      %v8755 = vsel %vm442, %v8573, 0
      %v8758 = vsel %vm442, %v8574, 0
      %8760 = vmatpush.bf16.msra.mxu0 %v8719
      %8761 = vmatpush.bf16.msra.mxu0 %v8718
      %8762 = vmatpush.bf16.msra.mxu0 %v8717
      %8763 = vmatpush.bf16.msra.mxu0 %v8716
      %8764 = vmatpush.bf16.msra.mxu0 %v8715
      %8765 = vmatpush.bf16.msra.mxu0 %v8714
      %8766 = vmatpush.bf16.msra.mxu0 %v8713
      %8767 = vmatpush.bf16.msra.mxu0 %v8712
      %8768 = vmatmul.bf16.gmra.mxu0 %v8596
      %v8769 = vpop.f32.mrf.mxu0
      %v8770 = vadd.f32 %v8639, %v8769
      %v8771 = vpop.f32.mrf.mxu0
      %v8772 = vadd.f32 %v8639, %v8771
      %8773 = vmatmul.bf16.gmra.mxu0 %v8599
      %v8774 = vpop.f32.mrf.mxu0
      %v8775 = vadd.f32 %v8639, %v8774
      %v8776 = vpop.f32.mrf.mxu0
      %v8777 = vadd.f32 %v8639, %v8776
      %8778 = vmatmul.bf16.gmra.mxu0 %v8602
      %v8779 = vpop.f32.mrf.mxu0
      %v8780 = vadd.f32 %v8639, %v8779
      %v8781 = vpop.f32.mrf.mxu0
      %v8782 = vadd.f32 %v8639, %v8781
      %8783 = vmatmul.bf16.gmra.mxu0 %v8605
      %v8784 = vpop.f32.mrf.mxu0
      %v8785 = vadd.f32 %v8639, %v8784
      %v8786 = vpop.f32.mrf.mxu0
      %v8787 = vadd.f32 %v8639, %v8786
      %8788 = vdwg.mxu0
      %8789 = vmatpush.bf16.msra.mxu0 %v8727
      %8790 = vmatpush.bf16.msra.mxu0 %v8726
      %8791 = vmatpush.bf16.msra.mxu0 %v8725
      %8792 = vmatpush.bf16.msra.mxu0 %v8724
      %8793 = vmatpush.bf16.msra.mxu0 %v8723
      %8794 = vmatpush.bf16.msra.mxu0 %v8722
      %8795 = vmatpush.bf16.msra.mxu0 %v8721
      %8796 = vmatpush.bf16.msra.mxu0 %v8720
      %8797 = vmatmul.bf16.gmra.mxu0 %v8628
      %v8798 = vpop.f32.mrf.mxu0
      %v8799 = vadd.f32 %v8770, %v8798
      %v8800 = vpop.f32.mrf.mxu0
      %v8801 = vadd.f32 %v8772, %v8800
      %8802 = vmatmul.bf16.gmra.mxu0 %v8631
      %v8803 = vpop.f32.mrf.mxu0
      %v8804 = vadd.f32 %v8775, %v8803
      %v8805 = vpop.f32.mrf.mxu0
      %v8806 = vadd.f32 %v8777, %v8805
      %8807 = vmatmul.bf16.gmra.mxu0 %v8634
      %v8808 = vpop.f32.mrf.mxu0
      %v8809 = vadd.f32 %v8780, %v8808
      %v8810 = vpop.f32.mrf.mxu0
      %v8811 = vadd.f32 %v8782, %v8810
      %8812 = vmatmul.bf16.gmra.mxu0 %v8637
      %v8813 = vpop.f32.mrf.mxu0
      %v8814 = vadd.f32 %v8785, %v8813
      %v8815 = vpop.f32.mrf.mxu0
      %v8816 = vadd.f32 %v8787, %v8815
      %8817 = vdwg.mxu0
      %8818 = vmatpush.bf16.msra.mxu0 0
      %8819 = vmatpush.bf16.msra.mxu0 0
      %8820 = vmatpush.bf16.msra.mxu0 0
      %8821 = vmatpush.bf16.msra.mxu0 0
      %8822 = vmatpush.bf16.msra.mxu0 0
      %8823 = vmatpush.bf16.msra.mxu0 0
      %8824 = vmatpush.bf16.msra.mxu0 %v8729
      %8825 = vmatpush.bf16.msra.mxu0 %v8728
      %8826 = vmatmul.bf16.gmra.mxu0 %v8749
      %v8827 = vpop.f32.mrf.mxu0
      %v8828 = vadd.f32 %v8799, %v8827
      %v8829 = vpop.f32.mrf.mxu0
      %v8830 = vadd.f32 %v8801, %v8829
      %8831 = vmatmul.bf16.gmra.mxu0 %v8752
      %v8832 = vpop.f32.mrf.mxu0
      %v8833 = vadd.f32 %v8804, %v8832
      %v8834 = vpop.f32.mrf.mxu0
      %v8835 = vadd.f32 %v8806, %v8834
      %8836 = vmatmul.bf16.gmra.mxu0 %v8755
      %v8837 = vpop.f32.mrf.mxu0
      %v8838 = vadd.f32 %v8809, %v8837
      %v8839 = vpop.f32.mrf.mxu0
      %v8840 = vadd.f32 %v8811, %v8839
      %8841 = vmatmul.bf16.gmra.mxu0 %v8758
      %v8842 = vpop.f32.mrf.mxu0
      %v8843 = vadd.f32 %v8814, %v8842
      %v8844 = vpop.f32.mrf.mxu0
      %v8845 = vadd.f32 %v8816, %v8844
      %8846 = vdwg.mxu0
      %v8847 = vmax.f32 %v8828, 0.0
      %v8848 = vmax.f32 %v8830, 0.0
      %v8849 = vmax.f32 %v8833, 0.0
      %v8850 = vmax.f32 %v8835, 0.0
      %v8851 = vmax.f32 %v8838, 0.0
      %v8852 = vmax.f32 %v8840, 0.0
      %v8853 = vmax.f32 %v8843, 0.0
      %v8854 = vmax.f32 %v8845, 0.0
      %8855 = vst.msk [vmem:[%s8156 + $0x1] sm:$0xff] %vm442, %v8847
      %8856 = vst.msk [vmem:[%s8156 + $0x11] sm:$0xff] %vm442, %v8848
      %8857 = vst.msk [vmem:[%s8156 + $0x21] sm:$0xff] %vm442, %v8849
      %8858 = vst.msk [vmem:[%s8156 + $0x31] sm:$0xff] %vm442, %v8850
      %8859 = vst.msk [vmem:[%s8156 + $0x41] sm:$0xff] %vm442, %v8851
      %8860 = vst.msk [vmem:[%s8156 + $0x51] sm:$0xff] %vm442, %v8852
      %8861 = vst.msk [vmem:[%s8156 + $0x61] sm:$0xff] %vm442, %v8853
      %8862 = vst.msk [vmem:[%s8156 + $0x71] sm:$0xff] %vm442, %v8854
      %s8863 = scalar_lea.vmem %s7, 144
      %v8864 = vld [vmem:[%s8863] sm:$0xf]
      %v8865 = vld [vmem:[%s8863 + $0x4] sm:$0xf]
      %v8866 = vld [vmem:[%s8863 + $0x8] sm:$0xf]
      %v8867 = vld [vmem:[%s8863 + $0xc] sm:$0xf]
      %v8868 = vld [vmem:[%s8863 + $0x10] sm:$0xf]
      %v8869 = vld [vmem:[%s8863 + $0x14] sm:$0xf]
      %v8870 = vld [vmem:[%s8863 + $0x18] sm:$0xf]
      %v8871 = vld [vmem:[%s8863 + $0x1c] sm:$0xf]
      %v8872 = vld [vmem:[%s8863 + $0x20] sm:$0xf]
      %v8873 = vld [vmem:[%s8863 + $0x24] sm:$0xf]
      %v8874 = vld [vmem:[%s8863 + $0x28] sm:$0xf]
      %v8875 = vld [vmem:[%s8863 + $0x2c] sm:$0xf]
      %v8876 = vld [vmem:[%s8863 + $0x30] sm:$0xf]
      %v8877 = vld [vmem:[%s8863 + $0x34] sm:$0xf]
      %v8878 = vld [vmem:[%s8863 + $0x38] sm:$0xf]
      %v8879 = vld [vmem:[%s8863 + $0x3c] sm:$0xf]
      %v8880 = vld [vmem:[%s8863 + $0x40] sm:$0xf]
      %v8881 = vld [vmem:[%s8863 + $0x44] sm:$0xf]
      %v8882 = vld [vmem:[%s8863 + $0x48] sm:$0xf]
      %v8883 = vld [vmem:[%s8863 + $0x4c] sm:$0xf]
      %v8884 = vld [vmem:[%s8863 + $0x50] sm:$0xf]
      %v8885 = vld [vmem:[%s8863 + $0x54] sm:$0xf]
      %v8886 = vld [vmem:[%s8863 + $0x58] sm:$0xf]
      %v8887 = vld [vmem:[%s8863 + $0x5c] sm:$0xf]
      %v8888 = vld [vmem:[%s8863 + $0x60] sm:$0xf]
      %v8889 = vld [vmem:[%s8863 + $0x64] sm:$0xf]
      %v8890 = vld [vmem:[%s8863 + $0x68] sm:$0xf]
      %v8891 = vld [vmem:[%s8863 + $0x6c] sm:$0xf]
      %v8892 = vld [vmem:[%s8863 + $0x70] sm:$0xf]
      %v8893 = vld [vmem:[%s8863 + $0x74] sm:$0xf]
      %v8894 = vld [vmem:[%s8863 + $0x78] sm:$0xf]
      %v8895 = vld [vmem:[%s8863 + $0x7c] sm:$0xf]
      %v8896 = vld [vmem:[%s8863 + $0x80] sm:$0xf]
      %v8897 = vld [vmem:[%s8863 + $0x84] sm:$0xf]
      %v8898 = vld [vmem:[%s8863 + $0x88] sm:$0xf]
      %v8899 = vld [vmem:[%s8863 + $0x8c] sm:$0xf]
      %v8900 = vld [vmem:[%s8 + $0x1] sm:$0x1]
      %v8901 = vld [vmem:[#allocation3] sm:$0xff]
      %v8902 = vld [vmem:[#allocation3 + $0x10] sm:$0xff]
      %v8903 = vld [vmem:[#allocation3 + $0x20] sm:$0xff]
      %v8904 = vld [vmem:[#allocation3 + $0x30] sm:$0xff]
      %v8905 = vld [vmem:[#allocation3 + $0x40] sm:$0xff]
      %v8906 = vld [vmem:[#allocation3 + $0x50] sm:$0xff]
      %v8907 = vld [vmem:[#allocation3 + $0x60] sm:$0xff]
      %v8908 = vld [vmem:[#allocation3 + $0x70] sm:$0xff]
      %v8909 = vpack.c.bf16 %v8901, %v8901
      %v8910 = vpack.c.bf16 %v8902, %v8902
      %v8911 = vpack.c.bf16 %v8903, %v8903
      %v8912 = vpack.c.bf16 %v8904, %v8904
      %v8913 = vpack.c.bf16 %v8905, %v8905
      %v8914 = vpack.c.bf16 %v8906, %v8906
      %v8915 = vpack.c.bf16 %v8907, %v8907
      %v8916 = vpack.c.bf16 %v8908, %v8908
      %v8917 = vld [vmem:[#allocation3 + $0x1] sm:$0xff]
      %v8918 = vld [vmem:[#allocation3 + $0x11] sm:$0xff]
      %v8919 = vld [vmem:[#allocation3 + $0x21] sm:$0xff]
      %v8920 = vld [vmem:[#allocation3 + $0x31] sm:$0xff]
      %v8921 = vld [vmem:[#allocation3 + $0x41] sm:$0xff]
      %v8922 = vld [vmem:[#allocation3 + $0x51] sm:$0xff]
      %v8923 = vld [vmem:[#allocation3 + $0x61] sm:$0xff]
      %v8924 = vld [vmem:[#allocation3 + $0x71] sm:$0xff]
      %v8925 = vpack.c.bf16 %v8917, %v8917
      %v8926 = vpack.c.bf16 %v8918, %v8918
      %v8927 = vpack.c.bf16 %v8919, %v8919
      %v8928 = vpack.c.bf16 %v8920, %v8920
      %v8929 = vpack.c.bf16 %v8921, %v8921
      %v8930 = vpack.c.bf16 %v8922, %v8922
      %v8931 = vpack.c.bf16 %v8923, %v8923
      %v8932 = vpack.c.bf16 %v8924, %v8924
      %v8933 = vld [vmem:[#allocation3 + $0x2] sm:$0xff]
      %v8934 = vld [vmem:[#allocation3 + $0x12] sm:$0xff]
      %v8935 = vld [vmem:[#allocation3 + $0x22] sm:$0xff]
      %v8936 = vld [vmem:[#allocation3 + $0x32] sm:$0xff]
      %v8937 = vld [vmem:[#allocation3 + $0x42] sm:$0xff]
      %v8938 = vld [vmem:[#allocation3 + $0x52] sm:$0xff]
      %v8939 = vld [vmem:[#allocation3 + $0x62] sm:$0xff]
      %v8940 = vld [vmem:[#allocation3 + $0x72] sm:$0xff]
      %v8941 = vpack.c.bf16 %v8933, %v8933
      %v8942 = vpack.c.bf16 %v8934, %v8934
      %v8943 = vpack.c.bf16 %v8935, %v8935
      %v8944 = vpack.c.bf16 %v8936, %v8936
      %v8945 = vpack.c.bf16 %v8937, %v8937
      %v8946 = vpack.c.bf16 %v8938, %v8938
      %v8947 = vpack.c.bf16 %v8939, %v8939
      %v8948 = vpack.c.bf16 %v8940, %v8940
      %v8949 = vld [vmem:[%s8156] sm:$0xff]
      %v8950 = vld [vmem:[%s8156 + $0x10] sm:$0xff]
      %v8951 = vld [vmem:[%s8156 + $0x20] sm:$0xff]
      %v8952 = vld [vmem:[%s8156 + $0x30] sm:$0xff]
      %v8953 = vld [vmem:[%s8156 + $0x40] sm:$0xff]
      %v8954 = vld [vmem:[%s8156 + $0x50] sm:$0xff]
      %v8955 = vld [vmem:[%s8156 + $0x60] sm:$0xff]
      %v8956 = vld [vmem:[%s8156 + $0x70] sm:$0xff]
      %v8957 = vpack.c.bf16 %v8949, %v8949
      %v8958 = vpack.c.bf16 %v8950, %v8950
      %v8959 = vpack.c.bf16 %v8951, %v8951
      %v8960 = vpack.c.bf16 %v8952, %v8952
      %v8961 = vpack.c.bf16 %v8953, %v8953
      %v8962 = vpack.c.bf16 %v8954, %v8954
      %v8963 = vpack.c.bf16 %v8955, %v8955
      %v8964 = vpack.c.bf16 %v8956, %v8956
      %v8965 = vld [vmem:[%s8156 + $0x1] sm:$0xff]
      %v8966 = vld [vmem:[%s8156 + $0x11] sm:$0xff]
      %v8967 = vld [vmem:[%s8156 + $0x21] sm:$0xff]
      %v8968 = vld [vmem:[%s8156 + $0x31] sm:$0xff]
      %v8969 = vld [vmem:[%s8156 + $0x41] sm:$0xff]
      %v8970 = vld [vmem:[%s8156 + $0x51] sm:$0xff]
      %v8971 = vld [vmem:[%s8156 + $0x61] sm:$0xff]
      %v8972 = vld [vmem:[%s8156 + $0x71] sm:$0xff]
      %v8973 = vpack.c.bf16 %v8965, %v8965
      %v8974 = vpack.c.bf16 %v8966, %v8966
      %v8975 = vpack.c.bf16 %v8967, %v8967
      %v8976 = vpack.c.bf16 %v8968, %v8968
      %v8977 = vpack.c.bf16 %v8969, %v8969
      %v8978 = vpack.c.bf16 %v8970, %v8970
      %v8979 = vpack.c.bf16 %v8971, %v8971
      %v8980 = vpack.c.bf16 %v8972, %v8972
      %v8981 = vld [vmem:[%s8156 + $0x2] sm:$0xff]
      %v8982 = vld [vmem:[%s8156 + $0x12] sm:$0xff]
      %v8983 = vld [vmem:[%s8156 + $0x22] sm:$0xff]
      %v8984 = vld [vmem:[%s8156 + $0x32] sm:$0xff]
      %v8985 = vld [vmem:[%s8156 + $0x42] sm:$0xff]
      %v8986 = vld [vmem:[%s8156 + $0x52] sm:$0xff]
      %v8987 = vld [vmem:[%s8156 + $0x62] sm:$0xff]
      %v8988 = vld [vmem:[%s8156 + $0x72] sm:$0xff]
      %v8989 = vpack.c.bf16 %v8981, %v8981
      %v8990 = vpack.c.bf16 %v8982, %v8982
      %v8991 = vpack.c.bf16 %v8983, %v8983
      %v8992 = vpack.c.bf16 %v8984, %v8984
      %v8993 = vpack.c.bf16 %v8985, %v8985
      %v8994 = vpack.c.bf16 %v8986, %v8986
      %v8995 = vpack.c.bf16 %v8987, %v8987
      %v8996 = vpack.c.bf16 %v8988, %v8988
      %v8997 = vld [vmem:[%s8298] sm:$0xff]
      %v8998 = vld [vmem:[%s8298 + $0x10] sm:$0xff]
      %v8999 = vld [vmem:[%s8298 + $0x20] sm:$0xff]
      %v9000 = vld [vmem:[%s8298 + $0x30] sm:$0xff]
      %v9001 = vld [vmem:[%s8298 + $0x40] sm:$0xff]
      %v9002 = vld [vmem:[%s8298 + $0x50] sm:$0xff]
      %v9003 = vld [vmem:[%s8298 + $0x60] sm:$0xff]
      %v9004 = vld [vmem:[%s8298 + $0x70] sm:$0xff]
      %v9005 = vpack.c.bf16 %v8997, %v8997
      %v9006 = vpack.c.bf16 %v8998, %v8998
      %v9007 = vpack.c.bf16 %v8999, %v8999
      %v9008 = vpack.c.bf16 %v9000, %v9000
      %v9009 = vpack.c.bf16 %v9001, %v9001
      %v9010 = vpack.c.bf16 %v9002, %v9002
      %v9011 = vpack.c.bf16 %v9003, %v9003
      %v9012 = vpack.c.bf16 %v9004, %v9004
      %v9013 = vld [vmem:[%s8298 + $0x1] sm:$0xff]
      %v9014 = vld [vmem:[%s8298 + $0x11] sm:$0xff]
      %v9015 = vld [vmem:[%s8298 + $0x21] sm:$0xff]
      %v9016 = vld [vmem:[%s8298 + $0x31] sm:$0xff]
      %v9017 = vld [vmem:[%s8298 + $0x41] sm:$0xff]
      %v9018 = vld [vmem:[%s8298 + $0x51] sm:$0xff]
      %v9019 = vld [vmem:[%s8298 + $0x61] sm:$0xff]
      %v9020 = vld [vmem:[%s8298 + $0x71] sm:$0xff]
      %v9021 = vpack.c.bf16 %v9013, %v9013
      %v9022 = vpack.c.bf16 %v9014, %v9014
      %v9023 = vpack.c.bf16 %v9015, %v9015
      %v9024 = vpack.c.bf16 %v9016, %v9016
      %v9025 = vpack.c.bf16 %v9017, %v9017
      %v9026 = vpack.c.bf16 %v9018, %v9018
      %v9027 = vpack.c.bf16 %v9019, %v9019
      %v9028 = vpack.c.bf16 %v9020, %v9020
      %v9029 = vld [vmem:[%s8298 + $0x2] sm:$0xff]
      %v9030 = vld [vmem:[%s8298 + $0x12] sm:$0xff]
      %v9031 = vld [vmem:[%s8298 + $0x22] sm:$0xff]
      %v9032 = vld [vmem:[%s8298 + $0x32] sm:$0xff]
      %v9033 = vld [vmem:[%s8298 + $0x42] sm:$0xff]
      %v9034 = vld [vmem:[%s8298 + $0x52] sm:$0xff]
      %v9035 = vld [vmem:[%s8298 + $0x62] sm:$0xff]
      %v9036 = vld [vmem:[%s8298 + $0x72] sm:$0xff]
      %v9037 = vpack.c.bf16 %v9029, %v9029
      %v9038 = vpack.c.bf16 %v9030, %v9030
      %v9039 = vpack.c.bf16 %v9031, %v9031
      %v9040 = vpack.c.bf16 %v9032, %v9032
      %v9041 = vpack.c.bf16 %v9033, %v9033
      %v9042 = vpack.c.bf16 %v9034, %v9034
      %v9043 = vpack.c.bf16 %v9035, %v9035
      %v9044 = vpack.c.bf16 %v9036, %v9036
      %v9053 = vunpack.c.l.b16 %v8909
      %v9054 = vunpack.c.l.b16 %v8910
      %v9055 = vunpack.c.l.b16 %v8911
      %v9056 = vunpack.c.l.b16 %v8912
      %v9057 = vunpack.c.l.b16 %v8913
      %v9058 = vunpack.c.l.b16 %v8914
      %v9059 = vunpack.c.l.b16 %v8915
      %v9060 = vunpack.c.l.b16 %v8916
      %v9061 = vpack.c.b16 %v9054, %v9053
      %v9062 = vpack.c.b16 %v9056, %v9055
      %v9063 = vpack.c.b16 %v9058, %v9057
      %v9064 = vpack.c.b16 %v9060, %v9059
      %v9073 = vunpack.c.l.b16 %v8925
      %v9074 = vunpack.c.l.b16 %v8926
      %v9075 = vunpack.c.l.b16 %v8927
      %v9076 = vunpack.c.l.b16 %v8928
      %v9077 = vunpack.c.l.b16 %v8929
      %v9078 = vunpack.c.l.b16 %v8930
      %v9079 = vunpack.c.l.b16 %v8931
      %v9080 = vunpack.c.l.b16 %v8932
      %v9081 = vpack.c.b16 %v9074, %v9073
      %v9082 = vpack.c.b16 %v9076, %v9075
      %v9083 = vpack.c.b16 %v9078, %v9077
      %v9084 = vpack.c.b16 %v9080, %v9079
      %9085 = vrot.lane.b32.xlu0 %v9081, 32
      %v9086 = vpop.permute.xlu0 %9085
      %9087 = vrot.lane.b32.xlu0 %v9082, 32
      %v9088 = vpop.permute.xlu0 %9087
      %9089 = vrot.lane.b32.xlu0 %v9083, 32
      %v9090 = vpop.permute.xlu0 %9089
      %9091 = vrot.lane.b32.xlu0 %v9084, 32
      %v9092 = vpop.permute.xlu0 %9091
      %v9101 = vunpack.c.l.b16 %v8941
      %v9102 = vunpack.c.l.b16 %v8942
      %v9103 = vunpack.c.l.b16 %v8943
      %v9104 = vunpack.c.l.b16 %v8944
      %v9105 = vunpack.c.l.b16 %v8945
      %v9106 = vunpack.c.l.b16 %v8946
      %v9107 = vunpack.c.l.b16 %v8947
      %v9108 = vunpack.c.l.b16 %v8948
      %v9109 = vpack.c.b16 %v9102, %v9101
      %v9110 = vpack.c.b16 %v9104, %v9103
      %v9111 = vpack.c.b16 %v9106, %v9105
      %v9112 = vpack.c.b16 %v9108, %v9107
      %9113 = vrot.lane.b32.xlu0 %v9109, 64
      %v9114 = vpop.permute.xlu0 %9113
      %9115 = vrot.lane.b32.xlu0 %v9110, 64
      %v9116 = vpop.permute.xlu0 %9115
      %9117 = vrot.lane.b32.xlu0 %v9111, 64
      %v9118 = vpop.permute.xlu0 %9117
      %9119 = vrot.lane.b32.xlu0 %v9112, 64
      %v9120 = vpop.permute.xlu0 %9119
      %v9129 = vunpack.c.l.b16 %v8957
      %v9130 = vunpack.c.l.b16 %v8958
      %v9131 = vunpack.c.l.b16 %v8959
      %v9132 = vunpack.c.l.b16 %v8960
      %v9133 = vunpack.c.l.b16 %v8961
      %v9134 = vunpack.c.l.b16 %v8962
      %v9135 = vunpack.c.l.b16 %v8963
      %v9136 = vunpack.c.l.b16 %v8964
      %v9137 = vpack.c.b16 %v9130, %v9129
      %v9138 = vpack.c.b16 %v9132, %v9131
      %v9139 = vpack.c.b16 %v9134, %v9133
      %v9140 = vpack.c.b16 %v9136, %v9135
      %9141 = vrot.lane.b32.xlu0 %v9137, 96
      %v9142 = vpop.permute.xlu0 %9141
      %9143 = vrot.lane.b32.xlu0 %v9138, 96
      %v9144 = vpop.permute.xlu0 %9143
      %9145 = vrot.lane.b32.xlu0 %v9139, 96
      %v9146 = vpop.permute.xlu0 %9145
      %9147 = vrot.lane.b32.xlu0 %v9140, 96
      %v9148 = vpop.permute.xlu0 %9147
      %v9157 = vunpack.c.l.b16 %v8973
      %v9158 = vunpack.c.l.b16 %v8974
      %v9159 = vunpack.c.l.b16 %v8975
      %v9160 = vunpack.c.l.b16 %v8976
      %v9161 = vunpack.c.l.b16 %v8977
      %v9162 = vunpack.c.l.b16 %v8978
      %v9163 = vunpack.c.l.b16 %v8979
      %v9164 = vunpack.c.l.b16 %v8980
      %v9165 = vpack.c.b16 %v9158, %v9157
      %v9166 = vpack.c.b16 %v9160, %v9159
      %v9167 = vpack.c.b16 %v9162, %v9161
      %v9168 = vpack.c.b16 %v9164, %v9163
      %v9177 = vunpack.c.l.b16 %v8989
      %v9178 = vunpack.c.l.b16 %v8990
      %v9179 = vunpack.c.l.b16 %v8991
      %v9180 = vunpack.c.l.b16 %v8992
      %v9181 = vunpack.c.l.b16 %v8993
      %v9182 = vunpack.c.l.b16 %v8994
      %v9183 = vunpack.c.l.b16 %v8995
      %v9184 = vunpack.c.l.b16 %v8996
      %v9185 = vpack.c.b16 %v9178, %v9177
      %v9186 = vpack.c.b16 %v9180, %v9179
      %v9187 = vpack.c.b16 %v9182, %v9181
      %v9188 = vpack.c.b16 %v9184, %v9183
      %9189 = vrot.lane.b32.xlu0 %v9185, 32
      %v9190 = vpop.permute.xlu0 %9189
      %9191 = vrot.lane.b32.xlu0 %v9186, 32
      %v9192 = vpop.permute.xlu0 %9191
      %9193 = vrot.lane.b32.xlu0 %v9187, 32
      %v9194 = vpop.permute.xlu0 %9193
      %9195 = vrot.lane.b32.xlu0 %v9188, 32
      %v9196 = vpop.permute.xlu0 %9195
      %v9205 = vunpack.c.l.b16 %v9005
      %v9206 = vunpack.c.l.b16 %v9006
      %v9207 = vunpack.c.l.b16 %v9007
      %v9208 = vunpack.c.l.b16 %v9008
      %v9209 = vunpack.c.l.b16 %v9009
      %v9210 = vunpack.c.l.b16 %v9010
      %v9211 = vunpack.c.l.b16 %v9011
      %v9212 = vunpack.c.l.b16 %v9012
      %v9213 = vpack.c.b16 %v9206, %v9205
      %v9214 = vpack.c.b16 %v9208, %v9207
      %v9215 = vpack.c.b16 %v9210, %v9209
      %v9216 = vpack.c.b16 %v9212, %v9211
      %9217 = vrot.lane.b32.xlu0 %v9213, 64
      %v9218 = vpop.permute.xlu0 %9217
      %9219 = vrot.lane.b32.xlu0 %v9214, 64
      %v9220 = vpop.permute.xlu0 %9219
      %9221 = vrot.lane.b32.xlu0 %v9215, 64
      %v9222 = vpop.permute.xlu0 %9221
      %9223 = vrot.lane.b32.xlu0 %v9216, 64
      %v9224 = vpop.permute.xlu0 %9223
      %v9233 = vunpack.c.l.b16 %v9021
      %v9234 = vunpack.c.l.b16 %v9022
      %v9235 = vunpack.c.l.b16 %v9023
      %v9236 = vunpack.c.l.b16 %v9024
      %v9237 = vunpack.c.l.b16 %v9025
      %v9238 = vunpack.c.l.b16 %v9026
      %v9239 = vunpack.c.l.b16 %v9027
      %v9240 = vunpack.c.l.b16 %v9028
      %v9241 = vpack.c.b16 %v9234, %v9233
      %v9242 = vpack.c.b16 %v9236, %v9235
      %v9243 = vpack.c.b16 %v9238, %v9237
      %v9244 = vpack.c.b16 %v9240, %v9239
      %9245 = vrot.lane.b32.xlu0 %v9241, 96
      %v9246 = vpop.permute.xlu0 %9245
      %9247 = vrot.lane.b32.xlu0 %v9242, 96
      %v9248 = vpop.permute.xlu0 %9247
      %9249 = vrot.lane.b32.xlu0 %v9243, 96
      %v9250 = vpop.permute.xlu0 %9249
      %9251 = vrot.lane.b32.xlu0 %v9244, 96
      %v9252 = vpop.permute.xlu0 %9251
      %v9261 = vunpack.c.l.b16 %v9037
      %v9262 = vunpack.c.l.b16 %v9038
      %v9263 = vunpack.c.l.b16 %v9039
      %v9264 = vunpack.c.l.b16 %v9040
      %v9265 = vunpack.c.l.b16 %v9041
      %v9266 = vunpack.c.l.b16 %v9042
      %v9267 = vunpack.c.l.b16 %v9043
      %v9268 = vunpack.c.l.b16 %v9044
      %v9269 = vpack.c.b16 %v9262, %v9261
      %v9270 = vpack.c.b16 %v9264, %v9263
      %v9271 = vpack.c.b16 %v9266, %v9265
      %v9272 = vpack.c.b16 %v9268, %v9267
      %v9275 = vsel %vm442, %v9061, %v9086
      %v9278 = vsel %vm442, %v9062, %v9088
      %v9281 = vsel %vm442, %v9063, %v9090
      %v9284 = vsel %vm442, %v9064, %v9092
      %v9286 = vsel %vm2157, %v9275, %v9114
      %v9288 = vsel %vm2157, %v9278, %v9116
      %v9290 = vsel %vm2157, %v9281, %v9118
      %v9292 = vsel %vm2157, %v9284, %v9120
      %v9294 = vsel %vm2190, %v9286, %v9142
      %v9297 = vsel %vm2190, %v9288, %v9144
      %v9300 = vsel %vm2190, %v9290, %v9146
      %v9303 = vsel %vm2190, %v9292, %v9148
      %v9307 = vsel %vm442, %v9165, %v9190
      %v9310 = vsel %vm442, %v9166, %v9192
      %v9313 = vsel %vm442, %v9167, %v9194
      %v9316 = vsel %vm442, %v9168, %v9196
      %v9318 = vsel %vm2157, %v9307, %v9218
      %v9320 = vsel %vm2157, %v9310, %v9220
      %v9322 = vsel %vm2157, %v9313, %v9222
      %v9324 = vsel %vm2157, %v9316, %v9224
      %v9326 = vsel %vm2190, %v9318, %v9246
      %v9329 = vsel %vm2190, %v9320, %v9248
      %v9332 = vsel %vm2190, %v9322, %v9250
      %v9335 = vsel %vm2190, %v9324, %v9252
      %v9337 = vperm.slane %v8900, 0
      %v9374 = vunpack.c.l.b16 %v8864
      %v9375 = vunpack.c.l.b16 %v8865
      %v9376 = vunpack.c.l.b16 %v8866
      %v9377 = vunpack.c.l.b16 %v8867
      %v9378 = vunpack.c.l.b16 %v8868
      %v9379 = vunpack.c.l.b16 %v8869
      %v9380 = vunpack.c.l.b16 %v8870
      %v9381 = vunpack.c.l.b16 %v8871
      %v9382 = vunpack.c.l.b16 %v8872
      %v9383 = vunpack.c.l.b16 %v8873
      %v9384 = vunpack.c.l.b16 %v8874
      %v9385 = vunpack.c.l.b16 %v8875
      %v9386 = vunpack.c.l.b16 %v8876
      %v9387 = vunpack.c.l.b16 %v8877
      %v9388 = vunpack.c.l.b16 %v8878
      %v9389 = vunpack.c.l.b16 %v8879
      %v9390 = vunpack.c.l.b16 %v8880
      %v9391 = vunpack.c.l.b16 %v8881
      %v9392 = vunpack.c.l.b16 %v8882
      %v9393 = vunpack.c.l.b16 %v8883
      %v9394 = vunpack.c.l.b16 %v8884
      %v9395 = vunpack.c.l.b16 %v8885
      %v9396 = vunpack.c.l.b16 %v8886
      %v9397 = vunpack.c.l.b16 %v8887
      %v9398 = vunpack.c.l.b16 %v8888
      %v9399 = vunpack.c.l.b16 %v8889
      %v9400 = vunpack.c.l.b16 %v8890
      %v9401 = vunpack.c.l.b16 %v8891
      %v9402 = vunpack.c.l.b16 %v8892
      %v9403 = vunpack.c.l.b16 %v8893
      %v9404 = vunpack.c.l.b16 %v8894
      %v9405 = vunpack.c.l.b16 %v8895
      %v9406 = vunpack.c.l.b16 %v8896
      %v9407 = vunpack.c.l.b16 %v8897
      %v9408 = vunpack.c.l.b16 %v8898
      %v9409 = vunpack.c.l.b16 %v8899
      %v9410 = vpack.c.b16 %v9375, %v9374
      %v9411 = vpack.c.b16 %v9377, %v9376
      %v9412 = vpack.c.b16 %v9379, %v9378
      %v9413 = vpack.c.b16 %v9381, %v9380
      %v9414 = vpack.c.b16 %v9383, %v9382
      %v9415 = vpack.c.b16 %v9385, %v9384
      %v9416 = vpack.c.b16 %v9387, %v9386
      %v9417 = vpack.c.b16 %v9389, %v9388
      %v9418 = vpack.c.b16 %v9391, %v9390
      %v9419 = vpack.c.b16 %v9393, %v9392
      %v9420 = vpack.c.b16 %v9395, %v9394
      %v9421 = vpack.c.b16 %v9397, %v9396
      %v9422 = vpack.c.b16 %v9399, %v9398
      %v9423 = vpack.c.b16 %v9401, %v9400
      %v9424 = vpack.c.b16 %v9403, %v9402
      %v9425 = vpack.c.b16 %v9405, %v9404
      %v9426 = vpack.c.b16 %v9407, %v9406
      %v9427 = vpack.c.b16 %v9409, %v9408
      %v9447 = vsel %vm442, %v9269, 0
      %v9450 = vsel %vm442, %v9270, 0
      %v9453 = vsel %vm442, %v9271, 0
      %v9456 = vsel %vm442, %v9272, 0
      %9458 = vmatpush.bf16.msra.mxu0 %v9417
      %9459 = vmatpush.bf16.msra.mxu0 %v9416
      %9460 = vmatpush.bf16.msra.mxu0 %v9415
      %9461 = vmatpush.bf16.msra.mxu0 %v9414
      %9462 = vmatpush.bf16.msra.mxu0 %v9413
      %9463 = vmatpush.bf16.msra.mxu0 %v9412
      %9464 = vmatpush.bf16.msra.mxu0 %v9411
      %9465 = vmatpush.bf16.msra.mxu0 %v9410
      %9466 = vmatmul.bf16.gmra.mxu0 %v9294
      %v9467 = vpop.f32.mrf.mxu0
      %v9468 = vadd.f32 %v9337, %v9467
      %v9469 = vpop.f32.mrf.mxu0
      %v9470 = vadd.f32 %v9337, %v9469
      %9471 = vmatmul.bf16.gmra.mxu0 %v9297
      %v9472 = vpop.f32.mrf.mxu0
      %v9473 = vadd.f32 %v9337, %v9472
      %v9474 = vpop.f32.mrf.mxu0
      %v9475 = vadd.f32 %v9337, %v9474
      %9476 = vmatmul.bf16.gmra.mxu0 %v9300
      %v9477 = vpop.f32.mrf.mxu0
      %v9478 = vadd.f32 %v9337, %v9477
      %v9479 = vpop.f32.mrf.mxu0
      %v9480 = vadd.f32 %v9337, %v9479
      %9481 = vmatmul.bf16.gmra.mxu0 %v9303
      %v9482 = vpop.f32.mrf.mxu0
      %v9483 = vadd.f32 %v9337, %v9482
      %v9484 = vpop.f32.mrf.mxu0
      %v9485 = vadd.f32 %v9337, %v9484
      %9486 = vdwg.mxu0
      %9487 = vmatpush.bf16.msra.mxu0 %v9425
      %9488 = vmatpush.bf16.msra.mxu0 %v9424
      %9489 = vmatpush.bf16.msra.mxu0 %v9423
      %9490 = vmatpush.bf16.msra.mxu0 %v9422
      %9491 = vmatpush.bf16.msra.mxu0 %v9421
      %9492 = vmatpush.bf16.msra.mxu0 %v9420
      %9493 = vmatpush.bf16.msra.mxu0 %v9419
      %9494 = vmatpush.bf16.msra.mxu0 %v9418
      %9495 = vmatmul.bf16.gmra.mxu0 %v9326
      %v9496 = vpop.f32.mrf.mxu0
      %v9497 = vadd.f32 %v9468, %v9496
      %v9498 = vpop.f32.mrf.mxu0
      %v9499 = vadd.f32 %v9470, %v9498
      %9500 = vmatmul.bf16.gmra.mxu0 %v9329
      %v9501 = vpop.f32.mrf.mxu0
      %v9502 = vadd.f32 %v9473, %v9501
      %v9503 = vpop.f32.mrf.mxu0
      %v9504 = vadd.f32 %v9475, %v9503
      %9505 = vmatmul.bf16.gmra.mxu0 %v9332
      %v9506 = vpop.f32.mrf.mxu0
      %v9507 = vadd.f32 %v9478, %v9506
      %v9508 = vpop.f32.mrf.mxu0
      %v9509 = vadd.f32 %v9480, %v9508
      %9510 = vmatmul.bf16.gmra.mxu0 %v9335
      %v9511 = vpop.f32.mrf.mxu0
      %v9512 = vadd.f32 %v9483, %v9511
      %v9513 = vpop.f32.mrf.mxu0
      %v9514 = vadd.f32 %v9485, %v9513
      %9515 = vdwg.mxu0
      %9516 = vmatpush.bf16.msra.mxu0 0
      %9517 = vmatpush.bf16.msra.mxu0 0
      %9518 = vmatpush.bf16.msra.mxu0 0
      %9519 = vmatpush.bf16.msra.mxu0 0
      %9520 = vmatpush.bf16.msra.mxu0 0
      %9521 = vmatpush.bf16.msra.mxu0 0
      %9522 = vmatpush.bf16.msra.mxu0 %v9427
      %9523 = vmatpush.bf16.msra.mxu0 %v9426
      %9524 = vmatmul.bf16.gmra.mxu0 %v9447
      %v9525 = vpop.f32.mrf.mxu0
      %v9526 = vadd.f32 %v9497, %v9525
      %v9527 = vpop.f32.mrf.mxu0
      %v9528 = vadd.f32 %v9499, %v9527
      %9529 = vmatmul.bf16.gmra.mxu0 %v9450
      %v9530 = vpop.f32.mrf.mxu0
      %v9531 = vadd.f32 %v9502, %v9530
      %v9532 = vpop.f32.mrf.mxu0
      %v9533 = vadd.f32 %v9504, %v9532
      %9534 = vmatmul.bf16.gmra.mxu0 %v9453
      %v9535 = vpop.f32.mrf.mxu0
      %v9536 = vadd.f32 %v9507, %v9535
      %v9537 = vpop.f32.mrf.mxu0
      %v9538 = vadd.f32 %v9509, %v9537
      %9539 = vmatmul.bf16.gmra.mxu0 %v9456
      %v9540 = vpop.f32.mrf.mxu0
      %v9541 = vadd.f32 %v9512, %v9540
      %v9542 = vpop.f32.mrf.mxu0
      %v9543 = vadd.f32 %v9514, %v9542
      %9544 = vdwg.mxu0
      %v9545 = vmax.f32 %v9526, 0.0
      %v9546 = vmax.f32 %v9528, 0.0
      %v9547 = vmax.f32 %v9531, 0.0
      %v9548 = vmax.f32 %v9533, 0.0
      %v9549 = vmax.f32 %v9536, 0.0
      %v9550 = vmax.f32 %v9538, 0.0
      %v9551 = vmax.f32 %v9541, 0.0
      %v9552 = vmax.f32 %v9543, 0.0
      %9553 = vst.msk [vmem:[%s8156 + $0x1] sm:$0xff] %vm442, %v9545
      %9554 = vst.msk [vmem:[%s8156 + $0x11] sm:$0xff] %vm442, %v9546
      %9555 = vst.msk [vmem:[%s8156 + $0x21] sm:$0xff] %vm442, %v9547
      %9556 = vst.msk [vmem:[%s8156 + $0x31] sm:$0xff] %vm442, %v9548
      %9557 = vst.msk [vmem:[%s8156 + $0x41] sm:$0xff] %vm442, %v9549
      %9558 = vst.msk [vmem:[%s8156 + $0x51] sm:$0xff] %vm442, %v9550
      %9559 = vst.msk [vmem:[%s8156 + $0x61] sm:$0xff] %vm442, %v9551
      %9560 = vst.msk [vmem:[%s8156 + $0x71] sm:$0xff] %vm442, %v9552
      %v9561 = vld [vmem:[%s9] sm:$0xf]
      %v9562 = vld [vmem:[%s9 + $0x4] sm:$0xf]
      %v9563 = vld [vmem:[%s9 + $0x8] sm:$0xf]
      %v9564 = vld [vmem:[%s9 + $0xc] sm:$0xf]
      %v9565 = vld [vmem:[%s9 + $0x10] sm:$0xf]
      %v9566 = vld [vmem:[%s9 + $0x14] sm:$0xf]
      %v9567 = vld [vmem:[%s9 + $0x18] sm:$0xf]
      %v9568 = vld [vmem:[%s9 + $0x1c] sm:$0xf]
      %v9569 = vld [vmem:[%s9 + $0x20] sm:$0xf]
      %v9570 = vld [vmem:[%s9 + $0x24] sm:$0xf]
      %v9571 = vld [vmem:[%s9 + $0x28] sm:$0xf]
      %v9572 = vld [vmem:[%s9 + $0x2c] sm:$0xf]
      %v9573 = vld [vmem:[%s9 + $0x30] sm:$0xf]
      %v9574 = vld [vmem:[%s9 + $0x34] sm:$0xf]
      %v9575 = vld [vmem:[%s9 + $0x38] sm:$0xf]
      %v9576 = vld [vmem:[%s9 + $0x3c] sm:$0xf]
      %v9577 = vld [vmem:[%s9 + $0x40] sm:$0xf]
      %v9578 = vld [vmem:[%s9 + $0x44] sm:$0xf]
      %v9579 = vld [vmem:[%s9 + $0x48] sm:$0xf]
      %v9580 = vld [vmem:[%s9 + $0x4c] sm:$0xf]
      %v9581 = vld [vmem:[%s9 + $0x50] sm:$0xf]
      %v9582 = vld [vmem:[%s9 + $0x54] sm:$0xf]
      %v9583 = vld [vmem:[%s9 + $0x58] sm:$0xf]
      %v9584 = vld [vmem:[%s9 + $0x5c] sm:$0xf]
      %v9585 = vld [vmem:[%s9 + $0x60] sm:$0xf]
      %v9586 = vld [vmem:[%s9 + $0x64] sm:$0xf]
      %v9587 = vld [vmem:[%s9 + $0x68] sm:$0xf]
      %v9588 = vld [vmem:[%s9 + $0x6c] sm:$0xf]
      %v9589 = vld [vmem:[%s9 + $0x70] sm:$0xf]
      %v9590 = vld [vmem:[%s9 + $0x74] sm:$0xf]
      %v9591 = vld [vmem:[%s9 + $0x78] sm:$0xf]
      %v9592 = vld [vmem:[%s9 + $0x7c] sm:$0xf]
      %v9593 = vld [vmem:[%s9 + $0x80] sm:$0xf]
      %v9594 = vld [vmem:[%s9 + $0x84] sm:$0xf]
      %v9595 = vld [vmem:[%s9 + $0x88] sm:$0xf]
      %v9596 = vld [vmem:[%s9 + $0x8c] sm:$0xf]
      %v9597 = vld [vmem:[%s11] sm:$0x3]
      %v9598 = vld [vmem:[#allocation3] sm:$0xff]
      %v9599 = vld [vmem:[#allocation3 + $0x10] sm:$0xff]
      %v9600 = vld [vmem:[#allocation3 + $0x20] sm:$0xff]
      %v9601 = vld [vmem:[#allocation3 + $0x30] sm:$0xff]
      %v9602 = vld [vmem:[#allocation3 + $0x40] sm:$0xff]
      %v9603 = vld [vmem:[#allocation3 + $0x50] sm:$0xff]
      %v9604 = vld [vmem:[#allocation3 + $0x60] sm:$0xff]
      %v9605 = vld [vmem:[#allocation3 + $0x70] sm:$0xff]
      %v9606 = vpack.c.bf16 %v9598, %v9598
      %v9607 = vpack.c.bf16 %v9599, %v9599
      %v9608 = vpack.c.bf16 %v9600, %v9600
      %v9609 = vpack.c.bf16 %v9601, %v9601
      %v9610 = vpack.c.bf16 %v9602, %v9602
      %v9611 = vpack.c.bf16 %v9603, %v9603
      %v9612 = vpack.c.bf16 %v9604, %v9604
      %v9613 = vpack.c.bf16 %v9605, %v9605
      %v9614 = vld [vmem:[#allocation3 + $0x1] sm:$0xff]
      %v9615 = vld [vmem:[#allocation3 + $0x11] sm:$0xff]
      %v9616 = vld [vmem:[#allocation3 + $0x21] sm:$0xff]
      %v9617 = vld [vmem:[#allocation3 + $0x31] sm:$0xff]
      %v9618 = vld [vmem:[#allocation3 + $0x41] sm:$0xff]
      %v9619 = vld [vmem:[#allocation3 + $0x51] sm:$0xff]
      %v9620 = vld [vmem:[#allocation3 + $0x61] sm:$0xff]
      %v9621 = vld [vmem:[#allocation3 + $0x71] sm:$0xff]
      %v9622 = vpack.c.bf16 %v9614, %v9614
      %v9623 = vpack.c.bf16 %v9615, %v9615
      %v9624 = vpack.c.bf16 %v9616, %v9616
      %v9625 = vpack.c.bf16 %v9617, %v9617
      %v9626 = vpack.c.bf16 %v9618, %v9618
      %v9627 = vpack.c.bf16 %v9619, %v9619
      %v9628 = vpack.c.bf16 %v9620, %v9620
      %v9629 = vpack.c.bf16 %v9621, %v9621
      %v9630 = vld [vmem:[%s8156] sm:$0xff]
      %v9631 = vld [vmem:[%s8156 + $0x10] sm:$0xff]
      %v9632 = vld [vmem:[%s8156 + $0x20] sm:$0xff]
      %v9633 = vld [vmem:[%s8156 + $0x30] sm:$0xff]
      %v9634 = vld [vmem:[%s8156 + $0x40] sm:$0xff]
      %v9635 = vld [vmem:[%s8156 + $0x50] sm:$0xff]
      %v9636 = vld [vmem:[%s8156 + $0x60] sm:$0xff]
      %v9637 = vld [vmem:[%s8156 + $0x70] sm:$0xff]
      %v9638 = vpack.c.bf16 %v9630, %v9630
      %v9639 = vpack.c.bf16 %v9631, %v9631
      %v9640 = vpack.c.bf16 %v9632, %v9632
      %v9641 = vpack.c.bf16 %v9633, %v9633
      %v9642 = vpack.c.bf16 %v9634, %v9634
      %v9643 = vpack.c.bf16 %v9635, %v9635
      %v9644 = vpack.c.bf16 %v9636, %v9636
      %v9645 = vpack.c.bf16 %v9637, %v9637
      %v9646 = vld [vmem:[%s8156 + $0x1] sm:$0xff]
      %v9647 = vld [vmem:[%s8156 + $0x11] sm:$0xff]
      %v9648 = vld [vmem:[%s8156 + $0x21] sm:$0xff]
      %v9649 = vld [vmem:[%s8156 + $0x31] sm:$0xff]
      %v9650 = vld [vmem:[%s8156 + $0x41] sm:$0xff]
      %v9651 = vld [vmem:[%s8156 + $0x51] sm:$0xff]
      %v9652 = vld [vmem:[%s8156 + $0x61] sm:$0xff]
      %v9653 = vld [vmem:[%s8156 + $0x71] sm:$0xff]
      %v9654 = vpack.c.bf16 %v9646, %v9646
      %v9655 = vpack.c.bf16 %v9647, %v9647
      %v9656 = vpack.c.bf16 %v9648, %v9648
      %v9657 = vpack.c.bf16 %v9649, %v9649
      %v9658 = vpack.c.bf16 %v9650, %v9650
      %v9659 = vpack.c.bf16 %v9651, %v9651
      %v9660 = vpack.c.bf16 %v9652, %v9652
      %v9661 = vpack.c.bf16 %v9653, %v9653
      %v9670 = vunpack.c.l.b16 %v9606
      %v9671 = vunpack.c.l.b16 %v9607
      %v9672 = vunpack.c.l.b16 %v9608
      %v9673 = vunpack.c.l.b16 %v9609
      %v9674 = vunpack.c.l.b16 %v9610
      %v9675 = vunpack.c.l.b16 %v9611
      %v9676 = vunpack.c.l.b16 %v9612
      %v9677 = vunpack.c.l.b16 %v9613
      %v9678 = vpack.c.b16 %v9671, %v9670
      %v9679 = vpack.c.b16 %v9673, %v9672
      %v9680 = vpack.c.b16 %v9675, %v9674
      %v9681 = vpack.c.b16 %v9677, %v9676
      %v9690 = vunpack.c.l.b16 %v9622
      %v9691 = vunpack.c.l.b16 %v9623
      %v9692 = vunpack.c.l.b16 %v9624
      %v9693 = vunpack.c.l.b16 %v9625
      %v9694 = vunpack.c.l.b16 %v9626
      %v9695 = vunpack.c.l.b16 %v9627
      %v9696 = vunpack.c.l.b16 %v9628
      %v9697 = vunpack.c.l.b16 %v9629
      %v9698 = vpack.c.b16 %v9691, %v9690
      %v9699 = vpack.c.b16 %v9693, %v9692
      %v9700 = vpack.c.b16 %v9695, %v9694
      %v9701 = vpack.c.b16 %v9697, %v9696
      %9702 = vrot.lane.b32.xlu0 %v9698, 32
      %v9703 = vpop.permute.xlu0 %9702
      %9704 = vrot.lane.b32.xlu0 %v9699, 32
      %v9705 = vpop.permute.xlu0 %9704
      %9706 = vrot.lane.b32.xlu0 %v9700, 32
      %v9707 = vpop.permute.xlu0 %9706
      %9708 = vrot.lane.b32.xlu0 %v9701, 32
      %v9709 = vpop.permute.xlu0 %9708
      %9710 = vrot.lane.b32.xlu0 %v9698, 64
      %v9711 = vpop.permute.xlu0 %9710
      %9712 = vrot.lane.b32.xlu0 %v9699, 64
      %v9713 = vpop.permute.xlu0 %9712
      %9714 = vrot.lane.b32.xlu0 %v9700, 64
      %v9715 = vpop.permute.xlu0 %9714
      %9716 = vrot.lane.b32.xlu0 %v9701, 64
      %v9717 = vpop.permute.xlu0 %9716
      %v9726 = vunpack.c.l.b16 %v9638
      %v9727 = vunpack.c.l.b16 %v9639
      %v9728 = vunpack.c.l.b16 %v9640
      %v9729 = vunpack.c.l.b16 %v9641
      %v9730 = vunpack.c.l.b16 %v9642
      %v9731 = vunpack.c.l.b16 %v9643
      %v9732 = vunpack.c.l.b16 %v9644
      %v9733 = vunpack.c.l.b16 %v9645
      %v9734 = vpack.c.b16 %v9727, %v9726
      %v9735 = vpack.c.b16 %v9729, %v9728
      %v9736 = vpack.c.b16 %v9731, %v9730
      %v9737 = vpack.c.b16 %v9733, %v9732
      %9738 = vrot.lane.b32.xlu0 %v9734, 96
      %v9739 = vpop.permute.xlu0 %9738
      %9740 = vrot.lane.b32.xlu0 %v9735, 96
      %v9741 = vpop.permute.xlu0 %9740
      %9742 = vrot.lane.b32.xlu0 %v9736, 96
      %v9743 = vpop.permute.xlu0 %9742
      %9744 = vrot.lane.b32.xlu0 %v9737, 96
      %v9745 = vpop.permute.xlu0 %9744
      %v9754 = vunpack.c.l.b16 %v9654
      %v9755 = vunpack.c.l.b16 %v9655
      %v9756 = vunpack.c.l.b16 %v9656
      %v9757 = vunpack.c.l.b16 %v9657
      %v9758 = vunpack.c.l.b16 %v9658
      %v9759 = vunpack.c.l.b16 %v9659
      %v9760 = vunpack.c.l.b16 %v9660
      %v9761 = vunpack.c.l.b16 %v9661
      %v9762 = vpack.c.b16 %v9755, %v9754
      %v9763 = vpack.c.b16 %v9757, %v9756
      %v9764 = vpack.c.b16 %v9759, %v9758
      %v9765 = vpack.c.b16 %v9761, %v9760
      %9766 = vrot.lane.b32.xlu0 %v9762, 32
      %v9767 = vpop.permute.xlu0 %9766
      %9768 = vrot.lane.b32.xlu0 %v9763, 32
      %v9769 = vpop.permute.xlu0 %9768
      %9770 = vrot.lane.b32.xlu0 %v9764, 32
      %v9771 = vpop.permute.xlu0 %9770
      %9772 = vrot.lane.b32.xlu0 %v9765, 32
      %v9773 = vpop.permute.xlu0 %9772
      %9774 = vrot.lane.b32.xlu0 %v9734, 64
      %v9775 = vpop.permute.xlu0 %9774
      %9776 = vrot.lane.b32.xlu0 %v9735, 64
      %v9777 = vpop.permute.xlu0 %9776
      %9778 = vrot.lane.b32.xlu0 %v9736, 64
      %v9779 = vpop.permute.xlu0 %9778
      %9780 = vrot.lane.b32.xlu0 %v9737, 64
      %v9781 = vpop.permute.xlu0 %9780
      %9782 = vrot.lane.b32.xlu0 %v9762, 96
      %v9783 = vpop.permute.xlu0 %9782
      %9784 = vrot.lane.b32.xlu0 %v9763, 96
      %v9785 = vpop.permute.xlu0 %9784
      %9786 = vrot.lane.b32.xlu0 %v9764, 96
      %v9787 = vpop.permute.xlu0 %9786
      %9788 = vrot.lane.b32.xlu0 %v9765, 96
      %v9789 = vpop.permute.xlu0 %9788
      %v9792 = vsel %vm442, %v9678, %v9703
      %v9795 = vsel %vm442, %v9679, %v9705
      %v9798 = vsel %vm442, %v9680, %v9707
      %v9801 = vsel %vm442, %v9681, %v9709
      %v9803 = vsel %vm2157, %v9792, %v9711
      %v9805 = vsel %vm2157, %v9795, %v9713
      %v9807 = vsel %vm2157, %v9798, %v9715
      %v9809 = vsel %vm2157, %v9801, %v9717
      %v9811 = vsel %vm2190, %v9803, %v9739
      %v9814 = vsel %vm2190, %v9805, %v9741
      %v9817 = vsel %vm2190, %v9807, %v9743
      %v9820 = vsel %vm2190, %v9809, %v9745
      %v9824 = vsel %vm442, %v9762, %v9767
      %v9827 = vsel %vm442, %v9763, %v9769
      %v9830 = vsel %vm442, %v9764, %v9771
      %v9833 = vsel %vm442, %v9765, %v9773
      %v9835 = vsel %vm2157, %v9824, %v9775
      %v9837 = vsel %vm2157, %v9827, %v9777
      %v9839 = vsel %vm2157, %v9830, %v9779
      %v9841 = vsel %vm2157, %v9833, %v9781
      %v9843 = vsel %vm2190, %v9835, %v9783
      %v9846 = vsel %vm2190, %v9837, %v9785
      %v9849 = vsel %vm2190, %v9839, %v9787
      %v9852 = vsel %vm2190, %v9841, %v9789
      %v9854 = vld [vmem:[%s10] sm:$0x1]
      %v9856 = vperm.slane %v9854, 0
      %v9894 = vunpack.c.l.b16 %v9561
      %v9895 = vunpack.c.l.b16 %v9562
      %v9896 = vunpack.c.l.b16 %v9563
      %v9897 = vunpack.c.l.b16 %v9564
      %v9898 = vunpack.c.l.b16 %v9565
      %v9899 = vunpack.c.l.b16 %v9566
      %v9900 = vunpack.c.l.b16 %v9567
      %v9901 = vunpack.c.l.b16 %v9568
      %v9902 = vunpack.c.l.b16 %v9569
      %v9903 = vunpack.c.l.b16 %v9570
      %v9904 = vunpack.c.l.b16 %v9571
      %v9905 = vunpack.c.l.b16 %v9572
      %v9906 = vunpack.c.l.b16 %v9573
      %v9907 = vunpack.c.l.b16 %v9574
      %v9908 = vunpack.c.l.b16 %v9575
      %v9909 = vunpack.c.l.b16 %v9576
      %v9910 = vunpack.c.l.b16 %v9577
      %v9911 = vunpack.c.l.b16 %v9578
      %v9912 = vunpack.c.l.b16 %v9579
      %v9913 = vunpack.c.l.b16 %v9580
      %v9914 = vunpack.c.l.b16 %v9581
      %v9915 = vunpack.c.l.b16 %v9582
      %v9916 = vunpack.c.l.b16 %v9583
      %v9917 = vunpack.c.l.b16 %v9584
      %v9918 = vunpack.c.l.b16 %v9585
      %v9919 = vunpack.c.l.b16 %v9586
      %v9920 = vunpack.c.l.b16 %v9587
      %v9921 = vunpack.c.l.b16 %v9588
      %v9922 = vunpack.c.l.b16 %v9589
      %v9923 = vunpack.c.l.b16 %v9590
      %v9924 = vunpack.c.l.b16 %v9591
      %v9925 = vunpack.c.l.b16 %v9592
      %v9926 = vunpack.c.l.b16 %v9593
      %v9927 = vunpack.c.l.b16 %v9594
      %v9928 = vunpack.c.l.b16 %v9595
      %v9929 = vunpack.c.l.b16 %v9596
      %v9930 = vpack.c.b16 %v9895, %v9894
      %v9931 = vpack.c.b16 %v9897, %v9896
      %v9932 = vpack.c.b16 %v9899, %v9898
      %v9933 = vpack.c.b16 %v9901, %v9900
      %v9934 = vpack.c.b16 %v9903, %v9902
      %v9935 = vpack.c.b16 %v9905, %v9904
      %v9936 = vpack.c.b16 %v9907, %v9906
      %v9937 = vpack.c.b16 %v9909, %v9908
      %v9938 = vpack.c.b16 %v9911, %v9910
      %v9939 = vpack.c.b16 %v9913, %v9912
      %v9940 = vpack.c.b16 %v9915, %v9914
      %v9941 = vpack.c.b16 %v9917, %v9916
      %v9942 = vpack.c.b16 %v9919, %v9918
      %v9943 = vpack.c.b16 %v9921, %v9920
      %v9944 = vpack.c.b16 %v9923, %v9922
      %v9945 = vpack.c.b16 %v9925, %v9924
      %v9946 = vpack.c.b16 %v9927, %v9926
      %v9947 = vpack.c.b16 %v9929, %v9928
      %v9966 = vsel %vm442, %v9762, 0
      %v9968 = vsel %vm442, %v9763, 0
      %v9970 = vsel %vm442, %v9764, 0
      %v9972 = vsel %vm442, %v9765, 0
      %9974 = vmatpush.bf16.msra.mxu0 %v9937
      %9975 = vmatpush.bf16.msra.mxu0 %v9936
      %9976 = vmatpush.bf16.msra.mxu0 %v9935
      %9977 = vmatpush.bf16.msra.mxu0 %v9934
      %9978 = vmatpush.bf16.msra.mxu0 %v9933
      %9979 = vmatpush.bf16.msra.mxu0 %v9932
      %9980 = vmatpush.bf16.msra.mxu0 %v9931
      %9981 = vmatpush.bf16.msra.mxu0 %v9930
      %9982 = vmatmul.bf16.gmra.mxu0 %v9811
      %v9983 = vpop.f32.mrf.mxu0
      %v9984 = vadd.f32 %v9856, %v9983
      %v9985 = vpop.f32.mrf.mxu0
      %v9986 = vadd.f32 %v9856, %v9985
      %9987 = vmatmul.bf16.gmra.mxu0 %v9814
      %v9988 = vpop.f32.mrf.mxu0
      %v9989 = vadd.f32 %v9856, %v9988
      %v9990 = vpop.f32.mrf.mxu0
      %v9991 = vadd.f32 %v9856, %v9990
      %9992 = vmatmul.bf16.gmra.mxu0 %v9817
      %v9993 = vpop.f32.mrf.mxu0
      %v9994 = vadd.f32 %v9856, %v9993
      %v9995 = vpop.f32.mrf.mxu0
      %v9996 = vadd.f32 %v9856, %v9995
      %9997 = vmatmul.bf16.gmra.mxu0 %v9820
      %v9998 = vpop.f32.mrf.mxu0
      %v9999 = vadd.f32 %v9856, %v9998
      %v10000 = vpop.f32.mrf.mxu0
      %v10001 = vadd.f32 %v9856, %v10000
      %10002 = vdwg.mxu0
      %10003 = vmatpush.bf16.msra.mxu0 %v9945
      %10004 = vmatpush.bf16.msra.mxu0 %v9944
      %10005 = vmatpush.bf16.msra.mxu0 %v9943
      %10006 = vmatpush.bf16.msra.mxu0 %v9942
      %10007 = vmatpush.bf16.msra.mxu0 %v9941
      %10008 = vmatpush.bf16.msra.mxu0 %v9940
      %10009 = vmatpush.bf16.msra.mxu0 %v9939
      %10010 = vmatpush.bf16.msra.mxu0 %v9938
      %10011 = vmatmul.bf16.gmra.mxu0 %v9843
      %v10012 = vpop.f32.mrf.mxu0
      %v10013 = vadd.f32 %v9984, %v10012
      %v10014 = vpop.f32.mrf.mxu0
      %v10015 = vadd.f32 %v9986, %v10014
      %10016 = vmatmul.bf16.gmra.mxu0 %v9846
      %v10017 = vpop.f32.mrf.mxu0
      %v10018 = vadd.f32 %v9989, %v10017
      %v10019 = vpop.f32.mrf.mxu0
      %v10020 = vadd.f32 %v9991, %v10019
      %10021 = vmatmul.bf16.gmra.mxu0 %v9849
      %v10022 = vpop.f32.mrf.mxu0
      %v10023 = vadd.f32 %v9994, %v10022
      %v10024 = vpop.f32.mrf.mxu0
      %v10025 = vadd.f32 %v9996, %v10024
      %10026 = vmatmul.bf16.gmra.mxu0 %v9852
      %v10027 = vpop.f32.mrf.mxu0
      %v10028 = vadd.f32 %v9999, %v10027
      %v10029 = vpop.f32.mrf.mxu0
      %v10030 = vadd.f32 %v10001, %v10029
      %10031 = vdwg.mxu0
      %10032 = vmatpush.bf16.msra.mxu0 0
      %10033 = vmatpush.bf16.msra.mxu0 0
      %10034 = vmatpush.bf16.msra.mxu0 0
      %10035 = vmatpush.bf16.msra.mxu0 0
      %10036 = vmatpush.bf16.msra.mxu0 0
      %10037 = vmatpush.bf16.msra.mxu0 0
      %10038 = vmatpush.bf16.msra.mxu0 %v9947
      %10039 = vmatpush.bf16.msra.mxu0 %v9946
      %10040 = vmatmul.bf16.gmra.mxu0 %v9966
      %v10041 = vpop.f32.mrf.mxu0
      %v10042 = vadd.f32 %v10013, %v10041
      %v10043 = vpop.f32.mrf.mxu0
      %v10044 = vadd.f32 %v10015, %v10043
      %10045 = vmatmul.bf16.gmra.mxu0 %v9968
      %v10046 = vpop.f32.mrf.mxu0
      %v10047 = vadd.f32 %v10018, %v10046
      %v10048 = vpop.f32.mrf.mxu0
      %v10049 = vadd.f32 %v10020, %v10048
      %10050 = vmatmul.bf16.gmra.mxu0 %v9970
      %v10051 = vpop.f32.mrf.mxu0
      %v10052 = vadd.f32 %v10023, %v10051
      %v10053 = vpop.f32.mrf.mxu0
      %v10054 = vadd.f32 %v10025, %v10053
      %10055 = vmatmul.bf16.gmra.mxu0 %v9972
      %v10056 = vpop.f32.mrf.mxu0
      %v10057 = vadd.f32 %v10028, %v10056
      %v10058 = vpop.f32.mrf.mxu0
      %v10059 = vadd.f32 %v10030, %v10058
      %10060 = vdwg.mxu0
      %v10061 = vmax.f32 %v10042, 0.0
      %v10062 = vmax.f32 %v10044, 0.0
      %v10063 = vmax.f32 %v10047, 0.0
      %v10064 = vmax.f32 %v10049, 0.0
      %v10065 = vmax.f32 %v10052, 0.0
      %v10066 = vmax.f32 %v10054, 0.0
      %v10067 = vmax.f32 %v10057, 0.0
      %v10068 = vmax.f32 %v10059, 0.0
      %v10069 = vpack.c.bf16 %v10062, %v10061
      %v10070 = vpack.c.bf16 %v10064, %v10063
      %v10071 = vpack.c.bf16 %v10066, %v10065
      %v10072 = vpack.c.bf16 %v10068, %v10067
      %v10074 = vsel %vm442, %v9597, 0
      %v10077 = vsel %vm442, %v10069, 0
      %v10080 = vsel %vm442, %v10070, 0
      %v10083 = vsel %vm442, %v10071, 0
      %v10086 = vsel %vm442, %v10072, 0
      %10088 = vmatpush.bf16.xpose.msra.mxu0 0
      %10089 = vmatpush.bf16.xpose.msra.mxu0 0
      %10090 = vmatpush.bf16.xpose.msra.mxu0 0
      %10091 = vmatpush.bf16.xpose.msra.mxu0 0
      %10092 = vmatpush.bf16.xpose.msra.mxu0 %v10086
      %10093 = vmatpush.bf16.xpose.msra.mxu0 %v10083
      %10094 = vmatpush.bf16.xpose.msra.mxu0 %v10080
      %10095 = vmatpush.bf16.xpose.msra.mxu0 %v10077
      %10096 = vmatmul.bf16.gmra.mxu0 %v10074
      %v10097 = vpop.f32.mrf.mxu0
      %v10098 = vadd.f32 0.0, %v10097
      %v10099 = vpop.f32.mrf.mxu0
      %10100 = vdwg.mxu0
      %v10101 = vld [vmem:[#allocation3 + $0x2] sm:$0xff]
      %v10102 = vld [vmem:[#allocation3 + $0x12] sm:$0xff]
      %v10103 = vld [vmem:[#allocation3 + $0x22] sm:$0xff]
      %v10104 = vld [vmem:[#allocation3 + $0x32] sm:$0xff]
      %v10105 = vld [vmem:[#allocation3 + $0x42] sm:$0xff]
      %v10106 = vld [vmem:[#allocation3 + $0x52] sm:$0xff]
      %v10107 = vld [vmem:[#allocation3 + $0x62] sm:$0xff]
      %v10108 = vld [vmem:[#allocation3 + $0x72] sm:$0xff]
      %v10109 = vpack.c.bf16 %v10101, %v10101
      %v10110 = vpack.c.bf16 %v10102, %v10102
      %v10111 = vpack.c.bf16 %v10103, %v10103
      %v10112 = vpack.c.bf16 %v10104, %v10104
      %v10113 = vpack.c.bf16 %v10105, %v10105
      %v10114 = vpack.c.bf16 %v10106, %v10106
      %v10115 = vpack.c.bf16 %v10107, %v10107
      %v10116 = vpack.c.bf16 %v10108, %v10108
      %v10117 = vld [vmem:[%s8156 + $0x2] sm:$0xff]
      %v10118 = vld [vmem:[%s8156 + $0x12] sm:$0xff]
      %v10119 = vld [vmem:[%s8156 + $0x22] sm:$0xff]
      %v10120 = vld [vmem:[%s8156 + $0x32] sm:$0xff]
      %v10121 = vld [vmem:[%s8156 + $0x42] sm:$0xff]
      %v10122 = vld [vmem:[%s8156 + $0x52] sm:$0xff]
      %v10123 = vld [vmem:[%s8156 + $0x62] sm:$0xff]
      %v10124 = vld [vmem:[%s8156 + $0x72] sm:$0xff]
      %v10125 = vpack.c.bf16 %v10117, %v10117
      %v10126 = vpack.c.bf16 %v10118, %v10118
      %v10127 = vpack.c.bf16 %v10119, %v10119
      %v10128 = vpack.c.bf16 %v10120, %v10120
      %v10129 = vpack.c.bf16 %v10121, %v10121
      %v10130 = vpack.c.bf16 %v10122, %v10122
      %v10131 = vpack.c.bf16 %v10123, %v10123
      %v10132 = vpack.c.bf16 %v10124, %v10124
      %v10141 = vunpack.c.l.b16 %v10109
      %v10142 = vunpack.c.l.b16 %v10110
      %v10143 = vunpack.c.l.b16 %v10111
      %v10144 = vunpack.c.l.b16 %v10112
      %v10145 = vunpack.c.l.b16 %v10113
      %v10146 = vunpack.c.l.b16 %v10114
      %v10147 = vunpack.c.l.b16 %v10115
      %v10148 = vunpack.c.l.b16 %v10116
      %v10149 = vpack.c.b16 %v10142, %v10141
      %v10150 = vpack.c.b16 %v10144, %v10143
      %v10151 = vpack.c.b16 %v10146, %v10145
      %v10152 = vpack.c.b16 %v10148, %v10147
      %10153 = vrot.lane.b32.xlu0 %v10149, 64
      %v10154 = vpop.permute.xlu0 %10153
      %10155 = vrot.lane.b32.xlu0 %v10150, 64
      %v10156 = vpop.permute.xlu0 %10155
      %10157 = vrot.lane.b32.xlu0 %v10151, 64
      %v10158 = vpop.permute.xlu0 %10157
      %10159 = vrot.lane.b32.xlu0 %v10152, 64
      %v10160 = vpop.permute.xlu0 %10159
      %v10169 = vunpack.c.l.b16 %v10125
      %v10170 = vunpack.c.l.b16 %v10126
      %v10171 = vunpack.c.l.b16 %v10127
      %v10172 = vunpack.c.l.b16 %v10128
      %v10173 = vunpack.c.l.b16 %v10129
      %v10174 = vunpack.c.l.b16 %v10130
      %v10175 = vunpack.c.l.b16 %v10131
      %v10176 = vunpack.c.l.b16 %v10132
      %v10177 = vpack.c.b16 %v10170, %v10169
      %v10178 = vpack.c.b16 %v10172, %v10171
      %v10179 = vpack.c.b16 %v10174, %v10173
      %v10180 = vpack.c.b16 %v10176, %v10175
      %10181 = vrot.lane.b32.xlu0 %v10177, 32
      %v10182 = vpop.permute.xlu0 %10181
      %10183 = vrot.lane.b32.xlu0 %v10178, 32
      %v10184 = vpop.permute.xlu0 %10183
      %10185 = vrot.lane.b32.xlu0 %v10179, 32
      %v10186 = vpop.permute.xlu0 %10185
      %10187 = vrot.lane.b32.xlu0 %v10180, 32
      %v10188 = vpop.permute.xlu0 %10187
      %10189 = vrot.lane.b32.xlu0 %v9762, 64
      %v10190 = vpop.permute.xlu0 %10189
      %10191 = vrot.lane.b32.xlu0 %v9763, 64
      %v10192 = vpop.permute.xlu0 %10191
      %10193 = vrot.lane.b32.xlu0 %v9764, 64
      %v10194 = vpop.permute.xlu0 %10193
      %10195 = vrot.lane.b32.xlu0 %v9765, 64
      %v10196 = vpop.permute.xlu0 %10195
      %v10198 = vsel %vm442, %v9698, %v9703
      %v10200 = vsel %vm442, %v9699, %v9705
      %v10202 = vsel %vm442, %v9700, %v9707
      %v10204 = vsel %vm442, %v9701, %v9709
      %v10206 = vsel %vm2157, %v10198, %v10154
      %v10208 = vsel %vm2157, %v10200, %v10156
      %v10210 = vsel %vm2157, %v10202, %v10158
      %v10212 = vsel %vm2157, %v10204, %v10160
      %v10213 = vsel %vm2190, %v10206, %v9783
      %v10215 = vsel %vm2190, %v10208, %v9785
      %v10217 = vsel %vm2190, %v10210, %v9787
      %v10219 = vsel %vm2190, %v10212, %v9789
      %v10222 = vsel %vm442, %v9762, %v10182
      %v10224 = vsel %vm442, %v9763, %v10184
      %v10226 = vsel %vm442, %v9764, %v10186
      %v10228 = vsel %vm442, %v9765, %v10188
      %v10230 = vsel %vm2157, %v10222, %v10190
      %v10232 = vsel %vm2157, %v10224, %v10192
      %v10234 = vsel %vm2157, %v10226, %v10194
      %v10236 = vsel %vm2157, %v10228, %v10196
      %v10237 = vsel %vm2190, %v10230, %v9783
      %v10239 = vsel %vm2190, %v10232, %v9785
      %v10241 = vsel %vm2190, %v10234, %v9787
      %v10243 = vsel %vm2190, %v10236, %v9789
      %v10246 = vsel %vm442, %v10177, 0
      %v10249 = vsel %vm442, %v10178, 0
      %v10252 = vsel %vm442, %v10179, 0
      %v10255 = vsel %vm442, %v10180, 0
      %10257 = vmatpush.bf16.msra.mxu0 %v9937
      %10258 = vmatpush.bf16.msra.mxu0 %v9936
      %10259 = vmatpush.bf16.msra.mxu0 %v9935
      %10260 = vmatpush.bf16.msra.mxu0 %v9934
      %10261 = vmatpush.bf16.msra.mxu0 %v9933
      %10262 = vmatpush.bf16.msra.mxu0 %v9932
      %10263 = vmatpush.bf16.msra.mxu0 %v9931
      %10264 = vmatpush.bf16.msra.mxu0 %v9930
      %10265 = vmatmul.bf16.gmra.mxu0 %v10213
      %v10266 = vpop.f32.mrf.mxu0
      %v10267 = vadd.f32 %v9856, %v10266
      %v10268 = vpop.f32.mrf.mxu0
      %v10269 = vadd.f32 %v9856, %v10268
      %10270 = vmatmul.bf16.gmra.mxu0 %v10215
      %v10271 = vpop.f32.mrf.mxu0
      %v10272 = vadd.f32 %v9856, %v10271
      %v10273 = vpop.f32.mrf.mxu0
      %v10274 = vadd.f32 %v9856, %v10273
      %10275 = vmatmul.bf16.gmra.mxu0 %v10217
      %v10276 = vpop.f32.mrf.mxu0
      %v10277 = vadd.f32 %v9856, %v10276
      %v10278 = vpop.f32.mrf.mxu0
      %v10279 = vadd.f32 %v9856, %v10278
      %10280 = vmatmul.bf16.gmra.mxu0 %v10219
      %v10281 = vpop.f32.mrf.mxu0
      %v10282 = vadd.f32 %v9856, %v10281
      %v10283 = vpop.f32.mrf.mxu0
      %v10284 = vadd.f32 %v9856, %v10283
      %10285 = vdwg.mxu0
      %10286 = vmatpush.bf16.msra.mxu0 %v9945
      %10287 = vmatpush.bf16.msra.mxu0 %v9944
      %10288 = vmatpush.bf16.msra.mxu0 %v9943
      %10289 = vmatpush.bf16.msra.mxu0 %v9942
      %10290 = vmatpush.bf16.msra.mxu0 %v9941
      %10291 = vmatpush.bf16.msra.mxu0 %v9940
      %10292 = vmatpush.bf16.msra.mxu0 %v9939
      %10293 = vmatpush.bf16.msra.mxu0 %v9938
      %10294 = vmatmul.bf16.gmra.mxu0 %v10237
      %v10295 = vpop.f32.mrf.mxu0
      %v10296 = vadd.f32 %v10267, %v10295
      %v10297 = vpop.f32.mrf.mxu0
      %v10298 = vadd.f32 %v10269, %v10297
      %10299 = vmatmul.bf16.gmra.mxu0 %v10239
      %v10300 = vpop.f32.mrf.mxu0
      %v10301 = vadd.f32 %v10272, %v10300
      %v10302 = vpop.f32.mrf.mxu0
      %v10303 = vadd.f32 %v10274, %v10302
      %10304 = vmatmul.bf16.gmra.mxu0 %v10241
      %v10305 = vpop.f32.mrf.mxu0
      %v10306 = vadd.f32 %v10277, %v10305
      %v10307 = vpop.f32.mrf.mxu0
      %v10308 = vadd.f32 %v10279, %v10307
      %10309 = vmatmul.bf16.gmra.mxu0 %v10243
      %v10310 = vpop.f32.mrf.mxu0
      %v10311 = vadd.f32 %v10282, %v10310
      %v10312 = vpop.f32.mrf.mxu0
      %v10313 = vadd.f32 %v10284, %v10312
      %10314 = vdwg.mxu0
      %10315 = vmatpush.bf16.msra.mxu0 0
      %10316 = vmatpush.bf16.msra.mxu0 0
      %10317 = vmatpush.bf16.msra.mxu0 0
      %10318 = vmatpush.bf16.msra.mxu0 0
      %10319 = vmatpush.bf16.msra.mxu0 0
      %10320 = vmatpush.bf16.msra.mxu0 0
      %10321 = vmatpush.bf16.msra.mxu0 %v9947
      %10322 = vmatpush.bf16.msra.mxu0 %v9946
      %10323 = vmatmul.bf16.gmra.mxu0 %v10246
      %v10324 = vpop.f32.mrf.mxu0
      %v10325 = vadd.f32 %v10296, %v10324
      %v10326 = vpop.f32.mrf.mxu0
      %v10327 = vadd.f32 %v10298, %v10326
      %10328 = vmatmul.bf16.gmra.mxu0 %v10249
      %v10329 = vpop.f32.mrf.mxu0
      %v10330 = vadd.f32 %v10301, %v10329
      %v10331 = vpop.f32.mrf.mxu0
      %v10332 = vadd.f32 %v10303, %v10331
      %10333 = vmatmul.bf16.gmra.mxu0 %v10252
      %v10334 = vpop.f32.mrf.mxu0
      %v10335 = vadd.f32 %v10306, %v10334
      %v10336 = vpop.f32.mrf.mxu0
      %v10337 = vadd.f32 %v10308, %v10336
      %10338 = vmatmul.bf16.gmra.mxu0 %v10255
      %v10339 = vpop.f32.mrf.mxu0
      %v10340 = vadd.f32 %v10311, %v10339
      %v10341 = vpop.f32.mrf.mxu0
      %v10342 = vadd.f32 %v10313, %v10341
      %10343 = vdwg.mxu0
      %v10344 = vmax.f32 %v10325, 0.0
      %v10345 = vmax.f32 %v10327, 0.0
      %v10346 = vmax.f32 %v10330, 0.0
      %v10347 = vmax.f32 %v10332, 0.0
      %v10348 = vmax.f32 %v10335, 0.0
      %v10349 = vmax.f32 %v10337, 0.0
      %v10350 = vmax.f32 %v10340, 0.0
      %v10351 = vmax.f32 %v10342, 0.0
      %v10352 = vpack.c.bf16 %v10345, %v10344
      %v10353 = vpack.c.bf16 %v10347, %v10346
      %v10354 = vpack.c.bf16 %v10349, %v10348
      %v10355 = vpack.c.bf16 %v10351, %v10350
      %v10357 = vsel %vm442, %v10352, 0
      %v10360 = vsel %vm442, %v10353, 0
      %v10363 = vsel %vm442, %v10354, 0
      %v10366 = vsel %vm442, %v10355, 0
      %10368 = vmatpush.bf16.xpose.msra.mxu0 0
      %10369 = vmatpush.bf16.xpose.msra.mxu0 0
      %10370 = vmatpush.bf16.xpose.msra.mxu0 0
      %10371 = vmatpush.bf16.xpose.msra.mxu0 0
      %10372 = vmatpush.bf16.xpose.msra.mxu0 %v10366
      %10373 = vmatpush.bf16.xpose.msra.mxu0 %v10363
      %10374 = vmatpush.bf16.xpose.msra.mxu0 %v10360
      %10375 = vmatpush.bf16.xpose.msra.mxu0 %v10357
      %10376 = vmatmul.bf16.gmra.mxu0 %v10074
      %v10377 = vpop.f32.mrf.mxu0
      %v10378 = vadd.f32 0.0, %v10377
      %v10379 = vpop.f32.mrf.mxu0
      %10380 = vdwg.mxu0
      %v10381 = vld [vmem:[%s8298] sm:$0xff]
      %v10382 = vld [vmem:[%s8298 + $0x10] sm:$0xff]
      %v10383 = vld [vmem:[%s8298 + $0x20] sm:$0xff]
      %v10384 = vld [vmem:[%s8298 + $0x30] sm:$0xff]
      %v10385 = vld [vmem:[%s8298 + $0x40] sm:$0xff]
      %v10386 = vld [vmem:[%s8298 + $0x50] sm:$0xff]
      %v10387 = vld [vmem:[%s8298 + $0x60] sm:$0xff]
      %v10388 = vld [vmem:[%s8298 + $0x70] sm:$0xff]
      %v10389 = vpack.c.bf16 %v10381, %v10381
      %v10390 = vpack.c.bf16 %v10382, %v10382
      %v10391 = vpack.c.bf16 %v10383, %v10383
      %v10392 = vpack.c.bf16 %v10384, %v10384
      %v10393 = vpack.c.bf16 %v10385, %v10385
      %v10394 = vpack.c.bf16 %v10386, %v10386
      %v10395 = vpack.c.bf16 %v10387, %v10387
      %v10396 = vpack.c.bf16 %v10388, %v10388
      %v10397 = vld [vmem:[%s8298 + $0x1] sm:$0xff]
      %v10398 = vld [vmem:[%s8298 + $0x11] sm:$0xff]
      %v10399 = vld [vmem:[%s8298 + $0x21] sm:$0xff]
      %v10400 = vld [vmem:[%s8298 + $0x31] sm:$0xff]
      %v10401 = vld [vmem:[%s8298 + $0x41] sm:$0xff]
      %v10402 = vld [vmem:[%s8298 + $0x51] sm:$0xff]
      %v10403 = vld [vmem:[%s8298 + $0x61] sm:$0xff]
      %v10404 = vld [vmem:[%s8298 + $0x71] sm:$0xff]
      %v10405 = vpack.c.bf16 %v10397, %v10397
      %v10406 = vpack.c.bf16 %v10398, %v10398
      %v10407 = vpack.c.bf16 %v10399, %v10399
      %v10408 = vpack.c.bf16 %v10400, %v10400
      %v10409 = vpack.c.bf16 %v10401, %v10401
      %v10410 = vpack.c.bf16 %v10402, %v10402
      %v10411 = vpack.c.bf16 %v10403, %v10403
      %v10412 = vpack.c.bf16 %v10404, %v10404
      %v10421 = vunpack.c.l.b16 %v10389
      %v10422 = vunpack.c.l.b16 %v10390
      %v10423 = vunpack.c.l.b16 %v10391
      %v10424 = vunpack.c.l.b16 %v10392
      %v10425 = vunpack.c.l.b16 %v10393
      %v10426 = vunpack.c.l.b16 %v10394
      %v10427 = vunpack.c.l.b16 %v10395
      %v10428 = vunpack.c.l.b16 %v10396
      %v10429 = vpack.c.b16 %v10422, %v10421
      %v10430 = vpack.c.b16 %v10424, %v10423
      %v10431 = vpack.c.b16 %v10426, %v10425
      %v10432 = vpack.c.b16 %v10428, %v10427
      %10433 = vrot.lane.b32.xlu0 %v10429, 64
      %v10434 = vpop.permute.xlu0 %10433
      %10435 = vrot.lane.b32.xlu0 %v10430, 64
      %v10436 = vpop.permute.xlu0 %10435
      %10437 = vrot.lane.b32.xlu0 %v10431, 64
      %v10438 = vpop.permute.xlu0 %10437
      %10439 = vrot.lane.b32.xlu0 %v10432, 64
      %v10440 = vpop.permute.xlu0 %10439
      %v10449 = vunpack.c.l.b16 %v10405
      %v10450 = vunpack.c.l.b16 %v10406
      %v10451 = vunpack.c.l.b16 %v10407
      %v10452 = vunpack.c.l.b16 %v10408
      %v10453 = vunpack.c.l.b16 %v10409
      %v10454 = vunpack.c.l.b16 %v10410
      %v10455 = vunpack.c.l.b16 %v10411
      %v10456 = vunpack.c.l.b16 %v10412
      %v10457 = vpack.c.b16 %v10450, %v10449
      %v10458 = vpack.c.b16 %v10452, %v10451
      %v10459 = vpack.c.b16 %v10454, %v10453
      %v10460 = vpack.c.b16 %v10456, %v10455
      %10461 = vrot.lane.b32.xlu0 %v10457, 96
      %v10462 = vpop.permute.xlu0 %10461
      %10463 = vrot.lane.b32.xlu0 %v10458, 96
      %v10464 = vpop.permute.xlu0 %10463
      %10465 = vrot.lane.b32.xlu0 %v10459, 96
      %v10466 = vpop.permute.xlu0 %10465
      %10467 = vrot.lane.b32.xlu0 %v10460, 96
      %v10468 = vpop.permute.xlu0 %10467
      %v10470 = vsel %vm442, %v9734, %v9767
      %v10472 = vsel %vm442, %v9735, %v9769
      %v10474 = vsel %vm442, %v9736, %v9771
      %v10476 = vsel %vm442, %v9737, %v9773
      %v10477 = vsel %vm2157, %v10470, %v10190
      %v10478 = vsel %vm2157, %v10472, %v10192
      %v10479 = vsel %vm2157, %v10474, %v10194
      %v10480 = vsel %vm2157, %v10476, %v10196
      %v10481 = vsel %vm2190, %v10477, %v9739
      %v10483 = vsel %vm2190, %v10478, %v9741
      %v10485 = vsel %vm2190, %v10479, %v9743
      %v10487 = vsel %vm2190, %v10480, %v9745
      %v10490 = vsel %vm2157, %v9824, %v10434
      %v10492 = vsel %vm2157, %v9827, %v10436
      %v10494 = vsel %vm2157, %v9830, %v10438
      %v10496 = vsel %vm2157, %v9833, %v10440
      %v10498 = vsel %vm2190, %v10490, %v10462
      %v10501 = vsel %vm2190, %v10492, %v10464
      %v10504 = vsel %vm2190, %v10494, %v10466
      %v10507 = vsel %vm2190, %v10496, %v10468
      %v10510 = vsel %vm442, %v10457, 0
      %v10513 = vsel %vm442, %v10458, 0
      %v10516 = vsel %vm442, %v10459, 0
      %v10519 = vsel %vm442, %v10460, 0
      %10521 = vmatpush.bf16.msra.mxu0 %v9937
      %10522 = vmatpush.bf16.msra.mxu0 %v9936
      %10523 = vmatpush.bf16.msra.mxu0 %v9935
      %10524 = vmatpush.bf16.msra.mxu0 %v9934
      %10525 = vmatpush.bf16.msra.mxu0 %v9933
      %10526 = vmatpush.bf16.msra.mxu0 %v9932
      %10527 = vmatpush.bf16.msra.mxu0 %v9931
      %10528 = vmatpush.bf16.msra.mxu0 %v9930
      %10529 = vmatmul.bf16.gmra.mxu0 %v10481
      %v10530 = vpop.f32.mrf.mxu0
      %v10531 = vadd.f32 %v9856, %v10530
      %v10532 = vpop.f32.mrf.mxu0
      %v10533 = vadd.f32 %v9856, %v10532
      %10534 = vmatmul.bf16.gmra.mxu0 %v10483
      %v10535 = vpop.f32.mrf.mxu0
      %v10536 = vadd.f32 %v9856, %v10535
      %v10537 = vpop.f32.mrf.mxu0
      %v10538 = vadd.f32 %v9856, %v10537
      %10539 = vmatmul.bf16.gmra.mxu0 %v10485
      %v10540 = vpop.f32.mrf.mxu0
      %v10541 = vadd.f32 %v9856, %v10540
      %v10542 = vpop.f32.mrf.mxu0
      %v10543 = vadd.f32 %v9856, %v10542
      %10544 = vmatmul.bf16.gmra.mxu0 %v10487
      %v10545 = vpop.f32.mrf.mxu0
      %v10546 = vadd.f32 %v9856, %v10545
      %v10547 = vpop.f32.mrf.mxu0
      %v10548 = vadd.f32 %v9856, %v10547
      %10549 = vdwg.mxu0
      %10550 = vmatpush.bf16.msra.mxu0 %v9945
      %10551 = vmatpush.bf16.msra.mxu0 %v9944
      %10552 = vmatpush.bf16.msra.mxu0 %v9943
      %10553 = vmatpush.bf16.msra.mxu0 %v9942
      %10554 = vmatpush.bf16.msra.mxu0 %v9941
      %10555 = vmatpush.bf16.msra.mxu0 %v9940
      %10556 = vmatpush.bf16.msra.mxu0 %v9939
      %10557 = vmatpush.bf16.msra.mxu0 %v9938
      %10558 = vmatmul.bf16.gmra.mxu0 %v10498
      %v10559 = vpop.f32.mrf.mxu0
      %v10560 = vadd.f32 %v10531, %v10559
      %v10561 = vpop.f32.mrf.mxu0
      %v10562 = vadd.f32 %v10533, %v10561
      %10563 = vmatmul.bf16.gmra.mxu0 %v10501
      %v10564 = vpop.f32.mrf.mxu0
      %v10565 = vadd.f32 %v10536, %v10564
      %v10566 = vpop.f32.mrf.mxu0
      %v10567 = vadd.f32 %v10538, %v10566
      %10568 = vmatmul.bf16.gmra.mxu0 %v10504
      %v10569 = vpop.f32.mrf.mxu0
      %v10570 = vadd.f32 %v10541, %v10569
      %v10571 = vpop.f32.mrf.mxu0
      %v10572 = vadd.f32 %v10543, %v10571
      %10573 = vmatmul.bf16.gmra.mxu0 %v10507
      %v10574 = vpop.f32.mrf.mxu0
      %v10575 = vadd.f32 %v10546, %v10574
      %v10576 = vpop.f32.mrf.mxu0
      %v10577 = vadd.f32 %v10548, %v10576
      %10578 = vdwg.mxu0
      %10579 = vmatpush.bf16.msra.mxu0 0
      %10580 = vmatpush.bf16.msra.mxu0 0
      %10581 = vmatpush.bf16.msra.mxu0 0
      %10582 = vmatpush.bf16.msra.mxu0 0
      %10583 = vmatpush.bf16.msra.mxu0 0
      %10584 = vmatpush.bf16.msra.mxu0 0
      %10585 = vmatpush.bf16.msra.mxu0 %v9947
      %10586 = vmatpush.bf16.msra.mxu0 %v9946
      %10587 = vmatmul.bf16.gmra.mxu0 %v10510
      %v10588 = vpop.f32.mrf.mxu0
      %v10589 = vadd.f32 %v10560, %v10588
      %v10590 = vpop.f32.mrf.mxu0
      %v10591 = vadd.f32 %v10562, %v10590
      %10592 = vmatmul.bf16.gmra.mxu0 %v10513
      %v10593 = vpop.f32.mrf.mxu0
      %v10594 = vadd.f32 %v10565, %v10593
      %v10595 = vpop.f32.mrf.mxu0
      %v10596 = vadd.f32 %v10567, %v10595
      %10597 = vmatmul.bf16.gmra.mxu0 %v10516
      %v10598 = vpop.f32.mrf.mxu0
      %v10599 = vadd.f32 %v10570, %v10598
      %v10600 = vpop.f32.mrf.mxu0
      %v10601 = vadd.f32 %v10572, %v10600
      %10602 = vmatmul.bf16.gmra.mxu0 %v10519
      %v10603 = vpop.f32.mrf.mxu0
      %v10604 = vadd.f32 %v10575, %v10603
      %v10605 = vpop.f32.mrf.mxu0
      %v10606 = vadd.f32 %v10577, %v10605
      %10607 = vdwg.mxu0
      %v10608 = vmax.f32 %v10589, 0.0
      %v10609 = vmax.f32 %v10591, 0.0
      %v10610 = vmax.f32 %v10594, 0.0
      %v10611 = vmax.f32 %v10596, 0.0
      %v10612 = vmax.f32 %v10599, 0.0
      %v10613 = vmax.f32 %v10601, 0.0
      %v10614 = vmax.f32 %v10604, 0.0
      %v10615 = vmax.f32 %v10606, 0.0
      %v10616 = vpack.c.bf16 %v10609, %v10608
      %v10617 = vpack.c.bf16 %v10611, %v10610
      %v10618 = vpack.c.bf16 %v10613, %v10612
      %v10619 = vpack.c.bf16 %v10615, %v10614
      %v10621 = vsel %vm442, %v10616, 0
      %v10624 = vsel %vm442, %v10617, 0
      %v10627 = vsel %vm442, %v10618, 0
      %v10630 = vsel %vm442, %v10619, 0
      %10632 = vmatpush.bf16.xpose.msra.mxu0 0
      %10633 = vmatpush.bf16.xpose.msra.mxu0 0
      %10634 = vmatpush.bf16.xpose.msra.mxu0 0
      %10635 = vmatpush.bf16.xpose.msra.mxu0 0
      %10636 = vmatpush.bf16.xpose.msra.mxu0 %v10630
      %10637 = vmatpush.bf16.xpose.msra.mxu0 %v10627
      %10638 = vmatpush.bf16.xpose.msra.mxu0 %v10624
      %10639 = vmatpush.bf16.xpose.msra.mxu0 %v10621
      %10640 = vmatmul.bf16.gmra.mxu0 %v10074
      %v10641 = vpop.f32.mrf.mxu0
      %v10642 = vadd.f32 0.0, %v10641
      %v10643 = vpop.f32.mrf.mxu0
      %10644 = vdwg.mxu0
      %v10645 = vld [vmem:[%s8298 + $0x2] sm:$0xff]
      %v10646 = vld [vmem:[%s8298 + $0x12] sm:$0xff]
      %v10647 = vld [vmem:[%s8298 + $0x22] sm:$0xff]
      %v10648 = vld [vmem:[%s8298 + $0x32] sm:$0xff]
      %v10649 = vld [vmem:[%s8298 + $0x42] sm:$0xff]
      %v10650 = vld [vmem:[%s8298 + $0x52] sm:$0xff]
      %v10651 = vld [vmem:[%s8298 + $0x62] sm:$0xff]
      %v10652 = vld [vmem:[%s8298 + $0x72] sm:$0xff]
      %v10653 = vpack.c.bf16 %v10645, %v10645
      %v10654 = vpack.c.bf16 %v10646, %v10646
      %v10655 = vpack.c.bf16 %v10647, %v10647
      %v10656 = vpack.c.bf16 %v10648, %v10648
      %v10657 = vpack.c.bf16 %v10649, %v10649
      %v10658 = vpack.c.bf16 %v10650, %v10650
      %v10659 = vpack.c.bf16 %v10651, %v10651
      %v10660 = vpack.c.bf16 %v10652, %v10652
      %10661 = vrot.lane.b32.xlu0 %v10177, 64
      %v10662 = vpop.permute.xlu0 %10661
      %10663 = vrot.lane.b32.xlu0 %v10178, 64
      %v10664 = vpop.permute.xlu0 %10663
      %10665 = vrot.lane.b32.xlu0 %v10179, 64
      %v10666 = vpop.permute.xlu0 %10665
      %10667 = vrot.lane.b32.xlu0 %v10180, 64
      %v10668 = vpop.permute.xlu0 %10667
      %10669 = vrot.lane.b32.xlu0 %v10457, 64
      %v10670 = vpop.permute.xlu0 %10669
      %10671 = vrot.lane.b32.xlu0 %v10458, 64
      %v10672 = vpop.permute.xlu0 %10671
      %10673 = vrot.lane.b32.xlu0 %v10459, 64
      %v10674 = vpop.permute.xlu0 %10673
      %10675 = vrot.lane.b32.xlu0 %v10460, 64
      %v10676 = vpop.permute.xlu0 %10675
      %v10685 = vunpack.c.l.b16 %v10653
      %v10686 = vunpack.c.l.b16 %v10654
      %v10687 = vunpack.c.l.b16 %v10655
      %v10688 = vunpack.c.l.b16 %v10656
      %v10689 = vunpack.c.l.b16 %v10657
      %v10690 = vunpack.c.l.b16 %v10658
      %v10691 = vunpack.c.l.b16 %v10659
      %v10692 = vunpack.c.l.b16 %v10660
      %v10693 = vpack.c.b16 %v10686, %v10685
      %v10694 = vpack.c.b16 %v10688, %v10687
      %v10695 = vpack.c.b16 %v10690, %v10689
      %v10696 = vpack.c.b16 %v10692, %v10691
      %v10698 = vsel %vm2157, %v9824, %v10662
      %v10700 = vsel %vm2157, %v9827, %v10664
      %v10702 = vsel %vm2157, %v9830, %v10666
      %v10704 = vsel %vm2157, %v9833, %v10668
      %v10705 = vsel %vm2190, %v10698, %v9783
      %v10707 = vsel %vm2190, %v10700, %v9785
      %v10709 = vsel %vm2190, %v10702, %v9787
      %v10711 = vsel %vm2190, %v10704, %v9789
      %v10714 = vsel %vm2157, %v10222, %v10670
      %v10716 = vsel %vm2157, %v10224, %v10672
      %v10718 = vsel %vm2157, %v10226, %v10674
      %v10720 = vsel %vm2157, %v10228, %v10676
      %v10721 = vsel %vm2190, %v10714, %v10462
      %v10723 = vsel %vm2190, %v10716, %v10464
      %v10725 = vsel %vm2190, %v10718, %v10466
      %v10727 = vsel %vm2190, %v10720, %v10468
      %v10730 = vsel %vm442, %v10693, 0
      %v10733 = vsel %vm442, %v10694, 0
      %v10736 = vsel %vm442, %v10695, 0
      %v10739 = vsel %vm442, %v10696, 0
      %10741 = vmatpush.bf16.msra.mxu0 %v9937
      %10742 = vmatpush.bf16.msra.mxu0 %v9936
      %10743 = vmatpush.bf16.msra.mxu0 %v9935
      %10744 = vmatpush.bf16.msra.mxu0 %v9934
      %10745 = vmatpush.bf16.msra.mxu0 %v9933
      %10746 = vmatpush.bf16.msra.mxu0 %v9932
      %10747 = vmatpush.bf16.msra.mxu0 %v9931
      %10748 = vmatpush.bf16.msra.mxu0 %v9930
      %10749 = vmatmul.bf16.gmra.mxu0 %v10705
      %v10750 = vpop.f32.mrf.mxu0
      %v10751 = vadd.f32 %v9856, %v10750
      %v10752 = vpop.f32.mrf.mxu0
      %v10753 = vadd.f32 %v9856, %v10752
      %10754 = vmatmul.bf16.gmra.mxu0 %v10707
      %v10755 = vpop.f32.mrf.mxu0
      %v10756 = vadd.f32 %v9856, %v10755
      %v10757 = vpop.f32.mrf.mxu0
      %v10758 = vadd.f32 %v9856, %v10757
      %10759 = vmatmul.bf16.gmra.mxu0 %v10709
      %v10760 = vpop.f32.mrf.mxu0
      %v10761 = vadd.f32 %v9856, %v10760
      %v10762 = vpop.f32.mrf.mxu0
      %v10763 = vadd.f32 %v9856, %v10762
      %10764 = vmatmul.bf16.gmra.mxu0 %v10711
      %v10765 = vpop.f32.mrf.mxu0
      %v10766 = vadd.f32 %v9856, %v10765
      %v10767 = vpop.f32.mrf.mxu0
      %v10768 = vadd.f32 %v9856, %v10767
      %10769 = vdwg.mxu0
      %10770 = vmatpush.bf16.msra.mxu0 %v9945
      %10771 = vmatpush.bf16.msra.mxu0 %v9944
      %10772 = vmatpush.bf16.msra.mxu0 %v9943
      %10773 = vmatpush.bf16.msra.mxu0 %v9942
      %10774 = vmatpush.bf16.msra.mxu0 %v9941
      %10775 = vmatpush.bf16.msra.mxu0 %v9940
      %10776 = vmatpush.bf16.msra.mxu0 %v9939
      %10777 = vmatpush.bf16.msra.mxu0 %v9938
      %10778 = vmatmul.bf16.gmra.mxu0 %v10721
      %v10779 = vpop.f32.mrf.mxu0
      %v10780 = vadd.f32 %v10751, %v10779
      %v10781 = vpop.f32.mrf.mxu0
      %v10782 = vadd.f32 %v10753, %v10781
      %10783 = vmatmul.bf16.gmra.mxu0 %v10723
      %v10784 = vpop.f32.mrf.mxu0
      %v10785 = vadd.f32 %v10756, %v10784
      %v10786 = vpop.f32.mrf.mxu0
      %v10787 = vadd.f32 %v10758, %v10786
      %10788 = vmatmul.bf16.gmra.mxu0 %v10725
      %v10789 = vpop.f32.mrf.mxu0
      %v10790 = vadd.f32 %v10761, %v10789
      %v10791 = vpop.f32.mrf.mxu0
      %v10792 = vadd.f32 %v10763, %v10791
      %10793 = vmatmul.bf16.gmra.mxu0 %v10727
      %v10794 = vpop.f32.mrf.mxu0
      %v10795 = vadd.f32 %v10766, %v10794
      %v10796 = vpop.f32.mrf.mxu0
      %v10797 = vadd.f32 %v10768, %v10796
      %10798 = vdwg.mxu0
      %10799 = vmatpush.bf16.msra.mxu0 0
      %10800 = vmatpush.bf16.msra.mxu0 0
      %10801 = vmatpush.bf16.msra.mxu0 0
      %10802 = vmatpush.bf16.msra.mxu0 0
      %10803 = vmatpush.bf16.msra.mxu0 0
      %10804 = vmatpush.bf16.msra.mxu0 0
      %10805 = vmatpush.bf16.msra.mxu0 %v9947
      %10806 = vmatpush.bf16.msra.mxu0 %v9946
      %10807 = vmatmul.bf16.gmra.mxu0 %v10730
      %v10808 = vpop.f32.mrf.mxu0
      %v10809 = vadd.f32 %v10780, %v10808
      %v10810 = vpop.f32.mrf.mxu0
      %v10811 = vadd.f32 %v10782, %v10810
      %10812 = vmatmul.bf16.gmra.mxu0 %v10733
      %v10813 = vpop.f32.mrf.mxu0
      %v10814 = vadd.f32 %v10785, %v10813
      %v10815 = vpop.f32.mrf.mxu0
      %v10816 = vadd.f32 %v10787, %v10815
      %10817 = vmatmul.bf16.gmra.mxu0 %v10736
      %v10818 = vpop.f32.mrf.mxu0
      %v10819 = vadd.f32 %v10790, %v10818
      %v10820 = vpop.f32.mrf.mxu0
      %v10821 = vadd.f32 %v10792, %v10820
      %10822 = vmatmul.bf16.gmra.mxu0 %v10739
      %v10823 = vpop.f32.mrf.mxu0
      %v10824 = vadd.f32 %v10795, %v10823
      %v10825 = vpop.f32.mrf.mxu0
      %v10826 = vadd.f32 %v10797, %v10825
      %10827 = vdwg.mxu0
      %v10828 = vmax.f32 %v10809, 0.0
      %v10829 = vmax.f32 %v10811, 0.0
      %v10830 = vmax.f32 %v10814, 0.0
      %v10831 = vmax.f32 %v10816, 0.0
      %v10832 = vmax.f32 %v10819, 0.0
      %v10833 = vmax.f32 %v10821, 0.0
      %v10834 = vmax.f32 %v10824, 0.0
      %v10835 = vmax.f32 %v10826, 0.0
      %v10836 = vpack.c.bf16 %v10829, %v10828
      %v10837 = vpack.c.bf16 %v10831, %v10830
      %v10838 = vpack.c.bf16 %v10833, %v10832
      %v10839 = vpack.c.bf16 %v10835, %v10834
      %v10841 = vsel %vm442, %v10836, 0
      %v10844 = vsel %vm442, %v10837, 0
      %v10847 = vsel %vm442, %v10838, 0
      %v10850 = vsel %vm442, %v10839, 0
      %10852 = vmatpush.bf16.xpose.msra.mxu0 0
      %10853 = vmatpush.bf16.xpose.msra.mxu0 0
      %10854 = vmatpush.bf16.xpose.msra.mxu0 0
      %10855 = vmatpush.bf16.xpose.msra.mxu0 0
      %10856 = vmatpush.bf16.xpose.msra.mxu0 %v10850
      %10857 = vmatpush.bf16.xpose.msra.mxu0 %v10847
      %10858 = vmatpush.bf16.xpose.msra.mxu0 %v10844
      %10859 = vmatpush.bf16.xpose.msra.mxu0 %v10841
      %10860 = vmatmul.bf16.gmra.mxu0 %v10074
      %v10861 = vpop.f32.mrf.mxu0
      %v10862 = vadd.f32 0.0, %v10861
      %v10863 = vpop.f32.mrf.mxu0
      %10864 = vdwg.mxu0
      %10866 = vrot.lane.b32.xlu0 %v10378, 64
      %v10867 = vpop.permute.xlu0 %10866
      %10870 = vrot.lane.b32.xlu0 %v10862, 64
      %v10871 = vpop.permute.xlu0 %10870
      %v10873 = vsel %vm2157, %v10098, %v10867
      %v10874 = vsel %vm2157, %v10642, %v10871
      %v10875 = vld [vmem:[%s12] sm:$0xf]
      %10877 = vset.pattern.permute.xlu0 0
      %10878 = vperm.xlu0 %10877, %v10875
      %v10879 = vpop.permute.xlu0 %10878
      %v10881 = vadd.f32 %v10873, %v10879
      %v10882 = vadd.f32 %v10874, %v10879
      %vm10883 = vcmask 1043456
      %v10884 = vsel %vm10883, %v10881, -inf
      %v10885 = vrot.slane %v10884, 4
      %v10886 = vmax.f32 %v10884, %v10885
      %v10887 = vrot.slane %v10886, 2
      %v10888 = vmax.f32 %v10886, %v10887
      %v10889 = vrot.slane %v10888, 1
      %v10890 = vmax.f32 %v10888, %v10889
      %v10891 = vsel %vm10883, %v10882, -inf
      %v10892 = vrot.slane %v10891, 4
      %v10893 = vmax.f32 %v10891, %v10892
      %v10894 = vrot.slane %v10893, 2
      %v10895 = vmax.f32 %v10893, %v10894
      %v10896 = vrot.slane %v10895, 1
      %v10897 = vmax.f32 %v10895, %v10896
      %v10898 = vsub.f32 %v10881, %v10890
      %v10899 = vsub.f32 %v10882, %v10897
      %v10900 = vmul.f32 %v10898, 1.442695
      %v10901 = vpow.pop %v10900
      %v10902 = vmul.f32 %v10899, 1.442695
      %v10903 = vpow.pop %v10902
      %v10904 = vsel %vm10883, %v10901, 0.0
      %v10905 = vrot.slane %v10904, 4
      %v10906 = vadd.f32 %v10904, %v10905
      %v10907 = vrot.slane %v10906, 2
      %v10908 = vadd.f32 %v10906, %v10907
      %v10909 = vrot.slane %v10908, 1
      %v10910 = vadd.f32 %v10908, %v10909
      %v10911 = vsel %vm10883, %v10903, 0.0
      %v10912 = vrot.slane %v10911, 4
      %v10913 = vadd.f32 %v10911, %v10912
      %v10914 = vrot.slane %v10913, 2
      %v10915 = vadd.f32 %v10913, %v10914
      %v10916 = vrot.slane %v10915, 1
      %v10917 = vadd.f32 %v10915, %v10916
      %v10918 = vrcp.pop %v10910
      %v10919 = vmul.f32 %v10910, %v10918
      %v10920 = vsub.f32 1.0, %v10919
      %v10921 = vmul.f32 %v10918, %v10920
      %v10922 = vadd.f32 %v10918, %v10921
      %vm10923 = vweird.f32 %v10910
      %vm10924 = vweird.f32 %v10918
      %vm10925 = vmor %vm10923, %vm10924
      %v10926 = vsel %vm10925, %v10918, %v10922
      %v10927 = vand.u32 2147483647, %v10910
      %vm10928 = vcmp.eq.f32.partialorder %v10927, 8.507059e+37
      %v10929 = vand.u32 %v10910, 2147483648
      %v10930 = vor.u32 1.1754944e-38, %v10929
      %v10931 = vsel %vm10928, %v10930, %v10926
      %v10932 = vmul.f32 %v10901, %v10931
      %v10933 = vrcp.pop %v10917
      %v10934 = vmul.f32 %v10917, %v10933
      %v10935 = vsub.f32 1.0, %v10934
      %v10936 = vmul.f32 %v10933, %v10935
      %v10937 = vadd.f32 %v10933, %v10936
      %vm10938 = vweird.f32 %v10917
      %vm10939 = vweird.f32 %v10933
      %vm10940 = vmor %vm10938, %vm10939
      %v10941 = vsel %vm10940, %v10933, %v10937
      %v10942 = vand.u32 2147483647, %v10917
      %vm10943 = vcmp.eq.f32.partialorder %v10942, 8.507059e+37
      %v10944 = vand.u32 %v10917, 2147483648
      %v10945 = vor.u32 1.1754944e-38, %v10944
      %v10946 = vsel %vm10943, %v10945, %v10941
      %v10947 = vmul.f32 %v10903, %v10946
      %v10950 = vrot.slane %v10947, 4
      %v10951 = vsel %vm10883, %v10932, %v10950
      %10953 = vst [vmem:[%s440] sm:$0xff] %v10951
      %p10954 = scmp.lt.s32.totalorder %s24, 1
      %s10955 = scalar_select %p10954, %s24, 1
      %s10956 = smul.addr %s10955, 2
      %s10957 = smul.addr %s10956, 4
      %s10958 = scalar_lea.vmem %s13, %s10957
      // Predicated region
      $region73: #{a_call__.1} parent=71 // pred_check
        %p10959 = pneg %p320
      $region74: #{a_call__.1} parent=71 // pred_check_branch
        %10961 = sbr.rel (%p10959) target = $region76
      $region75: #{a_call__.1} parent=71 // pred_region
        _
      $region76: #{a_call__.1} parent=71 // pred_fallthru
        _
    $region72: #{a_call__.1} parent=5 // pred_fallthru
      _
    %p10962 = scmp.le.s32.totalorder 2, %s19
    // Predicated region
    $region77: #{a_call__.1} parent=5 // pred_check
      %p10963 = pneg %p10962
    $region78: #{a_call__.1} parent=5 // pred_check_branch
      %10965 = sbr.rel (%p10963) target = $region80
    $region79: #{a_call__.1} parent=5 // pred_region
      %s10966 = ssub.s32 %s19, 2
      // Predicated region
      $region81: #{a_call__.1} parent=79 // pred_check
        %p10967 = pneg %p326
      $region82: #{a_call__.1} parent=79 // pred_check_branch
        %10969 = sbr.rel (%p10967) target = $region84
      $region83: #{a_call__.1} parent=79 // pred_region
        %p10970 = scmp.lt.s32.totalorder %s25, 1
        %s10971 = scalar_select %p10970, %s25, 1
        %s10972 = smul.addr %s10971, 2
        %s10973 = smul.addr %s10972, 4
        %s10974 = scalar_lea.vmem %s13, %s10973
      $region84: #{a_call__.1} parent=79 // pred_fallthru
        _
    $region80: #{a_call__.1} parent=5 // pred_fallthru
      _
  $region6: #{a_call__.1} parent=0 // loop_footer
    %s23 = sadd.s32 1, %s19
  $region7: #{a_call__.1} parent=0 // loop_footer_branch
    %18 = sbr.rel target = $region3
  $region8: #{a_call__.1} parent=0 // loop_exit
    _

</llo_original>
